<compile_context>
chip_gen: v7x
topology: tpu7x:2x2x1
jax: 0.10.0
libtpu: 0.0.40
codegen_flags: <defaults>
</compile_context>

<pallas_src>
import numpy as np
import jax
import jax.numpy as jnp
from jax.experimental import pallas as pl
from jax.experimental.pallas import tpu as pltpu

BN_EPS = 1e-5


# ---------------------------------------------------------------------------
# In-kernel helpers (traced inside the Pallas kernel body)
# ---------------------------------------------------------------------------
def _bn_train(h, gamma, beta, n_pix):
    """BatchNorm2d training-mode forward on a (n_pix, C) slab.

    Single reduction pass: var = E[x^2] - mean^2 (biased variance, matching the
    normalization PyTorch applies in training mode).  All math in f32.
    """
    inv_n = 1.0 / n_pix
    mean = jnp.sum(h, axis=0, keepdims=True) * inv_n
    var = jnp.sum(h * h, axis=0, keepdims=True) * inv_n - mean * mean
    scale = jax.lax.rsqrt(var + BN_EPS) * gamma            # (1, C)
    return h * scale + (beta - mean * scale)


def _im2col_3x3(src_ref, H, W):
    """Build the (N*H*W, 9*C) im2col slab from a zero-padded (N,H+2,W+2,C) ref.

    Tap order (dy, dx, c) matches an HWIO (3,3,C,Cout) weight reshaped to
    (9*C, Cout), so the whole 3x3 conv becomes ONE MXU matmul.
    """
    N, _, _, C = src_ref.shape
    npix = N * H * W
    taps = []
    for dy in range(3):
        for dx in range(3):
            taps.append(src_ref[:, dy:dy + H, dx:dx + W, :].reshape(npix, C))
    return jnp.concatenate(taps, axis=-1)                   # (npix, 9*C)


# ---------------------------------------------------------------------------
# The Pallas kernel: entire Block.forward in one invocation
# ---------------------------------------------------------------------------
def block_kernel(xp_ref, t_ref,
                 w1_ref, b1_ref, g1_ref, beta1_ref,
                 wt_ref, bt_ref,
                 w2_ref, b2_ref, g2_ref, beta2_ref,
                 w3_ref, b3_ref,
                 out_ref,
                 hpad_ref):
    N, Hp, Wp, _ = xp_ref.shape            # xp is pre-padded by 1 on H and W
    H, W = Hp - 2, Wp - 2
    Cout = hpad_ref.shape[-1]
    Ho, Wo = H // 2, W // 2
    npix = N * H * W
    npo = N * Ho * Wo

    # ---- conv1 (3x3, pad 1) as one K=9*Cin matmul -> bias -> ReLU -> BN1 ---
    col1 = _im2col_3x3(xp_ref, H, W).astype(jnp.bfloat16)
    h = jnp.dot(col1, w1_ref[...], preferred_element_type=jnp.float32)
    h = jnp.maximum(h + b1_ref[...], 0.0)
    h = _bn_train(h, g1_ref[...], beta1_ref[...], npix)            # (npix, Cout) f32

    # ---- time embedding: ReLU(Linear(t)), broadcast over H, W --------------
    te = jnp.dot(t_ref[...], wt_ref[...],
                 preferred_element_type=jnp.float32) + bt_ref[...]
    te = jnp.maximum(te, 0.0)                                      # (N, Cout)
    h = h.reshape(N, H * W, Cout) + te[:, None, :]

    # ---- padded scratch: zero ONLY the 1-pixel border, once.  The interior
    #      is fully overwritten before each use -> no full-buffer zero sweeps.
    zrow = jnp.zeros((N, 1, Wp, Cout), hpad_ref.dtype)
    zcol = jnp.zeros((N, Hp, 1, Cout), hpad_ref.dtype)
    hpad_ref[:, 0:1, :, :] = zrow
    hpad_ref[:, Hp - 1:Hp, :, :] = zrow
    hpad_ref[:, :, 0:1, :] = zcol
    hpad_ref[:, :, Wp - 1:Wp, :] = zcol

    # ---- conv2 (3x3, pad 1): producer written straight into the interior ---
    hpad_ref[:, 1:H + 1, 1:W + 1, :] = (
        h.reshape(N, H, W, Cout).astype(hpad_ref.dtype))
    col2 = _im2col_3x3(hpad_ref, H, W).astype(jnp.bfloat16)        # (npix, 9*Cout)
    h = jnp.dot(col2, w2_ref[...], preferred_element_type=jnp.float32)
    h = jnp.maximum(h + b2_ref[...], 0.0)
    h = _bn_train(h, g2_ref[...], beta2_ref[...], npix)            # (npix, Cout) f32

    # ---- transform: 4x4 / stride 2 / pad 1 conv as one K=16*Cout matmul ----
    # Border of hpad is still zero from above; only the interior is rewritten.
    hpad_ref[:, 1:H + 1, 1:W + 1, :] = (
        h.reshape(N, H, W, Cout).astype(hpad_ref.dtype))

    # Column deinterleave: two single-dim strided ref reads (sublane dim, f32).
    # Row deinterleave: free outer-dim reshape (H is not a layout dim).
    sub = {}
    for px in range(2):
        cph = hpad_ref[:, :, pl.ds(px, Wo + 1, stride=2), :]       # (N, Hp, Wo+1, C)
        cph = cph.reshape(N, Ho + 1, 2, Wo + 1, Cout)              # outer split: free
        for py in range(2):
            sub[(py, px)] = cph[:, :, py, :, :]                    # (N, Ho+1, Wo+1, C)

    taps = []
    for dy in range(4):
        for dx in range(4):
            s = sub[(dy % 2, dx % 2)]
            taps.append(s[:, dy // 2:dy // 2 + Ho,
                          dx // 2:dx // 2 + Wo, :].reshape(npo, Cout))
    col3 = jnp.concatenate(taps, axis=-1).astype(jnp.bfloat16)     # (npo, 16*Cout)
    y = jnp.dot(col3, w3_ref[...], preferred_element_type=jnp.float32)
    y = y + b3_ref[...]                                            # (npo, Cout) f32

    # ---- lane-dense output slab (N*Ho, Wo*Cout); wrapper restores NCHW -----
    y3 = y.reshape(N * Ho, Wo, Cout)                               # outer split: free
    out_ref[...] = jnp.concatenate([y3[:, j, :] for j in range(Wo)], axis=-1)


# ---------------------------------------------------------------------------
# Wrapper: NCHW <-> NHWC plumbing, weight repacking (im2col order) + pallas_call
# ---------------------------------------------------------------------------
@jax.jit
def block_forward(x_nchw, t, params):
    x = jnp.transpose(x_nchw, (0, 2, 3, 1)).astype(jnp.float32)   # NHWC
    xp = jnp.pad(x, ((0, 0), (1, 1), (1, 1), (0, 0)))             # f32, pad 1
    N, H, W, Cin = x.shape
    Cout = params["w1"].shape[-1]
    Ho, Wo = H // 2, W // 2

    # HWIO weights reshaped so taps sit on the matmul contraction dim (bf16).
    w1 = params["w1"].reshape(9 * Cin, Cout).astype(jnp.bfloat16)
    w2 = params["w2"].reshape(9 * Cout, Cout).astype(jnp.bfloat16)
    w3 = params["w3"].reshape(16 * Cout, Cout).astype(jnp.bfloat16)

    operands = (xp, t.astype(jnp.float32),
                w1, params["b1"], params["g1"], params["beta1"],
                params["wt"], params["bt"],
                w2, params["b2"], params["g2"], params["beta2"],
                w3, params["b3"])

    out_slab = pl.pallas_call(
        block_kernel,
        out_shape=jax.ShapeDtypeStruct((N * Ho, Wo * Cout), jnp.float32),
        in_specs=[pl.BlockSpec(memory_space=pltpu.MemorySpace.VMEM)] * len(operands),
        out_specs=pl.BlockSpec(memory_space=pltpu.MemorySpace.VMEM),
        scratch_shapes=[pltpu.VMEM((N, H + 2, W + 2, Cout), jnp.float32)],
    )(*operands)

    out = out_slab.reshape(N, Ho, Wo, Cout)
    return jnp.transpose(out, (0, 3, 1, 2))                       # back to NCHW


# ---------------------------------------------------------------------------
# Pure-JAX reference (XLA convs) for correctness checking
# ---------------------------------------------------------------------------
def ref_forward_nhwc(x_nhwc, t, p, conv_dtype=jnp.float32):
    dn = ("NHWC", "HWIO", "NHWC")

    def conv(x, w, b, stride, pad):
        y = jax.lax.conv_general_dilated(
            x.astype(conv_dtype), w.astype(conv_dtype), (stride, stride),
            [(pad, pad), (pad, pad)], dimension_numbers=dn,
            preferred_element_type=jnp.float32)
        return y + b.reshape(1, 1, 1, -1)

    def bn(h, g, be):
        mean = h.mean(axis=(0, 1, 2), keepdims=True)
        var = ((h - mean) ** 2).mean(axis=(0, 1, 2), keepdims=True)
        return (h - mean) * jax.lax.rsqrt(var + BN_EPS) * g.reshape(1, 1, 1, -1) \
            + be.reshape(1, 1, 1, -1)

    h = bn(jax.nn.relu(conv(x_nhwc, p["w1"], p["b1"], 1, 1)), p["g1"], p["beta1"])
    te = jax.nn.relu(t @ p["wt"] + p["bt"])
    h = h + te[:, None, None, :]
    h = bn(jax.nn.relu(conv(h, p["w2"], p["b2"], 1, 1)), p["g2"], p["beta2"])
    return conv(h, p["w3"], p["b3"], 2, 1)


# ---------------------------------------------------------------------------
# Deterministic parameter init (synthetic; shapes from Block.__init__, up=False)
# ---------------------------------------------------------------------------
def init_params(key, in_ch, out_ch, time_emb_dim):
    ks = jax.random.split(key, 14)
    n = lambda k, s, sc: sc * jax.random.normal(k, s, jnp.float32)
    return dict(
        w1=n(ks[0], (3, 3, in_ch, out_ch), 0.2),        # conv1 (HWIO)
        b1=n(ks[1], (1, out_ch), 0.1),
        g1=1.0 + n(ks[2], (1, out_ch), 0.1),            # bnorm1 weight
        beta1=n(ks[3], (1, out_ch), 0.1),               # bnorm1 bias
        wt=n(ks[4], (time_emb_dim, out_ch), 0.2),       # time_mlp
        bt=n(ks[5], (1, out_ch), 0.1),
        w2=n(ks[6], (3, 3, out_ch, out_ch), 0.2),       # conv2
        b2=n(ks[7], (1, out_ch), 0.1),
        g2=1.0 + n(ks[8], (1, out_ch), 0.1),            # bnorm2 weight
        beta2=n(ks[9], (1, out_ch), 0.1),               # bnorm2 bias
        w3=n(ks[10], (4, 4, out_ch, out_ch), 0.2),      # transform (4x4, s=2, p=1)
        b3=n(ks[11], (1, out_ch), 0.1),
    )


if __name__ == "__main__":
    N, IN_CH, OUT_CH, T_EMB, H, W = 2, 4, 8, 32, 16, 16

    key = jax.random.PRNGKey(0)
    kx, kt, kp = jax.random.split(key, 3)
    x = jax.random.normal(kx, (N, IN_CH, H, W), jnp.float32)    # NCHW, like PyTorch
    t = jax.random.normal(kt, (N, T_EMB), jnp.float32)
    params = init_params(kp, IN_CH, OUT_CH, T_EMB)

    out = block_forward(x, t, params)
    jax.block_until_ready(out)
    assert out.shape == (N, OUT_CH, H // 2, W // 2), out.shape

    x_nhwc = jnp.transpose(x, (0, 2, 3, 1))
    # Tight check against a precision-matched reference (bf16 conv operands,
    # f32 accumulation -- same dtype policy as the kernel's MXU path).
    ref_bf = jnp.transpose(ref_forward_nhwc(x_nhwc, t, params, jnp.bfloat16),
                           (0, 3, 1, 2))
    np.testing.assert_allclose(np.asarray(out), np.asarray(ref_bf),
                               rtol=2e-2, atol=2e-2)
    # Looser sanity check against the full-f32 reference (PyTorch semantics);
    # slack covers the intentional bf16 rounding of conv inputs/weights.
    ref_f32 = jnp.transpose(ref_forward_nhwc(x_nhwc, t, params, jnp.float32),
                            (0, 3, 1, 2))
    np.testing.assert_allclose(np.asarray(out), np.asarray(ref_f32),
                               rtol=1e-1, atol=1e-1)

    print("KERNEL_OK")
</pallas_src>

<mosaic_0001>
module attributes {stable_mosaic.version = 11 : i64} {
  func.func @block_kernel(%arg0: memref<2x18x18x4xf32, #tpu.memory_space<vmem>>, %arg1: memref<2x32xf32, #tpu.memory_space<vmem>>, %arg2: memref<36x8xbf16, #tpu.memory_space<vmem>>, %arg3: memref<1x8xf32, #tpu.memory_space<vmem>>, %arg4: memref<1x8xf32, #tpu.memory_space<vmem>>, %arg5: memref<1x8xf32, #tpu.memory_space<vmem>>, %arg6: memref<32x8xf32, #tpu.memory_space<vmem>>, %arg7: memref<1x8xf32, #tpu.memory_space<vmem>>, %arg8: memref<72x8xbf16, #tpu.memory_space<vmem>>, %arg9: memref<1x8xf32, #tpu.memory_space<vmem>>, %arg10: memref<1x8xf32, #tpu.memory_space<vmem>>, %arg11: memref<1x8xf32, #tpu.memory_space<vmem>>, %arg12: memref<128x8xbf16, #tpu.memory_space<vmem>>, %arg13: memref<1x8xf32, #tpu.memory_space<vmem>>, %arg14: memref<16x64xf32, #tpu.memory_space<vmem>>, %arg15: memref<2x18x18x8xf32, #tpu.memory_space<vmem>>) attributes {dimension_semantics = [], scalar_prefetch = 0 : i64, scratch_operands = 1 : i64, tpu.core_type = #tpu.core_type<tc>} {
    %c0 = arith.constant 0 : index
    %c0_0 = arith.constant 0 : index
    %c0_1 = arith.constant 0 : index
    %c0_2 = arith.constant 0 : index
    %0 = vector.load %arg0[%c0, %c0_0, %c0_1, %c0_2] : memref<2x18x18x4xf32, #tpu.memory_space<vmem>>, vector<2x16x16x4xf32>
    %1 = vector.shape_cast %0 : vector<2x16x16x4xf32> to vector<512x4xf32>
    %c0_3 = arith.constant 0 : index
    %c0_4 = arith.constant 0 : index
    %c1 = arith.constant 1 : index
    %c0_5 = arith.constant 0 : index
    %2 = vector.load %arg0[%c0_3, %c0_4, %c1, %c0_5] : memref<2x18x18x4xf32, #tpu.memory_space<vmem>>, vector<2x16x16x4xf32>
    %3 = vector.shape_cast %2 : vector<2x16x16x4xf32> to vector<512x4xf32>
    %c0_6 = arith.constant 0 : index
    %c0_7 = arith.constant 0 : index
    %c2 = arith.constant 2 : index
    %c0_8 = arith.constant 0 : index
    %4 = vector.load %arg0[%c0_6, %c0_7, %c2, %c0_8] : memref<2x18x18x4xf32, #tpu.memory_space<vmem>>, vector<2x16x16x4xf32>
    %5 = vector.shape_cast %4 : vector<2x16x16x4xf32> to vector<512x4xf32>
    %c0_9 = arith.constant 0 : index
    %c1_10 = arith.constant 1 : index
    %c0_11 = arith.constant 0 : index
    %c0_12 = arith.constant 0 : index
    %6 = vector.load %arg0[%c0_9, %c1_10, %c0_11, %c0_12] : memref<2x18x18x4xf32, #tpu.memory_space<vmem>>, vector<2x16x16x4xf32>
    %7 = vector.shape_cast %6 : vector<2x16x16x4xf32> to vector<512x4xf32>
    %c0_13 = arith.constant 0 : index
    %c1_14 = arith.constant 1 : index
    %c1_15 = arith.constant 1 : index
    %c0_16 = arith.constant 0 : index
    %8 = vector.load %arg0[%c0_13, %c1_14, %c1_15, %c0_16] : memref<2x18x18x4xf32, #tpu.memory_space<vmem>>, vector<2x16x16x4xf32>
    %9 = vector.shape_cast %8 : vector<2x16x16x4xf32> to vector<512x4xf32>
    %c0_17 = arith.constant 0 : index
    %c1_18 = arith.constant 1 : index
    %c2_19 = arith.constant 2 : index
    %c0_20 = arith.constant 0 : index
    %10 = vector.load %arg0[%c0_17, %c1_18, %c2_19, %c0_20] : memref<2x18x18x4xf32, #tpu.memory_space<vmem>>, vector<2x16x16x4xf32>
    %11 = vector.shape_cast %10 : vector<2x16x16x4xf32> to vector<512x4xf32>
    %c0_21 = arith.constant 0 : index
    %c2_22 = arith.constant 2 : index
    %c0_23 = arith.constant 0 : index
    %c0_24 = arith.constant 0 : index
    %12 = vector.load %arg0[%c0_21, %c2_22, %c0_23, %c0_24] : memref<2x18x18x4xf32, #tpu.memory_space<vmem>>, vector<2x16x16x4xf32>
    %13 = vector.shape_cast %12 : vector<2x16x16x4xf32> to vector<512x4xf32>
    %c0_25 = arith.constant 0 : index
    %c2_26 = arith.constant 2 : index
    %c1_27 = arith.constant 1 : index
    %c0_28 = arith.constant 0 : index
    %14 = vector.load %arg0[%c0_25, %c2_26, %c1_27, %c0_28] : memref<2x18x18x4xf32, #tpu.memory_space<vmem>>, vector<2x16x16x4xf32>
    %15 = vector.shape_cast %14 : vector<2x16x16x4xf32> to vector<512x4xf32>
    %c0_29 = arith.constant 0 : index
    %c2_30 = arith.constant 2 : index
    %c2_31 = arith.constant 2 : index
    %c0_32 = arith.constant 0 : index
    %16 = vector.load %arg0[%c0_29, %c2_30, %c2_31, %c0_32] : memref<2x18x18x4xf32, #tpu.memory_space<vmem>>, vector<2x16x16x4xf32>
    %17 = vector.shape_cast %16 : vector<2x16x16x4xf32> to vector<512x4xf32>
    %18 = tpu.concatenate %1, %3, %5, %7, %9, %11, %13, %15, %17 in 1 : vector<512x4xf32>, vector<512x4xf32>, vector<512x4xf32>, vector<512x4xf32>, vector<512x4xf32>, vector<512x4xf32>, vector<512x4xf32>, vector<512x4xf32>, vector<512x4xf32> -> vector<512x36xf32>
    %19 = arith.truncf %18 : vector<512x36xf32> to vector<512x36xbf16>
    %c0_33 = arith.constant 0 : index
    %c0_34 = arith.constant 0 : index
    %20 = vector.load %arg2[%c0_33, %c0_34] : memref<36x8xbf16, #tpu.memory_space<vmem>>, vector<36x8xbf16>
    %cst = arith.constant dense<0.000000e+00> : vector<512x8xf32>
    %21 = tpu.matmul %19, %20, %cst {dimension_numbers = #tpu.dot_dimension_numbers<[1], [0], [0], [1], [0, 0, 1, 1], [], []>} : vector<512x36xbf16>, vector<36x8xbf16>, vector<512x8xf32> -> vector<512x8xf32>
    %c0_35 = arith.constant 0 : index
    %c0_36 = arith.constant 0 : index
    %22 = vector.load %arg3[%c0_35, %c0_36] : memref<1x8xf32, #tpu.memory_space<vmem>>, vector<1x8xf32>
    %23 = vector.broadcast %22 : vector<1x8xf32> to vector<512x8xf32>
    %24 = arith.addf %21, %23 : vector<512x8xf32>
    %cst_37 = arith.constant 0.000000e+00 : f32
    %25 = vector.broadcast %cst_37 : f32 to vector<512x8xf32>
    %26 = arith.maximumf %24, %25 : vector<512x8xf32>
    %c0_38 = arith.constant 0 : index
    %c0_39 = arith.constant 0 : index
    %27 = vector.load %arg4[%c0_38, %c0_39] : memref<1x8xf32, #tpu.memory_space<vmem>>, vector<1x8xf32>
    %c0_40 = arith.constant 0 : index
    %c0_41 = arith.constant 0 : index
    %28 = vector.load %arg5[%c0_40, %c0_41] : memref<1x8xf32, #tpu.memory_space<vmem>>, vector<1x8xf32>
    %cst_42 = arith.constant dense<0.000000e+00> : vector<8xf32>
    %29 = vector.multi_reduction <add>, %26, %cst_42 [0] : vector<512x8xf32> to vector<8xf32>
    %30 = vector.shape_cast %29 : vector<8xf32> to vector<1x8xf32>
    %cst_43 = arith.constant 0.001953125 : f32
    %31 = vector.broadcast %cst_43 : f32 to vector<1x8xf32>
    %32 = arith.mulf %30, %31 : vector<1x8xf32>
    %33 = arith.mulf %26, %26 : vector<512x8xf32>
    %cst_44 = arith.constant dense<0.000000e+00> : vector<8xf32>
    %34 = vector.multi_reduction <add>, %33, %cst_44 [0] : vector<512x8xf32> to vector<8xf32>
    %35 = vector.shape_cast %34 : vector<8xf32> to vector<1x8xf32>
    %cst_45 = arith.constant 0.001953125 : f32
    %36 = vector.broadcast %cst_45 : f32 to vector<1x8xf32>
    %37 = arith.mulf %35, %36 : vector<1x8xf32>
    %38 = arith.mulf %32, %32 : vector<1x8xf32>
    %39 = arith.subf %37, %38 : vector<1x8xf32>
    %cst_46 = arith.constant 9.99999974E-6 : f32
    %40 = vector.broadcast %cst_46 : f32 to vector<1x8xf32>
    %41 = arith.addf %39, %40 : vector<1x8xf32>
    %42 = math.rsqrt %41 : vector<1x8xf32>
    %43 = arith.mulf %42, %27 : vector<1x8xf32>
    %44 = vector.broadcast %43 : vector<1x8xf32> to vector<512x8xf32>
    %45 = arith.mulf %26, %44 : vector<512x8xf32>
    %46 = arith.mulf %32, %43 : vector<1x8xf32>
    %47 = arith.subf %28, %46 : vector<1x8xf32>
    %48 = vector.broadcast %47 : vector<1x8xf32> to vector<512x8xf32>
    %49 = arith.addf %45, %48 : vector<512x8xf32>
    %c0_47 = arith.constant 0 : index
    %c0_48 = arith.constant 0 : index
    %50 = vector.load %arg1[%c0_47, %c0_48] : memref<2x32xf32, #tpu.memory_space<vmem>>, vector<2x32xf32>
    %c0_49 = arith.constant 0 : index
    %c0_50 = arith.constant 0 : index
    %51 = vector.load %arg6[%c0_49, %c0_50] : memref<32x8xf32, #tpu.memory_space<vmem>>, vector<32x8xf32>
    %cst_51 = arith.constant dense<0.000000e+00> : vector<2x8xf32>
    %52 = tpu.matmul %50, %51, %cst_51 {dimension_numbers = #tpu.dot_dimension_numbers<[1], [0], [0], [1], [0, 0, 1, 1], [], []>} : vector<2x32xf32>, vector<32x8xf32>, vector<2x8xf32> -> vector<2x8xf32>
    %c0_52 = arith.constant 0 : index
    %c0_53 = arith.constant 0 : index
    %53 = vector.load %arg7[%c0_52, %c0_53] : memref<1x8xf32, #tpu.memory_space<vmem>>, vector<1x8xf32>
    %54 = vector.broadcast %53 : vector<1x8xf32> to vector<2x8xf32>
    %55 = arith.addf %52, %54 : vector<2x8xf32>
    %cst_54 = arith.constant 0.000000e+00 : f32
    %56 = vector.broadcast %cst_54 : f32 to vector<2x8xf32>
    %57 = arith.maximumf %55, %56 : vector<2x8xf32>
    %58 = vector.shape_cast %49 : vector<512x8xf32> to vector<2x256x8xf32>
    %59 = vector.shape_cast %57 : vector<2x8xf32> to vector<2x1x8xf32>
    %60 = vector.broadcast %59 : vector<2x1x8xf32> to vector<2x256x8xf32>
    %61 = arith.addf %58, %60 : vector<2x256x8xf32>
    %cst_55 = arith.constant 0.000000e+00 : f32
    %62 = vector.broadcast %cst_55 : f32 to vector<2x1x18x8xf32>
    %cst_56 = arith.constant 0.000000e+00 : f32
    %63 = vector.broadcast %cst_56 : f32 to vector<2x18x1x8xf32>
    %c0_57 = arith.constant 0 : index
    %c0_58 = arith.constant 0 : index
    %c0_59 = arith.constant 0 : index
    %c0_60 = arith.constant 0 : index
    %64 = vector.load %arg15[%c0_57, %c0_58, %c0_59, %c0_60] : memref<2x18x18x8xf32, #tpu.memory_space<vmem>>, vector<2x1x18x8xf32>
    tpu.vector_store %arg15[%c0_57, %c0_58, %c0_59, %c0_60], %62 {strides = array<i32>} : memref<2x18x18x8xf32, #tpu.memory_space<vmem>>, vector<2x1x18x8xf32>,
    %c0_61 = arith.constant 0 : index
    %c17 = arith.constant 17 : index
    %c0_62 = arith.constant 0 : index
    %c0_63 = arith.constant 0 : index
    %65 = vector.load %arg15[%c0_61, %c17, %c0_62, %c0_63] : memref<2x18x18x8xf32, #tpu.memory_space<vmem>>, vector<2x1x18x8xf32>
    tpu.vector_store %arg15[%c0_61, %c17, %c0_62, %c0_63], %62 {strides = array<i32>} : memref<2x18x18x8xf32, #tpu.memory_space<vmem>>, vector<2x1x18x8xf32>,
    %c0_64 = arith.constant 0 : index
    %c0_65 = arith.constant 0 : index
    %c0_66 = arith.constant 0 : index
    %c0_67 = arith.constant 0 : index
    %66 = vector.load %arg15[%c0_64, %c0_65, %c0_66, %c0_67] : memref<2x18x18x8xf32, #tpu.memory_space<vmem>>, vector<2x18x1x8xf32>
    tpu.vector_store %arg15[%c0_64, %c0_65, %c0_66, %c0_67], %63 {strides = array<i32>} : memref<2x18x18x8xf32, #tpu.memory_space<vmem>>, vector<2x18x1x8xf32>,
    %c0_68 = arith.constant 0 : index
    %c0_69 = arith.constant 0 : index
    %c17_70 = arith.constant 17 : index
    %c0_71 = arith.constant 0 : index
    %67 = vector.load %arg15[%c0_68, %c0_69, %c17_70, %c0_71] : memref<2x18x18x8xf32, #tpu.memory_space<vmem>>, vector<2x18x1x8xf32>
    tpu.vector_store %arg15[%c0_68, %c0_69, %c17_70, %c0_71], %63 {strides = array<i32>} : memref<2x18x18x8xf32, #tpu.memory_space<vmem>>, vector<2x18x1x8xf32>,
    %68 = vector.shape_cast %61 : vector<2x256x8xf32> to vector<2x16x16x8xf32>
    %c0_72 = arith.constant 0 : index
    %c1_73 = arith.constant 1 : index
    %c1_74 = arith.constant 1 : index
    %c0_75 = arith.constant 0 : index
    %69 = vector.load %arg15[%c0_72, %c1_73, %c1_74, %c0_75] : memref<2x18x18x8xf32, #tpu.memory_space<vmem>>, vector<2x16x16x8xf32>
    tpu.vector_store %arg15[%c0_72, %c1_73, %c1_74, %c0_75], %68 {strides = array<i32>} : memref<2x18x18x8xf32, #tpu.memory_space<vmem>>, vector<2x16x16x8xf32>,
    %c0_76 = arith.constant 0 : index
    %c0_77 = arith.constant 0 : index
    %c0_78 = arith.constant 0 : index
    %c0_79 = arith.constant 0 : index
    %70 = vector.load %arg15[%c0_76, %c0_77, %c0_78, %c0_79] : memref<2x18x18x8xf32, #tpu.memory_space<vmem>>, vector<2x16x16x8xf32>
    %71 = vector.shape_cast %70 : vector<2x16x16x8xf32> to vector<512x8xf32>
    %c0_80 = arith.constant 0 : index
    %c0_81 = arith.constant 0 : index
    %c1_82 = arith.constant 1 : index
    %c0_83 = arith.constant 0 : index
    %72 = vector.load %arg15[%c0_80, %c0_81, %c1_82, %c0_83] : memref<2x18x18x8xf32, #tpu.memory_space<vmem>>, vector<2x16x16x8xf32>
    %73 = vector.shape_cast %72 : vector<2x16x16x8xf32> to vector<512x8xf32>
    %c0_84 = arith.constant 0 : index
    %c0_85 = arith.constant 0 : index
    %c2_86 = arith.constant 2 : index
    %c0_87 = arith.constant 0 : index
    %74 = vector.load %arg15[%c0_84, %c0_85, %c2_86, %c0_87] : memref<2x18x18x8xf32, #tpu.memory_space<vmem>>, vector<2x16x16x8xf32>
    %75 = vector.shape_cast %74 : vector<2x16x16x8xf32> to vector<512x8xf32>
    %c0_88 = arith.constant 0 : index
    %c1_89 = arith.constant 1 : index
    %c0_90 = arith.constant 0 : index
    %c0_91 = arith.constant 0 : index
    %76 = vector.load %arg15[%c0_88, %c1_89, %c0_90, %c0_91] : memref<2x18x18x8xf32, #tpu.memory_space<vmem>>, vector<2x16x16x8xf32>
    %77 = vector.shape_cast %76 : vector<2x16x16x8xf32> to vector<512x8xf32>
    %c0_92 = arith.constant 0 : index
    %c1_93 = arith.constant 1 : index
    %c1_94 = arith.constant 1 : index
    %c0_95 = arith.constant 0 : index
    %78 = vector.load %arg15[%c0_92, %c1_93, %c1_94, %c0_95] : memref<2x18x18x8xf32, #tpu.memory_space<vmem>>, vector<2x16x16x8xf32>
    %79 = vector.shape_cast %78 : vector<2x16x16x8xf32> to vector<512x8xf32>
    %c0_96 = arith.constant 0 : index
    %c1_97 = arith.constant 1 : index
    %c2_98 = arith.constant 2 : index
    %c0_99 = arith.constant 0 : index
    %80 = vector.load %arg15[%c0_96, %c1_97, %c2_98, %c0_99] : memref<2x18x18x8xf32, #tpu.memory_space<vmem>>, vector<2x16x16x8xf32>
    %81 = vector.shape_cast %80 : vector<2x16x16x8xf32> to vector<512x8xf32>
    %c0_100 = arith.constant 0 : index
    %c2_101 = arith.constant 2 : index
    %c0_102 = arith.constant 0 : index
    %c0_103 = arith.constant 0 : index
    %82 = vector.load %arg15[%c0_100, %c2_101, %c0_102, %c0_103] : memref<2x18x18x8xf32, #tpu.memory_space<vmem>>, vector<2x16x16x8xf32>
    %83 = vector.shape_cast %82 : vector<2x16x16x8xf32> to vector<512x8xf32>
    %c0_104 = arith.constant 0 : index
    %c2_105 = arith.constant 2 : index
    %c1_106 = arith.constant 1 : index
    %c0_107 = arith.constant 0 : index
    %84 = vector.load %arg15[%c0_104, %c2_105, %c1_106, %c0_107] : memref<2x18x18x8xf32, #tpu.memory_space<vmem>>, vector<2x16x16x8xf32>
    %85 = vector.shape_cast %84 : vector<2x16x16x8xf32> to vector<512x8xf32>
    %c0_108 = arith.constant 0 : index
    %c2_109 = arith.constant 2 : index
    %c2_110 = arith.constant 2 : index
    %c0_111 = arith.constant 0 : index
    %86 = vector.load %arg15[%c0_108, %c2_109, %c2_110, %c0_111] : memref<2x18x18x8xf32, #tpu.memory_space<vmem>>, vector<2x16x16x8xf32>
    %87 = vector.shape_cast %86 : vector<2x16x16x8xf32> to vector<512x8xf32>
    %88 = tpu.concatenate %71, %73, %75, %77, %79, %81, %83, %85, %87 in 1 : vector<512x8xf32>, vector<512x8xf32>, vector<512x8xf32>, vector<512x8xf32>, vector<512x8xf32>, vector<512x8xf32>, vector<512x8xf32>, vector<512x8xf32>, vector<512x8xf32> -> vector<512x72xf32>
    %89 = arith.truncf %88 : vector<512x72xf32> to vector<512x72xbf16>
    %c0_112 = arith.constant 0 : index
    %c0_113 = arith.constant 0 : index
    %90 = vector.load %arg8[%c0_112, %c0_113] : memref<72x8xbf16, #tpu.memory_space<vmem>>, vector<72x8xbf16>
    %cst_114 = arith.constant dense<0.000000e+00> : vector<512x8xf32>
    %91 = tpu.matmul %89, %90, %cst_114 {dimension_numbers = #tpu.dot_dimension_numbers<[1], [0], [0], [1], [0, 0, 1, 1], [], []>} : vector<512x72xbf16>, vector<72x8xbf16>, vector<512x8xf32> -> vector<512x8xf32>
    %c0_115 = arith.constant 0 : index
    %c0_116 = arith.constant 0 : index
    %92 = vector.load %arg9[%c0_115, %c0_116] : memref<1x8xf32, #tpu.memory_space<vmem>>, vector<1x8xf32>
    %93 = vector.broadcast %92 : vector<1x8xf32> to vector<512x8xf32>
    %94 = arith.addf %91, %93 : vector<512x8xf32>
    %cst_117 = arith.constant 0.000000e+00 : f32
    %95 = vector.broadcast %cst_117 : f32 to vector<512x8xf32>
    %96 = arith.maximumf %94, %95 : vector<512x8xf32>
    %c0_118 = arith.constant 0 : index
    %c0_119 = arith.constant 0 : index
    %97 = vector.load %arg10[%c0_118, %c0_119] : memref<1x8xf32, #tpu.memory_space<vmem>>, vector<1x8xf32>
    %c0_120 = arith.constant 0 : index
    %c0_121 = arith.constant 0 : index
    %98 = vector.load %arg11[%c0_120, %c0_121] : memref<1x8xf32, #tpu.memory_space<vmem>>, vector<1x8xf32>
    %cst_122 = arith.constant dense<0.000000e+00> : vector<8xf32>
    %99 = vector.multi_reduction <add>, %96, %cst_122 [0] : vector<512x8xf32> to vector<8xf32>
    %100 = vector.shape_cast %99 : vector<8xf32> to vector<1x8xf32>
    %cst_123 = arith.constant 0.001953125 : f32
    %101 = vector.broadcast %cst_123 : f32 to vector<1x8xf32>
    %102 = arith.mulf %100, %101 : vector<1x8xf32>
    %103 = arith.mulf %96, %96 : vector<512x8xf32>
    %cst_124 = arith.constant dense<0.000000e+00> : vector<8xf32>
    %104 = vector.multi_reduction <add>, %103, %cst_124 [0] : vector<512x8xf32> to vector<8xf32>
    %105 = vector.shape_cast %104 : vector<8xf32> to vector<1x8xf32>
    %cst_125 = arith.constant 0.001953125 : f32
    %106 = vector.broadcast %cst_125 : f32 to vector<1x8xf32>
    %107 = arith.mulf %105, %106 : vector<1x8xf32>
    %108 = arith.mulf %102, %102 : vector<1x8xf32>
    %109 = arith.subf %107, %108 : vector<1x8xf32>
    %cst_126 = arith.constant 9.99999974E-6 : f32
    %110 = vector.broadcast %cst_126 : f32 to vector<1x8xf32>
    %111 = arith.addf %109, %110 : vector<1x8xf32>
    %112 = math.rsqrt %111 : vector<1x8xf32>
    %113 = arith.mulf %112, %97 : vector<1x8xf32>
    %114 = vector.broadcast %113 : vector<1x8xf32> to vector<512x8xf32>
    %115 = arith.mulf %96, %114 : vector<512x8xf32>
    %116 = arith.mulf %102, %113 : vector<1x8xf32>
    %117 = arith.subf %98, %116 : vector<1x8xf32>
    %118 = vector.broadcast %117 : vector<1x8xf32> to vector<512x8xf32>
    %119 = arith.addf %115, %118 : vector<512x8xf32>
    %120 = vector.shape_cast %119 : vector<512x8xf32> to vector<2x16x16x8xf32>
    %c0_127 = arith.constant 0 : index
    %c1_128 = arith.constant 1 : index
    %c1_129 = arith.constant 1 : index
    %c0_130 = arith.constant 0 : index
    %121 = vector.load %arg15[%c0_127, %c1_128, %c1_129, %c0_130] : memref<2x18x18x8xf32, #tpu.memory_space<vmem>>, vector<2x16x16x8xf32>
    tpu.vector_store %arg15[%c0_127, %c1_128, %c1_129, %c0_130], %120 {strides = array<i32>} : memref<2x18x18x8xf32, #tpu.memory_space<vmem>>, vector<2x16x16x8xf32>,
    %c0_131 = arith.constant 0 : index
    %c0_132 = arith.constant 0 : index
    %c0_133 = arith.constant 0 : index
    %c0_134 = arith.constant 0 : index
    %122 = tpu.strided_load %arg15[%c0_131, %c0_132, %c0_133, %c0_134] {strides = array<i32: 1, 1, 2, 1>} : memref<2x18x18x8xf32, #tpu.memory_space<vmem>>, vector<2x18x9x8xf32>
    %123 = vector.shape_cast %122 : vector<2x18x9x8xf32> to vector<2x9x2x9x8xf32>
    %124 = vector.extract_strided_slice %123 {offsets = [0, 0, 0, 0, 0], sizes = [2, 9, 1, 9, 8], strides = [1, 1, 1, 1, 1]} : vector<2x9x2x9x8xf32> to vector<2x9x1x9x8xf32>
    %125 = vector.shape_cast %124 : vector<2x9x1x9x8xf32> to vector<2x9x9x8xf32>
    %126 = vector.extract_strided_slice %123 {offsets = [0, 0, 1, 0, 0], sizes = [2, 9, 1, 9, 8], strides = [1, 1, 1, 1, 1]} : vector<2x9x2x9x8xf32> to vector<2x9x1x9x8xf32>
    %127 = vector.shape_cast %126 : vector<2x9x1x9x8xf32> to vector<2x9x9x8xf32>
    %c0_135 = arith.constant 0 : index
    %c0_136 = arith.constant 0 : index
    %c1_137 = arith.constant 1 : index
    %c0_138 = arith.constant 0 : index
    %128 = tpu.strided_load %arg15[%c0_135, %c0_136, %c1_137, %c0_138] {strides = array<i32: 1, 1, 2, 1>} : memref<2x18x18x8xf32, #tpu.memory_space<vmem>>, vector<2x18x9x8xf32>
    %129 = vector.shape_cast %128 : vector<2x18x9x8xf32> to vector<2x9x2x9x8xf32>
    %130 = vector.extract_strided_slice %129 {offsets = [0, 0, 0, 0, 0], sizes = [2, 9, 1, 9, 8], strides = [1, 1, 1, 1, 1]} : vector<2x9x2x9x8xf32> to vector<2x9x1x9x8xf32>
    %131 = vector.shape_cast %130 : vector<2x9x1x9x8xf32> to vector<2x9x9x8xf32>
    %132 = vector.extract_strided_slice %129 {offsets = [0, 0, 1, 0, 0], sizes = [2, 9, 1, 9, 8], strides = [1, 1, 1, 1, 1]} : vector<2x9x2x9x8xf32> to vector<2x9x1x9x8xf32>
    %133 = vector.shape_cast %132 : vector<2x9x1x9x8xf32> to vector<2x9x9x8xf32>
    %134 = vector.extract_strided_slice %125 {offsets = [0, 0, 0, 0], sizes = [2, 8, 8, 8], strides = [1, 1, 1, 1]} : vector<2x9x9x8xf32> to vector<2x8x8x8xf32>
    %135 = vector.shape_cast %134 : vector<2x8x8x8xf32> to vector<128x8xf32>
    %136 = vector.extract_strided_slice %131 {offsets = [0, 0, 0, 0], sizes = [2, 8, 8, 8], strides = [1, 1, 1, 1]} : vector<2x9x9x8xf32> to vector<2x8x8x8xf32>
    %137 = vector.shape_cast %136 : vector<2x8x8x8xf32> to vector<128x8xf32>
    %138 = vector.extract_strided_slice %125 {offsets = [0, 0, 1, 0], sizes = [2, 8, 8, 8], strides = [1, 1, 1, 1]} : vector<2x9x9x8xf32> to vector<2x8x8x8xf32>
    %139 = vector.shape_cast %138 : vector<2x8x8x8xf32> to vector<128x8xf32>
    %140 = vector.extract_strided_slice %131 {offsets = [0, 0, 1, 0], sizes = [2, 8, 8, 8], strides = [1, 1, 1, 1]} : vector<2x9x9x8xf32> to vector<2x8x8x8xf32>
    %141 = vector.shape_cast %140 : vector<2x8x8x8xf32> to vector<128x8xf32>
    %142 = vector.extract_strided_slice %127 {offsets = [0, 0, 0, 0], sizes = [2, 8, 8, 8], strides = [1, 1, 1, 1]} : vector<2x9x9x8xf32> to vector<2x8x8x8xf32>
    %143 = vector.shape_cast %142 : vector<2x8x8x8xf32> to vector<128x8xf32>
    %144 = vector.extract_strided_slice %133 {offsets = [0, 0, 0, 0], sizes = [2, 8, 8, 8], strides = [1, 1, 1, 1]} : vector<2x9x9x8xf32> to vector<2x8x8x8xf32>
    %145 = vector.shape_cast %144 : vector<2x8x8x8xf32> to vector<128x8xf32>
    %146 = vector.extract_strided_slice %127 {offsets = [0, 0, 1, 0], sizes = [2, 8, 8, 8], strides = [1, 1, 1, 1]} : vector<2x9x9x8xf32> to vector<2x8x8x8xf32>
    %147 = vector.shape_cast %146 : vector<2x8x8x8xf32> to vector<128x8xf32>
    %148 = vector.extract_strided_slice %133 {offsets = [0, 0, 1, 0], sizes = [2, 8, 8, 8], strides = [1, 1, 1, 1]} : vector<2x9x9x8xf32> to vector<2x8x8x8xf32>
    %149 = vector.shape_cast %148 : vector<2x8x8x8xf32> to vector<128x8xf32>
    %150 = vector.extract_strided_slice %125 {offsets = [0, 1, 0, 0], sizes = [2, 8, 8, 8], strides = [1, 1, 1, 1]} : vector<2x9x9x8xf32> to vector<2x8x8x8xf32>
    %151 = vector.shape_cast %150 : vector<2x8x8x8xf32> to vector<128x8xf32>
    %152 = vector.extract_strided_slice %131 {offsets = [0, 1, 0, 0], sizes = [2, 8, 8, 8], strides = [1, 1, 1, 1]} : vector<2x9x9x8xf32> to vector<2x8x8x8xf32>
    %153 = vector.shape_cast %152 : vector<2x8x8x8xf32> to vector<128x8xf32>
    %154 = vector.extract_strided_slice %125 {offsets = [0, 1, 1, 0], sizes = [2, 8, 8, 8], strides = [1, 1, 1, 1]} : vector<2x9x9x8xf32> to vector<2x8x8x8xf32>
    %155 = vector.shape_cast %154 : vector<2x8x8x8xf32> to vector<128x8xf32>
    %156 = vector.extract_strided_slice %131 {offsets = [0, 1, 1, 0], sizes = [2, 8, 8, 8], strides = [1, 1, 1, 1]} : vector<2x9x9x8xf32> to vector<2x8x8x8xf32>
    %157 = vector.shape_cast %156 : vector<2x8x8x8xf32> to vector<128x8xf32>
    %158 = vector.extract_strided_slice %127 {offsets = [0, 1, 0, 0], sizes = [2, 8, 8, 8], strides = [1, 1, 1, 1]} : vector<2x9x9x8xf32> to vector<2x8x8x8xf32>
    %159 = vector.shape_cast %158 : vector<2x8x8x8xf32> to vector<128x8xf32>
    %160 = vector.extract_strided_slice %133 {offsets = [0, 1, 0, 0], sizes = [2, 8, 8, 8], strides = [1, 1, 1, 1]} : vector<2x9x9x8xf32> to vector<2x8x8x8xf32>
    %161 = vector.shape_cast %160 : vector<2x8x8x8xf32> to vector<128x8xf32>
    %162 = vector.extract_strided_slice %127 {offsets = [0, 1, 1, 0], sizes = [2, 8, 8, 8], strides = [1, 1, 1, 1]} : vector<2x9x9x8xf32> to vector<2x8x8x8xf32>
    %163 = vector.shape_cast %162 : vector<2x8x8x8xf32> to vector<128x8xf32>
    %164 = vector.extract_strided_slice %133 {offsets = [0, 1, 1, 0], sizes = [2, 8, 8, 8], strides = [1, 1, 1, 1]} : vector<2x9x9x8xf32> to vector<2x8x8x8xf32>
    %165 = vector.shape_cast %164 : vector<2x8x8x8xf32> to vector<128x8xf32>
    %166 = tpu.concatenate %135, %137, %139, %141, %143, %145, %147, %149, %151, %153, %155, %157, %159, %161, %163, %165 in 1 : vector<128x8xf32>, vector<128x8xf32>, vector<128x8xf32>, vector<128x8xf32>, vector<128x8xf32>, vector<128x8xf32>, vector<128x8xf32>, vector<128x8xf32>, vector<128x8xf32>, vector<128x8xf32>, vector<128x8xf32>, vector<128x8xf32>, vector<128x8xf32>, vector<128x8xf32>, vector<128x8xf32>, vector<128x8xf32> -> vector<128x128xf32>
    %167 = arith.truncf %166 : vector<128x128xf32> to vector<128x128xbf16>
    %c0_139 = arith.constant 0 : index
    %c0_140 = arith.constant 0 : index
    %168 = vector.load %arg12[%c0_139, %c0_140] : memref<128x8xbf16, #tpu.memory_space<vmem>>, vector<128x8xbf16>
    %cst_141 = arith.constant dense<0.000000e+00> : vector<128x8xf32>
    %169 = tpu.matmul %167, %168, %cst_141 {dimension_numbers = #tpu.dot_dimension_numbers<[1], [0], [0], [1], [0, 0, 1, 1], [], []>} : vector<128x128xbf16>, vector<128x8xbf16>, vector<128x8xf32> -> vector<128x8xf32>
    %c0_142 = arith.constant 0 : index
    %c0_143 = arith.constant 0 : index
    %170 = vector.load %arg13[%c0_142, %c0_143] : memref<1x8xf32, #tpu.memory_space<vmem>>, vector<1x8xf32>
    %171 = vector.broadcast %170 : vector<1x8xf32> to vector<128x8xf32>
    %172 = arith.addf %169, %171 : vector<128x8xf32>
    %173 = vector.shape_cast %172 : vector<128x8xf32> to vector<16x8x8xf32>
    %174 = vector.extract_strided_slice %173 {offsets = [0, 0, 0], sizes = [16, 1, 8], strides = [1, 1, 1]} : vector<16x8x8xf32> to vector<16x1x8xf32>
    %175 = vector.shape_cast %174 : vector<16x1x8xf32> to vector<16x8xf32>
    %176 = vector.extract_strided_slice %173 {offsets = [0, 1, 0], sizes = [16, 1, 8], strides = [1, 1, 1]} : vector<16x8x8xf32> to vector<16x1x8xf32>
    %177 = vector.shape_cast %176 : vector<16x1x8xf32> to vector<16x8xf32>
    %178 = vector.extract_strided_slice %173 {offsets = [0, 2, 0], sizes = [16, 1, 8], strides = [1, 1, 1]} : vector<16x8x8xf32> to vector<16x1x8xf32>
    %179 = vector.shape_cast %178 : vector<16x1x8xf32> to vector<16x8xf32>
    %180 = vector.extract_strided_slice %173 {offsets = [0, 3, 0], sizes = [16, 1, 8], strides = [1, 1, 1]} : vector<16x8x8xf32> to vector<16x1x8xf32>
    %181 = vector.shape_cast %180 : vector<16x1x8xf32> to vector<16x8xf32>
    %182 = vector.extract_strided_slice %173 {offsets = [0, 4, 0], sizes = [16, 1, 8], strides = [1, 1, 1]} : vector<16x8x8xf32> to vector<16x1x8xf32>
    %183 = vector.shape_cast %182 : vector<16x1x8xf32> to vector<16x8xf32>
    %184 = vector.extract_strided_slice %173 {offsets = [0, 5, 0], sizes = [16, 1, 8], strides = [1, 1, 1]} : vector<16x8x8xf32> to vector<16x1x8xf32>
    %185 = vector.shape_cast %184 : vector<16x1x8xf32> to vector<16x8xf32>
    %186 = vector.extract_strided_slice %173 {offsets = [0, 6, 0], sizes = [16, 1, 8], strides = [1, 1, 1]} : vector<16x8x8xf32> to vector<16x1x8xf32>
    %187 = vector.shape_cast %186 : vector<16x1x8xf32> to vector<16x8xf32>
    %188 = vector.extract_strided_slice %173 {offsets = [0, 7, 0], sizes = [16, 1, 8], strides = [1, 1, 1]} : vector<16x8x8xf32> to vector<16x1x8xf32>
    %189 = vector.shape_cast %188 : vector<16x1x8xf32> to vector<16x8xf32>
    %190 = tpu.concatenate %175, %177, %179, %181, %183, %185, %187, %189 in 1 : vector<16x8xf32>, vector<16x8xf32>, vector<16x8xf32>, vector<16x8xf32>, vector<16x8xf32>, vector<16x8xf32>, vector<16x8xf32>, vector<16x8xf32> -> vector<16x64xf32>
    %c0_144 = arith.constant 0 : index
    %c0_145 = arith.constant 0 : index
    %191 = vector.load %arg14[%c0_144, %c0_145] : memref<16x64xf32, #tpu.memory_space<vmem>>, vector<16x64xf32>
    tpu.vector_store %arg14[%c0_144, %c0_145], %190 {strides = array<i32>} : memref<16x64xf32, #tpu.memory_space<vmem>>, vector<16x64xf32>,
    return
  }
}

</mosaic_0001>

<llo_original>
// kernel: block_forward.1
$region0: #{block_forward.1}
  #allocation0 [shape = 'u32[]', space=smem, size = 0x4, offset = 0x4, fixed_abs, tag = 'smem constant byte address 0x4 - core index']
  #allocation1 [shape = 'u32[144,128]{1,0:T(1,128)}', space=vmem, size = 0x12000, scoped, tag = 'internal scratch']
  #allocation2 [shape = 'f32[2,18,18,8]{3,2,1,0:T(8,128)}', space=vmem, size = 0x6c000, scoped, tag = 'scratch operand']
  %s0 = inlined_call_operand.vmem [shape: f32[2,18,18,4], index: 0, kind: input, shape index: {}]
  %s1 = inlined_call_operand.vmem [shape: f32[2,32], index: 1, kind: input, shape index: {}]
  %s2 = inlined_call_operand.vmem [shape: bf16[36,8], index: 2, kind: input, shape index: {}]
  %s3 = inlined_call_operand.vmem [shape: f32[1,8], index: 3, kind: input, shape index: {}]
  %s4 = inlined_call_operand.vmem [shape: f32[1,8], index: 4, kind: input, shape index: {}]
  %s5 = inlined_call_operand.vmem [shape: f32[1,8], index: 5, kind: input, shape index: {}]
  %s6 = inlined_call_operand.vmem [shape: f32[32,8], index: 6, kind: input, shape index: {}]
  %s7 = inlined_call_operand.vmem [shape: f32[1,8], index: 7, kind: input, shape index: {}]
  %s8 = inlined_call_operand.vmem [shape: bf16[72,8], index: 8, kind: input, shape index: {}]
  %s9 = inlined_call_operand.vmem [shape: f32[1,8], index: 9, kind: input, shape index: {}]
  %s10 = inlined_call_operand.vmem [shape: f32[1,8], index: 10, kind: input, shape index: {}]
  %s11 = inlined_call_operand.vmem [shape: f32[1,8], index: 11, kind: input, shape index: {}]
  %s12 = inlined_call_operand.vmem [shape: bf16[128,8], index: 12, kind: input, shape index: {}]
  %s13 = inlined_call_operand.vmem [shape: f32[1,8], index: 13, kind: input, shape index: {}]
  %s14 = inlined_call_operand.vmem [shape: f32[16,64], index: 14, kind: output, shape index: {}]
  %s15 = sld [smem:[#allocation0]]
  $region66: #{block_forward.1} parent=0
    _
  %s17 = ssub.s32 1, %s15
  %s18 = scalar_select 0, %s17, %s15
  // Predicated region
  $region2: #{block_forward.1} parent=0 // pred_check
    _
  $region3: #{block_forward.1} parent=0 // pred_check_branch
    %20 = sbr.rel (0) target = $region5
  $region4: #{block_forward.1} parent=0 // pred_region
    _
  $region5: #{block_forward.1} parent=0 // pred_fallthru
    _
  // Predicated region
  $region6: #{block_forward.1} parent=0 // pred_check
    _
  $region7: #{block_forward.1} parent=0 // pred_check_branch
    %22 = sbr.rel (0) target = $region9
  $region8: #{block_forward.1} parent=0 // pred_region
    _
  $region9: #{block_forward.1} parent=0 // pred_fallthru
    _
  // Predicated region
  $region10: #{block_forward.1} parent=0 // pred_check
    _
  $region11: #{block_forward.1} parent=0 // pred_check_branch
    %24 = sbr.rel (0) target = $region13
  $region12: #{block_forward.1} parent=0 // pred_region
    _
  $region13: #{block_forward.1} parent=0 // pred_fallthru
    _
  // Predicated region
  $region14: #{block_forward.1} parent=0 // pred_check
    _
  $region15: #{block_forward.1} parent=0 // pred_check_branch
    %26 = sbr.rel (0) target = $region17
  $region16: #{block_forward.1} parent=0 // pred_region
    _
  $region17: #{block_forward.1} parent=0 // pred_fallthru
    _
  // Predicated region
  $region18: #{block_forward.1} parent=0 // pred_check
    _
  $region19: #{block_forward.1} parent=0 // pred_check_branch
    %28 = sbr.rel (0) target = $region21
  $region20: #{block_forward.1} parent=0 // pred_region
    _
  $region21: #{block_forward.1} parent=0 // pred_fallthru
    _
  // Predicated region
  $region22: #{block_forward.1} parent=0 // pred_check
    _
  $region23: #{block_forward.1} parent=0 // pred_check_branch
    %30 = sbr.rel (0) target = $region25
  $region24: #{block_forward.1} parent=0 // pred_region
    _
  $region25: #{block_forward.1} parent=0 // pred_fallthru
    _
  // Predicated region
  $region26: #{block_forward.1} parent=0 // pred_check
    _
  $region27: #{block_forward.1} parent=0 // pred_check_branch
    %32 = sbr.rel (0) target = $region29
  $region28: #{block_forward.1} parent=0 // pred_region
    _
  $region29: #{block_forward.1} parent=0 // pred_fallthru
    _
  // Predicated region
  $region30: #{block_forward.1} parent=0 // pred_check
    _
  $region31: #{block_forward.1} parent=0 // pred_check_branch
    %34 = sbr.rel (0) target = $region33
  $region32: #{block_forward.1} parent=0 // pred_region
    _
  $region33: #{block_forward.1} parent=0 // pred_fallthru
    _
  // Predicated region
  $region34: #{block_forward.1} parent=0 // pred_check
    _
  $region35: #{block_forward.1} parent=0 // pred_check_branch
    %36 = sbr.rel (0) target = $region37
  $region36: #{block_forward.1} parent=0 // pred_region
    _
  $region37: #{block_forward.1} parent=0 // pred_fallthru
    _
  // Predicated region
  $region38: #{block_forward.1} parent=0 // pred_check
    _
  $region39: #{block_forward.1} parent=0 // pred_check_branch
    %38 = sbr.rel (0) target = $region41
  $region40: #{block_forward.1} parent=0 // pred_region
    _
  $region41: #{block_forward.1} parent=0 // pred_fallthru
    _
  // Predicated region
  $region42: #{block_forward.1} parent=0 // pred_check
    _
  $region43: #{block_forward.1} parent=0 // pred_check_branch
    %40 = sbr.rel (0) target = $region45
  $region44: #{block_forward.1} parent=0 // pred_region
    _
  $region45: #{block_forward.1} parent=0 // pred_fallthru
    _
  // Predicated region
  $region46: #{block_forward.1} parent=0 // pred_check
    _
  $region47: #{block_forward.1} parent=0 // pred_check_branch
    %42 = sbr.rel (0) target = $region49
  $region48: #{block_forward.1} parent=0 // pred_region
    _
  $region49: #{block_forward.1} parent=0 // pred_fallthru
    _
  // Predicated region
  $region50: #{block_forward.1} parent=0 // pred_check
    _
  $region51: #{block_forward.1} parent=0 // pred_check_branch
    %44 = sbr.rel (0) target = $region53
  $region52: #{block_forward.1} parent=0 // pred_region
    _
  $region53: #{block_forward.1} parent=0 // pred_fallthru
    _
  // Predicated region
  $region54: #{block_forward.1} parent=0 // pred_check
    _
  $region55: #{block_forward.1} parent=0 // pred_check_branch
    %46 = sbr.rel (0) target = $region57
  $region56: #{block_forward.1} parent=0 // pred_region
    _
  $region57: #{block_forward.1} parent=0 // pred_fallthru
    _
  %v48 = vld [vmem:[%s0] sm:$0xff]
  %v49 = vld [vmem:[%s0 + $0x8] sm:$0xff]
  %v50 = vld [vmem:[%s0 + $0x18] sm:$0xff]
  %v51 = vld [vmem:[%s0 + $0x20] sm:$0xff]
  %v52 = vld [vmem:[%s0 + $0x30] sm:$0xff]
  %v53 = vld [vmem:[%s0 + $0x38] sm:$0xff]
  %v54 = vld [vmem:[%s0 + $0x48] sm:$0xff]
  %v55 = vld [vmem:[%s0 + $0x50] sm:$0xff]
  %v56 = vld [vmem:[%s0 + $0x60] sm:$0xff]
  %v57 = vld [vmem:[%s0 + $0x68] sm:$0xff]
  %v58 = vld [vmem:[%s0 + $0x78] sm:$0xff]
  %v59 = vld [vmem:[%s0 + $0x80] sm:$0xff]
  %v60 = vld [vmem:[%s0 + $0x90] sm:$0xff]
  %v61 = vld [vmem:[%s0 + $0x98] sm:$0xff]
  %v62 = vld [vmem:[%s0 + $0xa8] sm:$0xff]
  %v63 = vld [vmem:[%s0 + $0xb0] sm:$0xff]
  %v64 = vld [vmem:[%s0 + $0xc0] sm:$0xff]
  %v65 = vld [vmem:[%s0 + $0xc8] sm:$0xff]
  %v66 = vld [vmem:[%s0 + $0xd8] sm:$0xff]
  %v67 = vld [vmem:[%s0 + $0xe0] sm:$0xff]
  %v68 = vld [vmem:[%s0 + $0xf0] sm:$0xff]
  %v69 = vld [vmem:[%s0 + $0xf8] sm:$0xff]
  %v70 = vld [vmem:[%s0 + $0x108] sm:$0xff]
  %v71 = vld [vmem:[%s0 + $0x110] sm:$0xff]
  %v72 = vld [vmem:[%s0 + $0x120] sm:$0xff]
  %v73 = vld [vmem:[%s0 + $0x128] sm:$0xff]
  %v74 = vld [vmem:[%s0 + $0x138] sm:$0xff]
  %v75 = vld [vmem:[%s0 + $0x140] sm:$0xff]
  %v76 = vld [vmem:[%s0 + $0x150] sm:$0xff]
  %v77 = vld [vmem:[%s0 + $0x158] sm:$0xff]
  %v78 = vld [vmem:[%s0 + $0x168] sm:$0xff]
  %v79 = vld [vmem:[%s0 + $0x170] sm:$0xff]
  %v80 = vld [vmem:[%s0 + $0x1b0] sm:$0xff]
  %v81 = vld [vmem:[%s0 + $0x1b8] sm:$0xff]
  %v82 = vld [vmem:[%s0 + $0x1c8] sm:$0xff]
  %v83 = vld [vmem:[%s0 + $0x1d0] sm:$0xff]
  %v84 = vld [vmem:[%s0 + $0x1e0] sm:$0xff]
  %v85 = vld [vmem:[%s0 + $0x1e8] sm:$0xff]
  %v86 = vld [vmem:[%s0 + $0x1f8] sm:$0xff]
  %v87 = vld [vmem:[%s0 + $0x200] sm:$0xff]
  %v88 = vld [vmem:[%s0 + $0x210] sm:$0xff]
  %v89 = vld [vmem:[%s0 + $0x218] sm:$0xff]
  %v90 = vld [vmem:[%s0 + $0x228] sm:$0xff]
  %v91 = vld [vmem:[%s0 + $0x230] sm:$0xff]
  %v92 = vld [vmem:[%s0 + $0x240] sm:$0xff]
  %v93 = vld [vmem:[%s0 + $0x248] sm:$0xff]
  %v94 = vld [vmem:[%s0 + $0x258] sm:$0xff]
  %v95 = vld [vmem:[%s0 + $0x260] sm:$0xff]
  %v96 = vld [vmem:[%s0 + $0x270] sm:$0xff]
  %v97 = vld [vmem:[%s0 + $0x278] sm:$0xff]
  %v98 = vld [vmem:[%s0 + $0x288] sm:$0xff]
  %v99 = vld [vmem:[%s0 + $0x290] sm:$0xff]
  %v100 = vld [vmem:[%s0 + $0x2a0] sm:$0xff]
  %v101 = vld [vmem:[%s0 + $0x2a8] sm:$0xff]
  %v102 = vld [vmem:[%s0 + $0x2b8] sm:$0xff]
  %v103 = vld [vmem:[%s0 + $0x2c0] sm:$0xff]
  %v104 = vld [vmem:[%s0 + $0x2d0] sm:$0xff]
  %v105 = vld [vmem:[%s0 + $0x2d8] sm:$0xff]
  %v106 = vld [vmem:[%s0 + $0x2e8] sm:$0xff]
  %v107 = vld [vmem:[%s0 + $0x2f0] sm:$0xff]
  %v108 = vld [vmem:[%s0 + $0x300] sm:$0xff]
  %v109 = vld [vmem:[%s0 + $0x308] sm:$0xff]
  %v110 = vld [vmem:[%s0 + $0x318] sm:$0xff]
  %v111 = vld [vmem:[%s0 + $0x320] sm:$0xff]
  %v112 = vld [vmem:[%s0 + $0x1] sm:$0xff]
  %v113 = vld [vmem:[%s0 + $0x9] sm:$0xff]
  %v114 = vld [vmem:[%s0 + $0x19] sm:$0xff]
  %v115 = vld [vmem:[%s0 + $0x21] sm:$0xff]
  %v116 = vld [vmem:[%s0 + $0x31] sm:$0xff]
  %v117 = vld [vmem:[%s0 + $0x39] sm:$0xff]
  %v118 = vld [vmem:[%s0 + $0x49] sm:$0xff]
  %v119 = vld [vmem:[%s0 + $0x51] sm:$0xff]
  %v120 = vld [vmem:[%s0 + $0x61] sm:$0xff]
  %v121 = vld [vmem:[%s0 + $0x69] sm:$0xff]
  %v122 = vld [vmem:[%s0 + $0x79] sm:$0xff]
  %v123 = vld [vmem:[%s0 + $0x81] sm:$0xff]
  %v124 = vld [vmem:[%s0 + $0x91] sm:$0xff]
  %v125 = vld [vmem:[%s0 + $0x99] sm:$0xff]
  %v126 = vld [vmem:[%s0 + $0xa9] sm:$0xff]
  %v127 = vld [vmem:[%s0 + $0xb1] sm:$0xff]
  %v128 = vld [vmem:[%s0 + $0xc1] sm:$0xff]
  %v129 = vld [vmem:[%s0 + $0xc9] sm:$0xff]
  %v130 = vld [vmem:[%s0 + $0xd9] sm:$0xff]
  %v131 = vld [vmem:[%s0 + $0xe1] sm:$0xff]
  %v132 = vld [vmem:[%s0 + $0xf1] sm:$0xff]
  %v133 = vld [vmem:[%s0 + $0xf9] sm:$0xff]
  %v134 = vld [vmem:[%s0 + $0x109] sm:$0xff]
  %v135 = vld [vmem:[%s0 + $0x111] sm:$0xff]
  %v136 = vld [vmem:[%s0 + $0x121] sm:$0xff]
  %v137 = vld [vmem:[%s0 + $0x129] sm:$0xff]
  %v138 = vld [vmem:[%s0 + $0x139] sm:$0xff]
  %v139 = vld [vmem:[%s0 + $0x141] sm:$0xff]
  %v140 = vld [vmem:[%s0 + $0x151] sm:$0xff]
  %v141 = vld [vmem:[%s0 + $0x159] sm:$0xff]
  %v142 = vld [vmem:[%s0 + $0x169] sm:$0xff]
  %v143 = vld [vmem:[%s0 + $0x171] sm:$0xff]
  %v144 = vld [vmem:[%s0 + $0x1b1] sm:$0xff]
  %v145 = vld [vmem:[%s0 + $0x1b9] sm:$0xff]
  %v146 = vld [vmem:[%s0 + $0x1c9] sm:$0xff]
  %v147 = vld [vmem:[%s0 + $0x1d1] sm:$0xff]
  %v148 = vld [vmem:[%s0 + $0x1e1] sm:$0xff]
  %v149 = vld [vmem:[%s0 + $0x1e9] sm:$0xff]
  %v150 = vld [vmem:[%s0 + $0x1f9] sm:$0xff]
  %v151 = vld [vmem:[%s0 + $0x201] sm:$0xff]
  %v152 = vld [vmem:[%s0 + $0x211] sm:$0xff]
  %v153 = vld [vmem:[%s0 + $0x219] sm:$0xff]
  %v154 = vld [vmem:[%s0 + $0x229] sm:$0xff]
  %v155 = vld [vmem:[%s0 + $0x231] sm:$0xff]
  %v156 = vld [vmem:[%s0 + $0x241] sm:$0xff]
  %v157 = vld [vmem:[%s0 + $0x249] sm:$0xff]
  %v158 = vld [vmem:[%s0 + $0x259] sm:$0xff]
  %v159 = vld [vmem:[%s0 + $0x261] sm:$0xff]
  %v160 = vld [vmem:[%s0 + $0x271] sm:$0xff]
  %v161 = vld [vmem:[%s0 + $0x279] sm:$0xff]
  %v162 = vld [vmem:[%s0 + $0x289] sm:$0xff]
  %v163 = vld [vmem:[%s0 + $0x291] sm:$0xff]
  %v164 = vld [vmem:[%s0 + $0x2a1] sm:$0xff]
  %v165 = vld [vmem:[%s0 + $0x2a9] sm:$0xff]
  %v166 = vld [vmem:[%s0 + $0x2b9] sm:$0xff]
  %v167 = vld [vmem:[%s0 + $0x2c1] sm:$0xff]
  %v168 = vld [vmem:[%s0 + $0x2d1] sm:$0xff]
  %v169 = vld [vmem:[%s0 + $0x2d9] sm:$0xff]
  %v170 = vld [vmem:[%s0 + $0x2e9] sm:$0xff]
  %v171 = vld [vmem:[%s0 + $0x2f1] sm:$0xff]
  %v172 = vld [vmem:[%s0 + $0x301] sm:$0xff]
  %v173 = vld [vmem:[%s0 + $0x309] sm:$0xff]
  %v174 = vld [vmem:[%s0 + $0x319] sm:$0xff]
  %v175 = vld [vmem:[%s0 + $0x321] sm:$0xff]
  %v176 = vld [vmem:[%s0 + $0x2] sm:$0xff]
  %v177 = vld [vmem:[%s0 + $0xa] sm:$0xff]
  %v178 = vld [vmem:[%s0 + $0x1a] sm:$0xff]
  %v179 = vld [vmem:[%s0 + $0x22] sm:$0xff]
  %v180 = vld [vmem:[%s0 + $0x32] sm:$0xff]
  %v181 = vld [vmem:[%s0 + $0x3a] sm:$0xff]
  %v182 = vld [vmem:[%s0 + $0x4a] sm:$0xff]
  %v183 = vld [vmem:[%s0 + $0x52] sm:$0xff]
  %v184 = vld [vmem:[%s0 + $0x62] sm:$0xff]
  %v185 = vld [vmem:[%s0 + $0x6a] sm:$0xff]
  %v186 = vld [vmem:[%s0 + $0x7a] sm:$0xff]
  %v187 = vld [vmem:[%s0 + $0x82] sm:$0xff]
  %v188 = vld [vmem:[%s0 + $0x92] sm:$0xff]
  %v189 = vld [vmem:[%s0 + $0x9a] sm:$0xff]
  %v190 = vld [vmem:[%s0 + $0xaa] sm:$0xff]
  %v191 = vld [vmem:[%s0 + $0xb2] sm:$0xff]
  %v192 = vld [vmem:[%s0 + $0xc2] sm:$0xff]
  %v193 = vld [vmem:[%s0 + $0xca] sm:$0xff]
  %v194 = vld [vmem:[%s0 + $0xda] sm:$0xff]
  %v195 = vld [vmem:[%s0 + $0xe2] sm:$0xff]
  %v196 = vld [vmem:[%s0 + $0xf2] sm:$0xff]
  %v197 = vld [vmem:[%s0 + $0xfa] sm:$0xff]
  %v198 = vld [vmem:[%s0 + $0x10a] sm:$0xff]
  %v199 = vld [vmem:[%s0 + $0x112] sm:$0xff]
  %v200 = vld [vmem:[%s0 + $0x122] sm:$0xff]
  %v201 = vld [vmem:[%s0 + $0x12a] sm:$0xff]
  %v202 = vld [vmem:[%s0 + $0x13a] sm:$0xff]
  %v203 = vld [vmem:[%s0 + $0x142] sm:$0xff]
  %v204 = vld [vmem:[%s0 + $0x152] sm:$0xff]
  %v205 = vld [vmem:[%s0 + $0x15a] sm:$0xff]
  %v206 = vld [vmem:[%s0 + $0x16a] sm:$0xff]
  %v207 = vld [vmem:[%s0 + $0x172] sm:$0xff]
  %v208 = vld [vmem:[%s0 + $0x1b2] sm:$0xff]
  %v209 = vld [vmem:[%s0 + $0x1ba] sm:$0xff]
  %v210 = vld [vmem:[%s0 + $0x1ca] sm:$0xff]
  %v211 = vld [vmem:[%s0 + $0x1d2] sm:$0xff]
  %v212 = vld [vmem:[%s0 + $0x1e2] sm:$0xff]
  %v213 = vld [vmem:[%s0 + $0x1ea] sm:$0xff]
  %v214 = vld [vmem:[%s0 + $0x1fa] sm:$0xff]
  %v215 = vld [vmem:[%s0 + $0x202] sm:$0xff]
  %v216 = vld [vmem:[%s0 + $0x212] sm:$0xff]
  %v217 = vld [vmem:[%s0 + $0x21a] sm:$0xff]
  %v218 = vld [vmem:[%s0 + $0x22a] sm:$0xff]
  %v219 = vld [vmem:[%s0 + $0x232] sm:$0xff]
  %v220 = vld [vmem:[%s0 + $0x242] sm:$0xff]
  %v221 = vld [vmem:[%s0 + $0x24a] sm:$0xff]
  %v222 = vld [vmem:[%s0 + $0x25a] sm:$0xff]
  %v223 = vld [vmem:[%s0 + $0x262] sm:$0xff]
  %v224 = vld [vmem:[%s0 + $0x272] sm:$0xff]
  %v225 = vld [vmem:[%s0 + $0x27a] sm:$0xff]
  %v226 = vld [vmem:[%s0 + $0x28a] sm:$0xff]
  %v227 = vld [vmem:[%s0 + $0x292] sm:$0xff]
  %v228 = vld [vmem:[%s0 + $0x2a2] sm:$0xff]
  %v229 = vld [vmem:[%s0 + $0x2aa] sm:$0xff]
  %v230 = vld [vmem:[%s0 + $0x2ba] sm:$0xff]
  %v231 = vld [vmem:[%s0 + $0x2c2] sm:$0xff]
  %v232 = vld [vmem:[%s0 + $0x2d2] sm:$0xff]
  %v233 = vld [vmem:[%s0 + $0x2da] sm:$0xff]
  %v234 = vld [vmem:[%s0 + $0x2ea] sm:$0xff]
  %v235 = vld [vmem:[%s0 + $0x2f2] sm:$0xff]
  %v236 = vld [vmem:[%s0 + $0x302] sm:$0xff]
  %v237 = vld [vmem:[%s0 + $0x30a] sm:$0xff]
  %v238 = vld [vmem:[%s0 + $0x31a] sm:$0xff]
  %v239 = vld [vmem:[%s0 + $0x322] sm:$0xff]
  %s240 = scalar_lea.vmem %s0, 24
  %v241 = vld [vmem:[%s240] sm:$0xff]
  %v242 = vld [vmem:[%s240 + $0x8] sm:$0xff]
  %v243 = vld [vmem:[%s240 + $0x18] sm:$0xff]
  %v244 = vld [vmem:[%s240 + $0x20] sm:$0xff]
  %v245 = vld [vmem:[%s240 + $0x30] sm:$0xff]
  %v246 = vld [vmem:[%s240 + $0x38] sm:$0xff]
  %v247 = vld [vmem:[%s240 + $0x48] sm:$0xff]
  %v248 = vld [vmem:[%s240 + $0x50] sm:$0xff]
  %v249 = vld [vmem:[%s240 + $0x60] sm:$0xff]
  %v250 = vld [vmem:[%s240 + $0x68] sm:$0xff]
  %v251 = vld [vmem:[%s240 + $0x78] sm:$0xff]
  %v252 = vld [vmem:[%s240 + $0x80] sm:$0xff]
  %v253 = vld [vmem:[%s240 + $0x90] sm:$0xff]
  %v254 = vld [vmem:[%s240 + $0x98] sm:$0xff]
  %v255 = vld [vmem:[%s240 + $0xa8] sm:$0xff]
  %v256 = vld [vmem:[%s240 + $0xb0] sm:$0xff]
  %v257 = vld [vmem:[%s240 + $0xc0] sm:$0xff]
  %v258 = vld [vmem:[%s240 + $0xc8] sm:$0xff]
  %v259 = vld [vmem:[%s240 + $0xd8] sm:$0xff]
  %v260 = vld [vmem:[%s240 + $0xe0] sm:$0xff]
  %v261 = vld [vmem:[%s240 + $0xf0] sm:$0xff]
  %v262 = vld [vmem:[%s240 + $0xf8] sm:$0xff]
  %v263 = vld [vmem:[%s240 + $0x108] sm:$0xff]
  %v264 = vld [vmem:[%s240 + $0x110] sm:$0xff]
  %v265 = vld [vmem:[%s240 + $0x120] sm:$0xff]
  %v266 = vld [vmem:[%s240 + $0x128] sm:$0xff]
  %v267 = vld [vmem:[%s240 + $0x138] sm:$0xff]
  %v268 = vld [vmem:[%s240 + $0x140] sm:$0xff]
  %v269 = vld [vmem:[%s240 + $0x150] sm:$0xff]
  %v270 = vld [vmem:[%s240 + $0x158] sm:$0xff]
  %v271 = vld [vmem:[%s240 + $0x168] sm:$0xff]
  %v272 = vld [vmem:[%s240 + $0x170] sm:$0xff]
  %v273 = vld [vmem:[%s240 + $0x1b0] sm:$0xff]
  %v274 = vld [vmem:[%s240 + $0x1b8] sm:$0xff]
  %v275 = vld [vmem:[%s240 + $0x1c8] sm:$0xff]
  %v276 = vld [vmem:[%s240 + $0x1d0] sm:$0xff]
  %v277 = vld [vmem:[%s240 + $0x1e0] sm:$0xff]
  %v278 = vld [vmem:[%s240 + $0x1e8] sm:$0xff]
  %v279 = vld [vmem:[%s240 + $0x1f8] sm:$0xff]
  %v280 = vld [vmem:[%s240 + $0x200] sm:$0xff]
  %v281 = vld [vmem:[%s240 + $0x210] sm:$0xff]
  %v282 = vld [vmem:[%s240 + $0x218] sm:$0xff]
  %v283 = vld [vmem:[%s240 + $0x228] sm:$0xff]
  %v284 = vld [vmem:[%s240 + $0x230] sm:$0xff]
  %v285 = vld [vmem:[%s240 + $0x240] sm:$0xff]
  %v286 = vld [vmem:[%s240 + $0x248] sm:$0xff]
  %v287 = vld [vmem:[%s240 + $0x258] sm:$0xff]
  %v288 = vld [vmem:[%s240 + $0x260] sm:$0xff]
  %v289 = vld [vmem:[%s240 + $0x270] sm:$0xff]
  %v290 = vld [vmem:[%s240 + $0x278] sm:$0xff]
  %v291 = vld [vmem:[%s240 + $0x288] sm:$0xff]
  %v292 = vld [vmem:[%s240 + $0x290] sm:$0xff]
  %v293 = vld [vmem:[%s240 + $0x2a0] sm:$0xff]
  %v294 = vld [vmem:[%s240 + $0x2a8] sm:$0xff]
  %v295 = vld [vmem:[%s240 + $0x2b8] sm:$0xff]
  %v296 = vld [vmem:[%s240 + $0x2c0] sm:$0xff]
  %v297 = vld [vmem:[%s240 + $0x2d0] sm:$0xff]
  %v298 = vld [vmem:[%s240 + $0x2d8] sm:$0xff]
  %v299 = vld [vmem:[%s240 + $0x2e8] sm:$0xff]
  %v300 = vld [vmem:[%s240 + $0x2f0] sm:$0xff]
  %v301 = vld [vmem:[%s240 + $0x300] sm:$0xff]
  %v302 = vld [vmem:[%s240 + $0x308] sm:$0xff]
  %v303 = vld [vmem:[%s240 + $0x318] sm:$0xff]
  %v304 = vld [vmem:[%s240 + $0x320] sm:$0xff]
  %v305 = vld [vmem:[%s240 + $0x1] sm:$0xff]
  %v306 = vld [vmem:[%s240 + $0x9] sm:$0xff]
  %v307 = vld [vmem:[%s240 + $0x19] sm:$0xff]
  %v308 = vld [vmem:[%s240 + $0x21] sm:$0xff]
  %v309 = vld [vmem:[%s240 + $0x31] sm:$0xff]
  %v310 = vld [vmem:[%s240 + $0x39] sm:$0xff]
  %v311 = vld [vmem:[%s240 + $0x49] sm:$0xff]
  %v312 = vld [vmem:[%s240 + $0x51] sm:$0xff]
  %v313 = vld [vmem:[%s240 + $0x61] sm:$0xff]
  %v314 = vld [vmem:[%s240 + $0x69] sm:$0xff]
  %v315 = vld [vmem:[%s240 + $0x79] sm:$0xff]
  %v316 = vld [vmem:[%s240 + $0x81] sm:$0xff]
  %v317 = vld [vmem:[%s240 + $0x91] sm:$0xff]
  %v318 = vld [vmem:[%s240 + $0x99] sm:$0xff]
  %v319 = vld [vmem:[%s240 + $0xa9] sm:$0xff]
  %v320 = vld [vmem:[%s240 + $0xb1] sm:$0xff]
  %v321 = vld [vmem:[%s240 + $0xc1] sm:$0xff]
  %v322 = vld [vmem:[%s240 + $0xc9] sm:$0xff]
  %v323 = vld [vmem:[%s240 + $0xd9] sm:$0xff]
  %v324 = vld [vmem:[%s240 + $0xe1] sm:$0xff]
  %v325 = vld [vmem:[%s240 + $0xf1] sm:$0xff]
  %v326 = vld [vmem:[%s240 + $0xf9] sm:$0xff]
  %v327 = vld [vmem:[%s240 + $0x109] sm:$0xff]
  %v328 = vld [vmem:[%s240 + $0x111] sm:$0xff]
  %v329 = vld [vmem:[%s240 + $0x121] sm:$0xff]
  %v330 = vld [vmem:[%s240 + $0x129] sm:$0xff]
  %v331 = vld [vmem:[%s240 + $0x139] sm:$0xff]
  %v332 = vld [vmem:[%s240 + $0x141] sm:$0xff]
  %v333 = vld [vmem:[%s240 + $0x151] sm:$0xff]
  %v334 = vld [vmem:[%s240 + $0x159] sm:$0xff]
  %v335 = vld [vmem:[%s240 + $0x169] sm:$0xff]
  %v336 = vld [vmem:[%s240 + $0x171] sm:$0xff]
  %v337 = vld [vmem:[%s240 + $0x1b1] sm:$0xff]
  %v338 = vld [vmem:[%s240 + $0x1b9] sm:$0xff]
  %v339 = vld [vmem:[%s240 + $0x1c9] sm:$0xff]
  %v340 = vld [vmem:[%s240 + $0x1d1] sm:$0xff]
  %v341 = vld [vmem:[%s240 + $0x1e1] sm:$0xff]
  %v342 = vld [vmem:[%s240 + $0x1e9] sm:$0xff]
  %v343 = vld [vmem:[%s240 + $0x1f9] sm:$0xff]
  %v344 = vld [vmem:[%s240 + $0x201] sm:$0xff]
  %v345 = vld [vmem:[%s240 + $0x211] sm:$0xff]
  %v346 = vld [vmem:[%s240 + $0x219] sm:$0xff]
  %v347 = vld [vmem:[%s240 + $0x229] sm:$0xff]
  %v348 = vld [vmem:[%s240 + $0x231] sm:$0xff]
  %v349 = vld [vmem:[%s240 + $0x241] sm:$0xff]
  %v350 = vld [vmem:[%s240 + $0x249] sm:$0xff]
  %v351 = vld [vmem:[%s240 + $0x259] sm:$0xff]
  %v352 = vld [vmem:[%s240 + $0x261] sm:$0xff]
  %v353 = vld [vmem:[%s240 + $0x271] sm:$0xff]
  %v354 = vld [vmem:[%s240 + $0x279] sm:$0xff]
  %v355 = vld [vmem:[%s240 + $0x289] sm:$0xff]
  %v356 = vld [vmem:[%s240 + $0x291] sm:$0xff]
  %v357 = vld [vmem:[%s240 + $0x2a1] sm:$0xff]
  %v358 = vld [vmem:[%s240 + $0x2a9] sm:$0xff]
  %v359 = vld [vmem:[%s240 + $0x2b9] sm:$0xff]
  %v360 = vld [vmem:[%s240 + $0x2c1] sm:$0xff]
  %v361 = vld [vmem:[%s240 + $0x2d1] sm:$0xff]
  %v362 = vld [vmem:[%s240 + $0x2d9] sm:$0xff]
  %v363 = vld [vmem:[%s240 + $0x2e9] sm:$0xff]
  %v364 = vld [vmem:[%s240 + $0x2f1] sm:$0xff]
  %v365 = vld [vmem:[%s240 + $0x301] sm:$0xff]
  %v366 = vld [vmem:[%s240 + $0x309] sm:$0xff]
  %v367 = vld [vmem:[%s240 + $0x319] sm:$0xff]
  %v368 = vld [vmem:[%s240 + $0x321] sm:$0xff]
  %v369 = vld [vmem:[%s240 + $0x2] sm:$0xff]
  %v370 = vld [vmem:[%s240 + $0xa] sm:$0xff]
  %v371 = vld [vmem:[%s240 + $0x1a] sm:$0xff]
  %v372 = vld [vmem:[%s240 + $0x22] sm:$0xff]
  %v373 = vld [vmem:[%s240 + $0x32] sm:$0xff]
  %v374 = vld [vmem:[%s240 + $0x3a] sm:$0xff]
  %v375 = vld [vmem:[%s240 + $0x4a] sm:$0xff]
  %v376 = vld [vmem:[%s240 + $0x52] sm:$0xff]
  %v377 = vld [vmem:[%s240 + $0x62] sm:$0xff]
  %v378 = vld [vmem:[%s240 + $0x6a] sm:$0xff]
  %v379 = vld [vmem:[%s240 + $0x7a] sm:$0xff]
  %v380 = vld [vmem:[%s240 + $0x82] sm:$0xff]
  %v381 = vld [vmem:[%s240 + $0x92] sm:$0xff]
  %v382 = vld [vmem:[%s240 + $0x9a] sm:$0xff]
  %v383 = vld [vmem:[%s240 + $0xaa] sm:$0xff]
  %v384 = vld [vmem:[%s240 + $0xb2] sm:$0xff]
  %v385 = vld [vmem:[%s240 + $0xc2] sm:$0xff]
  %v386 = vld [vmem:[%s240 + $0xca] sm:$0xff]
  %v387 = vld [vmem:[%s240 + $0xda] sm:$0xff]
  %v388 = vld [vmem:[%s240 + $0xe2] sm:$0xff]
  %v389 = vld [vmem:[%s240 + $0xf2] sm:$0xff]
  %v390 = vld [vmem:[%s240 + $0xfa] sm:$0xff]
  %v391 = vld [vmem:[%s240 + $0x10a] sm:$0xff]
  %v392 = vld [vmem:[%s240 + $0x112] sm:$0xff]
  %v393 = vld [vmem:[%s240 + $0x122] sm:$0xff]
  %v394 = vld [vmem:[%s240 + $0x12a] sm:$0xff]
  %v395 = vld [vmem:[%s240 + $0x13a] sm:$0xff]
  %v396 = vld [vmem:[%s240 + $0x142] sm:$0xff]
  %v397 = vld [vmem:[%s240 + $0x152] sm:$0xff]
  %v398 = vld [vmem:[%s240 + $0x15a] sm:$0xff]
  %v399 = vld [vmem:[%s240 + $0x16a] sm:$0xff]
  %v400 = vld [vmem:[%s240 + $0x172] sm:$0xff]
  %v401 = vld [vmem:[%s240 + $0x1b2] sm:$0xff]
  %v402 = vld [vmem:[%s240 + $0x1ba] sm:$0xff]
  %v403 = vld [vmem:[%s240 + $0x1ca] sm:$0xff]
  %v404 = vld [vmem:[%s240 + $0x1d2] sm:$0xff]
  %v405 = vld [vmem:[%s240 + $0x1e2] sm:$0xff]
  %v406 = vld [vmem:[%s240 + $0x1ea] sm:$0xff]
  %v407 = vld [vmem:[%s240 + $0x1fa] sm:$0xff]
  %v408 = vld [vmem:[%s240 + $0x202] sm:$0xff]
  %v409 = vld [vmem:[%s240 + $0x212] sm:$0xff]
  %v410 = vld [vmem:[%s240 + $0x21a] sm:$0xff]
  %v411 = vld [vmem:[%s240 + $0x22a] sm:$0xff]
  %v412 = vld [vmem:[%s240 + $0x232] sm:$0xff]
  %v413 = vld [vmem:[%s240 + $0x242] sm:$0xff]
  %v414 = vld [vmem:[%s240 + $0x24a] sm:$0xff]
  %v415 = vld [vmem:[%s240 + $0x25a] sm:$0xff]
  %v416 = vld [vmem:[%s240 + $0x262] sm:$0xff]
  %v417 = vld [vmem:[%s240 + $0x272] sm:$0xff]
  %v418 = vld [vmem:[%s240 + $0x27a] sm:$0xff]
  %v419 = vld [vmem:[%s240 + $0x28a] sm:$0xff]
  %v420 = vld [vmem:[%s240 + $0x292] sm:$0xff]
  %v421 = vld [vmem:[%s240 + $0x2a2] sm:$0xff]
  %v422 = vld [vmem:[%s240 + $0x2aa] sm:$0xff]
  %v423 = vld [vmem:[%s240 + $0x2ba] sm:$0xff]
  %v424 = vld [vmem:[%s240 + $0x2c2] sm:$0xff]
  %v425 = vld [vmem:[%s240 + $0x2d2] sm:$0xff]
  %v426 = vld [vmem:[%s240 + $0x2da] sm:$0xff]
  %v427 = vld [vmem:[%s240 + $0x2ea] sm:$0xff]
  %v428 = vld [vmem:[%s240 + $0x2f2] sm:$0xff]
  %v429 = vld [vmem:[%s240 + $0x302] sm:$0xff]
  %v430 = vld [vmem:[%s240 + $0x30a] sm:$0xff]
  %v431 = vld [vmem:[%s240 + $0x31a] sm:$0xff]
  %v432 = vld [vmem:[%s240 + $0x322] sm:$0xff]
  %s433 = scalar_lea.vmem %s0, 48
  %v434 = vld [vmem:[%s433] sm:$0xff]
  %v435 = vld [vmem:[%s433 + $0x8] sm:$0xff]
  %v436 = vld [vmem:[%s433 + $0x18] sm:$0xff]
  %v437 = vld [vmem:[%s433 + $0x20] sm:$0xff]
  %v438 = vld [vmem:[%s433 + $0x30] sm:$0xff]
  %v439 = vld [vmem:[%s433 + $0x38] sm:$0xff]
  %v440 = vld [vmem:[%s433 + $0x48] sm:$0xff]
  %v441 = vld [vmem:[%s433 + $0x50] sm:$0xff]
  %v442 = vld [vmem:[%s433 + $0x60] sm:$0xff]
  %v443 = vld [vmem:[%s433 + $0x68] sm:$0xff]
  %v444 = vld [vmem:[%s433 + $0x78] sm:$0xff]
  %v445 = vld [vmem:[%s433 + $0x80] sm:$0xff]
  %v446 = vld [vmem:[%s433 + $0x90] sm:$0xff]
  %v447 = vld [vmem:[%s433 + $0x98] sm:$0xff]
  %v448 = vld [vmem:[%s433 + $0xa8] sm:$0xff]
  %v449 = vld [vmem:[%s433 + $0xb0] sm:$0xff]
  %v450 = vld [vmem:[%s433 + $0xc0] sm:$0xff]
  %v451 = vld [vmem:[%s433 + $0xc8] sm:$0xff]
  %v452 = vld [vmem:[%s433 + $0xd8] sm:$0xff]
  %v453 = vld [vmem:[%s433 + $0xe0] sm:$0xff]
  %v454 = vld [vmem:[%s433 + $0xf0] sm:$0xff]
  %v455 = vld [vmem:[%s433 + $0xf8] sm:$0xff]
  %v456 = vld [vmem:[%s433 + $0x108] sm:$0xff]
  %v457 = vld [vmem:[%s433 + $0x110] sm:$0xff]
  %v458 = vld [vmem:[%s433 + $0x120] sm:$0xff]
  %v459 = vld [vmem:[%s433 + $0x128] sm:$0xff]
  %v460 = vld [vmem:[%s433 + $0x138] sm:$0xff]
  %v461 = vld [vmem:[%s433 + $0x140] sm:$0xff]
  %v462 = vld [vmem:[%s433 + $0x150] sm:$0xff]
  %v463 = vld [vmem:[%s433 + $0x158] sm:$0xff]
  %v464 = vld [vmem:[%s433 + $0x168] sm:$0xff]
  %v465 = vld [vmem:[%s433 + $0x170] sm:$0xff]
  %v466 = vld [vmem:[%s433 + $0x1b0] sm:$0xff]
  %v467 = vld [vmem:[%s433 + $0x1b8] sm:$0xff]
  %v468 = vld [vmem:[%s433 + $0x1c8] sm:$0xff]
  %v469 = vld [vmem:[%s433 + $0x1d0] sm:$0xff]
  %v470 = vld [vmem:[%s433 + $0x1e0] sm:$0xff]
  %v471 = vld [vmem:[%s433 + $0x1e8] sm:$0xff]
  %v472 = vld [vmem:[%s433 + $0x1f8] sm:$0xff]
  %v473 = vld [vmem:[%s433 + $0x200] sm:$0xff]
  %v474 = vld [vmem:[%s433 + $0x210] sm:$0xff]
  %v475 = vld [vmem:[%s433 + $0x218] sm:$0xff]
  %v476 = vld [vmem:[%s433 + $0x228] sm:$0xff]
  %v477 = vld [vmem:[%s433 + $0x230] sm:$0xff]
  %v478 = vld [vmem:[%s433 + $0x240] sm:$0xff]
  %v479 = vld [vmem:[%s433 + $0x248] sm:$0xff]
  %v480 = vld [vmem:[%s433 + $0x258] sm:$0xff]
  %v481 = vld [vmem:[%s433 + $0x260] sm:$0xff]
  %v482 = vld [vmem:[%s433 + $0x270] sm:$0xff]
  %v483 = vld [vmem:[%s433 + $0x278] sm:$0xff]
  %v484 = vld [vmem:[%s433 + $0x288] sm:$0xff]
  %v485 = vld [vmem:[%s433 + $0x290] sm:$0xff]
  %v486 = vld [vmem:[%s433 + $0x2a0] sm:$0xff]
  %v487 = vld [vmem:[%s433 + $0x2a8] sm:$0xff]
  %v488 = vld [vmem:[%s433 + $0x2b8] sm:$0xff]
  %v489 = vld [vmem:[%s433 + $0x2c0] sm:$0xff]
  %v490 = vld [vmem:[%s433 + $0x2d0] sm:$0xff]
  %v491 = vld [vmem:[%s433 + $0x2d8] sm:$0xff]
  %v492 = vld [vmem:[%s433 + $0x2e8] sm:$0xff]
  %v493 = vld [vmem:[%s433 + $0x2f0] sm:$0xff]
  %v494 = vld [vmem:[%s433 + $0x300] sm:$0xff]
  %v495 = vld [vmem:[%s433 + $0x308] sm:$0xff]
  %v496 = vld [vmem:[%s433 + $0x318] sm:$0xff]
  %v497 = vld [vmem:[%s433 + $0x320] sm:$0xff]
  %v498 = vld [vmem:[%s433 + $0x1] sm:$0xff]
  %v499 = vld [vmem:[%s433 + $0x9] sm:$0xff]
  %v500 = vld [vmem:[%s433 + $0x19] sm:$0xff]
  %v501 = vld [vmem:[%s433 + $0x21] sm:$0xff]
  %v502 = vld [vmem:[%s433 + $0x31] sm:$0xff]
  %v503 = vld [vmem:[%s433 + $0x39] sm:$0xff]
  %v504 = vld [vmem:[%s433 + $0x49] sm:$0xff]
  %v505 = vld [vmem:[%s433 + $0x51] sm:$0xff]
  %v506 = vld [vmem:[%s433 + $0x61] sm:$0xff]
  %v507 = vld [vmem:[%s433 + $0x69] sm:$0xff]
  %v508 = vld [vmem:[%s433 + $0x79] sm:$0xff]
  %v509 = vld [vmem:[%s433 + $0x81] sm:$0xff]
  %v510 = vld [vmem:[%s433 + $0x91] sm:$0xff]
  %v511 = vld [vmem:[%s433 + $0x99] sm:$0xff]
  %v512 = vld [vmem:[%s433 + $0xa9] sm:$0xff]
  %v513 = vld [vmem:[%s433 + $0xb1] sm:$0xff]
  %v514 = vld [vmem:[%s433 + $0xc1] sm:$0xff]
  %v515 = vld [vmem:[%s433 + $0xc9] sm:$0xff]
  %v516 = vld [vmem:[%s433 + $0xd9] sm:$0xff]
  %v517 = vld [vmem:[%s433 + $0xe1] sm:$0xff]
  %v518 = vld [vmem:[%s433 + $0xf1] sm:$0xff]
  %v519 = vld [vmem:[%s433 + $0xf9] sm:$0xff]
  %v520 = vld [vmem:[%s433 + $0x109] sm:$0xff]
  %v521 = vld [vmem:[%s433 + $0x111] sm:$0xff]
  %v522 = vld [vmem:[%s433 + $0x121] sm:$0xff]
  %v523 = vld [vmem:[%s433 + $0x129] sm:$0xff]
  %v524 = vld [vmem:[%s433 + $0x139] sm:$0xff]
  %v525 = vld [vmem:[%s433 + $0x141] sm:$0xff]
  %v526 = vld [vmem:[%s433 + $0x151] sm:$0xff]
  %v527 = vld [vmem:[%s433 + $0x159] sm:$0xff]
  %v528 = vld [vmem:[%s433 + $0x169] sm:$0xff]
  %v529 = vld [vmem:[%s433 + $0x171] sm:$0xff]
  %v530 = vld [vmem:[%s433 + $0x1b1] sm:$0xff]
  %v531 = vld [vmem:[%s433 + $0x1b9] sm:$0xff]
  %v532 = vld [vmem:[%s433 + $0x1c9] sm:$0xff]
  %v533 = vld [vmem:[%s433 + $0x1d1] sm:$0xff]
  %v534 = vld [vmem:[%s433 + $0x1e1] sm:$0xff]
  %v535 = vld [vmem:[%s433 + $0x1e9] sm:$0xff]
  %v536 = vld [vmem:[%s433 + $0x1f9] sm:$0xff]
  %v537 = vld [vmem:[%s433 + $0x201] sm:$0xff]
  %v538 = vld [vmem:[%s433 + $0x211] sm:$0xff]
  %v539 = vld [vmem:[%s433 + $0x219] sm:$0xff]
  %v540 = vld [vmem:[%s433 + $0x229] sm:$0xff]
  %v541 = vld [vmem:[%s433 + $0x231] sm:$0xff]
  %v542 = vld [vmem:[%s433 + $0x241] sm:$0xff]
  %v543 = vld [vmem:[%s433 + $0x249] sm:$0xff]
  %v544 = vld [vmem:[%s433 + $0x259] sm:$0xff]
  %v545 = vld [vmem:[%s433 + $0x261] sm:$0xff]
  %v546 = vld [vmem:[%s433 + $0x271] sm:$0xff]
  %v547 = vld [vmem:[%s433 + $0x279] sm:$0xff]
  %v548 = vld [vmem:[%s433 + $0x289] sm:$0xff]
  %v549 = vld [vmem:[%s433 + $0x291] sm:$0xff]
  %v550 = vld [vmem:[%s433 + $0x2a1] sm:$0xff]
  %v551 = vld [vmem:[%s433 + $0x2a9] sm:$0xff]
  %v552 = vld [vmem:[%s433 + $0x2b9] sm:$0xff]
  %v553 = vld [vmem:[%s433 + $0x2c1] sm:$0xff]
  %v554 = vld [vmem:[%s433 + $0x2d1] sm:$0xff]
  %v555 = vld [vmem:[%s433 + $0x2d9] sm:$0xff]
  %v556 = vld [vmem:[%s433 + $0x2e9] sm:$0xff]
  %v557 = vld [vmem:[%s433 + $0x2f1] sm:$0xff]
  %v558 = vld [vmem:[%s433 + $0x301] sm:$0xff]
  %v559 = vld [vmem:[%s433 + $0x309] sm:$0xff]
  %v560 = vld [vmem:[%s433 + $0x319] sm:$0xff]
  %v561 = vld [vmem:[%s433 + $0x321] sm:$0xff]
  %v562 = vld [vmem:[%s433 + $0x2] sm:$0xff]
  %v563 = vld [vmem:[%s433 + $0xa] sm:$0xff]
  %v564 = vld [vmem:[%s433 + $0x1a] sm:$0xff]
  %v565 = vld [vmem:[%s433 + $0x22] sm:$0xff]
  %v566 = vld [vmem:[%s433 + $0x32] sm:$0xff]
  %v567 = vld [vmem:[%s433 + $0x3a] sm:$0xff]
  %v568 = vld [vmem:[%s433 + $0x4a] sm:$0xff]
  %v569 = vld [vmem:[%s433 + $0x52] sm:$0xff]
  %v570 = vld [vmem:[%s433 + $0x62] sm:$0xff]
  %v571 = vld [vmem:[%s433 + $0x6a] sm:$0xff]
  %v572 = vld [vmem:[%s433 + $0x7a] sm:$0xff]
  %v573 = vld [vmem:[%s433 + $0x82] sm:$0xff]
  %v574 = vld [vmem:[%s433 + $0x92] sm:$0xff]
  %v575 = vld [vmem:[%s433 + $0x9a] sm:$0xff]
  %v576 = vld [vmem:[%s433 + $0xaa] sm:$0xff]
  %v577 = vld [vmem:[%s433 + $0xb2] sm:$0xff]
  %v578 = vld [vmem:[%s433 + $0xc2] sm:$0xff]
  %v579 = vld [vmem:[%s433 + $0xca] sm:$0xff]
  %v580 = vld [vmem:[%s433 + $0xda] sm:$0xff]
  %v581 = vld [vmem:[%s433 + $0xe2] sm:$0xff]
  %v582 = vld [vmem:[%s433 + $0xf2] sm:$0xff]
  %v583 = vld [vmem:[%s433 + $0xfa] sm:$0xff]
  %v584 = vld [vmem:[%s433 + $0x10a] sm:$0xff]
  %v585 = vld [vmem:[%s433 + $0x112] sm:$0xff]
  %v586 = vld [vmem:[%s433 + $0x122] sm:$0xff]
  %v587 = vld [vmem:[%s433 + $0x12a] sm:$0xff]
  %v588 = vld [vmem:[%s433 + $0x13a] sm:$0xff]
  %v589 = vld [vmem:[%s433 + $0x142] sm:$0xff]
  %v590 = vld [vmem:[%s433 + $0x152] sm:$0xff]
  %v591 = vld [vmem:[%s433 + $0x15a] sm:$0xff]
  %v592 = vld [vmem:[%s433 + $0x16a] sm:$0xff]
  %v593 = vld [vmem:[%s433 + $0x172] sm:$0xff]
  %v594 = vld [vmem:[%s433 + $0x1b2] sm:$0xff]
  %v595 = vld [vmem:[%s433 + $0x1ba] sm:$0xff]
  %v596 = vld [vmem:[%s433 + $0x1ca] sm:$0xff]
  %v597 = vld [vmem:[%s433 + $0x1d2] sm:$0xff]
  %v598 = vld [vmem:[%s433 + $0x1e2] sm:$0xff]
  %v599 = vld [vmem:[%s433 + $0x1ea] sm:$0xff]
  %v600 = vld [vmem:[%s433 + $0x1fa] sm:$0xff]
  %v601 = vld [vmem:[%s433 + $0x202] sm:$0xff]
  %v602 = vld [vmem:[%s433 + $0x212] sm:$0xff]
  %v603 = vld [vmem:[%s433 + $0x21a] sm:$0xff]
  %v604 = vld [vmem:[%s433 + $0x22a] sm:$0xff]
  %v605 = vld [vmem:[%s433 + $0x232] sm:$0xff]
  %v606 = vld [vmem:[%s433 + $0x242] sm:$0xff]
  %v607 = vld [vmem:[%s433 + $0x24a] sm:$0xff]
  %v608 = vld [vmem:[%s433 + $0x25a] sm:$0xff]
  %v609 = vld [vmem:[%s433 + $0x262] sm:$0xff]
  %v610 = vld [vmem:[%s433 + $0x272] sm:$0xff]
  %v611 = vld [vmem:[%s433 + $0x27a] sm:$0xff]
  %v612 = vld [vmem:[%s433 + $0x28a] sm:$0xff]
  %v613 = vld [vmem:[%s433 + $0x292] sm:$0xff]
  %v614 = vld [vmem:[%s433 + $0x2a2] sm:$0xff]
  %v615 = vld [vmem:[%s433 + $0x2aa] sm:$0xff]
  %v616 = vld [vmem:[%s433 + $0x2ba] sm:$0xff]
  %v617 = vld [vmem:[%s433 + $0x2c2] sm:$0xff]
  %v618 = vld [vmem:[%s433 + $0x2d2] sm:$0xff]
  %v619 = vld [vmem:[%s433 + $0x2da] sm:$0xff]
  %v620 = vld [vmem:[%s433 + $0x2ea] sm:$0xff]
  %v621 = vld [vmem:[%s433 + $0x2f2] sm:$0xff]
  %v622 = vld [vmem:[%s433 + $0x302] sm:$0xff]
  %v623 = vld [vmem:[%s433 + $0x30a] sm:$0xff]
  %v624 = vld [vmem:[%s433 + $0x31a] sm:$0xff]
  %v625 = vld [vmem:[%s433 + $0x322] sm:$0xff]
  %690 = vrot.lane.b32.xlu0 %v112, 4
  %v691 = vpop.permute.xlu0 %690
  %692 = vrot.lane.b32.xlu0 %v113, 4
  %v693 = vpop.permute.xlu0 %692
  %694 = vrot.lane.b32.xlu0 %v114, 4
  %v695 = vpop.permute.xlu0 %694
  %696 = vrot.lane.b32.xlu0 %v115, 4
  %v697 = vpop.permute.xlu0 %696
  %698 = vrot.lane.b32.xlu0 %v116, 4
  %v699 = vpop.permute.xlu0 %698
  %700 = vrot.lane.b32.xlu0 %v117, 4
  %v701 = vpop.permute.xlu0 %700
  %702 = vrot.lane.b32.xlu0 %v118, 4
  %v703 = vpop.permute.xlu0 %702
  %704 = vrot.lane.b32.xlu0 %v119, 4
  %v705 = vpop.permute.xlu0 %704
  %706 = vrot.lane.b32.xlu0 %v120, 4
  %v707 = vpop.permute.xlu0 %706
  %708 = vrot.lane.b32.xlu0 %v121, 4
  %v709 = vpop.permute.xlu0 %708
  %710 = vrot.lane.b32.xlu0 %v122, 4
  %v711 = vpop.permute.xlu0 %710
  %712 = vrot.lane.b32.xlu0 %v123, 4
  %v713 = vpop.permute.xlu0 %712
  %714 = vrot.lane.b32.xlu0 %v124, 4
  %v715 = vpop.permute.xlu0 %714
  %716 = vrot.lane.b32.xlu0 %v125, 4
  %v717 = vpop.permute.xlu0 %716
  %718 = vrot.lane.b32.xlu0 %v126, 4
  %v719 = vpop.permute.xlu0 %718
  %720 = vrot.lane.b32.xlu0 %v127, 4
  %v721 = vpop.permute.xlu0 %720
  %722 = vrot.lane.b32.xlu0 %v128, 4
  %v723 = vpop.permute.xlu0 %722
  %724 = vrot.lane.b32.xlu0 %v129, 4
  %v725 = vpop.permute.xlu0 %724
  %726 = vrot.lane.b32.xlu0 %v130, 4
  %v727 = vpop.permute.xlu0 %726
  %728 = vrot.lane.b32.xlu0 %v131, 4
  %v729 = vpop.permute.xlu0 %728
  %730 = vrot.lane.b32.xlu0 %v132, 4
  %v731 = vpop.permute.xlu0 %730
  %732 = vrot.lane.b32.xlu0 %v133, 4
  %v733 = vpop.permute.xlu0 %732
  %734 = vrot.lane.b32.xlu0 %v134, 4
  %v735 = vpop.permute.xlu0 %734
  %736 = vrot.lane.b32.xlu0 %v135, 4
  %v737 = vpop.permute.xlu0 %736
  %738 = vrot.lane.b32.xlu0 %v136, 4
  %v739 = vpop.permute.xlu0 %738
  %740 = vrot.lane.b32.xlu0 %v137, 4
  %v741 = vpop.permute.xlu0 %740
  %742 = vrot.lane.b32.xlu0 %v138, 4
  %v743 = vpop.permute.xlu0 %742
  %744 = vrot.lane.b32.xlu0 %v139, 4
  %v745 = vpop.permute.xlu0 %744
  %746 = vrot.lane.b32.xlu0 %v140, 4
  %v747 = vpop.permute.xlu0 %746
  %748 = vrot.lane.b32.xlu0 %v141, 4
  %v749 = vpop.permute.xlu0 %748
  %750 = vrot.lane.b32.xlu0 %v142, 4
  %v751 = vpop.permute.xlu0 %750
  %752 = vrot.lane.b32.xlu0 %v143, 4
  %v753 = vpop.permute.xlu0 %752
  %754 = vrot.lane.b32.xlu0 %v144, 4
  %v755 = vpop.permute.xlu0 %754
  %756 = vrot.lane.b32.xlu0 %v145, 4
  %v757 = vpop.permute.xlu0 %756
  %758 = vrot.lane.b32.xlu0 %v146, 4
  %v759 = vpop.permute.xlu0 %758
  %760 = vrot.lane.b32.xlu0 %v147, 4
  %v761 = vpop.permute.xlu0 %760
  %762 = vrot.lane.b32.xlu0 %v148, 4
  %v763 = vpop.permute.xlu0 %762
  %764 = vrot.lane.b32.xlu0 %v149, 4
  %v765 = vpop.permute.xlu0 %764
  %766 = vrot.lane.b32.xlu0 %v150, 4
  %v767 = vpop.permute.xlu0 %766
  %768 = vrot.lane.b32.xlu0 %v151, 4
  %v769 = vpop.permute.xlu0 %768
  %770 = vrot.lane.b32.xlu0 %v152, 4
  %v771 = vpop.permute.xlu0 %770
  %772 = vrot.lane.b32.xlu0 %v153, 4
  %v773 = vpop.permute.xlu0 %772
  %774 = vrot.lane.b32.xlu0 %v154, 4
  %v775 = vpop.permute.xlu0 %774
  %776 = vrot.lane.b32.xlu0 %v155, 4
  %v777 = vpop.permute.xlu0 %776
  %778 = vrot.lane.b32.xlu0 %v156, 4
  %v779 = vpop.permute.xlu0 %778
  %780 = vrot.lane.b32.xlu0 %v157, 4
  %v781 = vpop.permute.xlu0 %780
  %782 = vrot.lane.b32.xlu0 %v158, 4
  %v783 = vpop.permute.xlu0 %782
  %784 = vrot.lane.b32.xlu0 %v159, 4
  %v785 = vpop.permute.xlu0 %784
  %786 = vrot.lane.b32.xlu0 %v160, 4
  %v787 = vpop.permute.xlu0 %786
  %788 = vrot.lane.b32.xlu0 %v161, 4
  %v789 = vpop.permute.xlu0 %788
  %790 = vrot.lane.b32.xlu0 %v162, 4
  %v791 = vpop.permute.xlu0 %790
  %792 = vrot.lane.b32.xlu0 %v163, 4
  %v793 = vpop.permute.xlu0 %792
  %794 = vrot.lane.b32.xlu0 %v164, 4
  %v795 = vpop.permute.xlu0 %794
  %796 = vrot.lane.b32.xlu0 %v165, 4
  %v797 = vpop.permute.xlu0 %796
  %798 = vrot.lane.b32.xlu0 %v166, 4
  %v799 = vpop.permute.xlu0 %798
  %800 = vrot.lane.b32.xlu0 %v167, 4
  %v801 = vpop.permute.xlu0 %800
  %802 = vrot.lane.b32.xlu0 %v168, 4
  %v803 = vpop.permute.xlu0 %802
  %804 = vrot.lane.b32.xlu0 %v169, 4
  %v805 = vpop.permute.xlu0 %804
  %806 = vrot.lane.b32.xlu0 %v170, 4
  %v807 = vpop.permute.xlu0 %806
  %808 = vrot.lane.b32.xlu0 %v171, 4
  %v809 = vpop.permute.xlu0 %808
  %810 = vrot.lane.b32.xlu0 %v172, 4
  %v811 = vpop.permute.xlu0 %810
  %812 = vrot.lane.b32.xlu0 %v173, 4
  %v813 = vpop.permute.xlu0 %812
  %814 = vrot.lane.b32.xlu0 %v174, 4
  %v815 = vpop.permute.xlu0 %814
  %816 = vrot.lane.b32.xlu0 %v175, 4
  %v817 = vpop.permute.xlu0 %816
  %946 = vrot.lane.b32.xlu0 %v176, 8
  %v947 = vpop.permute.xlu0 %946
  %948 = vrot.lane.b32.xlu0 %v177, 8
  %v949 = vpop.permute.xlu0 %948
  %950 = vrot.lane.b32.xlu0 %v178, 8
  %v951 = vpop.permute.xlu0 %950
  %952 = vrot.lane.b32.xlu0 %v179, 8
  %v953 = vpop.permute.xlu0 %952
  %954 = vrot.lane.b32.xlu0 %v180, 8
  %v955 = vpop.permute.xlu0 %954
  %956 = vrot.lane.b32.xlu0 %v181, 8
  %v957 = vpop.permute.xlu0 %956
  %958 = vrot.lane.b32.xlu0 %v182, 8
  %v959 = vpop.permute.xlu0 %958
  %960 = vrot.lane.b32.xlu0 %v183, 8
  %v961 = vpop.permute.xlu0 %960
  %962 = vrot.lane.b32.xlu0 %v184, 8
  %v963 = vpop.permute.xlu0 %962
  %964 = vrot.lane.b32.xlu0 %v185, 8
  %v965 = vpop.permute.xlu0 %964
  %966 = vrot.lane.b32.xlu0 %v186, 8
  %v967 = vpop.permute.xlu0 %966
  %968 = vrot.lane.b32.xlu0 %v187, 8
  %v969 = vpop.permute.xlu0 %968
  %970 = vrot.lane.b32.xlu0 %v188, 8
  %v971 = vpop.permute.xlu0 %970
  %972 = vrot.lane.b32.xlu0 %v189, 8
  %v973 = vpop.permute.xlu0 %972
  %974 = vrot.lane.b32.xlu0 %v190, 8
  %v975 = vpop.permute.xlu0 %974
  %976 = vrot.lane.b32.xlu0 %v191, 8
  %v977 = vpop.permute.xlu0 %976
  %978 = vrot.lane.b32.xlu0 %v192, 8
  %v979 = vpop.permute.xlu0 %978
  %980 = vrot.lane.b32.xlu0 %v193, 8
  %v981 = vpop.permute.xlu0 %980
  %982 = vrot.lane.b32.xlu0 %v194, 8
  %v983 = vpop.permute.xlu0 %982
  %984 = vrot.lane.b32.xlu0 %v195, 8
  %v985 = vpop.permute.xlu0 %984
  %986 = vrot.lane.b32.xlu0 %v196, 8
  %v987 = vpop.permute.xlu0 %986
  %988 = vrot.lane.b32.xlu0 %v197, 8
  %v989 = vpop.permute.xlu0 %988
  %990 = vrot.lane.b32.xlu0 %v198, 8
  %v991 = vpop.permute.xlu0 %990
  %992 = vrot.lane.b32.xlu0 %v199, 8
  %v993 = vpop.permute.xlu0 %992
  %994 = vrot.lane.b32.xlu0 %v200, 8
  %v995 = vpop.permute.xlu0 %994
  %996 = vrot.lane.b32.xlu0 %v201, 8
  %v997 = vpop.permute.xlu0 %996
  %998 = vrot.lane.b32.xlu0 %v202, 8
  %v999 = vpop.permute.xlu0 %998
  %1000 = vrot.lane.b32.xlu0 %v203, 8
  %v1001 = vpop.permute.xlu0 %1000
  %1002 = vrot.lane.b32.xlu0 %v204, 8
  %v1003 = vpop.permute.xlu0 %1002
  %1004 = vrot.lane.b32.xlu0 %v205, 8
  %v1005 = vpop.permute.xlu0 %1004
  %1006 = vrot.lane.b32.xlu0 %v206, 8
  %v1007 = vpop.permute.xlu0 %1006
  %1008 = vrot.lane.b32.xlu0 %v207, 8
  %v1009 = vpop.permute.xlu0 %1008
  %1010 = vrot.lane.b32.xlu0 %v208, 8
  %v1011 = vpop.permute.xlu0 %1010
  %1012 = vrot.lane.b32.xlu0 %v209, 8
  %v1013 = vpop.permute.xlu0 %1012
  %1014 = vrot.lane.b32.xlu0 %v210, 8
  %v1015 = vpop.permute.xlu0 %1014
  %1016 = vrot.lane.b32.xlu0 %v211, 8
  %v1017 = vpop.permute.xlu0 %1016
  %1018 = vrot.lane.b32.xlu0 %v212, 8
  %v1019 = vpop.permute.xlu0 %1018
  %1020 = vrot.lane.b32.xlu0 %v213, 8
  %v1021 = vpop.permute.xlu0 %1020
  %1022 = vrot.lane.b32.xlu0 %v214, 8
  %v1023 = vpop.permute.xlu0 %1022
  %1024 = vrot.lane.b32.xlu0 %v215, 8
  %v1025 = vpop.permute.xlu0 %1024
  %1026 = vrot.lane.b32.xlu0 %v216, 8
  %v1027 = vpop.permute.xlu0 %1026
  %1028 = vrot.lane.b32.xlu0 %v217, 8
  %v1029 = vpop.permute.xlu0 %1028
  %1030 = vrot.lane.b32.xlu0 %v218, 8
  %v1031 = vpop.permute.xlu0 %1030
  %1032 = vrot.lane.b32.xlu0 %v219, 8
  %v1033 = vpop.permute.xlu0 %1032
  %1034 = vrot.lane.b32.xlu0 %v220, 8
  %v1035 = vpop.permute.xlu0 %1034
  %1036 = vrot.lane.b32.xlu0 %v221, 8
  %v1037 = vpop.permute.xlu0 %1036
  %1038 = vrot.lane.b32.xlu0 %v222, 8
  %v1039 = vpop.permute.xlu0 %1038
  %1040 = vrot.lane.b32.xlu0 %v223, 8
  %v1041 = vpop.permute.xlu0 %1040
  %1042 = vrot.lane.b32.xlu0 %v224, 8
  %v1043 = vpop.permute.xlu0 %1042
  %1044 = vrot.lane.b32.xlu0 %v225, 8
  %v1045 = vpop.permute.xlu0 %1044
  %1046 = vrot.lane.b32.xlu0 %v226, 8
  %v1047 = vpop.permute.xlu0 %1046
  %1048 = vrot.lane.b32.xlu0 %v227, 8
  %v1049 = vpop.permute.xlu0 %1048
  %1050 = vrot.lane.b32.xlu0 %v228, 8
  %v1051 = vpop.permute.xlu0 %1050
  %1052 = vrot.lane.b32.xlu0 %v229, 8
  %v1053 = vpop.permute.xlu0 %1052
  %1054 = vrot.lane.b32.xlu0 %v230, 8
  %v1055 = vpop.permute.xlu0 %1054
  %1056 = vrot.lane.b32.xlu0 %v231, 8
  %v1057 = vpop.permute.xlu0 %1056
  %1058 = vrot.lane.b32.xlu0 %v232, 8
  %v1059 = vpop.permute.xlu0 %1058
  %1060 = vrot.lane.b32.xlu0 %v233, 8
  %v1061 = vpop.permute.xlu0 %1060
  %1062 = vrot.lane.b32.xlu0 %v234, 8
  %v1063 = vpop.permute.xlu0 %1062
  %1064 = vrot.lane.b32.xlu0 %v235, 8
  %v1065 = vpop.permute.xlu0 %1064
  %1066 = vrot.lane.b32.xlu0 %v236, 8
  %v1067 = vpop.permute.xlu0 %1066
  %1068 = vrot.lane.b32.xlu0 %v237, 8
  %v1069 = vpop.permute.xlu0 %1068
  %1070 = vrot.lane.b32.xlu0 %v238, 8
  %v1071 = vpop.permute.xlu0 %1070
  %1072 = vrot.lane.b32.xlu0 %v239, 8
  %v1073 = vpop.permute.xlu0 %1072
  %1202 = vrot.lane.b32.xlu0 %v241, 12
  %v1203 = vpop.permute.xlu0 %1202
  %1204 = vrot.lane.b32.xlu0 %v242, 12
  %v1205 = vpop.permute.xlu0 %1204
  %1206 = vrot.lane.b32.xlu0 %v243, 12
  %v1207 = vpop.permute.xlu0 %1206
  %1208 = vrot.lane.b32.xlu0 %v244, 12
  %v1209 = vpop.permute.xlu0 %1208
  %1210 = vrot.lane.b32.xlu0 %v245, 12
  %v1211 = vpop.permute.xlu0 %1210
  %1212 = vrot.lane.b32.xlu0 %v246, 12
  %v1213 = vpop.permute.xlu0 %1212
  %1214 = vrot.lane.b32.xlu0 %v247, 12
  %v1215 = vpop.permute.xlu0 %1214
  %1216 = vrot.lane.b32.xlu0 %v248, 12
  %v1217 = vpop.permute.xlu0 %1216
  %1218 = vrot.lane.b32.xlu0 %v249, 12
  %v1219 = vpop.permute.xlu0 %1218
  %1220 = vrot.lane.b32.xlu0 %v250, 12
  %v1221 = vpop.permute.xlu0 %1220
  %1222 = vrot.lane.b32.xlu0 %v251, 12
  %v1223 = vpop.permute.xlu0 %1222
  %1224 = vrot.lane.b32.xlu0 %v252, 12
  %v1225 = vpop.permute.xlu0 %1224
  %1226 = vrot.lane.b32.xlu0 %v253, 12
  %v1227 = vpop.permute.xlu0 %1226
  %1228 = vrot.lane.b32.xlu0 %v254, 12
  %v1229 = vpop.permute.xlu0 %1228
  %1230 = vrot.lane.b32.xlu0 %v255, 12
  %v1231 = vpop.permute.xlu0 %1230
  %1232 = vrot.lane.b32.xlu0 %v256, 12
  %v1233 = vpop.permute.xlu0 %1232
  %1234 = vrot.lane.b32.xlu0 %v257, 12
  %v1235 = vpop.permute.xlu0 %1234
  %1236 = vrot.lane.b32.xlu0 %v258, 12
  %v1237 = vpop.permute.xlu0 %1236
  %1238 = vrot.lane.b32.xlu0 %v259, 12
  %v1239 = vpop.permute.xlu0 %1238
  %1240 = vrot.lane.b32.xlu0 %v260, 12
  %v1241 = vpop.permute.xlu0 %1240
  %1242 = vrot.lane.b32.xlu0 %v261, 12
  %v1243 = vpop.permute.xlu0 %1242
  %1244 = vrot.lane.b32.xlu0 %v262, 12
  %v1245 = vpop.permute.xlu0 %1244
  %1246 = vrot.lane.b32.xlu0 %v263, 12
  %v1247 = vpop.permute.xlu0 %1246
  %1248 = vrot.lane.b32.xlu0 %v264, 12
  %v1249 = vpop.permute.xlu0 %1248
  %1250 = vrot.lane.b32.xlu0 %v265, 12
  %v1251 = vpop.permute.xlu0 %1250
  %1252 = vrot.lane.b32.xlu0 %v266, 12
  %v1253 = vpop.permute.xlu0 %1252
  %1254 = vrot.lane.b32.xlu0 %v267, 12
  %v1255 = vpop.permute.xlu0 %1254
  %1256 = vrot.lane.b32.xlu0 %v268, 12
  %v1257 = vpop.permute.xlu0 %1256
  %1258 = vrot.lane.b32.xlu0 %v269, 12
  %v1259 = vpop.permute.xlu0 %1258
  %1260 = vrot.lane.b32.xlu0 %v270, 12
  %v1261 = vpop.permute.xlu0 %1260
  %1262 = vrot.lane.b32.xlu0 %v271, 12
  %v1263 = vpop.permute.xlu0 %1262
  %1264 = vrot.lane.b32.xlu0 %v272, 12
  %v1265 = vpop.permute.xlu0 %1264
  %1266 = vrot.lane.b32.xlu0 %v273, 12
  %v1267 = vpop.permute.xlu0 %1266
  %1268 = vrot.lane.b32.xlu0 %v274, 12
  %v1269 = vpop.permute.xlu0 %1268
  %1270 = vrot.lane.b32.xlu0 %v275, 12
  %v1271 = vpop.permute.xlu0 %1270
  %1272 = vrot.lane.b32.xlu0 %v276, 12
  %v1273 = vpop.permute.xlu0 %1272
  %1274 = vrot.lane.b32.xlu0 %v277, 12
  %v1275 = vpop.permute.xlu0 %1274
  %1276 = vrot.lane.b32.xlu0 %v278, 12
  %v1277 = vpop.permute.xlu0 %1276
  %1278 = vrot.lane.b32.xlu0 %v279, 12
  %v1279 = vpop.permute.xlu0 %1278
  %1280 = vrot.lane.b32.xlu0 %v280, 12
  %v1281 = vpop.permute.xlu0 %1280
  %1282 = vrot.lane.b32.xlu0 %v281, 12
  %v1283 = vpop.permute.xlu0 %1282
  %1284 = vrot.lane.b32.xlu0 %v282, 12
  %v1285 = vpop.permute.xlu0 %1284
  %1286 = vrot.lane.b32.xlu0 %v283, 12
  %v1287 = vpop.permute.xlu0 %1286
  %1288 = vrot.lane.b32.xlu0 %v284, 12
  %v1289 = vpop.permute.xlu0 %1288
  %1290 = vrot.lane.b32.xlu0 %v285, 12
  %v1291 = vpop.permute.xlu0 %1290
  %1292 = vrot.lane.b32.xlu0 %v286, 12
  %v1293 = vpop.permute.xlu0 %1292
  %1294 = vrot.lane.b32.xlu0 %v287, 12
  %v1295 = vpop.permute.xlu0 %1294
  %1296 = vrot.lane.b32.xlu0 %v288, 12
  %v1297 = vpop.permute.xlu0 %1296
  %1298 = vrot.lane.b32.xlu0 %v289, 12
  %v1299 = vpop.permute.xlu0 %1298
  %1300 = vrot.lane.b32.xlu0 %v290, 12
  %v1301 = vpop.permute.xlu0 %1300
  %1302 = vrot.lane.b32.xlu0 %v291, 12
  %v1303 = vpop.permute.xlu0 %1302
  %1304 = vrot.lane.b32.xlu0 %v292, 12
  %v1305 = vpop.permute.xlu0 %1304
  %1306 = vrot.lane.b32.xlu0 %v293, 12
  %v1307 = vpop.permute.xlu0 %1306
  %1308 = vrot.lane.b32.xlu0 %v294, 12
  %v1309 = vpop.permute.xlu0 %1308
  %1310 = vrot.lane.b32.xlu0 %v295, 12
  %v1311 = vpop.permute.xlu0 %1310
  %1312 = vrot.lane.b32.xlu0 %v296, 12
  %v1313 = vpop.permute.xlu0 %1312
  %1314 = vrot.lane.b32.xlu0 %v297, 12
  %v1315 = vpop.permute.xlu0 %1314
  %1316 = vrot.lane.b32.xlu0 %v298, 12
  %v1317 = vpop.permute.xlu0 %1316
  %1318 = vrot.lane.b32.xlu0 %v299, 12
  %v1319 = vpop.permute.xlu0 %1318
  %1320 = vrot.lane.b32.xlu0 %v300, 12
  %v1321 = vpop.permute.xlu0 %1320
  %1322 = vrot.lane.b32.xlu0 %v301, 12
  %v1323 = vpop.permute.xlu0 %1322
  %1324 = vrot.lane.b32.xlu0 %v302, 12
  %v1325 = vpop.permute.xlu0 %1324
  %1326 = vrot.lane.b32.xlu0 %v303, 12
  %v1327 = vpop.permute.xlu0 %1326
  %1328 = vrot.lane.b32.xlu0 %v304, 12
  %v1329 = vpop.permute.xlu0 %1328
  %1458 = vrot.lane.b32.xlu0 %v305, 16
  %v1459 = vpop.permute.xlu0 %1458
  %1460 = vrot.lane.b32.xlu0 %v306, 16
  %v1461 = vpop.permute.xlu0 %1460
  %1462 = vrot.lane.b32.xlu0 %v307, 16
  %v1463 = vpop.permute.xlu0 %1462
  %1464 = vrot.lane.b32.xlu0 %v308, 16
  %v1465 = vpop.permute.xlu0 %1464
  %1466 = vrot.lane.b32.xlu0 %v309, 16
  %v1467 = vpop.permute.xlu0 %1466
  %1468 = vrot.lane.b32.xlu0 %v310, 16
  %v1469 = vpop.permute.xlu0 %1468
  %1470 = vrot.lane.b32.xlu0 %v311, 16
  %v1471 = vpop.permute.xlu0 %1470
  %1472 = vrot.lane.b32.xlu0 %v312, 16
  %v1473 = vpop.permute.xlu0 %1472
  %1474 = vrot.lane.b32.xlu0 %v313, 16
  %v1475 = vpop.permute.xlu0 %1474
  %1476 = vrot.lane.b32.xlu0 %v314, 16
  %v1477 = vpop.permute.xlu0 %1476
  %1478 = vrot.lane.b32.xlu0 %v315, 16
  %v1479 = vpop.permute.xlu0 %1478
  %1480 = vrot.lane.b32.xlu0 %v316, 16
  %v1481 = vpop.permute.xlu0 %1480
  %1482 = vrot.lane.b32.xlu0 %v317, 16
  %v1483 = vpop.permute.xlu0 %1482
  %1484 = vrot.lane.b32.xlu0 %v318, 16
  %v1485 = vpop.permute.xlu0 %1484
  %1486 = vrot.lane.b32.xlu0 %v319, 16
  %v1487 = vpop.permute.xlu0 %1486
  %1488 = vrot.lane.b32.xlu0 %v320, 16
  %v1489 = vpop.permute.xlu0 %1488
  %1490 = vrot.lane.b32.xlu0 %v321, 16
  %v1491 = vpop.permute.xlu0 %1490
  %1492 = vrot.lane.b32.xlu0 %v322, 16
  %v1493 = vpop.permute.xlu0 %1492
  %1494 = vrot.lane.b32.xlu0 %v323, 16
  %v1495 = vpop.permute.xlu0 %1494
  %1496 = vrot.lane.b32.xlu0 %v324, 16
  %v1497 = vpop.permute.xlu0 %1496
  %1498 = vrot.lane.b32.xlu0 %v325, 16
  %v1499 = vpop.permute.xlu0 %1498
  %1500 = vrot.lane.b32.xlu0 %v326, 16
  %v1501 = vpop.permute.xlu0 %1500
  %1502 = vrot.lane.b32.xlu0 %v327, 16
  %v1503 = vpop.permute.xlu0 %1502
  %1504 = vrot.lane.b32.xlu0 %v328, 16
  %v1505 = vpop.permute.xlu0 %1504
  %1506 = vrot.lane.b32.xlu0 %v329, 16
  %v1507 = vpop.permute.xlu0 %1506
  %1508 = vrot.lane.b32.xlu0 %v330, 16
  %v1509 = vpop.permute.xlu0 %1508
  %1510 = vrot.lane.b32.xlu0 %v331, 16
  %v1511 = vpop.permute.xlu0 %1510
  %1512 = vrot.lane.b32.xlu0 %v332, 16
  %v1513 = vpop.permute.xlu0 %1512
  %1514 = vrot.lane.b32.xlu0 %v333, 16
  %v1515 = vpop.permute.xlu0 %1514
  %1516 = vrot.lane.b32.xlu0 %v334, 16
  %v1517 = vpop.permute.xlu0 %1516
  %1518 = vrot.lane.b32.xlu0 %v335, 16
  %v1519 = vpop.permute.xlu0 %1518
  %1520 = vrot.lane.b32.xlu0 %v336, 16
  %v1521 = vpop.permute.xlu0 %1520
  %1522 = vrot.lane.b32.xlu0 %v337, 16
  %v1523 = vpop.permute.xlu0 %1522
  %1524 = vrot.lane.b32.xlu0 %v338, 16
  %v1525 = vpop.permute.xlu0 %1524
  %1526 = vrot.lane.b32.xlu0 %v339, 16
  %v1527 = vpop.permute.xlu0 %1526
  %1528 = vrot.lane.b32.xlu0 %v340, 16
  %v1529 = vpop.permute.xlu0 %1528
  %1530 = vrot.lane.b32.xlu0 %v341, 16
  %v1531 = vpop.permute.xlu0 %1530
  %1532 = vrot.lane.b32.xlu0 %v342, 16
  %v1533 = vpop.permute.xlu0 %1532
  %1534 = vrot.lane.b32.xlu0 %v343, 16
  %v1535 = vpop.permute.xlu0 %1534
  %1536 = vrot.lane.b32.xlu0 %v344, 16
  %v1537 = vpop.permute.xlu0 %1536
  %1538 = vrot.lane.b32.xlu0 %v345, 16
  %v1539 = vpop.permute.xlu0 %1538
  %1540 = vrot.lane.b32.xlu0 %v346, 16
  %v1541 = vpop.permute.xlu0 %1540
  %1542 = vrot.lane.b32.xlu0 %v347, 16
  %v1543 = vpop.permute.xlu0 %1542
  %1544 = vrot.lane.b32.xlu0 %v348, 16
  %v1545 = vpop.permute.xlu0 %1544
  %1546 = vrot.lane.b32.xlu0 %v349, 16
  %v1547 = vpop.permute.xlu0 %1546
  %1548 = vrot.lane.b32.xlu0 %v350, 16
  %v1549 = vpop.permute.xlu0 %1548
  %1550 = vrot.lane.b32.xlu0 %v351, 16
  %v1551 = vpop.permute.xlu0 %1550
  %1552 = vrot.lane.b32.xlu0 %v352, 16
  %v1553 = vpop.permute.xlu0 %1552
  %1554 = vrot.lane.b32.xlu0 %v353, 16
  %v1555 = vpop.permute.xlu0 %1554
  %1556 = vrot.lane.b32.xlu0 %v354, 16
  %v1557 = vpop.permute.xlu0 %1556
  %1558 = vrot.lane.b32.xlu0 %v355, 16
  %v1559 = vpop.permute.xlu0 %1558
  %1560 = vrot.lane.b32.xlu0 %v356, 16
  %v1561 = vpop.permute.xlu0 %1560
  %1562 = vrot.lane.b32.xlu0 %v357, 16
  %v1563 = vpop.permute.xlu0 %1562
  %1564 = vrot.lane.b32.xlu0 %v358, 16
  %v1565 = vpop.permute.xlu0 %1564
  %1566 = vrot.lane.b32.xlu0 %v359, 16
  %v1567 = vpop.permute.xlu0 %1566
  %1568 = vrot.lane.b32.xlu0 %v360, 16
  %v1569 = vpop.permute.xlu0 %1568
  %1570 = vrot.lane.b32.xlu0 %v361, 16
  %v1571 = vpop.permute.xlu0 %1570
  %1572 = vrot.lane.b32.xlu0 %v362, 16
  %v1573 = vpop.permute.xlu0 %1572
  %1574 = vrot.lane.b32.xlu0 %v363, 16
  %v1575 = vpop.permute.xlu0 %1574
  %1576 = vrot.lane.b32.xlu0 %v364, 16
  %v1577 = vpop.permute.xlu0 %1576
  %1578 = vrot.lane.b32.xlu0 %v365, 16
  %v1579 = vpop.permute.xlu0 %1578
  %1580 = vrot.lane.b32.xlu0 %v366, 16
  %v1581 = vpop.permute.xlu0 %1580
  %1582 = vrot.lane.b32.xlu0 %v367, 16
  %v1583 = vpop.permute.xlu0 %1582
  %1584 = vrot.lane.b32.xlu0 %v368, 16
  %v1585 = vpop.permute.xlu0 %1584
  %1714 = vrot.lane.b32.xlu0 %v369, 20
  %v1715 = vpop.permute.xlu0 %1714
  %1716 = vrot.lane.b32.xlu0 %v370, 20
  %v1717 = vpop.permute.xlu0 %1716
  %1718 = vrot.lane.b32.xlu0 %v371, 20
  %v1719 = vpop.permute.xlu0 %1718
  %1720 = vrot.lane.b32.xlu0 %v372, 20
  %v1721 = vpop.permute.xlu0 %1720
  %1722 = vrot.lane.b32.xlu0 %v373, 20
  %v1723 = vpop.permute.xlu0 %1722
  %1724 = vrot.lane.b32.xlu0 %v374, 20
  %v1725 = vpop.permute.xlu0 %1724
  %1726 = vrot.lane.b32.xlu0 %v375, 20
  %v1727 = vpop.permute.xlu0 %1726
  %1728 = vrot.lane.b32.xlu0 %v376, 20
  %v1729 = vpop.permute.xlu0 %1728
  %1730 = vrot.lane.b32.xlu0 %v377, 20
  %v1731 = vpop.permute.xlu0 %1730
  %1732 = vrot.lane.b32.xlu0 %v378, 20
  %v1733 = vpop.permute.xlu0 %1732
  %1734 = vrot.lane.b32.xlu0 %v379, 20
  %v1735 = vpop.permute.xlu0 %1734
  %1736 = vrot.lane.b32.xlu0 %v380, 20
  %v1737 = vpop.permute.xlu0 %1736
  %1738 = vrot.lane.b32.xlu0 %v381, 20
  %v1739 = vpop.permute.xlu0 %1738
  %1740 = vrot.lane.b32.xlu0 %v382, 20
  %v1741 = vpop.permute.xlu0 %1740
  %1742 = vrot.lane.b32.xlu0 %v383, 20
  %v1743 = vpop.permute.xlu0 %1742
  %1744 = vrot.lane.b32.xlu0 %v384, 20
  %v1745 = vpop.permute.xlu0 %1744
  %1746 = vrot.lane.b32.xlu0 %v385, 20
  %v1747 = vpop.permute.xlu0 %1746
  %1748 = vrot.lane.b32.xlu0 %v386, 20
  %v1749 = vpop.permute.xlu0 %1748
  %1750 = vrot.lane.b32.xlu0 %v387, 20
  %v1751 = vpop.permute.xlu0 %1750
  %1752 = vrot.lane.b32.xlu0 %v388, 20
  %v1753 = vpop.permute.xlu0 %1752
  %1754 = vrot.lane.b32.xlu0 %v389, 20
  %v1755 = vpop.permute.xlu0 %1754
  %1756 = vrot.lane.b32.xlu0 %v390, 20
  %v1757 = vpop.permute.xlu0 %1756
  %1758 = vrot.lane.b32.xlu0 %v391, 20
  %v1759 = vpop.permute.xlu0 %1758
  %1760 = vrot.lane.b32.xlu0 %v392, 20
  %v1761 = vpop.permute.xlu0 %1760
  %1762 = vrot.lane.b32.xlu0 %v393, 20
  %v1763 = vpop.permute.xlu0 %1762
  %1764 = vrot.lane.b32.xlu0 %v394, 20
  %v1765 = vpop.permute.xlu0 %1764
  %1766 = vrot.lane.b32.xlu0 %v395, 20
  %v1767 = vpop.permute.xlu0 %1766
  %1768 = vrot.lane.b32.xlu0 %v396, 20
  %v1769 = vpop.permute.xlu0 %1768
  %1770 = vrot.lane.b32.xlu0 %v397, 20
  %v1771 = vpop.permute.xlu0 %1770
  %1772 = vrot.lane.b32.xlu0 %v398, 20
  %v1773 = vpop.permute.xlu0 %1772
  %1774 = vrot.lane.b32.xlu0 %v399, 20
  %v1775 = vpop.permute.xlu0 %1774
  %1776 = vrot.lane.b32.xlu0 %v400, 20
  %v1777 = vpop.permute.xlu0 %1776
  %1778 = vrot.lane.b32.xlu0 %v401, 20
  %v1779 = vpop.permute.xlu0 %1778
  %1780 = vrot.lane.b32.xlu0 %v402, 20
  %v1781 = vpop.permute.xlu0 %1780
  %1782 = vrot.lane.b32.xlu0 %v403, 20
  %v1783 = vpop.permute.xlu0 %1782
  %1784 = vrot.lane.b32.xlu0 %v404, 20
  %v1785 = vpop.permute.xlu0 %1784
  %1786 = vrot.lane.b32.xlu0 %v405, 20
  %v1787 = vpop.permute.xlu0 %1786
  %1788 = vrot.lane.b32.xlu0 %v406, 20
  %v1789 = vpop.permute.xlu0 %1788
  %1790 = vrot.lane.b32.xlu0 %v407, 20
  %v1791 = vpop.permute.xlu0 %1790
  %1792 = vrot.lane.b32.xlu0 %v408, 20
  %v1793 = vpop.permute.xlu0 %1792
  %1794 = vrot.lane.b32.xlu0 %v409, 20
  %v1795 = vpop.permute.xlu0 %1794
  %1796 = vrot.lane.b32.xlu0 %v410, 20
  %v1797 = vpop.permute.xlu0 %1796
  %1798 = vrot.lane.b32.xlu0 %v411, 20
  %v1799 = vpop.permute.xlu0 %1798
  %1800 = vrot.lane.b32.xlu0 %v412, 20
  %v1801 = vpop.permute.xlu0 %1800
  %1802 = vrot.lane.b32.xlu0 %v413, 20
  %v1803 = vpop.permute.xlu0 %1802
  %1804 = vrot.lane.b32.xlu0 %v414, 20
  %v1805 = vpop.permute.xlu0 %1804
  %1806 = vrot.lane.b32.xlu0 %v415, 20
  %v1807 = vpop.permute.xlu0 %1806
  %1808 = vrot.lane.b32.xlu0 %v416, 20
  %v1809 = vpop.permute.xlu0 %1808
  %1810 = vrot.lane.b32.xlu0 %v417, 20
  %v1811 = vpop.permute.xlu0 %1810
  %1812 = vrot.lane.b32.xlu0 %v418, 20
  %v1813 = vpop.permute.xlu0 %1812
  %1814 = vrot.lane.b32.xlu0 %v419, 20
  %v1815 = vpop.permute.xlu0 %1814
  %1816 = vrot.lane.b32.xlu0 %v420, 20
  %v1817 = vpop.permute.xlu0 %1816
  %1818 = vrot.lane.b32.xlu0 %v421, 20
  %v1819 = vpop.permute.xlu0 %1818
  %1820 = vrot.lane.b32.xlu0 %v422, 20
  %v1821 = vpop.permute.xlu0 %1820
  %1822 = vrot.lane.b32.xlu0 %v423, 20
  %v1823 = vpop.permute.xlu0 %1822
  %1824 = vrot.lane.b32.xlu0 %v424, 20
  %v1825 = vpop.permute.xlu0 %1824
  %1826 = vrot.lane.b32.xlu0 %v425, 20
  %v1827 = vpop.permute.xlu0 %1826
  %1828 = vrot.lane.b32.xlu0 %v426, 20
  %v1829 = vpop.permute.xlu0 %1828
  %1830 = vrot.lane.b32.xlu0 %v427, 20
  %v1831 = vpop.permute.xlu0 %1830
  %1832 = vrot.lane.b32.xlu0 %v428, 20
  %v1833 = vpop.permute.xlu0 %1832
  %1834 = vrot.lane.b32.xlu0 %v429, 20
  %v1835 = vpop.permute.xlu0 %1834
  %1836 = vrot.lane.b32.xlu0 %v430, 20
  %v1837 = vpop.permute.xlu0 %1836
  %1838 = vrot.lane.b32.xlu0 %v431, 20
  %v1839 = vpop.permute.xlu0 %1838
  %1840 = vrot.lane.b32.xlu0 %v432, 20
  %v1841 = vpop.permute.xlu0 %1840
  %1970 = vrot.lane.b32.xlu0 %v434, 24
  %v1971 = vpop.permute.xlu0 %1970
  %1972 = vrot.lane.b32.xlu0 %v435, 24
  %v1973 = vpop.permute.xlu0 %1972
  %1974 = vrot.lane.b32.xlu0 %v436, 24
  %v1975 = vpop.permute.xlu0 %1974
  %1976 = vrot.lane.b32.xlu0 %v437, 24
  %v1977 = vpop.permute.xlu0 %1976
  %1978 = vrot.lane.b32.xlu0 %v438, 24
  %v1979 = vpop.permute.xlu0 %1978
  %1980 = vrot.lane.b32.xlu0 %v439, 24
  %v1981 = vpop.permute.xlu0 %1980
  %1982 = vrot.lane.b32.xlu0 %v440, 24
  %v1983 = vpop.permute.xlu0 %1982
  %1984 = vrot.lane.b32.xlu0 %v441, 24
  %v1985 = vpop.permute.xlu0 %1984
  %1986 = vrot.lane.b32.xlu0 %v442, 24
  %v1987 = vpop.permute.xlu0 %1986
  %1988 = vrot.lane.b32.xlu0 %v443, 24
  %v1989 = vpop.permute.xlu0 %1988
  %1990 = vrot.lane.b32.xlu0 %v444, 24
  %v1991 = vpop.permute.xlu0 %1990
  %1992 = vrot.lane.b32.xlu0 %v445, 24
  %v1993 = vpop.permute.xlu0 %1992
  %1994 = vrot.lane.b32.xlu0 %v446, 24
  %v1995 = vpop.permute.xlu0 %1994
  %1996 = vrot.lane.b32.xlu0 %v447, 24
  %v1997 = vpop.permute.xlu0 %1996
  %1998 = vrot.lane.b32.xlu0 %v448, 24
  %v1999 = vpop.permute.xlu0 %1998
  %2000 = vrot.lane.b32.xlu0 %v449, 24
  %v2001 = vpop.permute.xlu0 %2000
  %2002 = vrot.lane.b32.xlu0 %v450, 24
  %v2003 = vpop.permute.xlu0 %2002
  %2004 = vrot.lane.b32.xlu0 %v451, 24
  %v2005 = vpop.permute.xlu0 %2004
  %2006 = vrot.lane.b32.xlu0 %v452, 24
  %v2007 = vpop.permute.xlu0 %2006
  %2008 = vrot.lane.b32.xlu0 %v453, 24
  %v2009 = vpop.permute.xlu0 %2008
  %2010 = vrot.lane.b32.xlu0 %v454, 24
  %v2011 = vpop.permute.xlu0 %2010
  %2012 = vrot.lane.b32.xlu0 %v455, 24
  %v2013 = vpop.permute.xlu0 %2012
  %2014 = vrot.lane.b32.xlu0 %v456, 24
  %v2015 = vpop.permute.xlu0 %2014
  %2016 = vrot.lane.b32.xlu0 %v457, 24
  %v2017 = vpop.permute.xlu0 %2016
  %2018 = vrot.lane.b32.xlu0 %v458, 24
  %v2019 = vpop.permute.xlu0 %2018
  %2020 = vrot.lane.b32.xlu0 %v459, 24
  %v2021 = vpop.permute.xlu0 %2020
  %2022 = vrot.lane.b32.xlu0 %v460, 24
  %v2023 = vpop.permute.xlu0 %2022
  %2024 = vrot.lane.b32.xlu0 %v461, 24
  %v2025 = vpop.permute.xlu0 %2024
  %2026 = vrot.lane.b32.xlu0 %v462, 24
  %v2027 = vpop.permute.xlu0 %2026
  %2028 = vrot.lane.b32.xlu0 %v463, 24
  %v2029 = vpop.permute.xlu0 %2028
  %2030 = vrot.lane.b32.xlu0 %v464, 24
  %v2031 = vpop.permute.xlu0 %2030
  %2032 = vrot.lane.b32.xlu0 %v465, 24
  %v2033 = vpop.permute.xlu0 %2032
  %2034 = vrot.lane.b32.xlu0 %v466, 24
  %v2035 = vpop.permute.xlu0 %2034
  %2036 = vrot.lane.b32.xlu0 %v467, 24
  %v2037 = vpop.permute.xlu0 %2036
  %2038 = vrot.lane.b32.xlu0 %v468, 24
  %v2039 = vpop.permute.xlu0 %2038
  %2040 = vrot.lane.b32.xlu0 %v469, 24
  %v2041 = vpop.permute.xlu0 %2040
  %2042 = vrot.lane.b32.xlu0 %v470, 24
  %v2043 = vpop.permute.xlu0 %2042
  %2044 = vrot.lane.b32.xlu0 %v471, 24
  %v2045 = vpop.permute.xlu0 %2044
  %2046 = vrot.lane.b32.xlu0 %v472, 24
  %v2047 = vpop.permute.xlu0 %2046
  %2048 = vrot.lane.b32.xlu0 %v473, 24
  %v2049 = vpop.permute.xlu0 %2048
  %2050 = vrot.lane.b32.xlu0 %v474, 24
  %v2051 = vpop.permute.xlu0 %2050
  %2052 = vrot.lane.b32.xlu0 %v475, 24
  %v2053 = vpop.permute.xlu0 %2052
  %2054 = vrot.lane.b32.xlu0 %v476, 24
  %v2055 = vpop.permute.xlu0 %2054
  %2056 = vrot.lane.b32.xlu0 %v477, 24
  %v2057 = vpop.permute.xlu0 %2056
  %2058 = vrot.lane.b32.xlu0 %v478, 24
  %v2059 = vpop.permute.xlu0 %2058
  %2060 = vrot.lane.b32.xlu0 %v479, 24
  %v2061 = vpop.permute.xlu0 %2060
  %2062 = vrot.lane.b32.xlu0 %v480, 24
  %v2063 = vpop.permute.xlu0 %2062
  %2064 = vrot.lane.b32.xlu0 %v481, 24
  %v2065 = vpop.permute.xlu0 %2064
  %2066 = vrot.lane.b32.xlu0 %v482, 24
  %v2067 = vpop.permute.xlu0 %2066
  %2068 = vrot.lane.b32.xlu0 %v483, 24
  %v2069 = vpop.permute.xlu0 %2068
  %2070 = vrot.lane.b32.xlu0 %v484, 24
  %v2071 = vpop.permute.xlu0 %2070
  %2072 = vrot.lane.b32.xlu0 %v485, 24
  %v2073 = vpop.permute.xlu0 %2072
  %2074 = vrot.lane.b32.xlu0 %v486, 24
  %v2075 = vpop.permute.xlu0 %2074
  %2076 = vrot.lane.b32.xlu0 %v487, 24
  %v2077 = vpop.permute.xlu0 %2076
  %2078 = vrot.lane.b32.xlu0 %v488, 24
  %v2079 = vpop.permute.xlu0 %2078
  %2080 = vrot.lane.b32.xlu0 %v489, 24
  %v2081 = vpop.permute.xlu0 %2080
  %2082 = vrot.lane.b32.xlu0 %v490, 24
  %v2083 = vpop.permute.xlu0 %2082
  %2084 = vrot.lane.b32.xlu0 %v491, 24
  %v2085 = vpop.permute.xlu0 %2084
  %2086 = vrot.lane.b32.xlu0 %v492, 24
  %v2087 = vpop.permute.xlu0 %2086
  %2088 = vrot.lane.b32.xlu0 %v493, 24
  %v2089 = vpop.permute.xlu0 %2088
  %2090 = vrot.lane.b32.xlu0 %v494, 24
  %v2091 = vpop.permute.xlu0 %2090
  %2092 = vrot.lane.b32.xlu0 %v495, 24
  %v2093 = vpop.permute.xlu0 %2092
  %2094 = vrot.lane.b32.xlu0 %v496, 24
  %v2095 = vpop.permute.xlu0 %2094
  %2096 = vrot.lane.b32.xlu0 %v497, 24
  %v2097 = vpop.permute.xlu0 %2096
  %2226 = vrot.lane.b32.xlu0 %v498, 28
  %v2227 = vpop.permute.xlu0 %2226
  %2228 = vrot.lane.b32.xlu0 %v499, 28
  %v2229 = vpop.permute.xlu0 %2228
  %2230 = vrot.lane.b32.xlu0 %v500, 28
  %v2231 = vpop.permute.xlu0 %2230
  %2232 = vrot.lane.b32.xlu0 %v501, 28
  %v2233 = vpop.permute.xlu0 %2232
  %2234 = vrot.lane.b32.xlu0 %v502, 28
  %v2235 = vpop.permute.xlu0 %2234
  %2236 = vrot.lane.b32.xlu0 %v503, 28
  %v2237 = vpop.permute.xlu0 %2236
  %2238 = vrot.lane.b32.xlu0 %v504, 28
  %v2239 = vpop.permute.xlu0 %2238
  %2240 = vrot.lane.b32.xlu0 %v505, 28
  %v2241 = vpop.permute.xlu0 %2240
  %2242 = vrot.lane.b32.xlu0 %v506, 28
  %v2243 = vpop.permute.xlu0 %2242
  %2244 = vrot.lane.b32.xlu0 %v507, 28
  %v2245 = vpop.permute.xlu0 %2244
  %2246 = vrot.lane.b32.xlu0 %v508, 28
  %v2247 = vpop.permute.xlu0 %2246
  %2248 = vrot.lane.b32.xlu0 %v509, 28
  %v2249 = vpop.permute.xlu0 %2248
  %2250 = vrot.lane.b32.xlu0 %v510, 28
  %v2251 = vpop.permute.xlu0 %2250
  %2252 = vrot.lane.b32.xlu0 %v511, 28
  %v2253 = vpop.permute.xlu0 %2252
  %2254 = vrot.lane.b32.xlu0 %v512, 28
  %v2255 = vpop.permute.xlu0 %2254
  %2256 = vrot.lane.b32.xlu0 %v513, 28
  %v2257 = vpop.permute.xlu0 %2256
  %2258 = vrot.lane.b32.xlu0 %v514, 28
  %v2259 = vpop.permute.xlu0 %2258
  %2260 = vrot.lane.b32.xlu0 %v515, 28
  %v2261 = vpop.permute.xlu0 %2260
  %2262 = vrot.lane.b32.xlu0 %v516, 28
  %v2263 = vpop.permute.xlu0 %2262
  %2264 = vrot.lane.b32.xlu0 %v517, 28
  %v2265 = vpop.permute.xlu0 %2264
  %2266 = vrot.lane.b32.xlu0 %v518, 28
  %v2267 = vpop.permute.xlu0 %2266
  %2268 = vrot.lane.b32.xlu0 %v519, 28
  %v2269 = vpop.permute.xlu0 %2268
  %2270 = vrot.lane.b32.xlu0 %v520, 28
  %v2271 = vpop.permute.xlu0 %2270
  %2272 = vrot.lane.b32.xlu0 %v521, 28
  %v2273 = vpop.permute.xlu0 %2272
  %2274 = vrot.lane.b32.xlu0 %v522, 28
  %v2275 = vpop.permute.xlu0 %2274
  %2276 = vrot.lane.b32.xlu0 %v523, 28
  %v2277 = vpop.permute.xlu0 %2276
  %2278 = vrot.lane.b32.xlu0 %v524, 28
  %v2279 = vpop.permute.xlu0 %2278
  %2280 = vrot.lane.b32.xlu0 %v525, 28
  %v2281 = vpop.permute.xlu0 %2280
  %2282 = vrot.lane.b32.xlu0 %v526, 28
  %v2283 = vpop.permute.xlu0 %2282
  %2284 = vrot.lane.b32.xlu0 %v527, 28
  %v2285 = vpop.permute.xlu0 %2284
  %2286 = vrot.lane.b32.xlu0 %v528, 28
  %v2287 = vpop.permute.xlu0 %2286
  %2288 = vrot.lane.b32.xlu0 %v529, 28
  %v2289 = vpop.permute.xlu0 %2288
  %2290 = vrot.lane.b32.xlu0 %v530, 28
  %v2291 = vpop.permute.xlu0 %2290
  %2292 = vrot.lane.b32.xlu0 %v531, 28
  %v2293 = vpop.permute.xlu0 %2292
  %2294 = vrot.lane.b32.xlu0 %v532, 28
  %v2295 = vpop.permute.xlu0 %2294
  %2296 = vrot.lane.b32.xlu0 %v533, 28
  %v2297 = vpop.permute.xlu0 %2296
  %2298 = vrot.lane.b32.xlu0 %v534, 28
  %v2299 = vpop.permute.xlu0 %2298
  %2300 = vrot.lane.b32.xlu0 %v535, 28
  %v2301 = vpop.permute.xlu0 %2300
  %2302 = vrot.lane.b32.xlu0 %v536, 28
  %v2303 = vpop.permute.xlu0 %2302
  %2304 = vrot.lane.b32.xlu0 %v537, 28
  %v2305 = vpop.permute.xlu0 %2304
  %2306 = vrot.lane.b32.xlu0 %v538, 28
  %v2307 = vpop.permute.xlu0 %2306
  %2308 = vrot.lane.b32.xlu0 %v539, 28
  %v2309 = vpop.permute.xlu0 %2308
  %2310 = vrot.lane.b32.xlu0 %v540, 28
  %v2311 = vpop.permute.xlu0 %2310
  %2312 = vrot.lane.b32.xlu0 %v541, 28
  %v2313 = vpop.permute.xlu0 %2312
  %2314 = vrot.lane.b32.xlu0 %v542, 28
  %v2315 = vpop.permute.xlu0 %2314
  %2316 = vrot.lane.b32.xlu0 %v543, 28
  %v2317 = vpop.permute.xlu0 %2316
  %2318 = vrot.lane.b32.xlu0 %v544, 28
  %v2319 = vpop.permute.xlu0 %2318
  %2320 = vrot.lane.b32.xlu0 %v545, 28
  %v2321 = vpop.permute.xlu0 %2320
  %2322 = vrot.lane.b32.xlu0 %v546, 28
  %v2323 = vpop.permute.xlu0 %2322
  %2324 = vrot.lane.b32.xlu0 %v547, 28
  %v2325 = vpop.permute.xlu0 %2324
  %2326 = vrot.lane.b32.xlu0 %v548, 28
  %v2327 = vpop.permute.xlu0 %2326
  %2328 = vrot.lane.b32.xlu0 %v549, 28
  %v2329 = vpop.permute.xlu0 %2328
  %2330 = vrot.lane.b32.xlu0 %v550, 28
  %v2331 = vpop.permute.xlu0 %2330
  %2332 = vrot.lane.b32.xlu0 %v551, 28
  %v2333 = vpop.permute.xlu0 %2332
  %2334 = vrot.lane.b32.xlu0 %v552, 28
  %v2335 = vpop.permute.xlu0 %2334
  %2336 = vrot.lane.b32.xlu0 %v553, 28
  %v2337 = vpop.permute.xlu0 %2336
  %2338 = vrot.lane.b32.xlu0 %v554, 28
  %v2339 = vpop.permute.xlu0 %2338
  %2340 = vrot.lane.b32.xlu0 %v555, 28
  %v2341 = vpop.permute.xlu0 %2340
  %2342 = vrot.lane.b32.xlu0 %v556, 28
  %v2343 = vpop.permute.xlu0 %2342
  %2344 = vrot.lane.b32.xlu0 %v557, 28
  %v2345 = vpop.permute.xlu0 %2344
  %2346 = vrot.lane.b32.xlu0 %v558, 28
  %v2347 = vpop.permute.xlu0 %2346
  %2348 = vrot.lane.b32.xlu0 %v559, 28
  %v2349 = vpop.permute.xlu0 %2348
  %2350 = vrot.lane.b32.xlu0 %v560, 28
  %v2351 = vpop.permute.xlu0 %2350
  %2352 = vrot.lane.b32.xlu0 %v561, 28
  %v2353 = vpop.permute.xlu0 %2352
  %2482 = vrot.lane.b32.xlu0 %v562, 32
  %v2483 = vpop.permute.xlu0 %2482
  %2484 = vrot.lane.b32.xlu0 %v563, 32
  %v2485 = vpop.permute.xlu0 %2484
  %2486 = vrot.lane.b32.xlu0 %v564, 32
  %v2487 = vpop.permute.xlu0 %2486
  %2488 = vrot.lane.b32.xlu0 %v565, 32
  %v2489 = vpop.permute.xlu0 %2488
  %2490 = vrot.lane.b32.xlu0 %v566, 32
  %v2491 = vpop.permute.xlu0 %2490
  %2492 = vrot.lane.b32.xlu0 %v567, 32
  %v2493 = vpop.permute.xlu0 %2492
  %2494 = vrot.lane.b32.xlu0 %v568, 32
  %v2495 = vpop.permute.xlu0 %2494
  %2496 = vrot.lane.b32.xlu0 %v569, 32
  %v2497 = vpop.permute.xlu0 %2496
  %2498 = vrot.lane.b32.xlu0 %v570, 32
  %v2499 = vpop.permute.xlu0 %2498
  %2500 = vrot.lane.b32.xlu0 %v571, 32
  %v2501 = vpop.permute.xlu0 %2500
  %2502 = vrot.lane.b32.xlu0 %v572, 32
  %v2503 = vpop.permute.xlu0 %2502
  %2504 = vrot.lane.b32.xlu0 %v573, 32
  %v2505 = vpop.permute.xlu0 %2504
  %2506 = vrot.lane.b32.xlu0 %v574, 32
  %v2507 = vpop.permute.xlu0 %2506
  %2508 = vrot.lane.b32.xlu0 %v575, 32
  %v2509 = vpop.permute.xlu0 %2508
  %2510 = vrot.lane.b32.xlu0 %v576, 32
  %v2511 = vpop.permute.xlu0 %2510
  %2512 = vrot.lane.b32.xlu0 %v577, 32
  %v2513 = vpop.permute.xlu0 %2512
  %2514 = vrot.lane.b32.xlu0 %v578, 32
  %v2515 = vpop.permute.xlu0 %2514
  %2516 = vrot.lane.b32.xlu0 %v579, 32
  %v2517 = vpop.permute.xlu0 %2516
  %2518 = vrot.lane.b32.xlu0 %v580, 32
  %v2519 = vpop.permute.xlu0 %2518
  %2520 = vrot.lane.b32.xlu0 %v581, 32
  %v2521 = vpop.permute.xlu0 %2520
  %2522 = vrot.lane.b32.xlu0 %v582, 32
  %v2523 = vpop.permute.xlu0 %2522
  %2524 = vrot.lane.b32.xlu0 %v583, 32
  %v2525 = vpop.permute.xlu0 %2524
  %2526 = vrot.lane.b32.xlu0 %v584, 32
  %v2527 = vpop.permute.xlu0 %2526
  %2528 = vrot.lane.b32.xlu0 %v585, 32
  %v2529 = vpop.permute.xlu0 %2528
  %2530 = vrot.lane.b32.xlu0 %v586, 32
  %v2531 = vpop.permute.xlu0 %2530
  %2532 = vrot.lane.b32.xlu0 %v587, 32
  %v2533 = vpop.permute.xlu0 %2532
  %2534 = vrot.lane.b32.xlu0 %v588, 32
  %v2535 = vpop.permute.xlu0 %2534
  %2536 = vrot.lane.b32.xlu0 %v589, 32
  %v2537 = vpop.permute.xlu0 %2536
  %2538 = vrot.lane.b32.xlu0 %v590, 32
  %v2539 = vpop.permute.xlu0 %2538
  %2540 = vrot.lane.b32.xlu0 %v591, 32
  %v2541 = vpop.permute.xlu0 %2540
  %2542 = vrot.lane.b32.xlu0 %v592, 32
  %v2543 = vpop.permute.xlu0 %2542
  %2544 = vrot.lane.b32.xlu0 %v593, 32
  %v2545 = vpop.permute.xlu0 %2544
  %2546 = vrot.lane.b32.xlu0 %v594, 32
  %v2547 = vpop.permute.xlu0 %2546
  %2548 = vrot.lane.b32.xlu0 %v595, 32
  %v2549 = vpop.permute.xlu0 %2548
  %2550 = vrot.lane.b32.xlu0 %v596, 32
  %v2551 = vpop.permute.xlu0 %2550
  %2552 = vrot.lane.b32.xlu0 %v597, 32
  %v2553 = vpop.permute.xlu0 %2552
  %2554 = vrot.lane.b32.xlu0 %v598, 32
  %v2555 = vpop.permute.xlu0 %2554
  %2556 = vrot.lane.b32.xlu0 %v599, 32
  %v2557 = vpop.permute.xlu0 %2556
  %2558 = vrot.lane.b32.xlu0 %v600, 32
  %v2559 = vpop.permute.xlu0 %2558
  %2560 = vrot.lane.b32.xlu0 %v601, 32
  %v2561 = vpop.permute.xlu0 %2560
  %2562 = vrot.lane.b32.xlu0 %v602, 32
  %v2563 = vpop.permute.xlu0 %2562
  %2564 = vrot.lane.b32.xlu0 %v603, 32
  %v2565 = vpop.permute.xlu0 %2564
  %2566 = vrot.lane.b32.xlu0 %v604, 32
  %v2567 = vpop.permute.xlu0 %2566
  %2568 = vrot.lane.b32.xlu0 %v605, 32
  %v2569 = vpop.permute.xlu0 %2568
  %2570 = vrot.lane.b32.xlu0 %v606, 32
  %v2571 = vpop.permute.xlu0 %2570
  %2572 = vrot.lane.b32.xlu0 %v607, 32
  %v2573 = vpop.permute.xlu0 %2572
  %2574 = vrot.lane.b32.xlu0 %v608, 32
  %v2575 = vpop.permute.xlu0 %2574
  %2576 = vrot.lane.b32.xlu0 %v609, 32
  %v2577 = vpop.permute.xlu0 %2576
  %2578 = vrot.lane.b32.xlu0 %v610, 32
  %v2579 = vpop.permute.xlu0 %2578
  %2580 = vrot.lane.b32.xlu0 %v611, 32
  %v2581 = vpop.permute.xlu0 %2580
  %2582 = vrot.lane.b32.xlu0 %v612, 32
  %v2583 = vpop.permute.xlu0 %2582
  %2584 = vrot.lane.b32.xlu0 %v613, 32
  %v2585 = vpop.permute.xlu0 %2584
  %2586 = vrot.lane.b32.xlu0 %v614, 32
  %v2587 = vpop.permute.xlu0 %2586
  %2588 = vrot.lane.b32.xlu0 %v615, 32
  %v2589 = vpop.permute.xlu0 %2588
  %2590 = vrot.lane.b32.xlu0 %v616, 32
  %v2591 = vpop.permute.xlu0 %2590
  %2592 = vrot.lane.b32.xlu0 %v617, 32
  %v2593 = vpop.permute.xlu0 %2592
  %2594 = vrot.lane.b32.xlu0 %v618, 32
  %v2595 = vpop.permute.xlu0 %2594
  %2596 = vrot.lane.b32.xlu0 %v619, 32
  %v2597 = vpop.permute.xlu0 %2596
  %2598 = vrot.lane.b32.xlu0 %v620, 32
  %v2599 = vpop.permute.xlu0 %2598
  %2600 = vrot.lane.b32.xlu0 %v621, 32
  %v2601 = vpop.permute.xlu0 %2600
  %2602 = vrot.lane.b32.xlu0 %v622, 32
  %v2603 = vpop.permute.xlu0 %2602
  %2604 = vrot.lane.b32.xlu0 %v623, 32
  %v2605 = vpop.permute.xlu0 %2604
  %2606 = vrot.lane.b32.xlu0 %v624, 32
  %v2607 = vpop.permute.xlu0 %2606
  %2608 = vrot.lane.b32.xlu0 %v625, 32
  %v2609 = vpop.permute.xlu0 %2608
  %vm2674 = vcmask 31744
  %v2675 = vsel %vm2674, %v48, %v691
  %v2676 = vsel %vm2674, %v49, %v693
  %v2677 = vsel %vm2674, %v50, %v695
  %v2678 = vsel %vm2674, %v51, %v697
  %v2679 = vsel %vm2674, %v52, %v699
  %v2680 = vsel %vm2674, %v53, %v701
  %v2681 = vsel %vm2674, %v54, %v703
  %v2682 = vsel %vm2674, %v55, %v705
  %v2683 = vsel %vm2674, %v56, %v707
  %v2684 = vsel %vm2674, %v57, %v709
  %v2685 = vsel %vm2674, %v58, %v711
  %v2686 = vsel %vm2674, %v59, %v713
  %v2687 = vsel %vm2674, %v60, %v715
  %v2688 = vsel %vm2674, %v61, %v717
  %v2689 = vsel %vm2674, %v62, %v719
  %v2690 = vsel %vm2674, %v63, %v721
  %v2691 = vsel %vm2674, %v64, %v723
  %v2692 = vsel %vm2674, %v65, %v725
  %v2693 = vsel %vm2674, %v66, %v727
  %v2694 = vsel %vm2674, %v67, %v729
  %v2695 = vsel %vm2674, %v68, %v731
  %v2696 = vsel %vm2674, %v69, %v733
  %v2697 = vsel %vm2674, %v70, %v735
  %v2698 = vsel %vm2674, %v71, %v737
  %v2699 = vsel %vm2674, %v72, %v739
  %v2700 = vsel %vm2674, %v73, %v741
  %v2701 = vsel %vm2674, %v74, %v743
  %v2702 = vsel %vm2674, %v75, %v745
  %v2703 = vsel %vm2674, %v76, %v747
  %v2704 = vsel %vm2674, %v77, %v749
  %v2705 = vsel %vm2674, %v78, %v751
  %v2706 = vsel %vm2674, %v79, %v753
  %v2707 = vsel %vm2674, %v80, %v755
  %v2708 = vsel %vm2674, %v81, %v757
  %v2709 = vsel %vm2674, %v82, %v759
  %v2710 = vsel %vm2674, %v83, %v761
  %v2711 = vsel %vm2674, %v84, %v763
  %v2712 = vsel %vm2674, %v85, %v765
  %v2713 = vsel %vm2674, %v86, %v767
  %v2714 = vsel %vm2674, %v87, %v769
  %v2715 = vsel %vm2674, %v88, %v771
  %v2716 = vsel %vm2674, %v89, %v773
  %v2717 = vsel %vm2674, %v90, %v775
  %v2718 = vsel %vm2674, %v91, %v777
  %v2719 = vsel %vm2674, %v92, %v779
  %v2720 = vsel %vm2674, %v93, %v781
  %v2721 = vsel %vm2674, %v94, %v783
  %v2722 = vsel %vm2674, %v95, %v785
  %v2723 = vsel %vm2674, %v96, %v787
  %v2724 = vsel %vm2674, %v97, %v789
  %v2725 = vsel %vm2674, %v98, %v791
  %v2726 = vsel %vm2674, %v99, %v793
  %v2727 = vsel %vm2674, %v100, %v795
  %v2728 = vsel %vm2674, %v101, %v797
  %v2729 = vsel %vm2674, %v102, %v799
  %v2730 = vsel %vm2674, %v103, %v801
  %v2731 = vsel %vm2674, %v104, %v803
  %v2732 = vsel %vm2674, %v105, %v805
  %v2733 = vsel %vm2674, %v106, %v807
  %v2734 = vsel %vm2674, %v107, %v809
  %v2735 = vsel %vm2674, %v108, %v811
  %v2736 = vsel %vm2674, %v109, %v813
  %v2737 = vsel %vm2674, %v110, %v815
  %v2738 = vsel %vm2674, %v111, %v817
  %vm2739 = vcmask 64512
  %v2740 = vsel %vm2739, %v2675, %v947
  %v2741 = vsel %vm2739, %v2676, %v949
  %v2742 = vsel %vm2739, %v2677, %v951
  %v2743 = vsel %vm2739, %v2678, %v953
  %v2744 = vsel %vm2739, %v2679, %v955
  %v2745 = vsel %vm2739, %v2680, %v957
  %v2746 = vsel %vm2739, %v2681, %v959
  %v2747 = vsel %vm2739, %v2682, %v961
  %v2748 = vsel %vm2739, %v2683, %v963
  %v2749 = vsel %vm2739, %v2684, %v965
  %v2750 = vsel %vm2739, %v2685, %v967
  %v2751 = vsel %vm2739, %v2686, %v969
  %v2752 = vsel %vm2739, %v2687, %v971
  %v2753 = vsel %vm2739, %v2688, %v973
  %v2754 = vsel %vm2739, %v2689, %v975
  %v2755 = vsel %vm2739, %v2690, %v977
  %v2756 = vsel %vm2739, %v2691, %v979
  %v2757 = vsel %vm2739, %v2692, %v981
  %v2758 = vsel %vm2739, %v2693, %v983
  %v2759 = vsel %vm2739, %v2694, %v985
  %v2760 = vsel %vm2739, %v2695, %v987
  %v2761 = vsel %vm2739, %v2696, %v989
  %v2762 = vsel %vm2739, %v2697, %v991
  %v2763 = vsel %vm2739, %v2698, %v993
  %v2764 = vsel %vm2739, %v2699, %v995
  %v2765 = vsel %vm2739, %v2700, %v997
  %v2766 = vsel %vm2739, %v2701, %v999
  %v2767 = vsel %vm2739, %v2702, %v1001
  %v2768 = vsel %vm2739, %v2703, %v1003
  %v2769 = vsel %vm2739, %v2704, %v1005
  %v2770 = vsel %vm2739, %v2705, %v1007
  %v2771 = vsel %vm2739, %v2706, %v1009
  %v2772 = vsel %vm2739, %v2707, %v1011
  %v2773 = vsel %vm2739, %v2708, %v1013
  %v2774 = vsel %vm2739, %v2709, %v1015
  %v2775 = vsel %vm2739, %v2710, %v1017
  %v2776 = vsel %vm2739, %v2711, %v1019
  %v2777 = vsel %vm2739, %v2712, %v1021
  %v2778 = vsel %vm2739, %v2713, %v1023
  %v2779 = vsel %vm2739, %v2714, %v1025
  %v2780 = vsel %vm2739, %v2715, %v1027
  %v2781 = vsel %vm2739, %v2716, %v1029
  %v2782 = vsel %vm2739, %v2717, %v1031
  %v2783 = vsel %vm2739, %v2718, %v1033
  %v2784 = vsel %vm2739, %v2719, %v1035
  %v2785 = vsel %vm2739, %v2720, %v1037
  %v2786 = vsel %vm2739, %v2721, %v1039
  %v2787 = vsel %vm2739, %v2722, %v1041
  %v2788 = vsel %vm2739, %v2723, %v1043
  %v2789 = vsel %vm2739, %v2724, %v1045
  %v2790 = vsel %vm2739, %v2725, %v1047
  %v2791 = vsel %vm2739, %v2726, %v1049
  %v2792 = vsel %vm2739, %v2727, %v1051
  %v2793 = vsel %vm2739, %v2728, %v1053
  %v2794 = vsel %vm2739, %v2729, %v1055
  %v2795 = vsel %vm2739, %v2730, %v1057
  %v2796 = vsel %vm2739, %v2731, %v1059
  %v2797 = vsel %vm2739, %v2732, %v1061
  %v2798 = vsel %vm2739, %v2733, %v1063
  %v2799 = vsel %vm2739, %v2734, %v1065
  %v2800 = vsel %vm2739, %v2735, %v1067
  %v2801 = vsel %vm2739, %v2736, %v1069
  %v2802 = vsel %vm2739, %v2737, %v1071
  %v2803 = vsel %vm2739, %v2738, %v1073
  %vm2804 = vcmask 97280
  %v2805 = vsel %vm2804, %v2740, %v1203
  %v2806 = vsel %vm2804, %v2741, %v1205
  %v2807 = vsel %vm2804, %v2742, %v1207
  %v2808 = vsel %vm2804, %v2743, %v1209
  %v2809 = vsel %vm2804, %v2744, %v1211
  %v2810 = vsel %vm2804, %v2745, %v1213
  %v2811 = vsel %vm2804, %v2746, %v1215
  %v2812 = vsel %vm2804, %v2747, %v1217
  %v2813 = vsel %vm2804, %v2748, %v1219
  %v2814 = vsel %vm2804, %v2749, %v1221
  %v2815 = vsel %vm2804, %v2750, %v1223
  %v2816 = vsel %vm2804, %v2751, %v1225
  %v2817 = vsel %vm2804, %v2752, %v1227
  %v2818 = vsel %vm2804, %v2753, %v1229
  %v2819 = vsel %vm2804, %v2754, %v1231
  %v2820 = vsel %vm2804, %v2755, %v1233
  %v2821 = vsel %vm2804, %v2756, %v1235
  %v2822 = vsel %vm2804, %v2757, %v1237
  %v2823 = vsel %vm2804, %v2758, %v1239
  %v2824 = vsel %vm2804, %v2759, %v1241
  %v2825 = vsel %vm2804, %v2760, %v1243
  %v2826 = vsel %vm2804, %v2761, %v1245
  %v2827 = vsel %vm2804, %v2762, %v1247
  %v2828 = vsel %vm2804, %v2763, %v1249
  %v2829 = vsel %vm2804, %v2764, %v1251
  %v2830 = vsel %vm2804, %v2765, %v1253
  %v2831 = vsel %vm2804, %v2766, %v1255
  %v2832 = vsel %vm2804, %v2767, %v1257
  %v2833 = vsel %vm2804, %v2768, %v1259
  %v2834 = vsel %vm2804, %v2769, %v1261
  %v2835 = vsel %vm2804, %v2770, %v1263
  %v2836 = vsel %vm2804, %v2771, %v1265
  %v2837 = vsel %vm2804, %v2772, %v1267
  %v2838 = vsel %vm2804, %v2773, %v1269
  %v2839 = vsel %vm2804, %v2774, %v1271
  %v2840 = vsel %vm2804, %v2775, %v1273
  %v2841 = vsel %vm2804, %v2776, %v1275
  %v2842 = vsel %vm2804, %v2777, %v1277
  %v2843 = vsel %vm2804, %v2778, %v1279
  %v2844 = vsel %vm2804, %v2779, %v1281
  %v2845 = vsel %vm2804, %v2780, %v1283
  %v2846 = vsel %vm2804, %v2781, %v1285
  %v2847 = vsel %vm2804, %v2782, %v1287
  %v2848 = vsel %vm2804, %v2783, %v1289
  %v2849 = vsel %vm2804, %v2784, %v1291
  %v2850 = vsel %vm2804, %v2785, %v1293
  %v2851 = vsel %vm2804, %v2786, %v1295
  %v2852 = vsel %vm2804, %v2787, %v1297
  %v2853 = vsel %vm2804, %v2788, %v1299
  %v2854 = vsel %vm2804, %v2789, %v1301
  %v2855 = vsel %vm2804, %v2790, %v1303
  %v2856 = vsel %vm2804, %v2791, %v1305
  %v2857 = vsel %vm2804, %v2792, %v1307
  %v2858 = vsel %vm2804, %v2793, %v1309
  %v2859 = vsel %vm2804, %v2794, %v1311
  %v2860 = vsel %vm2804, %v2795, %v1313
  %v2861 = vsel %vm2804, %v2796, %v1315
  %v2862 = vsel %vm2804, %v2797, %v1317
  %v2863 = vsel %vm2804, %v2798, %v1319
  %v2864 = vsel %vm2804, %v2799, %v1321
  %v2865 = vsel %vm2804, %v2800, %v1323
  %v2866 = vsel %vm2804, %v2801, %v1325
  %v2867 = vsel %vm2804, %v2802, %v1327
  %v2868 = vsel %vm2804, %v2803, %v1329
  %vm2869 = vcmask 130048
  %v2870 = vsel %vm2869, %v2805, %v1459
  %v2871 = vsel %vm2869, %v2806, %v1461
  %v2872 = vsel %vm2869, %v2807, %v1463
  %v2873 = vsel %vm2869, %v2808, %v1465
  %v2874 = vsel %vm2869, %v2809, %v1467
  %v2875 = vsel %vm2869, %v2810, %v1469
  %v2876 = vsel %vm2869, %v2811, %v1471
  %v2877 = vsel %vm2869, %v2812, %v1473
  %v2878 = vsel %vm2869, %v2813, %v1475
  %v2879 = vsel %vm2869, %v2814, %v1477
  %v2880 = vsel %vm2869, %v2815, %v1479
  %v2881 = vsel %vm2869, %v2816, %v1481
  %v2882 = vsel %vm2869, %v2817, %v1483
  %v2883 = vsel %vm2869, %v2818, %v1485
  %v2884 = vsel %vm2869, %v2819, %v1487
  %v2885 = vsel %vm2869, %v2820, %v1489
  %v2886 = vsel %vm2869, %v2821, %v1491
  %v2887 = vsel %vm2869, %v2822, %v1493
  %v2888 = vsel %vm2869, %v2823, %v1495
  %v2889 = vsel %vm2869, %v2824, %v1497
  %v2890 = vsel %vm2869, %v2825, %v1499
  %v2891 = vsel %vm2869, %v2826, %v1501
  %v2892 = vsel %vm2869, %v2827, %v1503
  %v2893 = vsel %vm2869, %v2828, %v1505
  %v2894 = vsel %vm2869, %v2829, %v1507
  %v2895 = vsel %vm2869, %v2830, %v1509
  %v2896 = vsel %vm2869, %v2831, %v1511
  %v2897 = vsel %vm2869, %v2832, %v1513
  %v2898 = vsel %vm2869, %v2833, %v1515
  %v2899 = vsel %vm2869, %v2834, %v1517
  %v2900 = vsel %vm2869, %v2835, %v1519
  %v2901 = vsel %vm2869, %v2836, %v1521
  %v2902 = vsel %vm2869, %v2837, %v1523
  %v2903 = vsel %vm2869, %v2838, %v1525
  %v2904 = vsel %vm2869, %v2839, %v1527
  %v2905 = vsel %vm2869, %v2840, %v1529
  %v2906 = vsel %vm2869, %v2841, %v1531
  %v2907 = vsel %vm2869, %v2842, %v1533
  %v2908 = vsel %vm2869, %v2843, %v1535
  %v2909 = vsel %vm2869, %v2844, %v1537
  %v2910 = vsel %vm2869, %v2845, %v1539
  %v2911 = vsel %vm2869, %v2846, %v1541
  %v2912 = vsel %vm2869, %v2847, %v1543
  %v2913 = vsel %vm2869, %v2848, %v1545
  %v2914 = vsel %vm2869, %v2849, %v1547
  %v2915 = vsel %vm2869, %v2850, %v1549
  %v2916 = vsel %vm2869, %v2851, %v1551
  %v2917 = vsel %vm2869, %v2852, %v1553
  %v2918 = vsel %vm2869, %v2853, %v1555
  %v2919 = vsel %vm2869, %v2854, %v1557
  %v2920 = vsel %vm2869, %v2855, %v1559
  %v2921 = vsel %vm2869, %v2856, %v1561
  %v2922 = vsel %vm2869, %v2857, %v1563
  %v2923 = vsel %vm2869, %v2858, %v1565
  %v2924 = vsel %vm2869, %v2859, %v1567
  %v2925 = vsel %vm2869, %v2860, %v1569
  %v2926 = vsel %vm2869, %v2861, %v1571
  %v2927 = vsel %vm2869, %v2862, %v1573
  %v2928 = vsel %vm2869, %v2863, %v1575
  %v2929 = vsel %vm2869, %v2864, %v1577
  %v2930 = vsel %vm2869, %v2865, %v1579
  %v2931 = vsel %vm2869, %v2866, %v1581
  %v2932 = vsel %vm2869, %v2867, %v1583
  %v2933 = vsel %vm2869, %v2868, %v1585
  %vm2934 = vcmask 162816
  %v2935 = vsel %vm2934, %v2870, %v1715
  %v2936 = vsel %vm2934, %v2871, %v1717
  %v2937 = vsel %vm2934, %v2872, %v1719
  %v2938 = vsel %vm2934, %v2873, %v1721
  %v2939 = vsel %vm2934, %v2874, %v1723
  %v2940 = vsel %vm2934, %v2875, %v1725
  %v2941 = vsel %vm2934, %v2876, %v1727
  %v2942 = vsel %vm2934, %v2877, %v1729
  %v2943 = vsel %vm2934, %v2878, %v1731
  %v2944 = vsel %vm2934, %v2879, %v1733
  %v2945 = vsel %vm2934, %v2880, %v1735
  %v2946 = vsel %vm2934, %v2881, %v1737
  %v2947 = vsel %vm2934, %v2882, %v1739
  %v2948 = vsel %vm2934, %v2883, %v1741
  %v2949 = vsel %vm2934, %v2884, %v1743
  %v2950 = vsel %vm2934, %v2885, %v1745
  %v2951 = vsel %vm2934, %v2886, %v1747
  %v2952 = vsel %vm2934, %v2887, %v1749
  %v2953 = vsel %vm2934, %v2888, %v1751
  %v2954 = vsel %vm2934, %v2889, %v1753
  %v2955 = vsel %vm2934, %v2890, %v1755
  %v2956 = vsel %vm2934, %v2891, %v1757
  %v2957 = vsel %vm2934, %v2892, %v1759
  %v2958 = vsel %vm2934, %v2893, %v1761
  %v2959 = vsel %vm2934, %v2894, %v1763
  %v2960 = vsel %vm2934, %v2895, %v1765
  %v2961 = vsel %vm2934, %v2896, %v1767
  %v2962 = vsel %vm2934, %v2897, %v1769
  %v2963 = vsel %vm2934, %v2898, %v1771
  %v2964 = vsel %vm2934, %v2899, %v1773
  %v2965 = vsel %vm2934, %v2900, %v1775
  %v2966 = vsel %vm2934, %v2901, %v1777
  %v2967 = vsel %vm2934, %v2902, %v1779
  %v2968 = vsel %vm2934, %v2903, %v1781
  %v2969 = vsel %vm2934, %v2904, %v1783
  %v2970 = vsel %vm2934, %v2905, %v1785
  %v2971 = vsel %vm2934, %v2906, %v1787
  %v2972 = vsel %vm2934, %v2907, %v1789
  %v2973 = vsel %vm2934, %v2908, %v1791
  %v2974 = vsel %vm2934, %v2909, %v1793
  %v2975 = vsel %vm2934, %v2910, %v1795
  %v2976 = vsel %vm2934, %v2911, %v1797
  %v2977 = vsel %vm2934, %v2912, %v1799
  %v2978 = vsel %vm2934, %v2913, %v1801
  %v2979 = vsel %vm2934, %v2914, %v1803
  %v2980 = vsel %vm2934, %v2915, %v1805
  %v2981 = vsel %vm2934, %v2916, %v1807
  %v2982 = vsel %vm2934, %v2917, %v1809
  %v2983 = vsel %vm2934, %v2918, %v1811
  %v2984 = vsel %vm2934, %v2919, %v1813
  %v2985 = vsel %vm2934, %v2920, %v1815
  %v2986 = vsel %vm2934, %v2921, %v1817
  %v2987 = vsel %vm2934, %v2922, %v1819
  %v2988 = vsel %vm2934, %v2923, %v1821
  %v2989 = vsel %vm2934, %v2924, %v1823
  %v2990 = vsel %vm2934, %v2925, %v1825
  %v2991 = vsel %vm2934, %v2926, %v1827
  %v2992 = vsel %vm2934, %v2927, %v1829
  %v2993 = vsel %vm2934, %v2928, %v1831
  %v2994 = vsel %vm2934, %v2929, %v1833
  %v2995 = vsel %vm2934, %v2930, %v1835
  %v2996 = vsel %vm2934, %v2931, %v1837
  %v2997 = vsel %vm2934, %v2932, %v1839
  %v2998 = vsel %vm2934, %v2933, %v1841
  %vm2999 = vcmask 195584
  %v3000 = vsel %vm2999, %v2935, %v1971
  %v3001 = vsel %vm2999, %v2936, %v1973
  %v3002 = vsel %vm2999, %v2937, %v1975
  %v3003 = vsel %vm2999, %v2938, %v1977
  %v3004 = vsel %vm2999, %v2939, %v1979
  %v3005 = vsel %vm2999, %v2940, %v1981
  %v3006 = vsel %vm2999, %v2941, %v1983
  %v3007 = vsel %vm2999, %v2942, %v1985
  %v3008 = vsel %vm2999, %v2943, %v1987
  %v3009 = vsel %vm2999, %v2944, %v1989
  %v3010 = vsel %vm2999, %v2945, %v1991
  %v3011 = vsel %vm2999, %v2946, %v1993
  %v3012 = vsel %vm2999, %v2947, %v1995
  %v3013 = vsel %vm2999, %v2948, %v1997
  %v3014 = vsel %vm2999, %v2949, %v1999
  %v3015 = vsel %vm2999, %v2950, %v2001
  %v3016 = vsel %vm2999, %v2951, %v2003
  %v3017 = vsel %vm2999, %v2952, %v2005
  %v3018 = vsel %vm2999, %v2953, %v2007
  %v3019 = vsel %vm2999, %v2954, %v2009
  %v3020 = vsel %vm2999, %v2955, %v2011
  %v3021 = vsel %vm2999, %v2956, %v2013
  %v3022 = vsel %vm2999, %v2957, %v2015
  %v3023 = vsel %vm2999, %v2958, %v2017
  %v3024 = vsel %vm2999, %v2959, %v2019
  %v3025 = vsel %vm2999, %v2960, %v2021
  %v3026 = vsel %vm2999, %v2961, %v2023
  %v3027 = vsel %vm2999, %v2962, %v2025
  %v3028 = vsel %vm2999, %v2963, %v2027
  %v3029 = vsel %vm2999, %v2964, %v2029
  %v3030 = vsel %vm2999, %v2965, %v2031
  %v3031 = vsel %vm2999, %v2966, %v2033
  %v3032 = vsel %vm2999, %v2967, %v2035
  %v3033 = vsel %vm2999, %v2968, %v2037
  %v3034 = vsel %vm2999, %v2969, %v2039
  %v3035 = vsel %vm2999, %v2970, %v2041
  %v3036 = vsel %vm2999, %v2971, %v2043
  %v3037 = vsel %vm2999, %v2972, %v2045
  %v3038 = vsel %vm2999, %v2973, %v2047
  %v3039 = vsel %vm2999, %v2974, %v2049
  %v3040 = vsel %vm2999, %v2975, %v2051
  %v3041 = vsel %vm2999, %v2976, %v2053
  %v3042 = vsel %vm2999, %v2977, %v2055
  %v3043 = vsel %vm2999, %v2978, %v2057
  %v3044 = vsel %vm2999, %v2979, %v2059
  %v3045 = vsel %vm2999, %v2980, %v2061
  %v3046 = vsel %vm2999, %v2981, %v2063
  %v3047 = vsel %vm2999, %v2982, %v2065
  %v3048 = vsel %vm2999, %v2983, %v2067
  %v3049 = vsel %vm2999, %v2984, %v2069
  %v3050 = vsel %vm2999, %v2985, %v2071
  %v3051 = vsel %vm2999, %v2986, %v2073
  %v3052 = vsel %vm2999, %v2987, %v2075
  %v3053 = vsel %vm2999, %v2988, %v2077
  %v3054 = vsel %vm2999, %v2989, %v2079
  %v3055 = vsel %vm2999, %v2990, %v2081
  %v3056 = vsel %vm2999, %v2991, %v2083
  %v3057 = vsel %vm2999, %v2992, %v2085
  %v3058 = vsel %vm2999, %v2993, %v2087
  %v3059 = vsel %vm2999, %v2994, %v2089
  %v3060 = vsel %vm2999, %v2995, %v2091
  %v3061 = vsel %vm2999, %v2996, %v2093
  %v3062 = vsel %vm2999, %v2997, %v2095
  %v3063 = vsel %vm2999, %v2998, %v2097
  %vm3064 = vcmask 228352
  %v3065 = vsel %vm3064, %v3000, %v2227
  %v3066 = vsel %vm3064, %v3001, %v2229
  %v3067 = vsel %vm3064, %v3002, %v2231
  %v3068 = vsel %vm3064, %v3003, %v2233
  %v3069 = vsel %vm3064, %v3004, %v2235
  %v3070 = vsel %vm3064, %v3005, %v2237
  %v3071 = vsel %vm3064, %v3006, %v2239
  %v3072 = vsel %vm3064, %v3007, %v2241
  %v3073 = vsel %vm3064, %v3008, %v2243
  %v3074 = vsel %vm3064, %v3009, %v2245
  %v3075 = vsel %vm3064, %v3010, %v2247
  %v3076 = vsel %vm3064, %v3011, %v2249
  %v3077 = vsel %vm3064, %v3012, %v2251
  %v3078 = vsel %vm3064, %v3013, %v2253
  %v3079 = vsel %vm3064, %v3014, %v2255
  %v3080 = vsel %vm3064, %v3015, %v2257
  %v3081 = vsel %vm3064, %v3016, %v2259
  %v3082 = vsel %vm3064, %v3017, %v2261
  %v3083 = vsel %vm3064, %v3018, %v2263
  %v3084 = vsel %vm3064, %v3019, %v2265
  %v3085 = vsel %vm3064, %v3020, %v2267
  %v3086 = vsel %vm3064, %v3021, %v2269
  %v3087 = vsel %vm3064, %v3022, %v2271
  %v3088 = vsel %vm3064, %v3023, %v2273
  %v3089 = vsel %vm3064, %v3024, %v2275
  %v3090 = vsel %vm3064, %v3025, %v2277
  %v3091 = vsel %vm3064, %v3026, %v2279
  %v3092 = vsel %vm3064, %v3027, %v2281
  %v3093 = vsel %vm3064, %v3028, %v2283
  %v3094 = vsel %vm3064, %v3029, %v2285
  %v3095 = vsel %vm3064, %v3030, %v2287
  %v3096 = vsel %vm3064, %v3031, %v2289
  %v3097 = vsel %vm3064, %v3032, %v2291
  %v3098 = vsel %vm3064, %v3033, %v2293
  %v3099 = vsel %vm3064, %v3034, %v2295
  %v3100 = vsel %vm3064, %v3035, %v2297
  %v3101 = vsel %vm3064, %v3036, %v2299
  %v3102 = vsel %vm3064, %v3037, %v2301
  %v3103 = vsel %vm3064, %v3038, %v2303
  %v3104 = vsel %vm3064, %v3039, %v2305
  %v3105 = vsel %vm3064, %v3040, %v2307
  %v3106 = vsel %vm3064, %v3041, %v2309
  %v3107 = vsel %vm3064, %v3042, %v2311
  %v3108 = vsel %vm3064, %v3043, %v2313
  %v3109 = vsel %vm3064, %v3044, %v2315
  %v3110 = vsel %vm3064, %v3045, %v2317
  %v3111 = vsel %vm3064, %v3046, %v2319
  %v3112 = vsel %vm3064, %v3047, %v2321
  %v3113 = vsel %vm3064, %v3048, %v2323
  %v3114 = vsel %vm3064, %v3049, %v2325
  %v3115 = vsel %vm3064, %v3050, %v2327
  %v3116 = vsel %vm3064, %v3051, %v2329
  %v3117 = vsel %vm3064, %v3052, %v2331
  %v3118 = vsel %vm3064, %v3053, %v2333
  %v3119 = vsel %vm3064, %v3054, %v2335
  %v3120 = vsel %vm3064, %v3055, %v2337
  %v3121 = vsel %vm3064, %v3056, %v2339
  %v3122 = vsel %vm3064, %v3057, %v2341
  %v3123 = vsel %vm3064, %v3058, %v2343
  %v3124 = vsel %vm3064, %v3059, %v2345
  %v3125 = vsel %vm3064, %v3060, %v2347
  %v3126 = vsel %vm3064, %v3061, %v2349
  %v3127 = vsel %vm3064, %v3062, %v2351
  %v3128 = vsel %vm3064, %v3063, %v2353
  %vm3129 = vcmask 261120
  %v3130 = vsel %vm3129, %v3065, %v2483
  %v3131 = vsel %vm3129, %v3066, %v2485
  %v3132 = vsel %vm3129, %v3067, %v2487
  %v3133 = vsel %vm3129, %v3068, %v2489
  %v3134 = vsel %vm3129, %v3069, %v2491
  %v3135 = vsel %vm3129, %v3070, %v2493
  %v3136 = vsel %vm3129, %v3071, %v2495
  %v3137 = vsel %vm3129, %v3072, %v2497
  %v3138 = vsel %vm3129, %v3073, %v2499
  %v3139 = vsel %vm3129, %v3074, %v2501
  %v3140 = vsel %vm3129, %v3075, %v2503
  %v3141 = vsel %vm3129, %v3076, %v2505
  %v3142 = vsel %vm3129, %v3077, %v2507
  %v3143 = vsel %vm3129, %v3078, %v2509
  %v3144 = vsel %vm3129, %v3079, %v2511
  %v3145 = vsel %vm3129, %v3080, %v2513
  %v3146 = vsel %vm3129, %v3081, %v2515
  %v3147 = vsel %vm3129, %v3082, %v2517
  %v3148 = vsel %vm3129, %v3083, %v2519
  %v3149 = vsel %vm3129, %v3084, %v2521
  %v3150 = vsel %vm3129, %v3085, %v2523
  %v3151 = vsel %vm3129, %v3086, %v2525
  %v3152 = vsel %vm3129, %v3087, %v2527
  %v3153 = vsel %vm3129, %v3088, %v2529
  %v3154 = vsel %vm3129, %v3089, %v2531
  %v3155 = vsel %vm3129, %v3090, %v2533
  %v3156 = vsel %vm3129, %v3091, %v2535
  %v3157 = vsel %vm3129, %v3092, %v2537
  %v3158 = vsel %vm3129, %v3093, %v2539
  %v3159 = vsel %vm3129, %v3094, %v2541
  %v3160 = vsel %vm3129, %v3095, %v2543
  %v3161 = vsel %vm3129, %v3096, %v2545
  %v3162 = vsel %vm3129, %v3097, %v2547
  %v3163 = vsel %vm3129, %v3098, %v2549
  %v3164 = vsel %vm3129, %v3099, %v2551
  %v3165 = vsel %vm3129, %v3100, %v2553
  %v3166 = vsel %vm3129, %v3101, %v2555
  %v3167 = vsel %vm3129, %v3102, %v2557
  %v3168 = vsel %vm3129, %v3103, %v2559
  %v3169 = vsel %vm3129, %v3104, %v2561
  %v3170 = vsel %vm3129, %v3105, %v2563
  %v3171 = vsel %vm3129, %v3106, %v2565
  %v3172 = vsel %vm3129, %v3107, %v2567
  %v3173 = vsel %vm3129, %v3108, %v2569
  %v3174 = vsel %vm3129, %v3109, %v2571
  %v3175 = vsel %vm3129, %v3110, %v2573
  %v3176 = vsel %vm3129, %v3111, %v2575
  %v3177 = vsel %vm3129, %v3112, %v2577
  %v3178 = vsel %vm3129, %v3113, %v2579
  %v3179 = vsel %vm3129, %v3114, %v2581
  %v3180 = vsel %vm3129, %v3115, %v2583
  %v3181 = vsel %vm3129, %v3116, %v2585
  %v3182 = vsel %vm3129, %v3117, %v2587
  %v3183 = vsel %vm3129, %v3118, %v2589
  %v3184 = vsel %vm3129, %v3119, %v2591
  %v3185 = vsel %vm3129, %v3120, %v2593
  %v3186 = vsel %vm3129, %v3121, %v2595
  %v3187 = vsel %vm3129, %v3122, %v2597
  %v3188 = vsel %vm3129, %v3123, %v2599
  %v3189 = vsel %vm3129, %v3124, %v2601
  %v3190 = vsel %vm3129, %v3125, %v2603
  %v3191 = vsel %vm3129, %v3126, %v2605
  %v3192 = vsel %vm3129, %v3127, %v2607
  %v3193 = vsel %vm3129, %v3128, %v2609
  %v3194 = vpack.c.bf16 %v3131, %v3130
  %v3195 = vpack.c.bf16 %v3133, %v3132
  %v3196 = vpack.c.bf16 %v3135, %v3134
  %v3197 = vpack.c.bf16 %v3137, %v3136
  %v3198 = vpack.c.bf16 %v3139, %v3138
  %v3199 = vpack.c.bf16 %v3141, %v3140
  %v3200 = vpack.c.bf16 %v3143, %v3142
  %v3201 = vpack.c.bf16 %v3145, %v3144
  %v3202 = vpack.c.bf16 %v3147, %v3146
  %v3203 = vpack.c.bf16 %v3149, %v3148
  %v3204 = vpack.c.bf16 %v3151, %v3150
  %v3205 = vpack.c.bf16 %v3153, %v3152
  %v3206 = vpack.c.bf16 %v3155, %v3154
  %v3207 = vpack.c.bf16 %v3157, %v3156
  %v3208 = vpack.c.bf16 %v3159, %v3158
  %v3209 = vpack.c.bf16 %v3161, %v3160
  %v3210 = vpack.c.bf16 %v3163, %v3162
  %v3211 = vpack.c.bf16 %v3165, %v3164
  %v3212 = vpack.c.bf16 %v3167, %v3166
  %v3213 = vpack.c.bf16 %v3169, %v3168
  %v3214 = vpack.c.bf16 %v3171, %v3170
  %v3215 = vpack.c.bf16 %v3173, %v3172
  %v3216 = vpack.c.bf16 %v3175, %v3174
  %v3217 = vpack.c.bf16 %v3177, %v3176
  %v3218 = vpack.c.bf16 %v3179, %v3178
  %v3219 = vpack.c.bf16 %v3181, %v3180
  %v3220 = vpack.c.bf16 %v3183, %v3182
  %v3221 = vpack.c.bf16 %v3185, %v3184
  %v3222 = vpack.c.bf16 %v3187, %v3186
  %v3223 = vpack.c.bf16 %v3189, %v3188
  %v3224 = vpack.c.bf16 %v3191, %v3190
  %v3225 = vpack.c.bf16 %v3193, %v3192
  %v3226 = vld [vmem:[%s2] sm:$0xf]
  %v3227 = vld [vmem:[%s2 + $0x4] sm:$0xf]
  %v3228 = vld [vmem:[%s2 + $0x8] sm:$0xf]
  %v3229 = vld [vmem:[%s2 + $0xc] sm:$0xf]
  %v3230 = vld [vmem:[%s2 + $0x10] sm:$0x3]
  %v3231 = vld [vmem:[%s3] sm:$0x1]
  %v3233 = vlaneseq
  %v3234 = vshrl.u32 %v3233, 7
  %v3235 = vsub.s32 0, %v3234
  %v3236 = vrot.slane %v3231, %v3235
  %v3243 = vunpack.c.l.b16 %v3226
  %v3244 = vunpack.c.l.b16 %v3227
  %v3245 = vunpack.c.l.b16 %v3228
  %v3246 = vunpack.c.l.b16 %v3229
  %v3247 = vunpack.c.l.b16 %v3230
  %v3248 = vpack.c.b16 %v3244, %v3243
  %v3249 = vpack.c.b16 %v3246, %v3245
  %v3250 = vpack.c.b16 %v3247, %v3247
  %vm3253 = vcmask 293888
  %v3255 = vsel %vm3253, %v3194, 0
  %v3258 = vsel %vm3253, %v3195, 0
  %v3261 = vsel %vm3253, %v3196, 0
  %v3264 = vsel %vm3253, %v3197, 0
  %v3267 = vsel %vm3253, %v3198, 0
  %v3270 = vsel %vm3253, %v3199, 0
  %v3273 = vsel %vm3253, %v3200, 0
  %v3276 = vsel %vm3253, %v3201, 0
  %v3279 = vsel %vm3253, %v3202, 0
  %v3282 = vsel %vm3253, %v3203, 0
  %v3285 = vsel %vm3253, %v3204, 0
  %v3288 = vsel %vm3253, %v3205, 0
  %v3291 = vsel %vm3253, %v3206, 0
  %v3294 = vsel %vm3253, %v3207, 0
  %v3297 = vsel %vm3253, %v3208, 0
  %v3300 = vsel %vm3253, %v3209, 0
  %v3303 = vsel %vm3253, %v3210, 0
  %v3306 = vsel %vm3253, %v3211, 0
  %v3309 = vsel %vm3253, %v3212, 0
  %v3312 = vsel %vm3253, %v3213, 0
  %v3315 = vsel %vm3253, %v3214, 0
  %v3318 = vsel %vm3253, %v3215, 0
  %v3321 = vsel %vm3253, %v3216, 0
  %v3324 = vsel %vm3253, %v3217, 0
  %v3327 = vsel %vm3253, %v3218, 0
  %v3330 = vsel %vm3253, %v3219, 0
  %v3333 = vsel %vm3253, %v3220, 0
  %v3336 = vsel %vm3253, %v3221, 0
  %v3339 = vsel %vm3253, %v3222, 0
  %v3342 = vsel %vm3253, %v3223, 0
  %v3345 = vsel %vm3253, %v3224, 0
  %v3348 = vsel %vm3253, %v3225, 0
  %vm3350 = vcmask 1041408
  %v3352 = vsel %vm3350, %v3250, 0
  %3354 = vmatprep.subr.bf16.mxu0 0
  %3355 = vmatpush1.bf16.msra.mxu0 %v3248
  %3356 = vmatprep.subr.bf16.mxu0 0
  %3357 = vmatpush1.bf16.msra.mxu0 %v3249
  %3358 = vmatprep.subr.bf16.mxu0 0
  %3359 = vmatpush1.bf16.msra.mxu0 %v3352
  %3360 = vmatprep.subr.bf16.mxu0 0
  %3361 = vmatpush1.bf16.msra.mxu0 0
  %3362 = vmatprep.subr.bf16.mxu0 0
  %3363 = vmatpush1.bf16.msra.mxu0 0
  %3364 = vmatprep.subr.bf16.mxu0 0
  %3365 = vmatpush1.bf16.msra.mxu0 0
  %3366 = vmatprep.subr.bf16.mxu0 0
  %3367 = vmatpush1.bf16.msra.mxu0 0
  %3368 = vmatprep.subr.bf16.mxu0 0
  %3369 = vmatpush1.bf16.msra.mxu0 0
  %3370 = vmatprep.subr.bf16.mxu0 0
  %3371 = vmatpush1.bf16.msra.mxu0 0
  %3372 = vmatprep.subr.bf16.mxu0 0
  %3373 = vmatpush1.bf16.msra.mxu0 0
  %3374 = vmatprep.subr.bf16.mxu0 0
  %3375 = vmatpush1.bf16.msra.mxu0 0
  %3376 = vmatprep.subr.bf16.mxu0 0
  %3377 = vmatpush1.bf16.msra.mxu0 0
  %3378 = vmatprep.subr.bf16.mxu0 0
  %3379 = vmatpush1.bf16.msra.mxu0 0
  %3380 = vmatprep.subr.bf16.mxu0 0
  %3381 = vmatpush1.bf16.msra.mxu0 0
  %3382 = vmatprep.subr.bf16.mxu0 0
  %3383 = vmatpush1.bf16.msra.mxu0 0
  %3384 = vmatprep.subr.bf16.mxu0 0
  %3385 = vmatpush1.bf16.msra.mxu0 0
  %3386 = vmatprep.mubr.bf16.mxu0 0
  %3387 = vmatmul.mubr.bf16.gmra.mrb[0].mxu0 %v3255
  %v3388 = vpop.f32.mrb[0].mxu0
  %v3389 = vadd.f32 %v3236, %v3388
  %v3390 = vpop.f32.mrb[0].mxu0
  %v3391 = vpop.f32.mrb[0].mxu0
  %v3392 = vadd.f32 %v3236, %v3391
  %v3393 = vpop.f32.mrb[0].mxu0
  %3394 = vmatprep.mubr.bf16.mxu0 0
  %3395 = vmatmul.mubr.bf16.gmra.mrb[0].mxu0 %v3258
  %v3396 = vpop.f32.mrb[0].mxu0
  %v3397 = vadd.f32 %v3236, %v3396
  %v3398 = vpop.f32.mrb[0].mxu0
  %v3399 = vpop.f32.mrb[0].mxu0
  %v3400 = vadd.f32 %v3236, %v3399
  %v3401 = vpop.f32.mrb[0].mxu0
  %3402 = vmatprep.mubr.bf16.mxu0 0
  %3403 = vmatmul.mubr.bf16.gmra.mrb[0].mxu0 %v3261
  %v3404 = vpop.f32.mrb[0].mxu0
  %v3405 = vadd.f32 %v3236, %v3404
  %v3406 = vpop.f32.mrb[0].mxu0
  %v3407 = vpop.f32.mrb[0].mxu0
  %v3408 = vadd.f32 %v3236, %v3407
  %v3409 = vpop.f32.mrb[0].mxu0
  %3410 = vmatprep.mubr.bf16.mxu0 0
  %3411 = vmatmul.mubr.bf16.gmra.mrb[0].mxu0 %v3264
  %v3412 = vpop.f32.mrb[0].mxu0
  %v3413 = vadd.f32 %v3236, %v3412
  %v3414 = vpop.f32.mrb[0].mxu0
  %v3415 = vpop.f32.mrb[0].mxu0
  %v3416 = vadd.f32 %v3236, %v3415
  %v3417 = vpop.f32.mrb[0].mxu0
  %3418 = vmatprep.mubr.bf16.mxu0 0
  %3419 = vmatmul.mubr.bf16.gmra.mrb[0].mxu0 %v3267
  %v3420 = vpop.f32.mrb[0].mxu0
  %v3421 = vadd.f32 %v3236, %v3420
  %v3422 = vpop.f32.mrb[0].mxu0
  %v3423 = vpop.f32.mrb[0].mxu0
  %v3424 = vadd.f32 %v3236, %v3423
  %v3425 = vpop.f32.mrb[0].mxu0
  %3426 = vmatprep.mubr.bf16.mxu0 0
  %3427 = vmatmul.mubr.bf16.gmra.mrb[0].mxu0 %v3270
  %v3428 = vpop.f32.mrb[0].mxu0
  %v3429 = vadd.f32 %v3236, %v3428
  %v3430 = vpop.f32.mrb[0].mxu0
  %v3431 = vpop.f32.mrb[0].mxu0
  %v3432 = vadd.f32 %v3236, %v3431
  %v3433 = vpop.f32.mrb[0].mxu0
  %3434 = vmatprep.mubr.bf16.mxu0 0
  %3435 = vmatmul.mubr.bf16.gmra.mrb[0].mxu0 %v3273
  %v3436 = vpop.f32.mrb[0].mxu0
  %v3437 = vadd.f32 %v3236, %v3436
  %v3438 = vpop.f32.mrb[0].mxu0
  %v3439 = vpop.f32.mrb[0].mxu0
  %v3440 = vadd.f32 %v3236, %v3439
  %v3441 = vpop.f32.mrb[0].mxu0
  %3442 = vmatprep.mubr.bf16.mxu0 0
  %3443 = vmatmul.mubr.bf16.gmra.mrb[0].mxu0 %v3276
  %v3444 = vpop.f32.mrb[0].mxu0
  %v3445 = vadd.f32 %v3236, %v3444
  %v3446 = vpop.f32.mrb[0].mxu0
  %v3447 = vpop.f32.mrb[0].mxu0
  %v3448 = vadd.f32 %v3236, %v3447
  %v3449 = vpop.f32.mrb[0].mxu0
  %3450 = vmatprep.mubr.bf16.mxu0 0
  %3451 = vmatmul.mubr.bf16.gmra.mrb[0].mxu0 %v3279
  %v3452 = vpop.f32.mrb[0].mxu0
  %v3453 = vadd.f32 %v3236, %v3452
  %v3454 = vpop.f32.mrb[0].mxu0
  %v3455 = vpop.f32.mrb[0].mxu0
  %v3456 = vadd.f32 %v3236, %v3455
  %v3457 = vpop.f32.mrb[0].mxu0
  %3458 = vmatprep.mubr.bf16.mxu0 0
  %3459 = vmatmul.mubr.bf16.gmra.mrb[0].mxu0 %v3282
  %v3460 = vpop.f32.mrb[0].mxu0
  %v3461 = vadd.f32 %v3236, %v3460
  %v3462 = vpop.f32.mrb[0].mxu0
  %v3463 = vpop.f32.mrb[0].mxu0
  %v3464 = vadd.f32 %v3236, %v3463
  %v3465 = vpop.f32.mrb[0].mxu0
  %3466 = vmatprep.mubr.bf16.mxu0 0
  %3467 = vmatmul.mubr.bf16.gmra.mrb[0].mxu0 %v3285
  %v3468 = vpop.f32.mrb[0].mxu0
  %v3469 = vadd.f32 %v3236, %v3468
  %v3470 = vpop.f32.mrb[0].mxu0
  %v3471 = vpop.f32.mrb[0].mxu0
  %v3472 = vadd.f32 %v3236, %v3471
  %v3473 = vpop.f32.mrb[0].mxu0
  %3474 = vmatprep.mubr.bf16.mxu0 0
  %3475 = vmatmul.mubr.bf16.gmra.mrb[0].mxu0 %v3288
  %v3476 = vpop.f32.mrb[0].mxu0
  %v3477 = vadd.f32 %v3236, %v3476
  %v3478 = vpop.f32.mrb[0].mxu0
  %v3479 = vpop.f32.mrb[0].mxu0
  %v3480 = vadd.f32 %v3236, %v3479
  %v3481 = vpop.f32.mrb[0].mxu0
  %3482 = vmatprep.mubr.bf16.mxu0 0
  %3483 = vmatmul.mubr.bf16.gmra.mrb[0].mxu0 %v3291
  %v3484 = vpop.f32.mrb[0].mxu0
  %v3485 = vadd.f32 %v3236, %v3484
  %v3486 = vpop.f32.mrb[0].mxu0
  %v3487 = vpop.f32.mrb[0].mxu0
  %v3488 = vadd.f32 %v3236, %v3487
  %v3489 = vpop.f32.mrb[0].mxu0
  %3490 = vmatprep.mubr.bf16.mxu0 0
  %3491 = vmatmul.mubr.bf16.gmra.mrb[0].mxu0 %v3294
  %v3492 = vpop.f32.mrb[0].mxu0
  %v3493 = vadd.f32 %v3236, %v3492
  %v3494 = vpop.f32.mrb[0].mxu0
  %v3495 = vpop.f32.mrb[0].mxu0
  %v3496 = vadd.f32 %v3236, %v3495
  %v3497 = vpop.f32.mrb[0].mxu0
  %3498 = vmatprep.mubr.bf16.mxu0 0
  %3499 = vmatmul.mubr.bf16.gmra.mrb[0].mxu0 %v3297
  %v3500 = vpop.f32.mrb[0].mxu0
  %v3501 = vadd.f32 %v3236, %v3500
  %v3502 = vpop.f32.mrb[0].mxu0
  %v3503 = vpop.f32.mrb[0].mxu0
  %v3504 = vadd.f32 %v3236, %v3503
  %v3505 = vpop.f32.mrb[0].mxu0
  %3506 = vmatprep.mubr.bf16.mxu0 0
  %3507 = vmatmul.mubr.bf16.gmra.mrb[0].mxu0 %v3300
  %v3508 = vpop.f32.mrb[0].mxu0
  %v3509 = vadd.f32 %v3236, %v3508
  %v3510 = vpop.f32.mrb[0].mxu0
  %v3511 = vpop.f32.mrb[0].mxu0
  %v3512 = vadd.f32 %v3236, %v3511
  %v3513 = vpop.f32.mrb[0].mxu0
  %3514 = vmatprep.mubr.bf16.mxu0 0
  %3515 = vmatmul.mubr.bf16.gmra.mrb[0].mxu0 %v3303
  %v3516 = vpop.f32.mrb[0].mxu0
  %v3517 = vadd.f32 %v3236, %v3516
  %v3518 = vpop.f32.mrb[0].mxu0
  %v3519 = vpop.f32.mrb[0].mxu0
  %v3520 = vadd.f32 %v3236, %v3519
  %v3521 = vpop.f32.mrb[0].mxu0
  %3522 = vmatprep.mubr.bf16.mxu0 0
  %3523 = vmatmul.mubr.bf16.gmra.mrb[0].mxu0 %v3306
  %v3524 = vpop.f32.mrb[0].mxu0
  %v3525 = vadd.f32 %v3236, %v3524
  %v3526 = vpop.f32.mrb[0].mxu0
  %v3527 = vpop.f32.mrb[0].mxu0
  %v3528 = vadd.f32 %v3236, %v3527
  %v3529 = vpop.f32.mrb[0].mxu0
  %3530 = vmatprep.mubr.bf16.mxu0 0
  %3531 = vmatmul.mubr.bf16.gmra.mrb[0].mxu0 %v3309
  %v3532 = vpop.f32.mrb[0].mxu0
  %v3533 = vadd.f32 %v3236, %v3532
  %v3534 = vpop.f32.mrb[0].mxu0
  %v3535 = vpop.f32.mrb[0].mxu0
  %v3536 = vadd.f32 %v3236, %v3535
  %v3537 = vpop.f32.mrb[0].mxu0
  %3538 = vmatprep.mubr.bf16.mxu0 0
  %3539 = vmatmul.mubr.bf16.gmra.mrb[0].mxu0 %v3312
  %v3540 = vpop.f32.mrb[0].mxu0
  %v3541 = vadd.f32 %v3236, %v3540
  %v3542 = vpop.f32.mrb[0].mxu0
  %v3543 = vpop.f32.mrb[0].mxu0
  %v3544 = vadd.f32 %v3236, %v3543
  %v3545 = vpop.f32.mrb[0].mxu0
  %3546 = vmatprep.mubr.bf16.mxu0 0
  %3547 = vmatmul.mubr.bf16.gmra.mrb[0].mxu0 %v3315
  %v3548 = vpop.f32.mrb[0].mxu0
  %v3549 = vadd.f32 %v3236, %v3548
  %v3550 = vpop.f32.mrb[0].mxu0
  %v3551 = vpop.f32.mrb[0].mxu0
  %v3552 = vadd.f32 %v3236, %v3551
  %v3553 = vpop.f32.mrb[0].mxu0
  %3554 = vmatprep.mubr.bf16.mxu0 0
  %3555 = vmatmul.mubr.bf16.gmra.mrb[0].mxu0 %v3318
  %v3556 = vpop.f32.mrb[0].mxu0
  %v3557 = vadd.f32 %v3236, %v3556
  %v3558 = vpop.f32.mrb[0].mxu0
  %v3559 = vpop.f32.mrb[0].mxu0
  %v3560 = vadd.f32 %v3236, %v3559
  %v3561 = vpop.f32.mrb[0].mxu0
  %3562 = vmatprep.mubr.bf16.mxu0 0
  %3563 = vmatmul.mubr.bf16.gmra.mrb[0].mxu0 %v3321
  %v3564 = vpop.f32.mrb[0].mxu0
  %v3565 = vadd.f32 %v3236, %v3564
  %v3566 = vpop.f32.mrb[0].mxu0
  %v3567 = vpop.f32.mrb[0].mxu0
  %v3568 = vadd.f32 %v3236, %v3567
  %v3569 = vpop.f32.mrb[0].mxu0
  %3570 = vmatprep.mubr.bf16.mxu0 0
  %3571 = vmatmul.mubr.bf16.gmra.mrb[0].mxu0 %v3324
  %v3572 = vpop.f32.mrb[0].mxu0
  %v3573 = vadd.f32 %v3236, %v3572
  %v3574 = vpop.f32.mrb[0].mxu0
  %v3575 = vpop.f32.mrb[0].mxu0
  %v3576 = vadd.f32 %v3236, %v3575
  %v3577 = vpop.f32.mrb[0].mxu0
  %3578 = vmatprep.mubr.bf16.mxu0 0
  %3579 = vmatmul.mubr.bf16.gmra.mrb[0].mxu0 %v3327
  %v3580 = vpop.f32.mrb[0].mxu0
  %v3581 = vadd.f32 %v3236, %v3580
  %v3582 = vpop.f32.mrb[0].mxu0
  %v3583 = vpop.f32.mrb[0].mxu0
  %v3584 = vadd.f32 %v3236, %v3583
  %v3585 = vpop.f32.mrb[0].mxu0
  %3586 = vmatprep.mubr.bf16.mxu0 0
  %3587 = vmatmul.mubr.bf16.gmra.mrb[0].mxu0 %v3330
  %v3588 = vpop.f32.mrb[0].mxu0
  %v3589 = vadd.f32 %v3236, %v3588
  %v3590 = vpop.f32.mrb[0].mxu0
  %v3591 = vpop.f32.mrb[0].mxu0
  %v3592 = vadd.f32 %v3236, %v3591
  %v3593 = vpop.f32.mrb[0].mxu0
  %3594 = vmatprep.mubr.bf16.mxu0 0
  %3595 = vmatmul.mubr.bf16.gmra.mrb[0].mxu0 %v3333
  %v3596 = vpop.f32.mrb[0].mxu0
  %v3597 = vadd.f32 %v3236, %v3596
  %v3598 = vpop.f32.mrb[0].mxu0
  %v3599 = vpop.f32.mrb[0].mxu0
  %v3600 = vadd.f32 %v3236, %v3599
  %v3601 = vpop.f32.mrb[0].mxu0
  %3602 = vmatprep.mubr.bf16.mxu0 0
  %3603 = vmatmul.mubr.bf16.gmra.mrb[0].mxu0 %v3336
  %v3604 = vpop.f32.mrb[0].mxu0
  %v3605 = vadd.f32 %v3236, %v3604
  %v3606 = vpop.f32.mrb[0].mxu0
  %v3607 = vpop.f32.mrb[0].mxu0
  %v3608 = vadd.f32 %v3236, %v3607
  %v3609 = vpop.f32.mrb[0].mxu0
  %3610 = vmatprep.mubr.bf16.mxu0 0
  %3611 = vmatmul.mubr.bf16.gmra.mrb[0].mxu0 %v3339
  %v3612 = vpop.f32.mrb[0].mxu0
  %v3613 = vadd.f32 %v3236, %v3612
  %v3614 = vpop.f32.mrb[0].mxu0
  %v3615 = vpop.f32.mrb[0].mxu0
  %v3616 = vadd.f32 %v3236, %v3615
  %v3617 = vpop.f32.mrb[0].mxu0
  %3618 = vmatprep.mubr.bf16.mxu0 0
  %3619 = vmatmul.mubr.bf16.gmra.mrb[0].mxu0 %v3342
  %v3620 = vpop.f32.mrb[0].mxu0
  %v3621 = vadd.f32 %v3236, %v3620
  %v3622 = vpop.f32.mrb[0].mxu0
  %v3623 = vpop.f32.mrb[0].mxu0
  %v3624 = vadd.f32 %v3236, %v3623
  %v3625 = vpop.f32.mrb[0].mxu0
  %3626 = vmatprep.mubr.bf16.mxu0 0
  %3627 = vmatmul.mubr.bf16.gmra.mrb[0].mxu0 %v3345
  %v3628 = vpop.f32.mrb[0].mxu0
  %v3629 = vadd.f32 %v3236, %v3628
  %v3630 = vpop.f32.mrb[0].mxu0
  %v3631 = vpop.f32.mrb[0].mxu0
  %v3632 = vadd.f32 %v3236, %v3631
  %v3633 = vpop.f32.mrb[0].mxu0
  %3634 = vmatprep.mubr.bf16.mxu0 0
  %3635 = vmatmul.mubr.bf16.gmra.mrb[0].mxu0 %v3348
  %v3636 = vpop.f32.mrb[0].mxu0
  %v3637 = vadd.f32 %v3236, %v3636
  %v3638 = vpop.f32.mrb[0].mxu0
  %v3639 = vpop.f32.mrb[0].mxu0
  %v3640 = vadd.f32 %v3236, %v3639
  %v3641 = vpop.f32.mrb[0].mxu0
  %3642 = vdwg.mxu0
  %v3643 = vmax.f32 %v3389, 0.0
  %v3644 = vmax.f32 %v3392, 0.0
  %v3645 = vmax.f32 %v3397, 0.0
  %v3646 = vmax.f32 %v3400, 0.0
  %v3647 = vmax.f32 %v3405, 0.0
  %v3648 = vmax.f32 %v3408, 0.0
  %v3649 = vmax.f32 %v3413, 0.0
  %v3650 = vmax.f32 %v3416, 0.0
  %v3651 = vmax.f32 %v3421, 0.0
  %v3652 = vmax.f32 %v3424, 0.0
  %v3653 = vmax.f32 %v3429, 0.0
  %v3654 = vmax.f32 %v3432, 0.0
  %v3655 = vmax.f32 %v3437, 0.0
  %v3656 = vmax.f32 %v3440, 0.0
  %v3657 = vmax.f32 %v3445, 0.0
  %v3658 = vmax.f32 %v3448, 0.0
  %v3659 = vmax.f32 %v3453, 0.0
  %v3660 = vmax.f32 %v3456, 0.0
  %v3661 = vmax.f32 %v3461, 0.0
  %v3662 = vmax.f32 %v3464, 0.0
  %v3663 = vmax.f32 %v3469, 0.0
  %v3664 = vmax.f32 %v3472, 0.0
  %v3665 = vmax.f32 %v3477, 0.0
  %v3666 = vmax.f32 %v3480, 0.0
  %v3667 = vmax.f32 %v3485, 0.0
  %v3668 = vmax.f32 %v3488, 0.0
  %v3669 = vmax.f32 %v3493, 0.0
  %v3670 = vmax.f32 %v3496, 0.0
  %v3671 = vmax.f32 %v3501, 0.0
  %v3672 = vmax.f32 %v3504, 0.0
  %v3673 = vmax.f32 %v3509, 0.0
  %v3674 = vmax.f32 %v3512, 0.0
  %v3675 = vmax.f32 %v3517, 0.0
  %v3676 = vmax.f32 %v3520, 0.0
  %v3677 = vmax.f32 %v3525, 0.0
  %v3678 = vmax.f32 %v3528, 0.0
  %v3679 = vmax.f32 %v3533, 0.0
  %v3680 = vmax.f32 %v3536, 0.0
  %v3681 = vmax.f32 %v3541, 0.0
  %v3682 = vmax.f32 %v3544, 0.0
  %v3683 = vmax.f32 %v3549, 0.0
  %v3684 = vmax.f32 %v3552, 0.0
  %v3685 = vmax.f32 %v3557, 0.0
  %v3686 = vmax.f32 %v3560, 0.0
  %v3687 = vmax.f32 %v3565, 0.0
  %v3688 = vmax.f32 %v3568, 0.0
  %v3689 = vmax.f32 %v3573, 0.0
  %v3690 = vmax.f32 %v3576, 0.0
  %v3691 = vmax.f32 %v3581, 0.0
  %v3692 = vmax.f32 %v3584, 0.0
  %v3693 = vmax.f32 %v3589, 0.0
  %v3694 = vmax.f32 %v3592, 0.0
  %v3695 = vmax.f32 %v3597, 0.0
  %v3696 = vmax.f32 %v3600, 0.0
  %v3697 = vmax.f32 %v3605, 0.0
  %v3698 = vmax.f32 %v3608, 0.0
  %v3699 = vmax.f32 %v3613, 0.0
  %v3700 = vmax.f32 %v3616, 0.0
  %v3701 = vmax.f32 %v3621, 0.0
  %v3702 = vmax.f32 %v3624, 0.0
  %v3703 = vmax.f32 %v3629, 0.0
  %v3704 = vmax.f32 %v3632, 0.0
  %v3705 = vmax.f32 %v3637, 0.0
  %v3706 = vmax.f32 %v3640, 0.0
  %v3707 = vld [vmem:[%s4] sm:$0x1]
  %v3708 = vld [vmem:[%s5] sm:$0x1]
  %v3709 = vsel %vm2739, %v3643, 0.0
  %v3710 = vsel %vm2739, %v3644, 0.0
  %v3711 = vadd.f32 %v3709, %v3710
  %v3712 = vsel %vm2739, %v3645, 0.0
  %v3713 = vadd.f32 %v3711, %v3712
  %v3714 = vsel %vm2739, %v3646, 0.0
  %v3715 = vadd.f32 %v3713, %v3714
  %v3716 = vsel %vm2739, %v3647, 0.0
  %v3717 = vadd.f32 %v3715, %v3716
  %v3718 = vsel %vm2739, %v3648, 0.0
  %v3719 = vadd.f32 %v3717, %v3718
  %v3720 = vsel %vm2739, %v3649, 0.0
  %v3721 = vadd.f32 %v3719, %v3720
  %v3722 = vsel %vm2739, %v3650, 0.0
  %v3723 = vadd.f32 %v3721, %v3722
  %v3724 = vsel %vm2739, %v3651, 0.0
  %v3725 = vadd.f32 %v3723, %v3724
  %v3726 = vsel %vm2739, %v3652, 0.0
  %v3727 = vadd.f32 %v3725, %v3726
  %v3728 = vsel %vm2739, %v3653, 0.0
  %v3729 = vadd.f32 %v3727, %v3728
  %v3730 = vsel %vm2739, %v3654, 0.0
  %v3731 = vadd.f32 %v3729, %v3730
  %v3732 = vsel %vm2739, %v3655, 0.0
  %v3733 = vadd.f32 %v3731, %v3732
  %v3734 = vsel %vm2739, %v3656, 0.0
  %v3735 = vadd.f32 %v3733, %v3734
  %v3736 = vsel %vm2739, %v3657, 0.0
  %v3737 = vadd.f32 %v3735, %v3736
  %v3738 = vsel %vm2739, %v3658, 0.0
  %v3739 = vadd.f32 %v3737, %v3738
  %v3740 = vsel %vm2739, %v3659, 0.0
  %v3741 = vadd.f32 %v3739, %v3740
  %v3742 = vsel %vm2739, %v3660, 0.0
  %v3743 = vadd.f32 %v3741, %v3742
  %v3744 = vsel %vm2739, %v3661, 0.0
  %v3745 = vadd.f32 %v3743, %v3744
  %v3746 = vsel %vm2739, %v3662, 0.0
  %v3747 = vadd.f32 %v3745, %v3746
  %v3748 = vsel %vm2739, %v3663, 0.0
  %v3749 = vadd.f32 %v3747, %v3748
  %v3750 = vsel %vm2739, %v3664, 0.0
  %v3751 = vadd.f32 %v3749, %v3750
  %v3752 = vsel %vm2739, %v3665, 0.0
  %v3753 = vadd.f32 %v3751, %v3752
  %v3754 = vsel %vm2739, %v3666, 0.0
  %v3755 = vadd.f32 %v3753, %v3754
  %v3756 = vsel %vm2739, %v3667, 0.0
  %v3757 = vadd.f32 %v3755, %v3756
  %v3758 = vsel %vm2739, %v3668, 0.0
  %v3759 = vadd.f32 %v3757, %v3758
  %v3760 = vsel %vm2739, %v3669, 0.0
  %v3761 = vadd.f32 %v3759, %v3760
  %v3762 = vsel %vm2739, %v3670, 0.0
  %v3763 = vadd.f32 %v3761, %v3762
  %v3764 = vsel %vm2739, %v3671, 0.0
  %v3765 = vadd.f32 %v3763, %v3764
  %v3766 = vsel %vm2739, %v3672, 0.0
  %v3767 = vadd.f32 %v3765, %v3766
  %v3768 = vsel %vm2739, %v3673, 0.0
  %v3769 = vadd.f32 %v3767, %v3768
  %v3770 = vsel %vm2739, %v3674, 0.0
  %v3771 = vadd.f32 %v3769, %v3770
  %v3772 = vsel %vm2739, %v3675, 0.0
  %v3773 = vadd.f32 %v3771, %v3772
  %v3774 = vsel %vm2739, %v3676, 0.0
  %v3775 = vadd.f32 %v3773, %v3774
  %v3776 = vsel %vm2739, %v3677, 0.0
  %v3777 = vadd.f32 %v3775, %v3776
  %v3778 = vsel %vm2739, %v3678, 0.0
  %v3779 = vadd.f32 %v3777, %v3778
  %v3780 = vsel %vm2739, %v3679, 0.0
  %v3781 = vadd.f32 %v3779, %v3780
  %v3782 = vsel %vm2739, %v3680, 0.0
  %v3783 = vadd.f32 %v3781, %v3782
  %v3784 = vsel %vm2739, %v3681, 0.0
  %v3785 = vadd.f32 %v3783, %v3784
  %v3786 = vsel %vm2739, %v3682, 0.0
  %v3787 = vadd.f32 %v3785, %v3786
  %v3788 = vsel %vm2739, %v3683, 0.0
  %v3789 = vadd.f32 %v3787, %v3788
  %v3790 = vsel %vm2739, %v3684, 0.0
  %v3791 = vadd.f32 %v3789, %v3790
  %v3792 = vsel %vm2739, %v3685, 0.0
  %v3793 = vadd.f32 %v3791, %v3792
  %v3794 = vsel %vm2739, %v3686, 0.0
  %v3795 = vadd.f32 %v3793, %v3794
  %v3796 = vsel %vm2739, %v3687, 0.0
  %v3797 = vadd.f32 %v3795, %v3796
  %v3798 = vsel %vm2739, %v3688, 0.0
  %v3799 = vadd.f32 %v3797, %v3798
  %v3800 = vsel %vm2739, %v3689, 0.0
  %v3801 = vadd.f32 %v3799, %v3800
  %v3802 = vsel %vm2739, %v3690, 0.0
  %v3803 = vadd.f32 %v3801, %v3802
  %v3804 = vsel %vm2739, %v3691, 0.0
  %v3805 = vadd.f32 %v3803, %v3804
  %v3806 = vsel %vm2739, %v3692, 0.0
  %v3807 = vadd.f32 %v3805, %v3806
  %v3808 = vsel %vm2739, %v3693, 0.0
  %v3809 = vadd.f32 %v3807, %v3808
  %v3810 = vsel %vm2739, %v3694, 0.0
  %v3811 = vadd.f32 %v3809, %v3810
  %v3812 = vsel %vm2739, %v3695, 0.0
  %v3813 = vadd.f32 %v3811, %v3812
  %v3814 = vsel %vm2739, %v3696, 0.0
  %v3815 = vadd.f32 %v3813, %v3814
  %v3816 = vsel %vm2739, %v3697, 0.0
  %v3817 = vadd.f32 %v3815, %v3816
  %v3818 = vsel %vm2739, %v3698, 0.0
  %v3819 = vadd.f32 %v3817, %v3818
  %v3820 = vsel %vm2739, %v3699, 0.0
  %v3821 = vadd.f32 %v3819, %v3820
  %v3822 = vsel %vm2739, %v3700, 0.0
  %v3823 = vadd.f32 %v3821, %v3822
  %v3824 = vsel %vm2739, %v3701, 0.0
  %v3825 = vadd.f32 %v3823, %v3824
  %v3826 = vsel %vm2739, %v3702, 0.0
  %v3827 = vadd.f32 %v3825, %v3826
  %v3828 = vsel %vm2739, %v3703, 0.0
  %v3829 = vadd.f32 %v3827, %v3828
  %v3830 = vsel %vm2739, %v3704, 0.0
  %v3831 = vadd.f32 %v3829, %v3830
  %v3832 = vsel %vm2739, %v3705, 0.0
  %v3833 = vadd.f32 %v3831, %v3832
  %v3834 = vsel %vm2739, %v3706, 0.0
  %v3835 = vadd.f32 %v3833, %v3834
  %v3836 = vrot.slane %v3835, 4
  %v3837 = vadd.f32 %v3835, %v3836
  %v3838 = vrot.slane %v3837, 2
  %v3839 = vadd.f32 %v3837, %v3838
  %v3840 = vrot.slane %v3839, 1
  %v3841 = vadd.f32 %v3839, %v3840
  %v3842 = vmul.f32 %v3841, 0.001953125
  %v3843 = vmul.f32 %v3643, %v3643
  %v3844 = vmul.f32 %v3644, %v3644
  %v3845 = vmul.f32 %v3645, %v3645
  %v3846 = vmul.f32 %v3646, %v3646
  %v3847 = vmul.f32 %v3647, %v3647
  %v3848 = vmul.f32 %v3648, %v3648
  %v3849 = vmul.f32 %v3649, %v3649
  %v3850 = vmul.f32 %v3650, %v3650
  %v3851 = vmul.f32 %v3651, %v3651
  %v3852 = vmul.f32 %v3652, %v3652
  %v3853 = vmul.f32 %v3653, %v3653
  %v3854 = vmul.f32 %v3654, %v3654
  %v3855 = vmul.f32 %v3655, %v3655
  %v3856 = vmul.f32 %v3656, %v3656
  %v3857 = vmul.f32 %v3657, %v3657
  %v3858 = vmul.f32 %v3658, %v3658
  %v3859 = vmul.f32 %v3659, %v3659
  %v3860 = vmul.f32 %v3660, %v3660
  %v3861 = vmul.f32 %v3661, %v3661
  %v3862 = vmul.f32 %v3662, %v3662
  %v3863 = vmul.f32 %v3663, %v3663
  %v3864 = vmul.f32 %v3664, %v3664
  %v3865 = vmul.f32 %v3665, %v3665
  %v3866 = vmul.f32 %v3666, %v3666
  %v3867 = vmul.f32 %v3667, %v3667
  %v3868 = vmul.f32 %v3668, %v3668
  %v3869 = vmul.f32 %v3669, %v3669
  %v3870 = vmul.f32 %v3670, %v3670
  %v3871 = vmul.f32 %v3671, %v3671
  %v3872 = vmul.f32 %v3672, %v3672
  %v3873 = vmul.f32 %v3673, %v3673
  %v3874 = vmul.f32 %v3674, %v3674
  %v3875 = vmul.f32 %v3675, %v3675
  %v3876 = vmul.f32 %v3676, %v3676
  %v3877 = vmul.f32 %v3677, %v3677
  %v3878 = vmul.f32 %v3678, %v3678
  %v3879 = vmul.f32 %v3679, %v3679
  %v3880 = vmul.f32 %v3680, %v3680
  %v3881 = vmul.f32 %v3681, %v3681
  %v3882 = vmul.f32 %v3682, %v3682
  %v3883 = vmul.f32 %v3683, %v3683
  %v3884 = vmul.f32 %v3684, %v3684
  %v3885 = vmul.f32 %v3685, %v3685
  %v3886 = vmul.f32 %v3686, %v3686
  %v3887 = vmul.f32 %v3687, %v3687
  %v3888 = vmul.f32 %v3688, %v3688
  %v3889 = vmul.f32 %v3689, %v3689
  %v3890 = vmul.f32 %v3690, %v3690
  %v3891 = vmul.f32 %v3691, %v3691
  %v3892 = vmul.f32 %v3692, %v3692
  %v3893 = vmul.f32 %v3693, %v3693
  %v3894 = vmul.f32 %v3694, %v3694
  %v3895 = vmul.f32 %v3695, %v3695
  %v3896 = vmul.f32 %v3696, %v3696
  %v3897 = vmul.f32 %v3697, %v3697
  %v3898 = vmul.f32 %v3698, %v3698
  %v3899 = vmul.f32 %v3699, %v3699
  %v3900 = vmul.f32 %v3700, %v3700
  %v3901 = vmul.f32 %v3701, %v3701
  %v3902 = vmul.f32 %v3702, %v3702
  %v3903 = vmul.f32 %v3703, %v3703
  %v3904 = vmul.f32 %v3704, %v3704
  %v3905 = vmul.f32 %v3705, %v3705
  %v3906 = vmul.f32 %v3706, %v3706
  %v3907 = vsel %vm2739, %v3843, 0.0
  %v3908 = vsel %vm2739, %v3844, 0.0
  %v3909 = vadd.f32 %v3907, %v3908
  %v3910 = vsel %vm2739, %v3845, 0.0
  %v3911 = vadd.f32 %v3909, %v3910
  %v3912 = vsel %vm2739, %v3846, 0.0
  %v3913 = vadd.f32 %v3911, %v3912
  %v3914 = vsel %vm2739, %v3847, 0.0
  %v3915 = vadd.f32 %v3913, %v3914
  %v3916 = vsel %vm2739, %v3848, 0.0
  %v3917 = vadd.f32 %v3915, %v3916
  %v3918 = vsel %vm2739, %v3849, 0.0
  %v3919 = vadd.f32 %v3917, %v3918
  %v3920 = vsel %vm2739, %v3850, 0.0
  %v3921 = vadd.f32 %v3919, %v3920
  %v3922 = vsel %vm2739, %v3851, 0.0
  %v3923 = vadd.f32 %v3921, %v3922
  %v3924 = vsel %vm2739, %v3852, 0.0
  %v3925 = vadd.f32 %v3923, %v3924
  %v3926 = vsel %vm2739, %v3853, 0.0
  %v3927 = vadd.f32 %v3925, %v3926
  %v3928 = vsel %vm2739, %v3854, 0.0
  %v3929 = vadd.f32 %v3927, %v3928
  %v3930 = vsel %vm2739, %v3855, 0.0
  %v3931 = vadd.f32 %v3929, %v3930
  %v3932 = vsel %vm2739, %v3856, 0.0
  %v3933 = vadd.f32 %v3931, %v3932
  %v3934 = vsel %vm2739, %v3857, 0.0
  %v3935 = vadd.f32 %v3933, %v3934
  %v3936 = vsel %vm2739, %v3858, 0.0
  %v3937 = vadd.f32 %v3935, %v3936
  %v3938 = vsel %vm2739, %v3859, 0.0
  %v3939 = vadd.f32 %v3937, %v3938
  %v3940 = vsel %vm2739, %v3860, 0.0
  %v3941 = vadd.f32 %v3939, %v3940
  %v3942 = vsel %vm2739, %v3861, 0.0
  %v3943 = vadd.f32 %v3941, %v3942
  %v3944 = vsel %vm2739, %v3862, 0.0
  %v3945 = vadd.f32 %v3943, %v3944
  %v3946 = vsel %vm2739, %v3863, 0.0
  %v3947 = vadd.f32 %v3945, %v3946
  %v3948 = vsel %vm2739, %v3864, 0.0
  %v3949 = vadd.f32 %v3947, %v3948
  %v3950 = vsel %vm2739, %v3865, 0.0
  %v3951 = vadd.f32 %v3949, %v3950
  %v3952 = vsel %vm2739, %v3866, 0.0
  %v3953 = vadd.f32 %v3951, %v3952
  %v3954 = vsel %vm2739, %v3867, 0.0
  %v3955 = vadd.f32 %v3953, %v3954
  %v3956 = vsel %vm2739, %v3868, 0.0
  %v3957 = vadd.f32 %v3955, %v3956
  %v3958 = vsel %vm2739, %v3869, 0.0
  %v3959 = vadd.f32 %v3957, %v3958
  %v3960 = vsel %vm2739, %v3870, 0.0
  %v3961 = vadd.f32 %v3959, %v3960
  %v3962 = vsel %vm2739, %v3871, 0.0
  %v3963 = vadd.f32 %v3961, %v3962
  %v3964 = vsel %vm2739, %v3872, 0.0
  %v3965 = vadd.f32 %v3963, %v3964
  %v3966 = vsel %vm2739, %v3873, 0.0
  %v3967 = vadd.f32 %v3965, %v3966
  %v3968 = vsel %vm2739, %v3874, 0.0
  %v3969 = vadd.f32 %v3967, %v3968
  %v3970 = vsel %vm2739, %v3875, 0.0
  %v3971 = vadd.f32 %v3969, %v3970
  %v3972 = vsel %vm2739, %v3876, 0.0
  %v3973 = vadd.f32 %v3971, %v3972
  %v3974 = vsel %vm2739, %v3877, 0.0
  %v3975 = vadd.f32 %v3973, %v3974
  %v3976 = vsel %vm2739, %v3878, 0.0
  %v3977 = vadd.f32 %v3975, %v3976
  %v3978 = vsel %vm2739, %v3879, 0.0
  %v3979 = vadd.f32 %v3977, %v3978
  %v3980 = vsel %vm2739, %v3880, 0.0
  %v3981 = vadd.f32 %v3979, %v3980
  %v3982 = vsel %vm2739, %v3881, 0.0
  %v3983 = vadd.f32 %v3981, %v3982
  %v3984 = vsel %vm2739, %v3882, 0.0
  %v3985 = vadd.f32 %v3983, %v3984
  %v3986 = vsel %vm2739, %v3883, 0.0
  %v3987 = vadd.f32 %v3985, %v3986
  %v3988 = vsel %vm2739, %v3884, 0.0
  %v3989 = vadd.f32 %v3987, %v3988
  %v3990 = vsel %vm2739, %v3885, 0.0
  %v3991 = vadd.f32 %v3989, %v3990
  %v3992 = vsel %vm2739, %v3886, 0.0
  %v3993 = vadd.f32 %v3991, %v3992
  %v3994 = vsel %vm2739, %v3887, 0.0
  %v3995 = vadd.f32 %v3993, %v3994
  %v3996 = vsel %vm2739, %v3888, 0.0
  %v3997 = vadd.f32 %v3995, %v3996
  %v3998 = vsel %vm2739, %v3889, 0.0
  %v3999 = vadd.f32 %v3997, %v3998
  %v4000 = vsel %vm2739, %v3890, 0.0
  %v4001 = vadd.f32 %v3999, %v4000
  %v4002 = vsel %vm2739, %v3891, 0.0
  %v4003 = vadd.f32 %v4001, %v4002
  %v4004 = vsel %vm2739, %v3892, 0.0
  %v4005 = vadd.f32 %v4003, %v4004
  %v4006 = vsel %vm2739, %v3893, 0.0
  %v4007 = vadd.f32 %v4005, %v4006
  %v4008 = vsel %vm2739, %v3894, 0.0
  %v4009 = vadd.f32 %v4007, %v4008
  %v4010 = vsel %vm2739, %v3895, 0.0
  %v4011 = vadd.f32 %v4009, %v4010
  %v4012 = vsel %vm2739, %v3896, 0.0
  %v4013 = vadd.f32 %v4011, %v4012
  %v4014 = vsel %vm2739, %v3897, 0.0
  %v4015 = vadd.f32 %v4013, %v4014
  %v4016 = vsel %vm2739, %v3898, 0.0
  %v4017 = vadd.f32 %v4015, %v4016
  %v4018 = vsel %vm2739, %v3899, 0.0
  %v4019 = vadd.f32 %v4017, %v4018
  %v4020 = vsel %vm2739, %v3900, 0.0
  %v4021 = vadd.f32 %v4019, %v4020
  %v4022 = vsel %vm2739, %v3901, 0.0
  %v4023 = vadd.f32 %v4021, %v4022
  %v4024 = vsel %vm2739, %v3902, 0.0
  %v4025 = vadd.f32 %v4023, %v4024
  %v4026 = vsel %vm2739, %v3903, 0.0
  %v4027 = vadd.f32 %v4025, %v4026
  %v4028 = vsel %vm2739, %v3904, 0.0
  %v4029 = vadd.f32 %v4027, %v4028
  %v4030 = vsel %vm2739, %v3905, 0.0
  %v4031 = vadd.f32 %v4029, %v4030
  %v4032 = vsel %vm2739, %v3906, 0.0
  %v4033 = vadd.f32 %v4031, %v4032
  %v4034 = vrot.slane %v4033, 4
  %v4035 = vadd.f32 %v4033, %v4034
  %v4036 = vrot.slane %v4035, 2
  %v4037 = vadd.f32 %v4035, %v4036
  %v4038 = vrot.slane %v4037, 1
  %v4039 = vadd.f32 %v4037, %v4038
  %v4040 = vmul.f32 %v4039, 0.001953125
  %v4041 = vmul.f32 %v3842, %v3842
  %v4042 = vsub.f32 %v4040, %v4041
  %v4043 = vadd.f32 %v4042, 1e-05
  %v4044 = vrsqrt.pop %v4043
  %v4045 = vmul.f32 %v4044, %v3707
  %v4046 = vlaneseq
  %v4047 = vshrl.u32 %v4046, 7
  %v4048 = vsub.s32 0, %v4047
  %v4049 = vrot.slane %v4045, %v4048
  %v4050 = vmul.f32 %v3643, %v4049
  %v4051 = vmul.f32 %v3644, %v4049
  %v4052 = vmul.f32 %v3645, %v4049
  %v4053 = vmul.f32 %v3646, %v4049
  %v4054 = vmul.f32 %v3647, %v4049
  %v4055 = vmul.f32 %v3648, %v4049
  %v4056 = vmul.f32 %v3649, %v4049
  %v4057 = vmul.f32 %v3650, %v4049
  %v4058 = vmul.f32 %v3651, %v4049
  %v4059 = vmul.f32 %v3652, %v4049
  %v4060 = vmul.f32 %v3653, %v4049
  %v4061 = vmul.f32 %v3654, %v4049
  %v4062 = vmul.f32 %v3655, %v4049
  %v4063 = vmul.f32 %v3656, %v4049
  %v4064 = vmul.f32 %v3657, %v4049
  %v4065 = vmul.f32 %v3658, %v4049
  %v4066 = vmul.f32 %v3659, %v4049
  %v4067 = vmul.f32 %v3660, %v4049
  %v4068 = vmul.f32 %v3661, %v4049
  %v4069 = vmul.f32 %v3662, %v4049
  %v4070 = vmul.f32 %v3663, %v4049
  %v4071 = vmul.f32 %v3664, %v4049
  %v4072 = vmul.f32 %v3665, %v4049
  %v4073 = vmul.f32 %v3666, %v4049
  %v4074 = vmul.f32 %v3667, %v4049
  %v4075 = vmul.f32 %v3668, %v4049
  %v4076 = vmul.f32 %v3669, %v4049
  %v4077 = vmul.f32 %v3670, %v4049
  %v4078 = vmul.f32 %v3671, %v4049
  %v4079 = vmul.f32 %v3672, %v4049
  %v4080 = vmul.f32 %v3673, %v4049
  %v4081 = vmul.f32 %v3674, %v4049
  %v4082 = vmul.f32 %v3675, %v4049
  %v4083 = vmul.f32 %v3676, %v4049
  %v4084 = vmul.f32 %v3677, %v4049
  %v4085 = vmul.f32 %v3678, %v4049
  %v4086 = vmul.f32 %v3679, %v4049
  %v4087 = vmul.f32 %v3680, %v4049
  %v4088 = vmul.f32 %v3681, %v4049
  %v4089 = vmul.f32 %v3682, %v4049
  %v4090 = vmul.f32 %v3683, %v4049
  %v4091 = vmul.f32 %v3684, %v4049
  %v4092 = vmul.f32 %v3685, %v4049
  %v4093 = vmul.f32 %v3686, %v4049
  %v4094 = vmul.f32 %v3687, %v4049
  %v4095 = vmul.f32 %v3688, %v4049
  %v4096 = vmul.f32 %v3689, %v4049
  %v4097 = vmul.f32 %v3690, %v4049
  %v4098 = vmul.f32 %v3691, %v4049
  %v4099 = vmul.f32 %v3692, %v4049
  %v4100 = vmul.f32 %v3693, %v4049
  %v4101 = vmul.f32 %v3694, %v4049
  %v4102 = vmul.f32 %v3695, %v4049
  %v4103 = vmul.f32 %v3696, %v4049
  %v4104 = vmul.f32 %v3697, %v4049
  %v4105 = vmul.f32 %v3698, %v4049
  %v4106 = vmul.f32 %v3699, %v4049
  %v4107 = vmul.f32 %v3700, %v4049
  %v4108 = vmul.f32 %v3701, %v4049
  %v4109 = vmul.f32 %v3702, %v4049
  %v4110 = vmul.f32 %v3703, %v4049
  %v4111 = vmul.f32 %v3704, %v4049
  %v4112 = vmul.f32 %v3705, %v4049
  %v4113 = vmul.f32 %v3706, %v4049
  %v4114 = vmul.f32 %v3842, %v4045
  %v4115 = vsub.f32 %v3708, %v4114
  %v4117 = vlaneseq
  %v4118 = vshrl.u32 %v4117, 7
  %v4119 = vsub.s32 0, %v4118
  %v4120 = vrot.slane %v4115, %v4119
  %v4122 = vadd.f32 %v4050, %v4120
  %v4123 = vadd.f32 %v4051, %v4120
  %v4124 = vadd.f32 %v4052, %v4120
  %v4125 = vadd.f32 %v4053, %v4120
  %v4126 = vadd.f32 %v4054, %v4120
  %v4127 = vadd.f32 %v4055, %v4120
  %v4128 = vadd.f32 %v4056, %v4120
  %v4129 = vadd.f32 %v4057, %v4120
  %v4130 = vadd.f32 %v4058, %v4120
  %v4131 = vadd.f32 %v4059, %v4120
  %v4132 = vadd.f32 %v4060, %v4120
  %v4133 = vadd.f32 %v4061, %v4120
  %v4134 = vadd.f32 %v4062, %v4120
  %v4135 = vadd.f32 %v4063, %v4120
  %v4136 = vadd.f32 %v4064, %v4120
  %v4137 = vadd.f32 %v4065, %v4120
  %v4138 = vadd.f32 %v4066, %v4120
  %v4139 = vadd.f32 %v4067, %v4120
  %v4140 = vadd.f32 %v4068, %v4120
  %v4141 = vadd.f32 %v4069, %v4120
  %v4142 = vadd.f32 %v4070, %v4120
  %v4143 = vadd.f32 %v4071, %v4120
  %v4144 = vadd.f32 %v4072, %v4120
  %v4145 = vadd.f32 %v4073, %v4120
  %v4146 = vadd.f32 %v4074, %v4120
  %v4147 = vadd.f32 %v4075, %v4120
  %v4148 = vadd.f32 %v4076, %v4120
  %v4149 = vadd.f32 %v4077, %v4120
  %v4150 = vadd.f32 %v4078, %v4120
  %v4151 = vadd.f32 %v4079, %v4120
  %v4152 = vadd.f32 %v4080, %v4120
  %v4153 = vadd.f32 %v4081, %v4120
  %v4154 = vadd.f32 %v4082, %v4120
  %v4155 = vadd.f32 %v4083, %v4120
  %v4156 = vadd.f32 %v4084, %v4120
  %v4157 = vadd.f32 %v4085, %v4120
  %v4158 = vadd.f32 %v4086, %v4120
  %v4159 = vadd.f32 %v4087, %v4120
  %v4160 = vadd.f32 %v4088, %v4120
  %v4161 = vadd.f32 %v4089, %v4120
  %v4162 = vadd.f32 %v4090, %v4120
  %v4163 = vadd.f32 %v4091, %v4120
  %v4164 = vadd.f32 %v4092, %v4120
  %v4165 = vadd.f32 %v4093, %v4120
  %v4166 = vadd.f32 %v4094, %v4120
  %v4167 = vadd.f32 %v4095, %v4120
  %v4168 = vadd.f32 %v4096, %v4120
  %v4169 = vadd.f32 %v4097, %v4120
  %v4170 = vadd.f32 %v4098, %v4120
  %v4171 = vadd.f32 %v4099, %v4120
  %v4172 = vadd.f32 %v4100, %v4120
  %v4173 = vadd.f32 %v4101, %v4120
  %v4174 = vadd.f32 %v4102, %v4120
  %v4175 = vadd.f32 %v4103, %v4120
  %v4176 = vadd.f32 %v4104, %v4120
  %v4177 = vadd.f32 %v4105, %v4120
  %v4178 = vadd.f32 %v4106, %v4120
  %v4179 = vadd.f32 %v4107, %v4120
  %v4180 = vadd.f32 %v4108, %v4120
  %v4181 = vadd.f32 %v4109, %v4120
  %v4182 = vadd.f32 %v4110, %v4120
  %v4183 = vadd.f32 %v4111, %v4120
  %v4184 = vadd.f32 %v4112, %v4120
  %v4185 = vadd.f32 %v4113, %v4120
  %v4186 = vld [vmem:[%s1] sm:$0x3]
  %v4187 = vld [vmem:[%s6] sm:$0xff]
  %v4188 = vld [vmem:[%s6 + $0x8] sm:$0xff]
  %v4189 = vld [vmem:[%s6 + $0x10] sm:$0xff]
  %v4190 = vld [vmem:[%s6 + $0x18] sm:$0xff]
  %v4191 = vld [vmem:[%s7] sm:$0x1]
  %v4193 = vlaneseq
  %v4194 = vshrl.u32 %v4193, 7
  %v4195 = vsub.s32 0, %v4194
  %v4196 = vrot.slane %v4191, %v4195
  %v4199 = vsel %vm3129, %v4186, 0
  %4201 = vmatprep.subr.mxu0 0.0
  %4202 = vmatpush1.msra.mxu0 %v4187
  %4203 = vmatprep.subr.mxu0 0.0
  %4204 = vmatpush1.msra.mxu0 %v4188
  %4205 = vmatprep.subr.mxu0 0.0
  %4206 = vmatpush1.msra.mxu0 %v4189
  %4207 = vmatprep.subr.mxu0 0.0
  %4208 = vmatpush1.msra.mxu0 %v4190
  %4209 = vmatprep.subr.mxu0 0.0
  %4210 = vmatpush1.msra.mxu0 0.0
  %4211 = vmatprep.subr.mxu0 0.0
  %4212 = vmatpush1.msra.mxu0 0.0
  %4213 = vmatprep.subr.mxu0 0.0
  %4214 = vmatpush1.msra.mxu0 0.0
  %4215 = vmatprep.subr.mxu0 0.0
  %4216 = vmatpush1.msra.mxu0 0.0
  %4217 = vmatprep.subr.mxu0 0.0
  %4218 = vmatpush1.msra.mxu0 0.0
  %4219 = vmatprep.subr.mxu0 0.0
  %4220 = vmatpush1.msra.mxu0 0.0
  %4221 = vmatprep.subr.mxu0 0.0
  %4222 = vmatpush1.msra.mxu0 0.0
  %4223 = vmatprep.subr.mxu0 0.0
  %4224 = vmatpush1.msra.mxu0 0.0
  %4225 = vmatprep.subr.mxu0 0.0
  %4226 = vmatpush1.msra.mxu0 0.0
  %4227 = vmatprep.subr.mxu0 0.0
  %4228 = vmatpush1.msra.mxu0 0.0
  %4229 = vmatprep.subr.mxu0 0.0
  %4230 = vmatpush1.msra.mxu0 0.0
  %4231 = vmatprep.subr.mxu0 0.0
  %4232 = vmatpush1.msra.mxu0 0.0
  %4233 = vmatprep.subr.mxu0 0.0
  %4234 = vmatpush1.msra.mxu0 0.0
  %4235 = vmatprep.subr.mxu0 0.0
  %4236 = vmatpush1.msra.mxu0 0.0
  %4237 = vmatprep.subr.mxu0 0.0
  %4238 = vmatpush1.msra.mxu0 0.0
  %4239 = vmatprep.subr.mxu0 0.0
  %4240 = vmatpush1.msra.mxu0 0.0
  %4241 = vmatprep.subr.mxu0 0.0
  %4242 = vmatpush1.msra.mxu0 0.0
  %4243 = vmatprep.subr.mxu0 0.0
  %4244 = vmatpush1.msra.mxu0 0.0
  %4245 = vmatprep.subr.mxu0 0.0
  %4246 = vmatpush1.msra.mxu0 0.0
  %4247 = vmatprep.subr.mxu0 0.0
  %4248 = vmatpush1.msra.mxu0 0.0
  %4249 = vmatprep.subr.mxu0 0.0
  %4250 = vmatpush1.msra.mxu0 0.0
  %4251 = vmatprep.subr.mxu0 0.0
  %4252 = vmatpush1.msra.mxu0 0.0
  %4253 = vmatprep.subr.mxu0 0.0
  %4254 = vmatpush1.msra.mxu0 0.0
  %4255 = vmatprep.subr.mxu0 0.0
  %4256 = vmatpush1.msra.mxu0 0.0
  %4257 = vmatprep.subr.mxu0 0.0
  %4258 = vmatpush1.msra.mxu0 0.0
  %4259 = vmatprep.subr.mxu0 0.0
  %4260 = vmatpush1.msra.mxu0 0.0
  %4261 = vmatprep.subr.mxu0 0.0
  %4262 = vmatpush1.msra.mxu0 0.0
  %4263 = vmatprep.subr.mxu0 0.0
  %4264 = vmatpush1.msra.mxu0 0.0
  %4265 = vmatprep.mubr.f32.mxu0 0.0
  %4266 = vmatmul.mubr.f32.gmra.mrb[0].mxu0 %v4199
  %v4267 = vpop.f32.mrb[0].mxu0
  %v4268 = vadd.f32 %v4196, %v4267
  %v4269 = vpop.f32.mrb[0].mxu0
  %4270 = vdwg.mxu0
  %v4271 = vmax.f32 %v4268, 0.0
  %v4274 = vunpack.c.l.s4 1966171168
  %v4275 = vunpack.c.0.s8 %v4274
  %v4276 = vlaneseq
  %v4277 = vshrl.u32 %v4276, 7
  %v4278 = vsub.s32 %v4275, %v4277
  %v4279 = vrot.slane %v4271, %v4278
  %v4280 = vcombine.high %v4279, %v4279
  %v4282 = vunpack.c.l.s4 1966171168
  %v4283 = vunpack.c.0.s8 %v4282
  %v4284 = vlaneseq
  %v4285 = vshrl.u32 %v4284, 7
  %v4286 = vsub.s32 %v4283, %v4285
  %v4287 = vrot.slane %v4279, %v4286
  %v4289 = vunpack.c.l.s4 1966171168
  %v4290 = vunpack.c.0.s8 %v4289
  %v4291 = vlaneseq
  %v4292 = vshrl.u32 %v4291, 7
  %v4293 = vsub.s32 %v4290, %v4292
  %v4294 = vrot.slane %v4280, %v4293
  %v4295 = vlaneseq
  %v4296 = vshrl.u32 %v4295, 7
  %v4297 = vsub.s32 0, %v4296
  %v4298 = vrot.slane %v4287, %v4297
  %v4299 = vlaneseq
  %v4300 = vshrl.u32 %v4299, 7
  %v4301 = vsub.s32 0, %v4300
  %v4302 = vrot.slane %v4294, %v4301
  %v4305 = vadd.f32 %v4122, %v4298
  %v4306 = vadd.f32 %v4123, %v4298
  %v4307 = vadd.f32 %v4124, %v4298
  %v4308 = vadd.f32 %v4125, %v4298
  %v4309 = vadd.f32 %v4126, %v4298
  %v4310 = vadd.f32 %v4127, %v4298
  %v4311 = vadd.f32 %v4128, %v4298
  %v4312 = vadd.f32 %v4129, %v4298
  %v4313 = vadd.f32 %v4130, %v4298
  %v4314 = vadd.f32 %v4131, %v4298
  %v4315 = vadd.f32 %v4132, %v4298
  %v4316 = vadd.f32 %v4133, %v4298
  %v4317 = vadd.f32 %v4134, %v4298
  %v4318 = vadd.f32 %v4135, %v4298
  %v4319 = vadd.f32 %v4136, %v4298
  %v4320 = vadd.f32 %v4137, %v4298
  %v4321 = vadd.f32 %v4138, %v4298
  %v4322 = vadd.f32 %v4139, %v4298
  %v4323 = vadd.f32 %v4140, %v4298
  %v4324 = vadd.f32 %v4141, %v4298
  %v4325 = vadd.f32 %v4142, %v4298
  %v4326 = vadd.f32 %v4143, %v4298
  %v4327 = vadd.f32 %v4144, %v4298
  %v4328 = vadd.f32 %v4145, %v4298
  %v4329 = vadd.f32 %v4146, %v4298
  %v4330 = vadd.f32 %v4147, %v4298
  %v4331 = vadd.f32 %v4148, %v4298
  %v4332 = vadd.f32 %v4149, %v4298
  %v4333 = vadd.f32 %v4150, %v4298
  %v4334 = vadd.f32 %v4151, %v4298
  %v4335 = vadd.f32 %v4152, %v4298
  %v4336 = vadd.f32 %v4153, %v4298
  %v4337 = vadd.f32 %v4154, %v4302
  %v4338 = vadd.f32 %v4155, %v4302
  %v4339 = vadd.f32 %v4156, %v4302
  %v4340 = vadd.f32 %v4157, %v4302
  %v4341 = vadd.f32 %v4158, %v4302
  %v4342 = vadd.f32 %v4159, %v4302
  %v4343 = vadd.f32 %v4160, %v4302
  %v4344 = vadd.f32 %v4161, %v4302
  %v4345 = vadd.f32 %v4162, %v4302
  %v4346 = vadd.f32 %v4163, %v4302
  %v4347 = vadd.f32 %v4164, %v4302
  %v4348 = vadd.f32 %v4165, %v4302
  %v4349 = vadd.f32 %v4166, %v4302
  %v4350 = vadd.f32 %v4167, %v4302
  %v4351 = vadd.f32 %v4168, %v4302
  %v4352 = vadd.f32 %v4169, %v4302
  %v4353 = vadd.f32 %v4170, %v4302
  %v4354 = vadd.f32 %v4171, %v4302
  %v4355 = vadd.f32 %v4172, %v4302
  %v4356 = vadd.f32 %v4173, %v4302
  %v4357 = vadd.f32 %v4174, %v4302
  %v4358 = vadd.f32 %v4175, %v4302
  %v4359 = vadd.f32 %v4176, %v4302
  %v4360 = vadd.f32 %v4177, %v4302
  %v4361 = vadd.f32 %v4178, %v4302
  %v4362 = vadd.f32 %v4179, %v4302
  %v4363 = vadd.f32 %v4180, %v4302
  %v4364 = vadd.f32 %v4181, %v4302
  %v4365 = vadd.f32 %v4182, %v4302
  %v4366 = vadd.f32 %v4183, %v4302
  %v4367 = vadd.f32 %v4184, %v4302
  %v4368 = vadd.f32 %v4185, %v4302
  %4369 = vst.msk [vmem:[#allocation2] sm:$0xff] %vm2739, 0.0
  %4370 = vst.msk [vmem:[#allocation2 + $0x8] sm:$0xff] %vm2739, 0.0
  %vm4371 = vcmask 58368
  %4372 = vst.msk [vmem:[#allocation2 + $0x10] sm:$0x3] %vm4371, 0.0
  %4373 = vst.msk [vmem:[#allocation2 + $0x1b0] sm:$0xff] %vm2739, 0.0
  %4374 = vst.msk [vmem:[#allocation2 + $0x1b8] sm:$0xff] %vm2739, 0.0
  %4375 = vst.msk [vmem:[#allocation2 + $0x1c0] sm:$0x3] %vm4371, 0.0
  %s4376 = scalar_lea.vmem [#allocation2], 408
  %4377 = vst.msk [vmem:[%s4376] sm:$0xff] %vm2739, 0.0
  %4378 = vst.msk [vmem:[%s4376 + $0x8] sm:$0xff] %vm2739, 0.0
  %4379 = vst.msk [vmem:[%s4376 + $0x10] sm:$0x3] %vm4371, 0.0
  %4380 = vst.msk [vmem:[%s4376 + $0x1b0] sm:$0xff] %vm2739, 0.0
  %4381 = vst.msk [vmem:[%s4376 + $0x1b8] sm:$0xff] %vm2739, 0.0
  %4382 = vst.msk [vmem:[%s4376 + $0x1c0] sm:$0x3] %vm4371, 0.0
  %vm4383 = vcmask 57344
  %4384 = vst.msk [vmem:[#allocation2] sm:$0x1] %vm4383, 0.0
  %4385 = vst.msk [vmem:[#allocation2 + $0x18] sm:$0x1] %vm4383, 0.0
  %4386 = vst.msk [vmem:[#allocation2 + $0x30] sm:$0x1] %vm4383, 0.0
  %4387 = vst.msk [vmem:[#allocation2 + $0x48] sm:$0x1] %vm4383, 0.0
  %4388 = vst.msk [vmem:[#allocation2 + $0x60] sm:$0x1] %vm4383, 0.0
  %4389 = vst.msk [vmem:[#allocation2 + $0x78] sm:$0x1] %vm4383, 0.0
  %4390 = vst.msk [vmem:[#allocation2 + $0x90] sm:$0x1] %vm4383, 0.0
  %4391 = vst.msk [vmem:[#allocation2 + $0xa8] sm:$0x1] %vm4383, 0.0
  %4392 = vst.msk [vmem:[#allocation2 + $0xc0] sm:$0x1] %vm4383, 0.0
  %4393 = vst.msk [vmem:[#allocation2 + $0xd8] sm:$0x1] %vm4383, 0.0
  %4394 = vst.msk [vmem:[#allocation2 + $0xf0] sm:$0x1] %vm4383, 0.0
  %4395 = vst.msk [vmem:[#allocation2 + $0x108] sm:$0x1] %vm4383, 0.0
  %4396 = vst.msk [vmem:[#allocation2 + $0x120] sm:$0x1] %vm4383, 0.0
  %4397 = vst.msk [vmem:[#allocation2 + $0x138] sm:$0x1] %vm4383, 0.0
  %4398 = vst.msk [vmem:[#allocation2 + $0x150] sm:$0x1] %vm4383, 0.0
  %4399 = vst.msk [vmem:[#allocation2 + $0x168] sm:$0x1] %vm4383, 0.0
  %4400 = vst.msk [vmem:[#allocation2 + $0x180] sm:$0x1] %vm4383, 0.0
  %4401 = vst.msk [vmem:[#allocation2 + $0x198] sm:$0x1] %vm4383, 0.0
  %4402 = vst.msk [vmem:[#allocation2 + $0x1b0] sm:$0x1] %vm4383, 0.0
  %4403 = vst.msk [vmem:[#allocation2 + $0x1c8] sm:$0x1] %vm4383, 0.0
  %4404 = vst.msk [vmem:[#allocation2 + $0x1e0] sm:$0x1] %vm4383, 0.0
  %4405 = vst.msk [vmem:[#allocation2 + $0x1f8] sm:$0x1] %vm4383, 0.0
  %4406 = vst.msk [vmem:[#allocation2 + $0x210] sm:$0x1] %vm4383, 0.0
  %4407 = vst.msk [vmem:[#allocation2 + $0x228] sm:$0x1] %vm4383, 0.0
  %4408 = vst.msk [vmem:[#allocation2 + $0x240] sm:$0x1] %vm4383, 0.0
  %4409 = vst.msk [vmem:[#allocation2 + $0x258] sm:$0x1] %vm4383, 0.0
  %4410 = vst.msk [vmem:[#allocation2 + $0x270] sm:$0x1] %vm4383, 0.0
  %4411 = vst.msk [vmem:[#allocation2 + $0x288] sm:$0x1] %vm4383, 0.0
  %4412 = vst.msk [vmem:[#allocation2 + $0x2a0] sm:$0x1] %vm4383, 0.0
  %4413 = vst.msk [vmem:[#allocation2 + $0x2b8] sm:$0x1] %vm4383, 0.0
  %4414 = vst.msk [vmem:[#allocation2 + $0x2d0] sm:$0x1] %vm4383, 0.0
  %4415 = vst.msk [vmem:[#allocation2 + $0x2e8] sm:$0x1] %vm4383, 0.0
  %4416 = vst.msk [vmem:[#allocation2 + $0x300] sm:$0x1] %vm4383, 0.0
  %4417 = vst.msk [vmem:[#allocation2 + $0x318] sm:$0x1] %vm4383, 0.0
  %4418 = vst.msk [vmem:[#allocation2 + $0x330] sm:$0x1] %vm4383, 0.0
  %4419 = vst.msk [vmem:[#allocation2 + $0x348] sm:$0x1] %vm4383, 0.0
  %4420 = vst.msk [vmem:[#allocation2 + $0x11] sm:$0x1] %vm4383, 0.0
  %4421 = vst.msk [vmem:[#allocation2 + $0x29] sm:$0x1] %vm4383, 0.0
  %4422 = vst.msk [vmem:[#allocation2 + $0x41] sm:$0x1] %vm4383, 0.0
  %4423 = vst.msk [vmem:[#allocation2 + $0x59] sm:$0x1] %vm4383, 0.0
  %4424 = vst.msk [vmem:[#allocation2 + $0x71] sm:$0x1] %vm4383, 0.0
  %4425 = vst.msk [vmem:[#allocation2 + $0x89] sm:$0x1] %vm4383, 0.0
  %4426 = vst.msk [vmem:[#allocation2 + $0xa1] sm:$0x1] %vm4383, 0.0
  %4427 = vst.msk [vmem:[#allocation2 + $0xb9] sm:$0x1] %vm4383, 0.0
  %4428 = vst.msk [vmem:[#allocation2 + $0xd1] sm:$0x1] %vm4383, 0.0
  %4429 = vst.msk [vmem:[#allocation2 + $0xe9] sm:$0x1] %vm4383, 0.0
  %4430 = vst.msk [vmem:[#allocation2 + $0x101] sm:$0x1] %vm4383, 0.0
  %4431 = vst.msk [vmem:[#allocation2 + $0x119] sm:$0x1] %vm4383, 0.0
  %4432 = vst.msk [vmem:[#allocation2 + $0x131] sm:$0x1] %vm4383, 0.0
  %4433 = vst.msk [vmem:[#allocation2 + $0x149] sm:$0x1] %vm4383, 0.0
  %4434 = vst.msk [vmem:[#allocation2 + $0x161] sm:$0x1] %vm4383, 0.0
  %4435 = vst.msk [vmem:[#allocation2 + $0x179] sm:$0x1] %vm4383, 0.0
  %4436 = vst.msk [vmem:[#allocation2 + $0x191] sm:$0x1] %vm4383, 0.0
  %4437 = vst.msk [vmem:[#allocation2 + $0x1a9] sm:$0x1] %vm4383, 0.0
  %4438 = vst.msk [vmem:[#allocation2 + $0x1c1] sm:$0x1] %vm4383, 0.0
  %4439 = vst.msk [vmem:[#allocation2 + $0x1d9] sm:$0x1] %vm4383, 0.0
  %4440 = vst.msk [vmem:[#allocation2 + $0x1f1] sm:$0x1] %vm4383, 0.0
  %4441 = vst.msk [vmem:[#allocation2 + $0x209] sm:$0x1] %vm4383, 0.0
  %4442 = vst.msk [vmem:[#allocation2 + $0x221] sm:$0x1] %vm4383, 0.0
  %4443 = vst.msk [vmem:[#allocation2 + $0x239] sm:$0x1] %vm4383, 0.0
  %4444 = vst.msk [vmem:[#allocation2 + $0x251] sm:$0x1] %vm4383, 0.0
  %4445 = vst.msk [vmem:[#allocation2 + $0x269] sm:$0x1] %vm4383, 0.0
  %4446 = vst.msk [vmem:[#allocation2 + $0x281] sm:$0x1] %vm4383, 0.0
  %4447 = vst.msk [vmem:[#allocation2 + $0x299] sm:$0x1] %vm4383, 0.0
  %4448 = vst.msk [vmem:[#allocation2 + $0x2b1] sm:$0x1] %vm4383, 0.0
  %4449 = vst.msk [vmem:[#allocation2 + $0x2c9] sm:$0x1] %vm4383, 0.0
  %4450 = vst.msk [vmem:[#allocation2 + $0x2e1] sm:$0x1] %vm4383, 0.0
  %4451 = vst.msk [vmem:[#allocation2 + $0x2f9] sm:$0x1] %vm4383, 0.0
  %4452 = vst.msk [vmem:[#allocation2 + $0x311] sm:$0x1] %vm4383, 0.0
  %4453 = vst.msk [vmem:[#allocation2 + $0x329] sm:$0x1] %vm4383, 0.0
  %4454 = vst.msk [vmem:[#allocation2 + $0x341] sm:$0x1] %vm4383, 0.0
  %4455 = vst.msk [vmem:[#allocation2 + $0x359] sm:$0x1] %vm4383, 0.0
  %s4456 = scalar_lea.vmem [#allocation2], 24
  %4457 = vst.msk [vmem:[%s4456 + $0x1] sm:$0xff] %vm2739, %v4305
  %4458 = vst.msk [vmem:[%s4456 + $0x9] sm:$0xff] %vm2739, %v4306
  %4459 = vst.msk [vmem:[%s4456 + $0x19] sm:$0xff] %vm2739, %v4307
  %4460 = vst.msk [vmem:[%s4456 + $0x21] sm:$0xff] %vm2739, %v4308
  %4461 = vst.msk [vmem:[%s4456 + $0x31] sm:$0xff] %vm2739, %v4309
  %4462 = vst.msk [vmem:[%s4456 + $0x39] sm:$0xff] %vm2739, %v4310
  %4463 = vst.msk [vmem:[%s4456 + $0x49] sm:$0xff] %vm2739, %v4311
  %4464 = vst.msk [vmem:[%s4456 + $0x51] sm:$0xff] %vm2739, %v4312
  %4465 = vst.msk [vmem:[%s4456 + $0x61] sm:$0xff] %vm2739, %v4313
  %4466 = vst.msk [vmem:[%s4456 + $0x69] sm:$0xff] %vm2739, %v4314
  %4467 = vst.msk [vmem:[%s4456 + $0x79] sm:$0xff] %vm2739, %v4315
  %4468 = vst.msk [vmem:[%s4456 + $0x81] sm:$0xff] %vm2739, %v4316
  %4469 = vst.msk [vmem:[%s4456 + $0x91] sm:$0xff] %vm2739, %v4317
  %4470 = vst.msk [vmem:[%s4456 + $0x99] sm:$0xff] %vm2739, %v4318
  %4471 = vst.msk [vmem:[%s4456 + $0xa9] sm:$0xff] %vm2739, %v4319
  %4472 = vst.msk [vmem:[%s4456 + $0xb1] sm:$0xff] %vm2739, %v4320
  %4473 = vst.msk [vmem:[%s4456 + $0xc1] sm:$0xff] %vm2739, %v4321
  %4474 = vst.msk [vmem:[%s4456 + $0xc9] sm:$0xff] %vm2739, %v4322
  %4475 = vst.msk [vmem:[%s4456 + $0xd9] sm:$0xff] %vm2739, %v4323
  %4476 = vst.msk [vmem:[%s4456 + $0xe1] sm:$0xff] %vm2739, %v4324
  %4477 = vst.msk [vmem:[%s4456 + $0xf1] sm:$0xff] %vm2739, %v4325
  %4478 = vst.msk [vmem:[%s4456 + $0xf9] sm:$0xff] %vm2739, %v4326
  %4479 = vst.msk [vmem:[%s4456 + $0x109] sm:$0xff] %vm2739, %v4327
  %4480 = vst.msk [vmem:[%s4456 + $0x111] sm:$0xff] %vm2739, %v4328
  %4481 = vst.msk [vmem:[%s4456 + $0x121] sm:$0xff] %vm2739, %v4329
  %4482 = vst.msk [vmem:[%s4456 + $0x129] sm:$0xff] %vm2739, %v4330
  %4483 = vst.msk [vmem:[%s4456 + $0x139] sm:$0xff] %vm2739, %v4331
  %4484 = vst.msk [vmem:[%s4456 + $0x141] sm:$0xff] %vm2739, %v4332
  %4485 = vst.msk [vmem:[%s4456 + $0x151] sm:$0xff] %vm2739, %v4333
  %4486 = vst.msk [vmem:[%s4456 + $0x159] sm:$0xff] %vm2739, %v4334
  %4487 = vst.msk [vmem:[%s4456 + $0x169] sm:$0xff] %vm2739, %v4335
  %4488 = vst.msk [vmem:[%s4456 + $0x171] sm:$0xff] %vm2739, %v4336
  %4489 = vst.msk [vmem:[%s4456 + $0x1b1] sm:$0xff] %vm2739, %v4337
  %4490 = vst.msk [vmem:[%s4456 + $0x1b9] sm:$0xff] %vm2739, %v4338
  %4491 = vst.msk [vmem:[%s4456 + $0x1c9] sm:$0xff] %vm2739, %v4339
  %4492 = vst.msk [vmem:[%s4456 + $0x1d1] sm:$0xff] %vm2739, %v4340
  %4493 = vst.msk [vmem:[%s4456 + $0x1e1] sm:$0xff] %vm2739, %v4341
  %4494 = vst.msk [vmem:[%s4456 + $0x1e9] sm:$0xff] %vm2739, %v4342
  %4495 = vst.msk [vmem:[%s4456 + $0x1f9] sm:$0xff] %vm2739, %v4343
  %4496 = vst.msk [vmem:[%s4456 + $0x201] sm:$0xff] %vm2739, %v4344
  %4497 = vst.msk [vmem:[%s4456 + $0x211] sm:$0xff] %vm2739, %v4345
  %4498 = vst.msk [vmem:[%s4456 + $0x219] sm:$0xff] %vm2739, %v4346
  %4499 = vst.msk [vmem:[%s4456 + $0x229] sm:$0xff] %vm2739, %v4347
  %4500 = vst.msk [vmem:[%s4456 + $0x231] sm:$0xff] %vm2739, %v4348
  %4501 = vst.msk [vmem:[%s4456 + $0x241] sm:$0xff] %vm2739, %v4349
  %4502 = vst.msk [vmem:[%s4456 + $0x249] sm:$0xff] %vm2739, %v4350
  %4503 = vst.msk [vmem:[%s4456 + $0x259] sm:$0xff] %vm2739, %v4351
  %4504 = vst.msk [vmem:[%s4456 + $0x261] sm:$0xff] %vm2739, %v4352
  %4505 = vst.msk [vmem:[%s4456 + $0x271] sm:$0xff] %vm2739, %v4353
  %4506 = vst.msk [vmem:[%s4456 + $0x279] sm:$0xff] %vm2739, %v4354
  %4507 = vst.msk [vmem:[%s4456 + $0x289] sm:$0xff] %vm2739, %v4355
  %4508 = vst.msk [vmem:[%s4456 + $0x291] sm:$0xff] %vm2739, %v4356
  %4509 = vst.msk [vmem:[%s4456 + $0x2a1] sm:$0xff] %vm2739, %v4357
  %4510 = vst.msk [vmem:[%s4456 + $0x2a9] sm:$0xff] %vm2739, %v4358
  %4511 = vst.msk [vmem:[%s4456 + $0x2b9] sm:$0xff] %vm2739, %v4359
  %4512 = vst.msk [vmem:[%s4456 + $0x2c1] sm:$0xff] %vm2739, %v4360
  %4513 = vst.msk [vmem:[%s4456 + $0x2d1] sm:$0xff] %vm2739, %v4361
  %4514 = vst.msk [vmem:[%s4456 + $0x2d9] sm:$0xff] %vm2739, %v4362
  %4515 = vst.msk [vmem:[%s4456 + $0x2e9] sm:$0xff] %vm2739, %v4363
  %4516 = vst.msk [vmem:[%s4456 + $0x2f1] sm:$0xff] %vm2739, %v4364
  %4517 = vst.msk [vmem:[%s4456 + $0x301] sm:$0xff] %vm2739, %v4365
  %4518 = vst.msk [vmem:[%s4456 + $0x309] sm:$0xff] %vm2739, %v4366
  %4519 = vst.msk [vmem:[%s4456 + $0x319] sm:$0xff] %vm2739, %v4367
  %4520 = vst.msk [vmem:[%s4456 + $0x321] sm:$0xff] %vm2739, %v4368
  %v4521 = vld [vmem:[#allocation2] sm:$0xff]
  %v4522 = vld [vmem:[#allocation2 + $0x8] sm:$0xff]
  %v4523 = vld [vmem:[#allocation2 + $0x18] sm:$0xff]
  %v4524 = vld [vmem:[#allocation2 + $0x20] sm:$0xff]
  %v4525 = vld [vmem:[#allocation2 + $0x30] sm:$0xff]
  %v4526 = vld [vmem:[#allocation2 + $0x38] sm:$0xff]
  %v4527 = vld [vmem:[#allocation2 + $0x48] sm:$0xff]
  %v4528 = vld [vmem:[#allocation2 + $0x50] sm:$0xff]
  %v4529 = vld [vmem:[#allocation2 + $0x60] sm:$0xff]
  %v4530 = vld [vmem:[#allocation2 + $0x68] sm:$0xff]
  %v4531 = vld [vmem:[#allocation2 + $0x78] sm:$0xff]
  %v4532 = vld [vmem:[#allocation2 + $0x80] sm:$0xff]
  %v4533 = vld [vmem:[#allocation2 + $0x90] sm:$0xff]
  %v4534 = vld [vmem:[#allocation2 + $0x98] sm:$0xff]
  %v4535 = vld [vmem:[#allocation2 + $0xa8] sm:$0xff]
  %v4536 = vld [vmem:[#allocation2 + $0xb0] sm:$0xff]
  %v4537 = vld [vmem:[#allocation2 + $0xc0] sm:$0xff]
  %v4538 = vld [vmem:[#allocation2 + $0xc8] sm:$0xff]
  %v4539 = vld [vmem:[#allocation2 + $0xd8] sm:$0xff]
  %v4540 = vld [vmem:[#allocation2 + $0xe0] sm:$0xff]
  %v4541 = vld [vmem:[#allocation2 + $0xf0] sm:$0xff]
  %v4542 = vld [vmem:[#allocation2 + $0xf8] sm:$0xff]
  %v4543 = vld [vmem:[#allocation2 + $0x108] sm:$0xff]
  %v4544 = vld [vmem:[#allocation2 + $0x110] sm:$0xff]
  %v4545 = vld [vmem:[#allocation2 + $0x120] sm:$0xff]
  %v4546 = vld [vmem:[#allocation2 + $0x128] sm:$0xff]
  %v4547 = vld [vmem:[#allocation2 + $0x138] sm:$0xff]
  %v4548 = vld [vmem:[#allocation2 + $0x140] sm:$0xff]
  %v4549 = vld [vmem:[#allocation2 + $0x150] sm:$0xff]
  %v4550 = vld [vmem:[#allocation2 + $0x158] sm:$0xff]
  %v4551 = vld [vmem:[#allocation2 + $0x168] sm:$0xff]
  %v4552 = vld [vmem:[#allocation2 + $0x170] sm:$0xff]
  %v4553 = vld [vmem:[#allocation2 + $0x1b0] sm:$0xff]
  %v4554 = vld [vmem:[#allocation2 + $0x1b8] sm:$0xff]
  %v4555 = vld [vmem:[#allocation2 + $0x1c8] sm:$0xff]
  %v4556 = vld [vmem:[#allocation2 + $0x1d0] sm:$0xff]
  %v4557 = vld [vmem:[#allocation2 + $0x1e0] sm:$0xff]
  %v4558 = vld [vmem:[#allocation2 + $0x1e8] sm:$0xff]
  %v4559 = vld [vmem:[#allocation2 + $0x1f8] sm:$0xff]
  %v4560 = vld [vmem:[#allocation2 + $0x200] sm:$0xff]
  %v4561 = vld [vmem:[#allocation2 + $0x210] sm:$0xff]
  %v4562 = vld [vmem:[#allocation2 + $0x218] sm:$0xff]
  %v4563 = vld [vmem:[#allocation2 + $0x228] sm:$0xff]
  %v4564 = vld [vmem:[#allocation2 + $0x230] sm:$0xff]
  %v4565 = vld [vmem:[#allocation2 + $0x240] sm:$0xff]
  %v4566 = vld [vmem:[#allocation2 + $0x248] sm:$0xff]
  %v4567 = vld [vmem:[#allocation2 + $0x258] sm:$0xff]
  %v4568 = vld [vmem:[#allocation2 + $0x260] sm:$0xff]
  %v4569 = vld [vmem:[#allocation2 + $0x270] sm:$0xff]
  %v4570 = vld [vmem:[#allocation2 + $0x278] sm:$0xff]
  %v4571 = vld [vmem:[#allocation2 + $0x288] sm:$0xff]
  %v4572 = vld [vmem:[#allocation2 + $0x290] sm:$0xff]
  %v4573 = vld [vmem:[#allocation2 + $0x2a0] sm:$0xff]
  %v4574 = vld [vmem:[#allocation2 + $0x2a8] sm:$0xff]
  %v4575 = vld [vmem:[#allocation2 + $0x2b8] sm:$0xff]
  %v4576 = vld [vmem:[#allocation2 + $0x2c0] sm:$0xff]
  %v4577 = vld [vmem:[#allocation2 + $0x2d0] sm:$0xff]
  %v4578 = vld [vmem:[#allocation2 + $0x2d8] sm:$0xff]
  %v4579 = vld [vmem:[#allocation2 + $0x2e8] sm:$0xff]
  %v4580 = vld [vmem:[#allocation2 + $0x2f0] sm:$0xff]
  %v4581 = vld [vmem:[#allocation2 + $0x300] sm:$0xff]
  %v4582 = vld [vmem:[#allocation2 + $0x308] sm:$0xff]
  %v4583 = vld [vmem:[#allocation2 + $0x318] sm:$0xff]
  %v4584 = vld [vmem:[#allocation2 + $0x320] sm:$0xff]
  %v4585 = vld [vmem:[#allocation2 + $0x1] sm:$0xff]
  %v4586 = vld [vmem:[#allocation2 + $0x9] sm:$0xff]
  %v4587 = vld [vmem:[#allocation2 + $0x19] sm:$0xff]
  %v4588 = vld [vmem:[#allocation2 + $0x21] sm:$0xff]
  %v4589 = vld [vmem:[#allocation2 + $0x31] sm:$0xff]
  %v4590 = vld [vmem:[#allocation2 + $0x39] sm:$0xff]
  %v4591 = vld [vmem:[#allocation2 + $0x49] sm:$0xff]
  %v4592 = vld [vmem:[#allocation2 + $0x51] sm:$0xff]
  %v4593 = vld [vmem:[#allocation2 + $0x61] sm:$0xff]
  %v4594 = vld [vmem:[#allocation2 + $0x69] sm:$0xff]
  %v4595 = vld [vmem:[#allocation2 + $0x79] sm:$0xff]
  %v4596 = vld [vmem:[#allocation2 + $0x81] sm:$0xff]
  %v4597 = vld [vmem:[#allocation2 + $0x91] sm:$0xff]
  %v4598 = vld [vmem:[#allocation2 + $0x99] sm:$0xff]
  %v4599 = vld [vmem:[#allocation2 + $0xa9] sm:$0xff]
  %v4600 = vld [vmem:[#allocation2 + $0xb1] sm:$0xff]
  %v4601 = vld [vmem:[#allocation2 + $0xc1] sm:$0xff]
  %v4602 = vld [vmem:[#allocation2 + $0xc9] sm:$0xff]
  %v4603 = vld [vmem:[#allocation2 + $0xd9] sm:$0xff]
  %v4604 = vld [vmem:[#allocation2 + $0xe1] sm:$0xff]
  %v4605 = vld [vmem:[#allocation2 + $0xf1] sm:$0xff]
  %v4606 = vld [vmem:[#allocation2 + $0xf9] sm:$0xff]
  %v4607 = vld [vmem:[#allocation2 + $0x109] sm:$0xff]
  %v4608 = vld [vmem:[#allocation2 + $0x111] sm:$0xff]
  %v4609 = vld [vmem:[#allocation2 + $0x121] sm:$0xff]
  %v4610 = vld [vmem:[#allocation2 + $0x129] sm:$0xff]
  %v4611 = vld [vmem:[#allocation2 + $0x139] sm:$0xff]
  %v4612 = vld [vmem:[#allocation2 + $0x141] sm:$0xff]
  %v4613 = vld [vmem:[#allocation2 + $0x151] sm:$0xff]
  %v4614 = vld [vmem:[#allocation2 + $0x159] sm:$0xff]
  %v4615 = vld [vmem:[#allocation2 + $0x169] sm:$0xff]
  %v4616 = vld [vmem:[#allocation2 + $0x171] sm:$0xff]
  %v4617 = vld [vmem:[#allocation2 + $0x1b1] sm:$0xff]
  %v4618 = vld [vmem:[#allocation2 + $0x1b9] sm:$0xff]
  %v4619 = vld [vmem:[#allocation2 + $0x1c9] sm:$0xff]
  %v4620 = vld [vmem:[#allocation2 + $0x1d1] sm:$0xff]
  %v4621 = vld [vmem:[#allocation2 + $0x1e1] sm:$0xff]
  %v4622 = vld [vmem:[#allocation2 + $0x1e9] sm:$0xff]
  %v4623 = vld [vmem:[#allocation2 + $0x1f9] sm:$0xff]
  %v4624 = vld [vmem:[#allocation2 + $0x201] sm:$0xff]
  %v4625 = vld [vmem:[#allocation2 + $0x211] sm:$0xff]
  %v4626 = vld [vmem:[#allocation2 + $0x219] sm:$0xff]
  %v4627 = vld [vmem:[#allocation2 + $0x229] sm:$0xff]
  %v4628 = vld [vmem:[#allocation2 + $0x231] sm:$0xff]
  %v4629 = vld [vmem:[#allocation2 + $0x241] sm:$0xff]
  %v4630 = vld [vmem:[#allocation2 + $0x249] sm:$0xff]
  %v4631 = vld [vmem:[#allocation2 + $0x259] sm:$0xff]
  %v4632 = vld [vmem:[#allocation2 + $0x261] sm:$0xff]
  %v4633 = vld [vmem:[#allocation2 + $0x271] sm:$0xff]
  %v4634 = vld [vmem:[#allocation2 + $0x279] sm:$0xff]
  %v4635 = vld [vmem:[#allocation2 + $0x289] sm:$0xff]
  %v4636 = vld [vmem:[#allocation2 + $0x291] sm:$0xff]
  %v4637 = vld [vmem:[#allocation2 + $0x2a1] sm:$0xff]
  %v4638 = vld [vmem:[#allocation2 + $0x2a9] sm:$0xff]
  %v4639 = vld [vmem:[#allocation2 + $0x2b9] sm:$0xff]
  %v4640 = vld [vmem:[#allocation2 + $0x2c1] sm:$0xff]
  %v4641 = vld [vmem:[#allocation2 + $0x2d1] sm:$0xff]
  %v4642 = vld [vmem:[#allocation2 + $0x2d9] sm:$0xff]
  %v4643 = vld [vmem:[#allocation2 + $0x2e9] sm:$0xff]
  %v4644 = vld [vmem:[#allocation2 + $0x2f1] sm:$0xff]
  %v4645 = vld [vmem:[#allocation2 + $0x301] sm:$0xff]
  %v4646 = vld [vmem:[#allocation2 + $0x309] sm:$0xff]
  %v4647 = vld [vmem:[#allocation2 + $0x319] sm:$0xff]
  %v4648 = vld [vmem:[#allocation2 + $0x321] sm:$0xff]
  %v4649 = vld [vmem:[#allocation2 + $0x2] sm:$0xff]
  %v4650 = vld [vmem:[#allocation2 + $0xa] sm:$0xff]
  %v4651 = vld [vmem:[#allocation2 + $0x1a] sm:$0xff]
  %v4652 = vld [vmem:[#allocation2 + $0x22] sm:$0xff]
  %v4653 = vld [vmem:[#allocation2 + $0x32] sm:$0xff]
  %v4654 = vld [vmem:[#allocation2 + $0x3a] sm:$0xff]
  %v4655 = vld [vmem:[#allocation2 + $0x4a] sm:$0xff]
  %v4656 = vld [vmem:[#allocation2 + $0x52] sm:$0xff]
  %v4657 = vld [vmem:[#allocation2 + $0x62] sm:$0xff]
  %v4658 = vld [vmem:[#allocation2 + $0x6a] sm:$0xff]
  %v4659 = vld [vmem:[#allocation2 + $0x7a] sm:$0xff]
  %v4660 = vld [vmem:[#allocation2 + $0x82] sm:$0xff]
  %v4661 = vld [vmem:[#allocation2 + $0x92] sm:$0xff]
  %v4662 = vld [vmem:[#allocation2 + $0x9a] sm:$0xff]
  %v4663 = vld [vmem:[#allocation2 + $0xaa] sm:$0xff]
  %v4664 = vld [vmem:[#allocation2 + $0xb2] sm:$0xff]
  %v4665 = vld [vmem:[#allocation2 + $0xc2] sm:$0xff]
  %v4666 = vld [vmem:[#allocation2 + $0xca] sm:$0xff]
  %v4667 = vld [vmem:[#allocation2 + $0xda] sm:$0xff]
  %v4668 = vld [vmem:[#allocation2 + $0xe2] sm:$0xff]
  %v4669 = vld [vmem:[#allocation2 + $0xf2] sm:$0xff]
  %v4670 = vld [vmem:[#allocation2 + $0xfa] sm:$0xff]
  %v4671 = vld [vmem:[#allocation2 + $0x10a] sm:$0xff]
  %v4672 = vld [vmem:[#allocation2 + $0x112] sm:$0xff]
  %v4673 = vld [vmem:[#allocation2 + $0x122] sm:$0xff]
  %v4674 = vld [vmem:[#allocation2 + $0x12a] sm:$0xff]
  %v4675 = vld [vmem:[#allocation2 + $0x13a] sm:$0xff]
  %v4676 = vld [vmem:[#allocation2 + $0x142] sm:$0xff]
  %v4677 = vld [vmem:[#allocation2 + $0x152] sm:$0xff]
  %v4678 = vld [vmem:[#allocation2 + $0x15a] sm:$0xff]
  %v4679 = vld [vmem:[#allocation2 + $0x16a] sm:$0xff]
  %v4680 = vld [vmem:[#allocation2 + $0x172] sm:$0xff]
  %v4681 = vld [vmem:[#allocation2 + $0x1b2] sm:$0xff]
  %v4682 = vld [vmem:[#allocation2 + $0x1ba] sm:$0xff]
  %v4683 = vld [vmem:[#allocation2 + $0x1ca] sm:$0xff]
  %v4684 = vld [vmem:[#allocation2 + $0x1d2] sm:$0xff]
  %v4685 = vld [vmem:[#allocation2 + $0x1e2] sm:$0xff]
  %v4686 = vld [vmem:[#allocation2 + $0x1ea] sm:$0xff]
  %v4687 = vld [vmem:[#allocation2 + $0x1fa] sm:$0xff]
  %v4688 = vld [vmem:[#allocation2 + $0x202] sm:$0xff]
  %v4689 = vld [vmem:[#allocation2 + $0x212] sm:$0xff]
  %v4690 = vld [vmem:[#allocation2 + $0x21a] sm:$0xff]
  %v4691 = vld [vmem:[#allocation2 + $0x22a] sm:$0xff]
  %v4692 = vld [vmem:[#allocation2 + $0x232] sm:$0xff]
  %v4693 = vld [vmem:[#allocation2 + $0x242] sm:$0xff]
  %v4694 = vld [vmem:[#allocation2 + $0x24a] sm:$0xff]
  %v4695 = vld [vmem:[#allocation2 + $0x25a] sm:$0xff]
  %v4696 = vld [vmem:[#allocation2 + $0x262] sm:$0xff]
  %v4697 = vld [vmem:[#allocation2 + $0x272] sm:$0xff]
  %v4698 = vld [vmem:[#allocation2 + $0x27a] sm:$0xff]
  %v4699 = vld [vmem:[#allocation2 + $0x28a] sm:$0xff]
  %v4700 = vld [vmem:[#allocation2 + $0x292] sm:$0xff]
  %v4701 = vld [vmem:[#allocation2 + $0x2a2] sm:$0xff]
  %v4702 = vld [vmem:[#allocation2 + $0x2aa] sm:$0xff]
  %v4703 = vld [vmem:[#allocation2 + $0x2ba] sm:$0xff]
  %v4704 = vld [vmem:[#allocation2 + $0x2c2] sm:$0xff]
  %v4705 = vld [vmem:[#allocation2 + $0x2d2] sm:$0xff]
  %v4706 = vld [vmem:[#allocation2 + $0x2da] sm:$0xff]
  %v4707 = vld [vmem:[#allocation2 + $0x2ea] sm:$0xff]
  %v4708 = vld [vmem:[#allocation2 + $0x2f2] sm:$0xff]
  %v4709 = vld [vmem:[#allocation2 + $0x302] sm:$0xff]
  %v4710 = vld [vmem:[#allocation2 + $0x30a] sm:$0xff]
  %v4711 = vld [vmem:[#allocation2 + $0x31a] sm:$0xff]
  %v4712 = vld [vmem:[#allocation2 + $0x322] sm:$0xff]
  %v4713 = vld [vmem:[%s4456] sm:$0xff]
  %v4714 = vld [vmem:[%s4456 + $0x8] sm:$0xff]
  %v4715 = vld [vmem:[%s4456 + $0x18] sm:$0xff]
  %v4716 = vld [vmem:[%s4456 + $0x20] sm:$0xff]
  %v4717 = vld [vmem:[%s4456 + $0x30] sm:$0xff]
  %v4718 = vld [vmem:[%s4456 + $0x38] sm:$0xff]
  %v4719 = vld [vmem:[%s4456 + $0x48] sm:$0xff]
  %v4720 = vld [vmem:[%s4456 + $0x50] sm:$0xff]
  %v4721 = vld [vmem:[%s4456 + $0x60] sm:$0xff]
  %v4722 = vld [vmem:[%s4456 + $0x68] sm:$0xff]
  %v4723 = vld [vmem:[%s4456 + $0x78] sm:$0xff]
  %v4724 = vld [vmem:[%s4456 + $0x80] sm:$0xff]
  %v4725 = vld [vmem:[%s4456 + $0x90] sm:$0xff]
  %v4726 = vld [vmem:[%s4456 + $0x98] sm:$0xff]
  %v4727 = vld [vmem:[%s4456 + $0xa8] sm:$0xff]
  %v4728 = vld [vmem:[%s4456 + $0xb0] sm:$0xff]
  %v4729 = vld [vmem:[%s4456 + $0xc0] sm:$0xff]
  %v4730 = vld [vmem:[%s4456 + $0xc8] sm:$0xff]
  %v4731 = vld [vmem:[%s4456 + $0xd8] sm:$0xff]
  %v4732 = vld [vmem:[%s4456 + $0xe0] sm:$0xff]
  %v4733 = vld [vmem:[%s4456 + $0xf0] sm:$0xff]
  %v4734 = vld [vmem:[%s4456 + $0xf8] sm:$0xff]
  %v4735 = vld [vmem:[%s4456 + $0x108] sm:$0xff]
  %v4736 = vld [vmem:[%s4456 + $0x110] sm:$0xff]
  %v4737 = vld [vmem:[%s4456 + $0x120] sm:$0xff]
  %v4738 = vld [vmem:[%s4456 + $0x128] sm:$0xff]
  %v4739 = vld [vmem:[%s4456 + $0x138] sm:$0xff]
  %v4740 = vld [vmem:[%s4456 + $0x140] sm:$0xff]
  %v4741 = vld [vmem:[%s4456 + $0x150] sm:$0xff]
  %v4742 = vld [vmem:[%s4456 + $0x158] sm:$0xff]
  %v4743 = vld [vmem:[%s4456 + $0x168] sm:$0xff]
  %v4744 = vld [vmem:[%s4456 + $0x170] sm:$0xff]
  %v4745 = vld [vmem:[%s4456 + $0x1b0] sm:$0xff]
  %v4746 = vld [vmem:[%s4456 + $0x1b8] sm:$0xff]
  %v4747 = vld [vmem:[%s4456 + $0x1c8] sm:$0xff]
  %v4748 = vld [vmem:[%s4456 + $0x1d0] sm:$0xff]
  %v4749 = vld [vmem:[%s4456 + $0x1e0] sm:$0xff]
  %v4750 = vld [vmem:[%s4456 + $0x1e8] sm:$0xff]
  %v4751 = vld [vmem:[%s4456 + $0x1f8] sm:$0xff]
  %v4752 = vld [vmem:[%s4456 + $0x200] sm:$0xff]
  %v4753 = vld [vmem:[%s4456 + $0x210] sm:$0xff]
  %v4754 = vld [vmem:[%s4456 + $0x218] sm:$0xff]
  %v4755 = vld [vmem:[%s4456 + $0x228] sm:$0xff]
  %v4756 = vld [vmem:[%s4456 + $0x230] sm:$0xff]
  %v4757 = vld [vmem:[%s4456 + $0x240] sm:$0xff]
  %v4758 = vld [vmem:[%s4456 + $0x248] sm:$0xff]
  %v4759 = vld [vmem:[%s4456 + $0x258] sm:$0xff]
  %v4760 = vld [vmem:[%s4456 + $0x260] sm:$0xff]
  %v4761 = vld [vmem:[%s4456 + $0x270] sm:$0xff]
  %v4762 = vld [vmem:[%s4456 + $0x278] sm:$0xff]
  %v4763 = vld [vmem:[%s4456 + $0x288] sm:$0xff]
  %v4764 = vld [vmem:[%s4456 + $0x290] sm:$0xff]
  %v4765 = vld [vmem:[%s4456 + $0x2a0] sm:$0xff]
  %v4766 = vld [vmem:[%s4456 + $0x2a8] sm:$0xff]
  %v4767 = vld [vmem:[%s4456 + $0x2b8] sm:$0xff]
  %v4768 = vld [vmem:[%s4456 + $0x2c0] sm:$0xff]
  %v4769 = vld [vmem:[%s4456 + $0x2d0] sm:$0xff]
  %v4770 = vld [vmem:[%s4456 + $0x2d8] sm:$0xff]
  %v4771 = vld [vmem:[%s4456 + $0x2e8] sm:$0xff]
  %v4772 = vld [vmem:[%s4456 + $0x2f0] sm:$0xff]
  %v4773 = vld [vmem:[%s4456 + $0x300] sm:$0xff]
  %v4774 = vld [vmem:[%s4456 + $0x308] sm:$0xff]
  %v4775 = vld [vmem:[%s4456 + $0x318] sm:$0xff]
  %v4776 = vld [vmem:[%s4456 + $0x320] sm:$0xff]
  %v4777 = vld [vmem:[%s4456 + $0x1] sm:$0xff]
  %v4778 = vld [vmem:[%s4456 + $0x9] sm:$0xff]
  %v4779 = vld [vmem:[%s4456 + $0x19] sm:$0xff]
  %v4780 = vld [vmem:[%s4456 + $0x21] sm:$0xff]
  %v4781 = vld [vmem:[%s4456 + $0x31] sm:$0xff]
  %v4782 = vld [vmem:[%s4456 + $0x39] sm:$0xff]
  %v4783 = vld [vmem:[%s4456 + $0x49] sm:$0xff]
  %v4784 = vld [vmem:[%s4456 + $0x51] sm:$0xff]
  %v4785 = vld [vmem:[%s4456 + $0x61] sm:$0xff]
  %v4786 = vld [vmem:[%s4456 + $0x69] sm:$0xff]
  %v4787 = vld [vmem:[%s4456 + $0x79] sm:$0xff]
  %v4788 = vld [vmem:[%s4456 + $0x81] sm:$0xff]
  %v4789 = vld [vmem:[%s4456 + $0x91] sm:$0xff]
  %v4790 = vld [vmem:[%s4456 + $0x99] sm:$0xff]
  %v4791 = vld [vmem:[%s4456 + $0xa9] sm:$0xff]
  %v4792 = vld [vmem:[%s4456 + $0xb1] sm:$0xff]
  %v4793 = vld [vmem:[%s4456 + $0xc1] sm:$0xff]
  %v4794 = vld [vmem:[%s4456 + $0xc9] sm:$0xff]
  %v4795 = vld [vmem:[%s4456 + $0xd9] sm:$0xff]
  %v4796 = vld [vmem:[%s4456 + $0xe1] sm:$0xff]
  %v4797 = vld [vmem:[%s4456 + $0xf1] sm:$0xff]
  %v4798 = vld [vmem:[%s4456 + $0xf9] sm:$0xff]
  %v4799 = vld [vmem:[%s4456 + $0x109] sm:$0xff]
  %v4800 = vld [vmem:[%s4456 + $0x111] sm:$0xff]
  %v4801 = vld [vmem:[%s4456 + $0x121] sm:$0xff]
  %v4802 = vld [vmem:[%s4456 + $0x129] sm:$0xff]
  %v4803 = vld [vmem:[%s4456 + $0x139] sm:$0xff]
  %v4804 = vld [vmem:[%s4456 + $0x141] sm:$0xff]
  %v4805 = vld [vmem:[%s4456 + $0x151] sm:$0xff]
  %v4806 = vld [vmem:[%s4456 + $0x159] sm:$0xff]
  %v4807 = vld [vmem:[%s4456 + $0x169] sm:$0xff]
  %v4808 = vld [vmem:[%s4456 + $0x171] sm:$0xff]
  %v4809 = vld [vmem:[%s4456 + $0x1b1] sm:$0xff]
  %v4810 = vld [vmem:[%s4456 + $0x1b9] sm:$0xff]
  %v4811 = vld [vmem:[%s4456 + $0x1c9] sm:$0xff]
  %v4812 = vld [vmem:[%s4456 + $0x1d1] sm:$0xff]
  %v4813 = vld [vmem:[%s4456 + $0x1e1] sm:$0xff]
  %v4814 = vld [vmem:[%s4456 + $0x1e9] sm:$0xff]
  %v4815 = vld [vmem:[%s4456 + $0x1f9] sm:$0xff]
  %v4816 = vld [vmem:[%s4456 + $0x201] sm:$0xff]
  %v4817 = vld [vmem:[%s4456 + $0x211] sm:$0xff]
  %v4818 = vld [vmem:[%s4456 + $0x219] sm:$0xff]
  %v4819 = vld [vmem:[%s4456 + $0x229] sm:$0xff]
  %v4820 = vld [vmem:[%s4456 + $0x231] sm:$0xff]
  %v4821 = vld [vmem:[%s4456 + $0x241] sm:$0xff]
  %v4822 = vld [vmem:[%s4456 + $0x249] sm:$0xff]
  %v4823 = vld [vmem:[%s4456 + $0x259] sm:$0xff]
  %v4824 = vld [vmem:[%s4456 + $0x261] sm:$0xff]
  %v4825 = vld [vmem:[%s4456 + $0x271] sm:$0xff]
  %v4826 = vld [vmem:[%s4456 + $0x279] sm:$0xff]
  %v4827 = vld [vmem:[%s4456 + $0x289] sm:$0xff]
  %v4828 = vld [vmem:[%s4456 + $0x291] sm:$0xff]
  %v4829 = vld [vmem:[%s4456 + $0x2a1] sm:$0xff]
  %v4830 = vld [vmem:[%s4456 + $0x2a9] sm:$0xff]
  %v4831 = vld [vmem:[%s4456 + $0x2b9] sm:$0xff]
  %v4832 = vld [vmem:[%s4456 + $0x2c1] sm:$0xff]
  %v4833 = vld [vmem:[%s4456 + $0x2d1] sm:$0xff]
  %v4834 = vld [vmem:[%s4456 + $0x2d9] sm:$0xff]
  %v4835 = vld [vmem:[%s4456 + $0x2e9] sm:$0xff]
  %v4836 = vld [vmem:[%s4456 + $0x2f1] sm:$0xff]
  %v4837 = vld [vmem:[%s4456 + $0x301] sm:$0xff]
  %v4838 = vld [vmem:[%s4456 + $0x309] sm:$0xff]
  %v4839 = vld [vmem:[%s4456 + $0x319] sm:$0xff]
  %v4840 = vld [vmem:[%s4456 + $0x321] sm:$0xff]
  %v4841 = vld [vmem:[%s4456 + $0x2] sm:$0xff]
  %v4842 = vld [vmem:[%s4456 + $0xa] sm:$0xff]
  %v4843 = vld [vmem:[%s4456 + $0x1a] sm:$0xff]
  %v4844 = vld [vmem:[%s4456 + $0x22] sm:$0xff]
  %v4845 = vld [vmem:[%s4456 + $0x32] sm:$0xff]
  %v4846 = vld [vmem:[%s4456 + $0x3a] sm:$0xff]
  %v4847 = vld [vmem:[%s4456 + $0x4a] sm:$0xff]
  %v4848 = vld [vmem:[%s4456 + $0x52] sm:$0xff]
  %v4849 = vld [vmem:[%s4456 + $0x62] sm:$0xff]
  %v4850 = vld [vmem:[%s4456 + $0x6a] sm:$0xff]
  %v4851 = vld [vmem:[%s4456 + $0x7a] sm:$0xff]
  %v4852 = vld [vmem:[%s4456 + $0x82] sm:$0xff]
  %v4853 = vld [vmem:[%s4456 + $0x92] sm:$0xff]
  %v4854 = vld [vmem:[%s4456 + $0x9a] sm:$0xff]
  %v4855 = vld [vmem:[%s4456 + $0xaa] sm:$0xff]
  %v4856 = vld [vmem:[%s4456 + $0xb2] sm:$0xff]
  %v4857 = vld [vmem:[%s4456 + $0xc2] sm:$0xff]
  %v4858 = vld [vmem:[%s4456 + $0xca] sm:$0xff]
  %v4859 = vld [vmem:[%s4456 + $0xda] sm:$0xff]
  %v4860 = vld [vmem:[%s4456 + $0xe2] sm:$0xff]
  %v4861 = vld [vmem:[%s4456 + $0xf2] sm:$0xff]
  %v4862 = vld [vmem:[%s4456 + $0xfa] sm:$0xff]
  %v4863 = vld [vmem:[%s4456 + $0x10a] sm:$0xff]
  %v4864 = vld [vmem:[%s4456 + $0x112] sm:$0xff]
  %v4865 = vld [vmem:[%s4456 + $0x122] sm:$0xff]
  %v4866 = vld [vmem:[%s4456 + $0x12a] sm:$0xff]
  %v4867 = vld [vmem:[%s4456 + $0x13a] sm:$0xff]
  %v4868 = vld [vmem:[%s4456 + $0x142] sm:$0xff]
  %v4869 = vld [vmem:[%s4456 + $0x152] sm:$0xff]
  %v4870 = vld [vmem:[%s4456 + $0x15a] sm:$0xff]
  %v4871 = vld [vmem:[%s4456 + $0x16a] sm:$0xff]
  %v4872 = vld [vmem:[%s4456 + $0x172] sm:$0xff]
  %v4873 = vld [vmem:[%s4456 + $0x1b2] sm:$0xff]
  %v4874 = vld [vmem:[%s4456 + $0x1ba] sm:$0xff]
  %v4875 = vld [vmem:[%s4456 + $0x1ca] sm:$0xff]
  %v4876 = vld [vmem:[%s4456 + $0x1d2] sm:$0xff]
  %v4877 = vld [vmem:[%s4456 + $0x1e2] sm:$0xff]
  %v4878 = vld [vmem:[%s4456 + $0x1ea] sm:$0xff]
  %v4879 = vld [vmem:[%s4456 + $0x1fa] sm:$0xff]
  %v4880 = vld [vmem:[%s4456 + $0x202] sm:$0xff]
  %v4881 = vld [vmem:[%s4456 + $0x212] sm:$0xff]
  %v4882 = vld [vmem:[%s4456 + $0x21a] sm:$0xff]
  %v4883 = vld [vmem:[%s4456 + $0x22a] sm:$0xff]
  %v4884 = vld [vmem:[%s4456 + $0x232] sm:$0xff]
  %v4885 = vld [vmem:[%s4456 + $0x242] sm:$0xff]
  %v4886 = vld [vmem:[%s4456 + $0x24a] sm:$0xff]
  %v4887 = vld [vmem:[%s4456 + $0x25a] sm:$0xff]
  %v4888 = vld [vmem:[%s4456 + $0x262] sm:$0xff]
  %v4889 = vld [vmem:[%s4456 + $0x272] sm:$0xff]
  %v4890 = vld [vmem:[%s4456 + $0x27a] sm:$0xff]
  %v4891 = vld [vmem:[%s4456 + $0x28a] sm:$0xff]
  %v4892 = vld [vmem:[%s4456 + $0x292] sm:$0xff]
  %v4893 = vld [vmem:[%s4456 + $0x2a2] sm:$0xff]
  %v4894 = vld [vmem:[%s4456 + $0x2aa] sm:$0xff]
  %v4895 = vld [vmem:[%s4456 + $0x2ba] sm:$0xff]
  %v4896 = vld [vmem:[%s4456 + $0x2c2] sm:$0xff]
  %v4897 = vld [vmem:[%s4456 + $0x2d2] sm:$0xff]
  %v4898 = vld [vmem:[%s4456 + $0x2da] sm:$0xff]
  %v4899 = vld [vmem:[%s4456 + $0x2ea] sm:$0xff]
  %v4900 = vld [vmem:[%s4456 + $0x2f2] sm:$0xff]
  %v4901 = vld [vmem:[%s4456 + $0x302] sm:$0xff]
  %v4902 = vld [vmem:[%s4456 + $0x30a] sm:$0xff]
  %v4903 = vld [vmem:[%s4456 + $0x31a] sm:$0xff]
  %v4904 = vld [vmem:[%s4456 + $0x322] sm:$0xff]
  %s4905 = scalar_lea.vmem [#allocation2], 48
  %v4906 = vld [vmem:[%s4905] sm:$0xff]
  %v4907 = vld [vmem:[%s4905 + $0x8] sm:$0xff]
  %v4908 = vld [vmem:[%s4905 + $0x18] sm:$0xff]
  %v4909 = vld [vmem:[%s4905 + $0x20] sm:$0xff]
  %v4910 = vld [vmem:[%s4905 + $0x30] sm:$0xff]
  %v4911 = vld [vmem:[%s4905 + $0x38] sm:$0xff]
  %v4912 = vld [vmem:[%s4905 + $0x48] sm:$0xff]
  %v4913 = vld [vmem:[%s4905 + $0x50] sm:$0xff]
  %v4914 = vld [vmem:[%s4905 + $0x60] sm:$0xff]
  %v4915 = vld [vmem:[%s4905 + $0x68] sm:$0xff]
  %v4916 = vld [vmem:[%s4905 + $0x78] sm:$0xff]
  %v4917 = vld [vmem:[%s4905 + $0x80] sm:$0xff]
  %v4918 = vld [vmem:[%s4905 + $0x90] sm:$0xff]
  %v4919 = vld [vmem:[%s4905 + $0x98] sm:$0xff]
  %v4920 = vld [vmem:[%s4905 + $0xa8] sm:$0xff]
  %v4921 = vld [vmem:[%s4905 + $0xb0] sm:$0xff]
  %v4922 = vld [vmem:[%s4905 + $0xc0] sm:$0xff]
  %v4923 = vld [vmem:[%s4905 + $0xc8] sm:$0xff]
  %v4924 = vld [vmem:[%s4905 + $0xd8] sm:$0xff]
  %v4925 = vld [vmem:[%s4905 + $0xe0] sm:$0xff]
  %v4926 = vld [vmem:[%s4905 + $0xf0] sm:$0xff]
  %v4927 = vld [vmem:[%s4905 + $0xf8] sm:$0xff]
  %v4928 = vld [vmem:[%s4905 + $0x108] sm:$0xff]
  %v4929 = vld [vmem:[%s4905 + $0x110] sm:$0xff]
  %v4930 = vld [vmem:[%s4905 + $0x120] sm:$0xff]
  %v4931 = vld [vmem:[%s4905 + $0x128] sm:$0xff]
  %v4932 = vld [vmem:[%s4905 + $0x138] sm:$0xff]
  %v4933 = vld [vmem:[%s4905 + $0x140] sm:$0xff]
  %v4934 = vld [vmem:[%s4905 + $0x150] sm:$0xff]
  %v4935 = vld [vmem:[%s4905 + $0x158] sm:$0xff]
  %v4936 = vld [vmem:[%s4905 + $0x168] sm:$0xff]
  %v4937 = vld [vmem:[%s4905 + $0x170] sm:$0xff]
  %v4938 = vld [vmem:[%s4905 + $0x1b0] sm:$0xff]
  %v4939 = vld [vmem:[%s4905 + $0x1b8] sm:$0xff]
  %v4940 = vld [vmem:[%s4905 + $0x1c8] sm:$0xff]
  %v4941 = vld [vmem:[%s4905 + $0x1d0] sm:$0xff]
  %v4942 = vld [vmem:[%s4905 + $0x1e0] sm:$0xff]
  %v4943 = vld [vmem:[%s4905 + $0x1e8] sm:$0xff]
  %v4944 = vld [vmem:[%s4905 + $0x1f8] sm:$0xff]
  %v4945 = vld [vmem:[%s4905 + $0x200] sm:$0xff]
  %v4946 = vld [vmem:[%s4905 + $0x210] sm:$0xff]
  %v4947 = vld [vmem:[%s4905 + $0x218] sm:$0xff]
  %v4948 = vld [vmem:[%s4905 + $0x228] sm:$0xff]
  %v4949 = vld [vmem:[%s4905 + $0x230] sm:$0xff]
  %v4950 = vld [vmem:[%s4905 + $0x240] sm:$0xff]
  %v4951 = vld [vmem:[%s4905 + $0x248] sm:$0xff]
  %v4952 = vld [vmem:[%s4905 + $0x258] sm:$0xff]
  %v4953 = vld [vmem:[%s4905 + $0x260] sm:$0xff]
  %v4954 = vld [vmem:[%s4905 + $0x270] sm:$0xff]
  %v4955 = vld [vmem:[%s4905 + $0x278] sm:$0xff]
  %v4956 = vld [vmem:[%s4905 + $0x288] sm:$0xff]
  %v4957 = vld [vmem:[%s4905 + $0x290] sm:$0xff]
  %v4958 = vld [vmem:[%s4905 + $0x2a0] sm:$0xff]
  %v4959 = vld [vmem:[%s4905 + $0x2a8] sm:$0xff]
  %v4960 = vld [vmem:[%s4905 + $0x2b8] sm:$0xff]
  %v4961 = vld [vmem:[%s4905 + $0x2c0] sm:$0xff]
  %v4962 = vld [vmem:[%s4905 + $0x2d0] sm:$0xff]
  %v4963 = vld [vmem:[%s4905 + $0x2d8] sm:$0xff]
  %v4964 = vld [vmem:[%s4905 + $0x2e8] sm:$0xff]
  %v4965 = vld [vmem:[%s4905 + $0x2f0] sm:$0xff]
  %v4966 = vld [vmem:[%s4905 + $0x300] sm:$0xff]
  %v4967 = vld [vmem:[%s4905 + $0x308] sm:$0xff]
  %v4968 = vld [vmem:[%s4905 + $0x318] sm:$0xff]
  %v4969 = vld [vmem:[%s4905 + $0x320] sm:$0xff]
  %v4970 = vld [vmem:[%s4905 + $0x1] sm:$0xff]
  %v4971 = vld [vmem:[%s4905 + $0x9] sm:$0xff]
  %v4972 = vld [vmem:[%s4905 + $0x19] sm:$0xff]
  %v4973 = vld [vmem:[%s4905 + $0x21] sm:$0xff]
  %v4974 = vld [vmem:[%s4905 + $0x31] sm:$0xff]
  %v4975 = vld [vmem:[%s4905 + $0x39] sm:$0xff]
  %v4976 = vld [vmem:[%s4905 + $0x49] sm:$0xff]
  %v4977 = vld [vmem:[%s4905 + $0x51] sm:$0xff]
  %v4978 = vld [vmem:[%s4905 + $0x61] sm:$0xff]
  %v4979 = vld [vmem:[%s4905 + $0x69] sm:$0xff]
  %v4980 = vld [vmem:[%s4905 + $0x79] sm:$0xff]
  %v4981 = vld [vmem:[%s4905 + $0x81] sm:$0xff]
  %v4982 = vld [vmem:[%s4905 + $0x91] sm:$0xff]
  %v4983 = vld [vmem:[%s4905 + $0x99] sm:$0xff]
  %v4984 = vld [vmem:[%s4905 + $0xa9] sm:$0xff]
  %v4985 = vld [vmem:[%s4905 + $0xb1] sm:$0xff]
  %v4986 = vld [vmem:[%s4905 + $0xc1] sm:$0xff]
  %v4987 = vld [vmem:[%s4905 + $0xc9] sm:$0xff]
  %v4988 = vld [vmem:[%s4905 + $0xd9] sm:$0xff]
  %v4989 = vld [vmem:[%s4905 + $0xe1] sm:$0xff]
  %v4990 = vld [vmem:[%s4905 + $0xf1] sm:$0xff]
  %v4991 = vld [vmem:[%s4905 + $0xf9] sm:$0xff]
  %v4992 = vld [vmem:[%s4905 + $0x109] sm:$0xff]
  %v4993 = vld [vmem:[%s4905 + $0x111] sm:$0xff]
  %v4994 = vld [vmem:[%s4905 + $0x121] sm:$0xff]
  %v4995 = vld [vmem:[%s4905 + $0x129] sm:$0xff]
  %v4996 = vld [vmem:[%s4905 + $0x139] sm:$0xff]
  %v4997 = vld [vmem:[%s4905 + $0x141] sm:$0xff]
  %v4998 = vld [vmem:[%s4905 + $0x151] sm:$0xff]
  %v4999 = vld [vmem:[%s4905 + $0x159] sm:$0xff]
  %v5000 = vld [vmem:[%s4905 + $0x169] sm:$0xff]
  %v5001 = vld [vmem:[%s4905 + $0x171] sm:$0xff]
  %v5002 = vld [vmem:[%s4905 + $0x1b1] sm:$0xff]
  %v5003 = vld [vmem:[%s4905 + $0x1b9] sm:$0xff]
  %v5004 = vld [vmem:[%s4905 + $0x1c9] sm:$0xff]
  %v5005 = vld [vmem:[%s4905 + $0x1d1] sm:$0xff]
  %v5006 = vld [vmem:[%s4905 + $0x1e1] sm:$0xff]
  %v5007 = vld [vmem:[%s4905 + $0x1e9] sm:$0xff]
  %v5008 = vld [vmem:[%s4905 + $0x1f9] sm:$0xff]
  %v5009 = vld [vmem:[%s4905 + $0x201] sm:$0xff]
  %v5010 = vld [vmem:[%s4905 + $0x211] sm:$0xff]
  %v5011 = vld [vmem:[%s4905 + $0x219] sm:$0xff]
  %v5012 = vld [vmem:[%s4905 + $0x229] sm:$0xff]
  %v5013 = vld [vmem:[%s4905 + $0x231] sm:$0xff]
  %v5014 = vld [vmem:[%s4905 + $0x241] sm:$0xff]
  %v5015 = vld [vmem:[%s4905 + $0x249] sm:$0xff]
  %v5016 = vld [vmem:[%s4905 + $0x259] sm:$0xff]
  %v5017 = vld [vmem:[%s4905 + $0x261] sm:$0xff]
  %v5018 = vld [vmem:[%s4905 + $0x271] sm:$0xff]
  %v5019 = vld [vmem:[%s4905 + $0x279] sm:$0xff]
  %v5020 = vld [vmem:[%s4905 + $0x289] sm:$0xff]
  %v5021 = vld [vmem:[%s4905 + $0x291] sm:$0xff]
  %v5022 = vld [vmem:[%s4905 + $0x2a1] sm:$0xff]
  %v5023 = vld [vmem:[%s4905 + $0x2a9] sm:$0xff]
  %v5024 = vld [vmem:[%s4905 + $0x2b9] sm:$0xff]
  %v5025 = vld [vmem:[%s4905 + $0x2c1] sm:$0xff]
  %v5026 = vld [vmem:[%s4905 + $0x2d1] sm:$0xff]
  %v5027 = vld [vmem:[%s4905 + $0x2d9] sm:$0xff]
  %v5028 = vld [vmem:[%s4905 + $0x2e9] sm:$0xff]
  %v5029 = vld [vmem:[%s4905 + $0x2f1] sm:$0xff]
  %v5030 = vld [vmem:[%s4905 + $0x301] sm:$0xff]
  %v5031 = vld [vmem:[%s4905 + $0x309] sm:$0xff]
  %v5032 = vld [vmem:[%s4905 + $0x319] sm:$0xff]
  %v5033 = vld [vmem:[%s4905 + $0x321] sm:$0xff]
  %v5034 = vld [vmem:[%s4905 + $0x2] sm:$0xff]
  %v5035 = vld [vmem:[%s4905 + $0xa] sm:$0xff]
  %v5036 = vld [vmem:[%s4905 + $0x1a] sm:$0xff]
  %v5037 = vld [vmem:[%s4905 + $0x22] sm:$0xff]
  %v5038 = vld [vmem:[%s4905 + $0x32] sm:$0xff]
  %v5039 = vld [vmem:[%s4905 + $0x3a] sm:$0xff]
  %v5040 = vld [vmem:[%s4905 + $0x4a] sm:$0xff]
  %v5041 = vld [vmem:[%s4905 + $0x52] sm:$0xff]
  %v5042 = vld [vmem:[%s4905 + $0x62] sm:$0xff]
  %v5043 = vld [vmem:[%s4905 + $0x6a] sm:$0xff]
  %v5044 = vld [vmem:[%s4905 + $0x7a] sm:$0xff]
  %v5045 = vld [vmem:[%s4905 + $0x82] sm:$0xff]
  %v5046 = vld [vmem:[%s4905 + $0x92] sm:$0xff]
  %v5047 = vld [vmem:[%s4905 + $0x9a] sm:$0xff]
  %v5048 = vld [vmem:[%s4905 + $0xaa] sm:$0xff]
  %v5049 = vld [vmem:[%s4905 + $0xb2] sm:$0xff]
  %v5050 = vld [vmem:[%s4905 + $0xc2] sm:$0xff]
  %v5051 = vld [vmem:[%s4905 + $0xca] sm:$0xff]
  %v5052 = vld [vmem:[%s4905 + $0xda] sm:$0xff]
  %v5053 = vld [vmem:[%s4905 + $0xe2] sm:$0xff]
  %v5054 = vld [vmem:[%s4905 + $0xf2] sm:$0xff]
  %v5055 = vld [vmem:[%s4905 + $0xfa] sm:$0xff]
  %v5056 = vld [vmem:[%s4905 + $0x10a] sm:$0xff]
  %v5057 = vld [vmem:[%s4905 + $0x112] sm:$0xff]
  %v5058 = vld [vmem:[%s4905 + $0x122] sm:$0xff]
  %v5059 = vld [vmem:[%s4905 + $0x12a] sm:$0xff]
  %v5060 = vld [vmem:[%s4905 + $0x13a] sm:$0xff]
  %v5061 = vld [vmem:[%s4905 + $0x142] sm:$0xff]
  %v5062 = vld [vmem:[%s4905 + $0x152] sm:$0xff]
  %v5063 = vld [vmem:[%s4905 + $0x15a] sm:$0xff]
  %v5064 = vld [vmem:[%s4905 + $0x16a] sm:$0xff]
  %v5065 = vld [vmem:[%s4905 + $0x172] sm:$0xff]
  %v5066 = vld [vmem:[%s4905 + $0x1b2] sm:$0xff]
  %v5067 = vld [vmem:[%s4905 + $0x1ba] sm:$0xff]
  %v5068 = vld [vmem:[%s4905 + $0x1ca] sm:$0xff]
  %v5069 = vld [vmem:[%s4905 + $0x1d2] sm:$0xff]
  %v5070 = vld [vmem:[%s4905 + $0x1e2] sm:$0xff]
  %v5071 = vld [vmem:[%s4905 + $0x1ea] sm:$0xff]
  %v5072 = vld [vmem:[%s4905 + $0x1fa] sm:$0xff]
  %v5073 = vld [vmem:[%s4905 + $0x202] sm:$0xff]
  %v5074 = vld [vmem:[%s4905 + $0x212] sm:$0xff]
  %v5075 = vld [vmem:[%s4905 + $0x21a] sm:$0xff]
  %v5076 = vld [vmem:[%s4905 + $0x22a] sm:$0xff]
  %v5077 = vld [vmem:[%s4905 + $0x232] sm:$0xff]
  %v5078 = vld [vmem:[%s4905 + $0x242] sm:$0xff]
  %v5079 = vld [vmem:[%s4905 + $0x24a] sm:$0xff]
  %v5080 = vld [vmem:[%s4905 + $0x25a] sm:$0xff]
  %v5081 = vld [vmem:[%s4905 + $0x262] sm:$0xff]
  %v5082 = vld [vmem:[%s4905 + $0x272] sm:$0xff]
  %v5083 = vld [vmem:[%s4905 + $0x27a] sm:$0xff]
  %v5084 = vld [vmem:[%s4905 + $0x28a] sm:$0xff]
  %v5085 = vld [vmem:[%s4905 + $0x292] sm:$0xff]
  %v5086 = vld [vmem:[%s4905 + $0x2a2] sm:$0xff]
  %v5087 = vld [vmem:[%s4905 + $0x2aa] sm:$0xff]
  %v5088 = vld [vmem:[%s4905 + $0x2ba] sm:$0xff]
  %v5089 = vld [vmem:[%s4905 + $0x2c2] sm:$0xff]
  %v5090 = vld [vmem:[%s4905 + $0x2d2] sm:$0xff]
  %v5091 = vld [vmem:[%s4905 + $0x2da] sm:$0xff]
  %v5092 = vld [vmem:[%s4905 + $0x2ea] sm:$0xff]
  %v5093 = vld [vmem:[%s4905 + $0x2f2] sm:$0xff]
  %v5094 = vld [vmem:[%s4905 + $0x302] sm:$0xff]
  %v5095 = vld [vmem:[%s4905 + $0x30a] sm:$0xff]
  %v5096 = vld [vmem:[%s4905 + $0x31a] sm:$0xff]
  %v5097 = vld [vmem:[%s4905 + $0x322] sm:$0xff]
  %5162 = vrot.lane.b32.xlu0 %v4585, 8
  %v5163 = vpop.permute.xlu0 %5162
  %5164 = vrot.lane.b32.xlu0 %v4586, 8
  %v5165 = vpop.permute.xlu0 %5164
  %5166 = vrot.lane.b32.xlu0 %v4587, 8
  %v5167 = vpop.permute.xlu0 %5166
  %5168 = vrot.lane.b32.xlu0 %v4588, 8
  %v5169 = vpop.permute.xlu0 %5168
  %5170 = vrot.lane.b32.xlu0 %v4589, 8
  %v5171 = vpop.permute.xlu0 %5170
  %5172 = vrot.lane.b32.xlu0 %v4590, 8
  %v5173 = vpop.permute.xlu0 %5172
  %5174 = vrot.lane.b32.xlu0 %v4591, 8
  %v5175 = vpop.permute.xlu0 %5174
  %5176 = vrot.lane.b32.xlu0 %v4592, 8
  %v5177 = vpop.permute.xlu0 %5176
  %5178 = vrot.lane.b32.xlu0 %v4593, 8
  %v5179 = vpop.permute.xlu0 %5178
  %5180 = vrot.lane.b32.xlu0 %v4594, 8
  %v5181 = vpop.permute.xlu0 %5180
  %5182 = vrot.lane.b32.xlu0 %v4595, 8
  %v5183 = vpop.permute.xlu0 %5182
  %5184 = vrot.lane.b32.xlu0 %v4596, 8
  %v5185 = vpop.permute.xlu0 %5184
  %5186 = vrot.lane.b32.xlu0 %v4597, 8
  %v5187 = vpop.permute.xlu0 %5186
  %5188 = vrot.lane.b32.xlu0 %v4598, 8
  %v5189 = vpop.permute.xlu0 %5188
  %5190 = vrot.lane.b32.xlu0 %v4599, 8
  %v5191 = vpop.permute.xlu0 %5190
  %5192 = vrot.lane.b32.xlu0 %v4600, 8
  %v5193 = vpop.permute.xlu0 %5192
  %5194 = vrot.lane.b32.xlu0 %v4601, 8
  %v5195 = vpop.permute.xlu0 %5194
  %5196 = vrot.lane.b32.xlu0 %v4602, 8
  %v5197 = vpop.permute.xlu0 %5196
  %5198 = vrot.lane.b32.xlu0 %v4603, 8
  %v5199 = vpop.permute.xlu0 %5198
  %5200 = vrot.lane.b32.xlu0 %v4604, 8
  %v5201 = vpop.permute.xlu0 %5200
  %5202 = vrot.lane.b32.xlu0 %v4605, 8
  %v5203 = vpop.permute.xlu0 %5202
  %5204 = vrot.lane.b32.xlu0 %v4606, 8
  %v5205 = vpop.permute.xlu0 %5204
  %5206 = vrot.lane.b32.xlu0 %v4607, 8
  %v5207 = vpop.permute.xlu0 %5206
  %5208 = vrot.lane.b32.xlu0 %v4608, 8
  %v5209 = vpop.permute.xlu0 %5208
  %5210 = vrot.lane.b32.xlu0 %v4609, 8
  %v5211 = vpop.permute.xlu0 %5210
  %5212 = vrot.lane.b32.xlu0 %v4610, 8
  %v5213 = vpop.permute.xlu0 %5212
  %5214 = vrot.lane.b32.xlu0 %v4611, 8
  %v5215 = vpop.permute.xlu0 %5214
  %5216 = vrot.lane.b32.xlu0 %v4612, 8
  %v5217 = vpop.permute.xlu0 %5216
  %5218 = vrot.lane.b32.xlu0 %v4613, 8
  %v5219 = vpop.permute.xlu0 %5218
  %5220 = vrot.lane.b32.xlu0 %v4614, 8
  %v5221 = vpop.permute.xlu0 %5220
  %5222 = vrot.lane.b32.xlu0 %v4615, 8
  %v5223 = vpop.permute.xlu0 %5222
  %5224 = vrot.lane.b32.xlu0 %v4616, 8
  %v5225 = vpop.permute.xlu0 %5224
  %5226 = vrot.lane.b32.xlu0 %v4617, 8
  %v5227 = vpop.permute.xlu0 %5226
  %5228 = vrot.lane.b32.xlu0 %v4618, 8
  %v5229 = vpop.permute.xlu0 %5228
  %5230 = vrot.lane.b32.xlu0 %v4619, 8
  %v5231 = vpop.permute.xlu0 %5230
  %5232 = vrot.lane.b32.xlu0 %v4620, 8
  %v5233 = vpop.permute.xlu0 %5232
  %5234 = vrot.lane.b32.xlu0 %v4621, 8
  %v5235 = vpop.permute.xlu0 %5234
  %5236 = vrot.lane.b32.xlu0 %v4622, 8
  %v5237 = vpop.permute.xlu0 %5236
  %5238 = vrot.lane.b32.xlu0 %v4623, 8
  %v5239 = vpop.permute.xlu0 %5238
  %5240 = vrot.lane.b32.xlu0 %v4624, 8
  %v5241 = vpop.permute.xlu0 %5240
  %5242 = vrot.lane.b32.xlu0 %v4625, 8
  %v5243 = vpop.permute.xlu0 %5242
  %5244 = vrot.lane.b32.xlu0 %v4626, 8
  %v5245 = vpop.permute.xlu0 %5244
  %5246 = vrot.lane.b32.xlu0 %v4627, 8
  %v5247 = vpop.permute.xlu0 %5246
  %5248 = vrot.lane.b32.xlu0 %v4628, 8
  %v5249 = vpop.permute.xlu0 %5248
  %5250 = vrot.lane.b32.xlu0 %v4629, 8
  %v5251 = vpop.permute.xlu0 %5250
  %5252 = vrot.lane.b32.xlu0 %v4630, 8
  %v5253 = vpop.permute.xlu0 %5252
  %5254 = vrot.lane.b32.xlu0 %v4631, 8
  %v5255 = vpop.permute.xlu0 %5254
  %5256 = vrot.lane.b32.xlu0 %v4632, 8
  %v5257 = vpop.permute.xlu0 %5256
  %5258 = vrot.lane.b32.xlu0 %v4633, 8
  %v5259 = vpop.permute.xlu0 %5258
  %5260 = vrot.lane.b32.xlu0 %v4634, 8
  %v5261 = vpop.permute.xlu0 %5260
  %5262 = vrot.lane.b32.xlu0 %v4635, 8
  %v5263 = vpop.permute.xlu0 %5262
  %5264 = vrot.lane.b32.xlu0 %v4636, 8
  %v5265 = vpop.permute.xlu0 %5264
  %5266 = vrot.lane.b32.xlu0 %v4637, 8
  %v5267 = vpop.permute.xlu0 %5266
  %5268 = vrot.lane.b32.xlu0 %v4638, 8
  %v5269 = vpop.permute.xlu0 %5268
  %5270 = vrot.lane.b32.xlu0 %v4639, 8
  %v5271 = vpop.permute.xlu0 %5270
  %5272 = vrot.lane.b32.xlu0 %v4640, 8
  %v5273 = vpop.permute.xlu0 %5272
  %5274 = vrot.lane.b32.xlu0 %v4641, 8
  %v5275 = vpop.permute.xlu0 %5274
  %5276 = vrot.lane.b32.xlu0 %v4642, 8
  %v5277 = vpop.permute.xlu0 %5276
  %5278 = vrot.lane.b32.xlu0 %v4643, 8
  %v5279 = vpop.permute.xlu0 %5278
  %5280 = vrot.lane.b32.xlu0 %v4644, 8
  %v5281 = vpop.permute.xlu0 %5280
  %5282 = vrot.lane.b32.xlu0 %v4645, 8
  %v5283 = vpop.permute.xlu0 %5282
  %5284 = vrot.lane.b32.xlu0 %v4646, 8
  %v5285 = vpop.permute.xlu0 %5284
  %5286 = vrot.lane.b32.xlu0 %v4647, 8
  %v5287 = vpop.permute.xlu0 %5286
  %5288 = vrot.lane.b32.xlu0 %v4648, 8
  %v5289 = vpop.permute.xlu0 %5288
  %5418 = vrot.lane.b32.xlu0 %v4649, 16
  %v5419 = vpop.permute.xlu0 %5418
  %5420 = vrot.lane.b32.xlu0 %v4650, 16
  %v5421 = vpop.permute.xlu0 %5420
  %5422 = vrot.lane.b32.xlu0 %v4651, 16
  %v5423 = vpop.permute.xlu0 %5422
  %5424 = vrot.lane.b32.xlu0 %v4652, 16
  %v5425 = vpop.permute.xlu0 %5424
  %5426 = vrot.lane.b32.xlu0 %v4653, 16
  %v5427 = vpop.permute.xlu0 %5426
  %5428 = vrot.lane.b32.xlu0 %v4654, 16
  %v5429 = vpop.permute.xlu0 %5428
  %5430 = vrot.lane.b32.xlu0 %v4655, 16
  %v5431 = vpop.permute.xlu0 %5430
  %5432 = vrot.lane.b32.xlu0 %v4656, 16
  %v5433 = vpop.permute.xlu0 %5432
  %5434 = vrot.lane.b32.xlu0 %v4657, 16
  %v5435 = vpop.permute.xlu0 %5434
  %5436 = vrot.lane.b32.xlu0 %v4658, 16
  %v5437 = vpop.permute.xlu0 %5436
  %5438 = vrot.lane.b32.xlu0 %v4659, 16
  %v5439 = vpop.permute.xlu0 %5438
  %5440 = vrot.lane.b32.xlu0 %v4660, 16
  %v5441 = vpop.permute.xlu0 %5440
  %5442 = vrot.lane.b32.xlu0 %v4661, 16
  %v5443 = vpop.permute.xlu0 %5442
  %5444 = vrot.lane.b32.xlu0 %v4662, 16
  %v5445 = vpop.permute.xlu0 %5444
  %5446 = vrot.lane.b32.xlu0 %v4663, 16
  %v5447 = vpop.permute.xlu0 %5446
  %5448 = vrot.lane.b32.xlu0 %v4664, 16
  %v5449 = vpop.permute.xlu0 %5448
  %5450 = vrot.lane.b32.xlu0 %v4665, 16
  %v5451 = vpop.permute.xlu0 %5450
  %5452 = vrot.lane.b32.xlu0 %v4666, 16
  %v5453 = vpop.permute.xlu0 %5452
  %5454 = vrot.lane.b32.xlu0 %v4667, 16
  %v5455 = vpop.permute.xlu0 %5454
  %5456 = vrot.lane.b32.xlu0 %v4668, 16
  %v5457 = vpop.permute.xlu0 %5456
  %5458 = vrot.lane.b32.xlu0 %v4669, 16
  %v5459 = vpop.permute.xlu0 %5458
  %5460 = vrot.lane.b32.xlu0 %v4670, 16
  %v5461 = vpop.permute.xlu0 %5460
  %5462 = vrot.lane.b32.xlu0 %v4671, 16
  %v5463 = vpop.permute.xlu0 %5462
  %5464 = vrot.lane.b32.xlu0 %v4672, 16
  %v5465 = vpop.permute.xlu0 %5464
  %5466 = vrot.lane.b32.xlu0 %v4673, 16
  %v5467 = vpop.permute.xlu0 %5466
  %5468 = vrot.lane.b32.xlu0 %v4674, 16
  %v5469 = vpop.permute.xlu0 %5468
  %5470 = vrot.lane.b32.xlu0 %v4675, 16
  %v5471 = vpop.permute.xlu0 %5470
  %5472 = vrot.lane.b32.xlu0 %v4676, 16
  %v5473 = vpop.permute.xlu0 %5472
  %5474 = vrot.lane.b32.xlu0 %v4677, 16
  %v5475 = vpop.permute.xlu0 %5474
  %5476 = vrot.lane.b32.xlu0 %v4678, 16
  %v5477 = vpop.permute.xlu0 %5476
  %5478 = vrot.lane.b32.xlu0 %v4679, 16
  %v5479 = vpop.permute.xlu0 %5478
  %5480 = vrot.lane.b32.xlu0 %v4680, 16
  %v5481 = vpop.permute.xlu0 %5480
  %5482 = vrot.lane.b32.xlu0 %v4681, 16
  %v5483 = vpop.permute.xlu0 %5482
  %5484 = vrot.lane.b32.xlu0 %v4682, 16
  %v5485 = vpop.permute.xlu0 %5484
  %5486 = vrot.lane.b32.xlu0 %v4683, 16
  %v5487 = vpop.permute.xlu0 %5486
  %5488 = vrot.lane.b32.xlu0 %v4684, 16
  %v5489 = vpop.permute.xlu0 %5488
  %5490 = vrot.lane.b32.xlu0 %v4685, 16
  %v5491 = vpop.permute.xlu0 %5490
  %5492 = vrot.lane.b32.xlu0 %v4686, 16
  %v5493 = vpop.permute.xlu0 %5492
  %5494 = vrot.lane.b32.xlu0 %v4687, 16
  %v5495 = vpop.permute.xlu0 %5494
  %5496 = vrot.lane.b32.xlu0 %v4688, 16
  %v5497 = vpop.permute.xlu0 %5496
  %5498 = vrot.lane.b32.xlu0 %v4689, 16
  %v5499 = vpop.permute.xlu0 %5498
  %5500 = vrot.lane.b32.xlu0 %v4690, 16
  %v5501 = vpop.permute.xlu0 %5500
  %5502 = vrot.lane.b32.xlu0 %v4691, 16
  %v5503 = vpop.permute.xlu0 %5502
  %5504 = vrot.lane.b32.xlu0 %v4692, 16
  %v5505 = vpop.permute.xlu0 %5504
  %5506 = vrot.lane.b32.xlu0 %v4693, 16
  %v5507 = vpop.permute.xlu0 %5506
  %5508 = vrot.lane.b32.xlu0 %v4694, 16
  %v5509 = vpop.permute.xlu0 %5508
  %5510 = vrot.lane.b32.xlu0 %v4695, 16
  %v5511 = vpop.permute.xlu0 %5510
  %5512 = vrot.lane.b32.xlu0 %v4696, 16
  %v5513 = vpop.permute.xlu0 %5512
  %5514 = vrot.lane.b32.xlu0 %v4697, 16
  %v5515 = vpop.permute.xlu0 %5514
  %5516 = vrot.lane.b32.xlu0 %v4698, 16
  %v5517 = vpop.permute.xlu0 %5516
  %5518 = vrot.lane.b32.xlu0 %v4699, 16
  %v5519 = vpop.permute.xlu0 %5518
  %5520 = vrot.lane.b32.xlu0 %v4700, 16
  %v5521 = vpop.permute.xlu0 %5520
  %5522 = vrot.lane.b32.xlu0 %v4701, 16
  %v5523 = vpop.permute.xlu0 %5522
  %5524 = vrot.lane.b32.xlu0 %v4702, 16
  %v5525 = vpop.permute.xlu0 %5524
  %5526 = vrot.lane.b32.xlu0 %v4703, 16
  %v5527 = vpop.permute.xlu0 %5526
  %5528 = vrot.lane.b32.xlu0 %v4704, 16
  %v5529 = vpop.permute.xlu0 %5528
  %5530 = vrot.lane.b32.xlu0 %v4705, 16
  %v5531 = vpop.permute.xlu0 %5530
  %5532 = vrot.lane.b32.xlu0 %v4706, 16
  %v5533 = vpop.permute.xlu0 %5532
  %5534 = vrot.lane.b32.xlu0 %v4707, 16
  %v5535 = vpop.permute.xlu0 %5534
  %5536 = vrot.lane.b32.xlu0 %v4708, 16
  %v5537 = vpop.permute.xlu0 %5536
  %5538 = vrot.lane.b32.xlu0 %v4709, 16
  %v5539 = vpop.permute.xlu0 %5538
  %5540 = vrot.lane.b32.xlu0 %v4710, 16
  %v5541 = vpop.permute.xlu0 %5540
  %5542 = vrot.lane.b32.xlu0 %v4711, 16
  %v5543 = vpop.permute.xlu0 %5542
  %5544 = vrot.lane.b32.xlu0 %v4712, 16
  %v5545 = vpop.permute.xlu0 %5544
  %5674 = vrot.lane.b32.xlu0 %v4713, 24
  %v5675 = vpop.permute.xlu0 %5674
  %5676 = vrot.lane.b32.xlu0 %v4714, 24
  %v5677 = vpop.permute.xlu0 %5676
  %5678 = vrot.lane.b32.xlu0 %v4715, 24
  %v5679 = vpop.permute.xlu0 %5678
  %5680 = vrot.lane.b32.xlu0 %v4716, 24
  %v5681 = vpop.permute.xlu0 %5680
  %5682 = vrot.lane.b32.xlu0 %v4717, 24
  %v5683 = vpop.permute.xlu0 %5682
  %5684 = vrot.lane.b32.xlu0 %v4718, 24
  %v5685 = vpop.permute.xlu0 %5684
  %5686 = vrot.lane.b32.xlu0 %v4719, 24
  %v5687 = vpop.permute.xlu0 %5686
  %5688 = vrot.lane.b32.xlu0 %v4720, 24
  %v5689 = vpop.permute.xlu0 %5688
  %5690 = vrot.lane.b32.xlu0 %v4721, 24
  %v5691 = vpop.permute.xlu0 %5690
  %5692 = vrot.lane.b32.xlu0 %v4722, 24
  %v5693 = vpop.permute.xlu0 %5692
  %5694 = vrot.lane.b32.xlu0 %v4723, 24
  %v5695 = vpop.permute.xlu0 %5694
  %5696 = vrot.lane.b32.xlu0 %v4724, 24
  %v5697 = vpop.permute.xlu0 %5696
  %5698 = vrot.lane.b32.xlu0 %v4725, 24
  %v5699 = vpop.permute.xlu0 %5698
  %5700 = vrot.lane.b32.xlu0 %v4726, 24
  %v5701 = vpop.permute.xlu0 %5700
  %5702 = vrot.lane.b32.xlu0 %v4727, 24
  %v5703 = vpop.permute.xlu0 %5702
  %5704 = vrot.lane.b32.xlu0 %v4728, 24
  %v5705 = vpop.permute.xlu0 %5704
  %5706 = vrot.lane.b32.xlu0 %v4729, 24
  %v5707 = vpop.permute.xlu0 %5706
  %5708 = vrot.lane.b32.xlu0 %v4730, 24
  %v5709 = vpop.permute.xlu0 %5708
  %5710 = vrot.lane.b32.xlu0 %v4731, 24
  %v5711 = vpop.permute.xlu0 %5710
  %5712 = vrot.lane.b32.xlu0 %v4732, 24
  %v5713 = vpop.permute.xlu0 %5712
  %5714 = vrot.lane.b32.xlu0 %v4733, 24
  %v5715 = vpop.permute.xlu0 %5714
  %5716 = vrot.lane.b32.xlu0 %v4734, 24
  %v5717 = vpop.permute.xlu0 %5716
  %5718 = vrot.lane.b32.xlu0 %v4735, 24
  %v5719 = vpop.permute.xlu0 %5718
  %5720 = vrot.lane.b32.xlu0 %v4736, 24
  %v5721 = vpop.permute.xlu0 %5720
  %5722 = vrot.lane.b32.xlu0 %v4737, 24
  %v5723 = vpop.permute.xlu0 %5722
  %5724 = vrot.lane.b32.xlu0 %v4738, 24
  %v5725 = vpop.permute.xlu0 %5724
  %5726 = vrot.lane.b32.xlu0 %v4739, 24
  %v5727 = vpop.permute.xlu0 %5726
  %5728 = vrot.lane.b32.xlu0 %v4740, 24
  %v5729 = vpop.permute.xlu0 %5728
  %5730 = vrot.lane.b32.xlu0 %v4741, 24
  %v5731 = vpop.permute.xlu0 %5730
  %5732 = vrot.lane.b32.xlu0 %v4742, 24
  %v5733 = vpop.permute.xlu0 %5732
  %5734 = vrot.lane.b32.xlu0 %v4743, 24
  %v5735 = vpop.permute.xlu0 %5734
  %5736 = vrot.lane.b32.xlu0 %v4744, 24
  %v5737 = vpop.permute.xlu0 %5736
  %5738 = vrot.lane.b32.xlu0 %v4745, 24
  %v5739 = vpop.permute.xlu0 %5738
  %5740 = vrot.lane.b32.xlu0 %v4746, 24
  %v5741 = vpop.permute.xlu0 %5740
  %5742 = vrot.lane.b32.xlu0 %v4747, 24
  %v5743 = vpop.permute.xlu0 %5742
  %5744 = vrot.lane.b32.xlu0 %v4748, 24
  %v5745 = vpop.permute.xlu0 %5744
  %5746 = vrot.lane.b32.xlu0 %v4749, 24
  %v5747 = vpop.permute.xlu0 %5746
  %5748 = vrot.lane.b32.xlu0 %v4750, 24
  %v5749 = vpop.permute.xlu0 %5748
  %5750 = vrot.lane.b32.xlu0 %v4751, 24
  %v5751 = vpop.permute.xlu0 %5750
  %5752 = vrot.lane.b32.xlu0 %v4752, 24
  %v5753 = vpop.permute.xlu0 %5752
  %5754 = vrot.lane.b32.xlu0 %v4753, 24
  %v5755 = vpop.permute.xlu0 %5754
  %5756 = vrot.lane.b32.xlu0 %v4754, 24
  %v5757 = vpop.permute.xlu0 %5756
  %5758 = vrot.lane.b32.xlu0 %v4755, 24
  %v5759 = vpop.permute.xlu0 %5758
  %5760 = vrot.lane.b32.xlu0 %v4756, 24
  %v5761 = vpop.permute.xlu0 %5760
  %5762 = vrot.lane.b32.xlu0 %v4757, 24
  %v5763 = vpop.permute.xlu0 %5762
  %5764 = vrot.lane.b32.xlu0 %v4758, 24
  %v5765 = vpop.permute.xlu0 %5764
  %5766 = vrot.lane.b32.xlu0 %v4759, 24
  %v5767 = vpop.permute.xlu0 %5766
  %5768 = vrot.lane.b32.xlu0 %v4760, 24
  %v5769 = vpop.permute.xlu0 %5768
  %5770 = vrot.lane.b32.xlu0 %v4761, 24
  %v5771 = vpop.permute.xlu0 %5770
  %5772 = vrot.lane.b32.xlu0 %v4762, 24
  %v5773 = vpop.permute.xlu0 %5772
  %5774 = vrot.lane.b32.xlu0 %v4763, 24
  %v5775 = vpop.permute.xlu0 %5774
  %5776 = vrot.lane.b32.xlu0 %v4764, 24
  %v5777 = vpop.permute.xlu0 %5776
  %5778 = vrot.lane.b32.xlu0 %v4765, 24
  %v5779 = vpop.permute.xlu0 %5778
  %5780 = vrot.lane.b32.xlu0 %v4766, 24
  %v5781 = vpop.permute.xlu0 %5780
  %5782 = vrot.lane.b32.xlu0 %v4767, 24
  %v5783 = vpop.permute.xlu0 %5782
  %5784 = vrot.lane.b32.xlu0 %v4768, 24
  %v5785 = vpop.permute.xlu0 %5784
  %5786 = vrot.lane.b32.xlu0 %v4769, 24
  %v5787 = vpop.permute.xlu0 %5786
  %5788 = vrot.lane.b32.xlu0 %v4770, 24
  %v5789 = vpop.permute.xlu0 %5788
  %5790 = vrot.lane.b32.xlu0 %v4771, 24
  %v5791 = vpop.permute.xlu0 %5790
  %5792 = vrot.lane.b32.xlu0 %v4772, 24
  %v5793 = vpop.permute.xlu0 %5792
  %5794 = vrot.lane.b32.xlu0 %v4773, 24
  %v5795 = vpop.permute.xlu0 %5794
  %5796 = vrot.lane.b32.xlu0 %v4774, 24
  %v5797 = vpop.permute.xlu0 %5796
  %5798 = vrot.lane.b32.xlu0 %v4775, 24
  %v5799 = vpop.permute.xlu0 %5798
  %5800 = vrot.lane.b32.xlu0 %v4776, 24
  %v5801 = vpop.permute.xlu0 %5800
  %5930 = vrot.lane.b32.xlu0 %v4777, 32
  %v5931 = vpop.permute.xlu0 %5930
  %5932 = vrot.lane.b32.xlu0 %v4778, 32
  %v5933 = vpop.permute.xlu0 %5932
  %5934 = vrot.lane.b32.xlu0 %v4779, 32
  %v5935 = vpop.permute.xlu0 %5934
  %5936 = vrot.lane.b32.xlu0 %v4780, 32
  %v5937 = vpop.permute.xlu0 %5936
  %5938 = vrot.lane.b32.xlu0 %v4781, 32
  %v5939 = vpop.permute.xlu0 %5938
  %5940 = vrot.lane.b32.xlu0 %v4782, 32
  %v5941 = vpop.permute.xlu0 %5940
  %5942 = vrot.lane.b32.xlu0 %v4783, 32
  %v5943 = vpop.permute.xlu0 %5942
  %5944 = vrot.lane.b32.xlu0 %v4784, 32
  %v5945 = vpop.permute.xlu0 %5944
  %5946 = vrot.lane.b32.xlu0 %v4785, 32
  %v5947 = vpop.permute.xlu0 %5946
  %5948 = vrot.lane.b32.xlu0 %v4786, 32
  %v5949 = vpop.permute.xlu0 %5948
  %5950 = vrot.lane.b32.xlu0 %v4787, 32
  %v5951 = vpop.permute.xlu0 %5950
  %5952 = vrot.lane.b32.xlu0 %v4788, 32
  %v5953 = vpop.permute.xlu0 %5952
  %5954 = vrot.lane.b32.xlu0 %v4789, 32
  %v5955 = vpop.permute.xlu0 %5954
  %5956 = vrot.lane.b32.xlu0 %v4790, 32
  %v5957 = vpop.permute.xlu0 %5956
  %5958 = vrot.lane.b32.xlu0 %v4791, 32
  %v5959 = vpop.permute.xlu0 %5958
  %5960 = vrot.lane.b32.xlu0 %v4792, 32
  %v5961 = vpop.permute.xlu0 %5960
  %5962 = vrot.lane.b32.xlu0 %v4793, 32
  %v5963 = vpop.permute.xlu0 %5962
  %5964 = vrot.lane.b32.xlu0 %v4794, 32
  %v5965 = vpop.permute.xlu0 %5964
  %5966 = vrot.lane.b32.xlu0 %v4795, 32
  %v5967 = vpop.permute.xlu0 %5966
  %5968 = vrot.lane.b32.xlu0 %v4796, 32
  %v5969 = vpop.permute.xlu0 %5968
  %5970 = vrot.lane.b32.xlu0 %v4797, 32
  %v5971 = vpop.permute.xlu0 %5970
  %5972 = vrot.lane.b32.xlu0 %v4798, 32
  %v5973 = vpop.permute.xlu0 %5972
  %5974 = vrot.lane.b32.xlu0 %v4799, 32
  %v5975 = vpop.permute.xlu0 %5974
  %5976 = vrot.lane.b32.xlu0 %v4800, 32
  %v5977 = vpop.permute.xlu0 %5976
  %5978 = vrot.lane.b32.xlu0 %v4801, 32
  %v5979 = vpop.permute.xlu0 %5978
  %5980 = vrot.lane.b32.xlu0 %v4802, 32
  %v5981 = vpop.permute.xlu0 %5980
  %5982 = vrot.lane.b32.xlu0 %v4803, 32
  %v5983 = vpop.permute.xlu0 %5982
  %5984 = vrot.lane.b32.xlu0 %v4804, 32
  %v5985 = vpop.permute.xlu0 %5984
  %5986 = vrot.lane.b32.xlu0 %v4805, 32
  %v5987 = vpop.permute.xlu0 %5986
  %5988 = vrot.lane.b32.xlu0 %v4806, 32
  %v5989 = vpop.permute.xlu0 %5988
  %5990 = vrot.lane.b32.xlu0 %v4807, 32
  %v5991 = vpop.permute.xlu0 %5990
  %5992 = vrot.lane.b32.xlu0 %v4808, 32
  %v5993 = vpop.permute.xlu0 %5992
  %5994 = vrot.lane.b32.xlu0 %v4809, 32
  %v5995 = vpop.permute.xlu0 %5994
  %5996 = vrot.lane.b32.xlu0 %v4810, 32
  %v5997 = vpop.permute.xlu0 %5996
  %5998 = vrot.lane.b32.xlu0 %v4811, 32
  %v5999 = vpop.permute.xlu0 %5998
  %6000 = vrot.lane.b32.xlu0 %v4812, 32
  %v6001 = vpop.permute.xlu0 %6000
  %6002 = vrot.lane.b32.xlu0 %v4813, 32
  %v6003 = vpop.permute.xlu0 %6002
  %6004 = vrot.lane.b32.xlu0 %v4814, 32
  %v6005 = vpop.permute.xlu0 %6004
  %6006 = vrot.lane.b32.xlu0 %v4815, 32
  %v6007 = vpop.permute.xlu0 %6006
  %6008 = vrot.lane.b32.xlu0 %v4816, 32
  %v6009 = vpop.permute.xlu0 %6008
  %6010 = vrot.lane.b32.xlu0 %v4817, 32
  %v6011 = vpop.permute.xlu0 %6010
  %6012 = vrot.lane.b32.xlu0 %v4818, 32
  %v6013 = vpop.permute.xlu0 %6012
  %6014 = vrot.lane.b32.xlu0 %v4819, 32
  %v6015 = vpop.permute.xlu0 %6014
  %6016 = vrot.lane.b32.xlu0 %v4820, 32
  %v6017 = vpop.permute.xlu0 %6016
  %6018 = vrot.lane.b32.xlu0 %v4821, 32
  %v6019 = vpop.permute.xlu0 %6018
  %6020 = vrot.lane.b32.xlu0 %v4822, 32
  %v6021 = vpop.permute.xlu0 %6020
  %6022 = vrot.lane.b32.xlu0 %v4823, 32
  %v6023 = vpop.permute.xlu0 %6022
  %6024 = vrot.lane.b32.xlu0 %v4824, 32
  %v6025 = vpop.permute.xlu0 %6024
  %6026 = vrot.lane.b32.xlu0 %v4825, 32
  %v6027 = vpop.permute.xlu0 %6026
  %6028 = vrot.lane.b32.xlu0 %v4826, 32
  %v6029 = vpop.permute.xlu0 %6028
  %6030 = vrot.lane.b32.xlu0 %v4827, 32
  %v6031 = vpop.permute.xlu0 %6030
  %6032 = vrot.lane.b32.xlu0 %v4828, 32
  %v6033 = vpop.permute.xlu0 %6032
  %6034 = vrot.lane.b32.xlu0 %v4829, 32
  %v6035 = vpop.permute.xlu0 %6034
  %6036 = vrot.lane.b32.xlu0 %v4830, 32
  %v6037 = vpop.permute.xlu0 %6036
  %6038 = vrot.lane.b32.xlu0 %v4831, 32
  %v6039 = vpop.permute.xlu0 %6038
  %6040 = vrot.lane.b32.xlu0 %v4832, 32
  %v6041 = vpop.permute.xlu0 %6040
  %6042 = vrot.lane.b32.xlu0 %v4833, 32
  %v6043 = vpop.permute.xlu0 %6042
  %6044 = vrot.lane.b32.xlu0 %v4834, 32
  %v6045 = vpop.permute.xlu0 %6044
  %6046 = vrot.lane.b32.xlu0 %v4835, 32
  %v6047 = vpop.permute.xlu0 %6046
  %6048 = vrot.lane.b32.xlu0 %v4836, 32
  %v6049 = vpop.permute.xlu0 %6048
  %6050 = vrot.lane.b32.xlu0 %v4837, 32
  %v6051 = vpop.permute.xlu0 %6050
  %6052 = vrot.lane.b32.xlu0 %v4838, 32
  %v6053 = vpop.permute.xlu0 %6052
  %6054 = vrot.lane.b32.xlu0 %v4839, 32
  %v6055 = vpop.permute.xlu0 %6054
  %6056 = vrot.lane.b32.xlu0 %v4840, 32
  %v6057 = vpop.permute.xlu0 %6056
  %6186 = vrot.lane.b32.xlu0 %v4841, 40
  %v6187 = vpop.permute.xlu0 %6186
  %6188 = vrot.lane.b32.xlu0 %v4842, 40
  %v6189 = vpop.permute.xlu0 %6188
  %6190 = vrot.lane.b32.xlu0 %v4843, 40
  %v6191 = vpop.permute.xlu0 %6190
  %6192 = vrot.lane.b32.xlu0 %v4844, 40
  %v6193 = vpop.permute.xlu0 %6192
  %6194 = vrot.lane.b32.xlu0 %v4845, 40
  %v6195 = vpop.permute.xlu0 %6194
  %6196 = vrot.lane.b32.xlu0 %v4846, 40
  %v6197 = vpop.permute.xlu0 %6196
  %6198 = vrot.lane.b32.xlu0 %v4847, 40
  %v6199 = vpop.permute.xlu0 %6198
  %6200 = vrot.lane.b32.xlu0 %v4848, 40
  %v6201 = vpop.permute.xlu0 %6200
  %6202 = vrot.lane.b32.xlu0 %v4849, 40
  %v6203 = vpop.permute.xlu0 %6202
  %6204 = vrot.lane.b32.xlu0 %v4850, 40
  %v6205 = vpop.permute.xlu0 %6204
  %6206 = vrot.lane.b32.xlu0 %v4851, 40
  %v6207 = vpop.permute.xlu0 %6206
  %6208 = vrot.lane.b32.xlu0 %v4852, 40
  %v6209 = vpop.permute.xlu0 %6208
  %6210 = vrot.lane.b32.xlu0 %v4853, 40
  %v6211 = vpop.permute.xlu0 %6210
  %6212 = vrot.lane.b32.xlu0 %v4854, 40
  %v6213 = vpop.permute.xlu0 %6212
  %6214 = vrot.lane.b32.xlu0 %v4855, 40
  %v6215 = vpop.permute.xlu0 %6214
  %6216 = vrot.lane.b32.xlu0 %v4856, 40
  %v6217 = vpop.permute.xlu0 %6216
  %6218 = vrot.lane.b32.xlu0 %v4857, 40
  %v6219 = vpop.permute.xlu0 %6218
  %6220 = vrot.lane.b32.xlu0 %v4858, 40
  %v6221 = vpop.permute.xlu0 %6220
  %6222 = vrot.lane.b32.xlu0 %v4859, 40
  %v6223 = vpop.permute.xlu0 %6222
  %6224 = vrot.lane.b32.xlu0 %v4860, 40
  %v6225 = vpop.permute.xlu0 %6224
  %6226 = vrot.lane.b32.xlu0 %v4861, 40
  %v6227 = vpop.permute.xlu0 %6226
  %6228 = vrot.lane.b32.xlu0 %v4862, 40
  %v6229 = vpop.permute.xlu0 %6228
  %6230 = vrot.lane.b32.xlu0 %v4863, 40
  %v6231 = vpop.permute.xlu0 %6230
  %6232 = vrot.lane.b32.xlu0 %v4864, 40
  %v6233 = vpop.permute.xlu0 %6232
  %6234 = vrot.lane.b32.xlu0 %v4865, 40
  %v6235 = vpop.permute.xlu0 %6234
  %6236 = vrot.lane.b32.xlu0 %v4866, 40
  %v6237 = vpop.permute.xlu0 %6236
  %6238 = vrot.lane.b32.xlu0 %v4867, 40
  %v6239 = vpop.permute.xlu0 %6238
  %6240 = vrot.lane.b32.xlu0 %v4868, 40
  %v6241 = vpop.permute.xlu0 %6240
  %6242 = vrot.lane.b32.xlu0 %v4869, 40
  %v6243 = vpop.permute.xlu0 %6242
  %6244 = vrot.lane.b32.xlu0 %v4870, 40
  %v6245 = vpop.permute.xlu0 %6244
  %6246 = vrot.lane.b32.xlu0 %v4871, 40
  %v6247 = vpop.permute.xlu0 %6246
  %6248 = vrot.lane.b32.xlu0 %v4872, 40
  %v6249 = vpop.permute.xlu0 %6248
  %6250 = vrot.lane.b32.xlu0 %v4873, 40
  %v6251 = vpop.permute.xlu0 %6250
  %6252 = vrot.lane.b32.xlu0 %v4874, 40
  %v6253 = vpop.permute.xlu0 %6252
  %6254 = vrot.lane.b32.xlu0 %v4875, 40
  %v6255 = vpop.permute.xlu0 %6254
  %6256 = vrot.lane.b32.xlu0 %v4876, 40
  %v6257 = vpop.permute.xlu0 %6256
  %6258 = vrot.lane.b32.xlu0 %v4877, 40
  %v6259 = vpop.permute.xlu0 %6258
  %6260 = vrot.lane.b32.xlu0 %v4878, 40
  %v6261 = vpop.permute.xlu0 %6260
  %6262 = vrot.lane.b32.xlu0 %v4879, 40
  %v6263 = vpop.permute.xlu0 %6262
  %6264 = vrot.lane.b32.xlu0 %v4880, 40
  %v6265 = vpop.permute.xlu0 %6264
  %6266 = vrot.lane.b32.xlu0 %v4881, 40
  %v6267 = vpop.permute.xlu0 %6266
  %6268 = vrot.lane.b32.xlu0 %v4882, 40
  %v6269 = vpop.permute.xlu0 %6268
  %6270 = vrot.lane.b32.xlu0 %v4883, 40
  %v6271 = vpop.permute.xlu0 %6270
  %6272 = vrot.lane.b32.xlu0 %v4884, 40
  %v6273 = vpop.permute.xlu0 %6272
  %6274 = vrot.lane.b32.xlu0 %v4885, 40
  %v6275 = vpop.permute.xlu0 %6274
  %6276 = vrot.lane.b32.xlu0 %v4886, 40
  %v6277 = vpop.permute.xlu0 %6276
  %6278 = vrot.lane.b32.xlu0 %v4887, 40
  %v6279 = vpop.permute.xlu0 %6278
  %6280 = vrot.lane.b32.xlu0 %v4888, 40
  %v6281 = vpop.permute.xlu0 %6280
  %6282 = vrot.lane.b32.xlu0 %v4889, 40
  %v6283 = vpop.permute.xlu0 %6282
  %6284 = vrot.lane.b32.xlu0 %v4890, 40
  %v6285 = vpop.permute.xlu0 %6284
  %6286 = vrot.lane.b32.xlu0 %v4891, 40
  %v6287 = vpop.permute.xlu0 %6286
  %6288 = vrot.lane.b32.xlu0 %v4892, 40
  %v6289 = vpop.permute.xlu0 %6288
  %6290 = vrot.lane.b32.xlu0 %v4893, 40
  %v6291 = vpop.permute.xlu0 %6290
  %6292 = vrot.lane.b32.xlu0 %v4894, 40
  %v6293 = vpop.permute.xlu0 %6292
  %6294 = vrot.lane.b32.xlu0 %v4895, 40
  %v6295 = vpop.permute.xlu0 %6294
  %6296 = vrot.lane.b32.xlu0 %v4896, 40
  %v6297 = vpop.permute.xlu0 %6296
  %6298 = vrot.lane.b32.xlu0 %v4897, 40
  %v6299 = vpop.permute.xlu0 %6298
  %6300 = vrot.lane.b32.xlu0 %v4898, 40
  %v6301 = vpop.permute.xlu0 %6300
  %6302 = vrot.lane.b32.xlu0 %v4899, 40
  %v6303 = vpop.permute.xlu0 %6302
  %6304 = vrot.lane.b32.xlu0 %v4900, 40
  %v6305 = vpop.permute.xlu0 %6304
  %6306 = vrot.lane.b32.xlu0 %v4901, 40
  %v6307 = vpop.permute.xlu0 %6306
  %6308 = vrot.lane.b32.xlu0 %v4902, 40
  %v6309 = vpop.permute.xlu0 %6308
  %6310 = vrot.lane.b32.xlu0 %v4903, 40
  %v6311 = vpop.permute.xlu0 %6310
  %6312 = vrot.lane.b32.xlu0 %v4904, 40
  %v6313 = vpop.permute.xlu0 %6312
  %6442 = vrot.lane.b32.xlu0 %v4906, 48
  %v6443 = vpop.permute.xlu0 %6442
  %6444 = vrot.lane.b32.xlu0 %v4907, 48
  %v6445 = vpop.permute.xlu0 %6444
  %6446 = vrot.lane.b32.xlu0 %v4908, 48
  %v6447 = vpop.permute.xlu0 %6446
  %6448 = vrot.lane.b32.xlu0 %v4909, 48
  %v6449 = vpop.permute.xlu0 %6448
  %6450 = vrot.lane.b32.xlu0 %v4910, 48
  %v6451 = vpop.permute.xlu0 %6450
  %6452 = vrot.lane.b32.xlu0 %v4911, 48
  %v6453 = vpop.permute.xlu0 %6452
  %6454 = vrot.lane.b32.xlu0 %v4912, 48
  %v6455 = vpop.permute.xlu0 %6454
  %6456 = vrot.lane.b32.xlu0 %v4913, 48
  %v6457 = vpop.permute.xlu0 %6456
  %6458 = vrot.lane.b32.xlu0 %v4914, 48
  %v6459 = vpop.permute.xlu0 %6458
  %6460 = vrot.lane.b32.xlu0 %v4915, 48
  %v6461 = vpop.permute.xlu0 %6460
  %6462 = vrot.lane.b32.xlu0 %v4916, 48
  %v6463 = vpop.permute.xlu0 %6462
  %6464 = vrot.lane.b32.xlu0 %v4917, 48
  %v6465 = vpop.permute.xlu0 %6464
  %6466 = vrot.lane.b32.xlu0 %v4918, 48
  %v6467 = vpop.permute.xlu0 %6466
  %6468 = vrot.lane.b32.xlu0 %v4919, 48
  %v6469 = vpop.permute.xlu0 %6468
  %6470 = vrot.lane.b32.xlu0 %v4920, 48
  %v6471 = vpop.permute.xlu0 %6470
  %6472 = vrot.lane.b32.xlu0 %v4921, 48
  %v6473 = vpop.permute.xlu0 %6472
  %6474 = vrot.lane.b32.xlu0 %v4922, 48
  %v6475 = vpop.permute.xlu0 %6474
  %6476 = vrot.lane.b32.xlu0 %v4923, 48
  %v6477 = vpop.permute.xlu0 %6476
  %6478 = vrot.lane.b32.xlu0 %v4924, 48
  %v6479 = vpop.permute.xlu0 %6478
  %6480 = vrot.lane.b32.xlu0 %v4925, 48
  %v6481 = vpop.permute.xlu0 %6480
  %6482 = vrot.lane.b32.xlu0 %v4926, 48
  %v6483 = vpop.permute.xlu0 %6482
  %6484 = vrot.lane.b32.xlu0 %v4927, 48
  %v6485 = vpop.permute.xlu0 %6484
  %6486 = vrot.lane.b32.xlu0 %v4928, 48
  %v6487 = vpop.permute.xlu0 %6486
  %6488 = vrot.lane.b32.xlu0 %v4929, 48
  %v6489 = vpop.permute.xlu0 %6488
  %6490 = vrot.lane.b32.xlu0 %v4930, 48
  %v6491 = vpop.permute.xlu0 %6490
  %6492 = vrot.lane.b32.xlu0 %v4931, 48
  %v6493 = vpop.permute.xlu0 %6492
  %6494 = vrot.lane.b32.xlu0 %v4932, 48
  %v6495 = vpop.permute.xlu0 %6494
  %6496 = vrot.lane.b32.xlu0 %v4933, 48
  %v6497 = vpop.permute.xlu0 %6496
  %6498 = vrot.lane.b32.xlu0 %v4934, 48
  %v6499 = vpop.permute.xlu0 %6498
  %6500 = vrot.lane.b32.xlu0 %v4935, 48
  %v6501 = vpop.permute.xlu0 %6500
  %6502 = vrot.lane.b32.xlu0 %v4936, 48
  %v6503 = vpop.permute.xlu0 %6502
  %6504 = vrot.lane.b32.xlu0 %v4937, 48
  %v6505 = vpop.permute.xlu0 %6504
  %6506 = vrot.lane.b32.xlu0 %v4938, 48
  %v6507 = vpop.permute.xlu0 %6506
  %6508 = vrot.lane.b32.xlu0 %v4939, 48
  %v6509 = vpop.permute.xlu0 %6508
  %6510 = vrot.lane.b32.xlu0 %v4940, 48
  %v6511 = vpop.permute.xlu0 %6510
  %6512 = vrot.lane.b32.xlu0 %v4941, 48
  %v6513 = vpop.permute.xlu0 %6512
  %6514 = vrot.lane.b32.xlu0 %v4942, 48
  %v6515 = vpop.permute.xlu0 %6514
  %6516 = vrot.lane.b32.xlu0 %v4943, 48
  %v6517 = vpop.permute.xlu0 %6516
  %6518 = vrot.lane.b32.xlu0 %v4944, 48
  %v6519 = vpop.permute.xlu0 %6518
  %6520 = vrot.lane.b32.xlu0 %v4945, 48
  %v6521 = vpop.permute.xlu0 %6520
  %6522 = vrot.lane.b32.xlu0 %v4946, 48
  %v6523 = vpop.permute.xlu0 %6522
  %6524 = vrot.lane.b32.xlu0 %v4947, 48
  %v6525 = vpop.permute.xlu0 %6524
  %6526 = vrot.lane.b32.xlu0 %v4948, 48
  %v6527 = vpop.permute.xlu0 %6526
  %6528 = vrot.lane.b32.xlu0 %v4949, 48
  %v6529 = vpop.permute.xlu0 %6528
  %6530 = vrot.lane.b32.xlu0 %v4950, 48
  %v6531 = vpop.permute.xlu0 %6530
  %6532 = vrot.lane.b32.xlu0 %v4951, 48
  %v6533 = vpop.permute.xlu0 %6532
  %6534 = vrot.lane.b32.xlu0 %v4952, 48
  %v6535 = vpop.permute.xlu0 %6534
  %6536 = vrot.lane.b32.xlu0 %v4953, 48
  %v6537 = vpop.permute.xlu0 %6536
  %6538 = vrot.lane.b32.xlu0 %v4954, 48
  %v6539 = vpop.permute.xlu0 %6538
  %6540 = vrot.lane.b32.xlu0 %v4955, 48
  %v6541 = vpop.permute.xlu0 %6540
  %6542 = vrot.lane.b32.xlu0 %v4956, 48
  %v6543 = vpop.permute.xlu0 %6542
  %6544 = vrot.lane.b32.xlu0 %v4957, 48
  %v6545 = vpop.permute.xlu0 %6544
  %6546 = vrot.lane.b32.xlu0 %v4958, 48
  %v6547 = vpop.permute.xlu0 %6546
  %6548 = vrot.lane.b32.xlu0 %v4959, 48
  %v6549 = vpop.permute.xlu0 %6548
  %6550 = vrot.lane.b32.xlu0 %v4960, 48
  %v6551 = vpop.permute.xlu0 %6550
  %6552 = vrot.lane.b32.xlu0 %v4961, 48
  %v6553 = vpop.permute.xlu0 %6552
  %6554 = vrot.lane.b32.xlu0 %v4962, 48
  %v6555 = vpop.permute.xlu0 %6554
  %6556 = vrot.lane.b32.xlu0 %v4963, 48
  %v6557 = vpop.permute.xlu0 %6556
  %6558 = vrot.lane.b32.xlu0 %v4964, 48
  %v6559 = vpop.permute.xlu0 %6558
  %6560 = vrot.lane.b32.xlu0 %v4965, 48
  %v6561 = vpop.permute.xlu0 %6560
  %6562 = vrot.lane.b32.xlu0 %v4966, 48
  %v6563 = vpop.permute.xlu0 %6562
  %6564 = vrot.lane.b32.xlu0 %v4967, 48
  %v6565 = vpop.permute.xlu0 %6564
  %6566 = vrot.lane.b32.xlu0 %v4968, 48
  %v6567 = vpop.permute.xlu0 %6566
  %6568 = vrot.lane.b32.xlu0 %v4969, 48
  %v6569 = vpop.permute.xlu0 %6568
  %6698 = vrot.lane.b32.xlu0 %v4970, 56
  %v6699 = vpop.permute.xlu0 %6698
  %6700 = vrot.lane.b32.xlu0 %v4971, 56
  %v6701 = vpop.permute.xlu0 %6700
  %6702 = vrot.lane.b32.xlu0 %v4972, 56
  %v6703 = vpop.permute.xlu0 %6702
  %6704 = vrot.lane.b32.xlu0 %v4973, 56
  %v6705 = vpop.permute.xlu0 %6704
  %6706 = vrot.lane.b32.xlu0 %v4974, 56
  %v6707 = vpop.permute.xlu0 %6706
  %6708 = vrot.lane.b32.xlu0 %v4975, 56
  %v6709 = vpop.permute.xlu0 %6708
  %6710 = vrot.lane.b32.xlu0 %v4976, 56
  %v6711 = vpop.permute.xlu0 %6710
  %6712 = vrot.lane.b32.xlu0 %v4977, 56
  %v6713 = vpop.permute.xlu0 %6712
  %6714 = vrot.lane.b32.xlu0 %v4978, 56
  %v6715 = vpop.permute.xlu0 %6714
  %6716 = vrot.lane.b32.xlu0 %v4979, 56
  %v6717 = vpop.permute.xlu0 %6716
  %6718 = vrot.lane.b32.xlu0 %v4980, 56
  %v6719 = vpop.permute.xlu0 %6718
  %6720 = vrot.lane.b32.xlu0 %v4981, 56
  %v6721 = vpop.permute.xlu0 %6720
  %6722 = vrot.lane.b32.xlu0 %v4982, 56
  %v6723 = vpop.permute.xlu0 %6722
  %6724 = vrot.lane.b32.xlu0 %v4983, 56
  %v6725 = vpop.permute.xlu0 %6724
  %6726 = vrot.lane.b32.xlu0 %v4984, 56
  %v6727 = vpop.permute.xlu0 %6726
  %6728 = vrot.lane.b32.xlu0 %v4985, 56
  %v6729 = vpop.permute.xlu0 %6728
  %6730 = vrot.lane.b32.xlu0 %v4986, 56
  %v6731 = vpop.permute.xlu0 %6730
  %6732 = vrot.lane.b32.xlu0 %v4987, 56
  %v6733 = vpop.permute.xlu0 %6732
  %6734 = vrot.lane.b32.xlu0 %v4988, 56
  %v6735 = vpop.permute.xlu0 %6734
  %6736 = vrot.lane.b32.xlu0 %v4989, 56
  %v6737 = vpop.permute.xlu0 %6736
  %6738 = vrot.lane.b32.xlu0 %v4990, 56
  %v6739 = vpop.permute.xlu0 %6738
  %6740 = vrot.lane.b32.xlu0 %v4991, 56
  %v6741 = vpop.permute.xlu0 %6740
  %6742 = vrot.lane.b32.xlu0 %v4992, 56
  %v6743 = vpop.permute.xlu0 %6742
  %6744 = vrot.lane.b32.xlu0 %v4993, 56
  %v6745 = vpop.permute.xlu0 %6744
  %6746 = vrot.lane.b32.xlu0 %v4994, 56
  %v6747 = vpop.permute.xlu0 %6746
  %6748 = vrot.lane.b32.xlu0 %v4995, 56
  %v6749 = vpop.permute.xlu0 %6748
  %6750 = vrot.lane.b32.xlu0 %v4996, 56
  %v6751 = vpop.permute.xlu0 %6750
  %6752 = vrot.lane.b32.xlu0 %v4997, 56
  %v6753 = vpop.permute.xlu0 %6752
  %6754 = vrot.lane.b32.xlu0 %v4998, 56
  %v6755 = vpop.permute.xlu0 %6754
  %6756 = vrot.lane.b32.xlu0 %v4999, 56
  %v6757 = vpop.permute.xlu0 %6756
  %6758 = vrot.lane.b32.xlu0 %v5000, 56
  %v6759 = vpop.permute.xlu0 %6758
  %6760 = vrot.lane.b32.xlu0 %v5001, 56
  %v6761 = vpop.permute.xlu0 %6760
  %6762 = vrot.lane.b32.xlu0 %v5002, 56
  %v6763 = vpop.permute.xlu0 %6762
  %6764 = vrot.lane.b32.xlu0 %v5003, 56
  %v6765 = vpop.permute.xlu0 %6764
  %6766 = vrot.lane.b32.xlu0 %v5004, 56
  %v6767 = vpop.permute.xlu0 %6766
  %6768 = vrot.lane.b32.xlu0 %v5005, 56
  %v6769 = vpop.permute.xlu0 %6768
  %6770 = vrot.lane.b32.xlu0 %v5006, 56
  %v6771 = vpop.permute.xlu0 %6770
  %6772 = vrot.lane.b32.xlu0 %v5007, 56
  %v6773 = vpop.permute.xlu0 %6772
  %6774 = vrot.lane.b32.xlu0 %v5008, 56
  %v6775 = vpop.permute.xlu0 %6774
  %6776 = vrot.lane.b32.xlu0 %v5009, 56
  %v6777 = vpop.permute.xlu0 %6776
  %6778 = vrot.lane.b32.xlu0 %v5010, 56
  %v6779 = vpop.permute.xlu0 %6778
  %6780 = vrot.lane.b32.xlu0 %v5011, 56
  %v6781 = vpop.permute.xlu0 %6780
  %6782 = vrot.lane.b32.xlu0 %v5012, 56
  %v6783 = vpop.permute.xlu0 %6782
  %6784 = vrot.lane.b32.xlu0 %v5013, 56
  %v6785 = vpop.permute.xlu0 %6784
  %6786 = vrot.lane.b32.xlu0 %v5014, 56
  %v6787 = vpop.permute.xlu0 %6786
  %6788 = vrot.lane.b32.xlu0 %v5015, 56
  %v6789 = vpop.permute.xlu0 %6788
  %6790 = vrot.lane.b32.xlu0 %v5016, 56
  %v6791 = vpop.permute.xlu0 %6790
  %6792 = vrot.lane.b32.xlu0 %v5017, 56
  %v6793 = vpop.permute.xlu0 %6792
  %6794 = vrot.lane.b32.xlu0 %v5018, 56
  %v6795 = vpop.permute.xlu0 %6794
  %6796 = vrot.lane.b32.xlu0 %v5019, 56
  %v6797 = vpop.permute.xlu0 %6796
  %6798 = vrot.lane.b32.xlu0 %v5020, 56
  %v6799 = vpop.permute.xlu0 %6798
  %6800 = vrot.lane.b32.xlu0 %v5021, 56
  %v6801 = vpop.permute.xlu0 %6800
  %6802 = vrot.lane.b32.xlu0 %v5022, 56
  %v6803 = vpop.permute.xlu0 %6802
  %6804 = vrot.lane.b32.xlu0 %v5023, 56
  %v6805 = vpop.permute.xlu0 %6804
  %6806 = vrot.lane.b32.xlu0 %v5024, 56
  %v6807 = vpop.permute.xlu0 %6806
  %6808 = vrot.lane.b32.xlu0 %v5025, 56
  %v6809 = vpop.permute.xlu0 %6808
  %6810 = vrot.lane.b32.xlu0 %v5026, 56
  %v6811 = vpop.permute.xlu0 %6810
  %6812 = vrot.lane.b32.xlu0 %v5027, 56
  %v6813 = vpop.permute.xlu0 %6812
  %6814 = vrot.lane.b32.xlu0 %v5028, 56
  %v6815 = vpop.permute.xlu0 %6814
  %6816 = vrot.lane.b32.xlu0 %v5029, 56
  %v6817 = vpop.permute.xlu0 %6816
  %6818 = vrot.lane.b32.xlu0 %v5030, 56
  %v6819 = vpop.permute.xlu0 %6818
  %6820 = vrot.lane.b32.xlu0 %v5031, 56
  %v6821 = vpop.permute.xlu0 %6820
  %6822 = vrot.lane.b32.xlu0 %v5032, 56
  %v6823 = vpop.permute.xlu0 %6822
  %6824 = vrot.lane.b32.xlu0 %v5033, 56
  %v6825 = vpop.permute.xlu0 %6824
  %6954 = vrot.lane.b32.xlu0 %v5034, 64
  %v6955 = vpop.permute.xlu0 %6954
  %6956 = vrot.lane.b32.xlu0 %v5035, 64
  %v6957 = vpop.permute.xlu0 %6956
  %6958 = vrot.lane.b32.xlu0 %v5036, 64
  %v6959 = vpop.permute.xlu0 %6958
  %6960 = vrot.lane.b32.xlu0 %v5037, 64
  %v6961 = vpop.permute.xlu0 %6960
  %6962 = vrot.lane.b32.xlu0 %v5038, 64
  %v6963 = vpop.permute.xlu0 %6962
  %6964 = vrot.lane.b32.xlu0 %v5039, 64
  %v6965 = vpop.permute.xlu0 %6964
  %6966 = vrot.lane.b32.xlu0 %v5040, 64
  %v6967 = vpop.permute.xlu0 %6966
  %6968 = vrot.lane.b32.xlu0 %v5041, 64
  %v6969 = vpop.permute.xlu0 %6968
  %6970 = vrot.lane.b32.xlu0 %v5042, 64
  %v6971 = vpop.permute.xlu0 %6970
  %6972 = vrot.lane.b32.xlu0 %v5043, 64
  %v6973 = vpop.permute.xlu0 %6972
  %6974 = vrot.lane.b32.xlu0 %v5044, 64
  %v6975 = vpop.permute.xlu0 %6974
  %6976 = vrot.lane.b32.xlu0 %v5045, 64
  %v6977 = vpop.permute.xlu0 %6976
  %6978 = vrot.lane.b32.xlu0 %v5046, 64
  %v6979 = vpop.permute.xlu0 %6978
  %6980 = vrot.lane.b32.xlu0 %v5047, 64
  %v6981 = vpop.permute.xlu0 %6980
  %6982 = vrot.lane.b32.xlu0 %v5048, 64
  %v6983 = vpop.permute.xlu0 %6982
  %6984 = vrot.lane.b32.xlu0 %v5049, 64
  %v6985 = vpop.permute.xlu0 %6984
  %6986 = vrot.lane.b32.xlu0 %v5050, 64
  %v6987 = vpop.permute.xlu0 %6986
  %6988 = vrot.lane.b32.xlu0 %v5051, 64
  %v6989 = vpop.permute.xlu0 %6988
  %6990 = vrot.lane.b32.xlu0 %v5052, 64
  %v6991 = vpop.permute.xlu0 %6990
  %6992 = vrot.lane.b32.xlu0 %v5053, 64
  %v6993 = vpop.permute.xlu0 %6992
  %6994 = vrot.lane.b32.xlu0 %v5054, 64
  %v6995 = vpop.permute.xlu0 %6994
  %6996 = vrot.lane.b32.xlu0 %v5055, 64
  %v6997 = vpop.permute.xlu0 %6996
  %6998 = vrot.lane.b32.xlu0 %v5056, 64
  %v6999 = vpop.permute.xlu0 %6998
  %7000 = vrot.lane.b32.xlu0 %v5057, 64
  %v7001 = vpop.permute.xlu0 %7000
  %7002 = vrot.lane.b32.xlu0 %v5058, 64
  %v7003 = vpop.permute.xlu0 %7002
  %7004 = vrot.lane.b32.xlu0 %v5059, 64
  %v7005 = vpop.permute.xlu0 %7004
  %7006 = vrot.lane.b32.xlu0 %v5060, 64
  %v7007 = vpop.permute.xlu0 %7006
  %7008 = vrot.lane.b32.xlu0 %v5061, 64
  %v7009 = vpop.permute.xlu0 %7008
  %7010 = vrot.lane.b32.xlu0 %v5062, 64
  %v7011 = vpop.permute.xlu0 %7010
  %7012 = vrot.lane.b32.xlu0 %v5063, 64
  %v7013 = vpop.permute.xlu0 %7012
  %7014 = vrot.lane.b32.xlu0 %v5064, 64
  %v7015 = vpop.permute.xlu0 %7014
  %7016 = vrot.lane.b32.xlu0 %v5065, 64
  %v7017 = vpop.permute.xlu0 %7016
  %7018 = vrot.lane.b32.xlu0 %v5066, 64
  %v7019 = vpop.permute.xlu0 %7018
  %7020 = vrot.lane.b32.xlu0 %v5067, 64
  %v7021 = vpop.permute.xlu0 %7020
  %7022 = vrot.lane.b32.xlu0 %v5068, 64
  %v7023 = vpop.permute.xlu0 %7022
  %7024 = vrot.lane.b32.xlu0 %v5069, 64
  %v7025 = vpop.permute.xlu0 %7024
  %7026 = vrot.lane.b32.xlu0 %v5070, 64
  %v7027 = vpop.permute.xlu0 %7026
  %7028 = vrot.lane.b32.xlu0 %v5071, 64
  %v7029 = vpop.permute.xlu0 %7028
  %7030 = vrot.lane.b32.xlu0 %v5072, 64
  %v7031 = vpop.permute.xlu0 %7030
  %7032 = vrot.lane.b32.xlu0 %v5073, 64
  %v7033 = vpop.permute.xlu0 %7032
  %7034 = vrot.lane.b32.xlu0 %v5074, 64
  %v7035 = vpop.permute.xlu0 %7034
  %7036 = vrot.lane.b32.xlu0 %v5075, 64
  %v7037 = vpop.permute.xlu0 %7036
  %7038 = vrot.lane.b32.xlu0 %v5076, 64
  %v7039 = vpop.permute.xlu0 %7038
  %7040 = vrot.lane.b32.xlu0 %v5077, 64
  %v7041 = vpop.permute.xlu0 %7040
  %7042 = vrot.lane.b32.xlu0 %v5078, 64
  %v7043 = vpop.permute.xlu0 %7042
  %7044 = vrot.lane.b32.xlu0 %v5079, 64
  %v7045 = vpop.permute.xlu0 %7044
  %7046 = vrot.lane.b32.xlu0 %v5080, 64
  %v7047 = vpop.permute.xlu0 %7046
  %7048 = vrot.lane.b32.xlu0 %v5081, 64
  %v7049 = vpop.permute.xlu0 %7048
  %7050 = vrot.lane.b32.xlu0 %v5082, 64
  %v7051 = vpop.permute.xlu0 %7050
  %7052 = vrot.lane.b32.xlu0 %v5083, 64
  %v7053 = vpop.permute.xlu0 %7052
  %7054 = vrot.lane.b32.xlu0 %v5084, 64
  %v7055 = vpop.permute.xlu0 %7054
  %7056 = vrot.lane.b32.xlu0 %v5085, 64
  %v7057 = vpop.permute.xlu0 %7056
  %7058 = vrot.lane.b32.xlu0 %v5086, 64
  %v7059 = vpop.permute.xlu0 %7058
  %7060 = vrot.lane.b32.xlu0 %v5087, 64
  %v7061 = vpop.permute.xlu0 %7060
  %7062 = vrot.lane.b32.xlu0 %v5088, 64
  %v7063 = vpop.permute.xlu0 %7062
  %7064 = vrot.lane.b32.xlu0 %v5089, 64
  %v7065 = vpop.permute.xlu0 %7064
  %7066 = vrot.lane.b32.xlu0 %v5090, 64
  %v7067 = vpop.permute.xlu0 %7066
  %7068 = vrot.lane.b32.xlu0 %v5091, 64
  %v7069 = vpop.permute.xlu0 %7068
  %7070 = vrot.lane.b32.xlu0 %v5092, 64
  %v7071 = vpop.permute.xlu0 %7070
  %7072 = vrot.lane.b32.xlu0 %v5093, 64
  %v7073 = vpop.permute.xlu0 %7072
  %7074 = vrot.lane.b32.xlu0 %v5094, 64
  %v7075 = vpop.permute.xlu0 %7074
  %7076 = vrot.lane.b32.xlu0 %v5095, 64
  %v7077 = vpop.permute.xlu0 %7076
  %7078 = vrot.lane.b32.xlu0 %v5096, 64
  %v7079 = vpop.permute.xlu0 %7078
  %7080 = vrot.lane.b32.xlu0 %v5097, 64
  %v7081 = vpop.permute.xlu0 %7080
  %v7146 = vsel %vm2739, %v4521, %v5163
  %v7147 = vsel %vm2739, %v4522, %v5165
  %v7148 = vsel %vm2739, %v4523, %v5167
  %v7149 = vsel %vm2739, %v4524, %v5169
  %v7150 = vsel %vm2739, %v4525, %v5171
  %v7151 = vsel %vm2739, %v4526, %v5173
  %v7152 = vsel %vm2739, %v4527, %v5175
  %v7153 = vsel %vm2739, %v4528, %v5177
  %v7154 = vsel %vm2739, %v4529, %v5179
  %v7155 = vsel %vm2739, %v4530, %v5181
  %v7156 = vsel %vm2739, %v4531, %v5183
  %v7157 = vsel %vm2739, %v4532, %v5185
  %v7158 = vsel %vm2739, %v4533, %v5187
  %v7159 = vsel %vm2739, %v4534, %v5189
  %v7160 = vsel %vm2739, %v4535, %v5191
  %v7161 = vsel %vm2739, %v4536, %v5193
  %v7162 = vsel %vm2739, %v4537, %v5195
  %v7163 = vsel %vm2739, %v4538, %v5197
  %v7164 = vsel %vm2739, %v4539, %v5199
  %v7165 = vsel %vm2739, %v4540, %v5201
  %v7166 = vsel %vm2739, %v4541, %v5203
  %v7167 = vsel %vm2739, %v4542, %v5205
  %v7168 = vsel %vm2739, %v4543, %v5207
  %v7169 = vsel %vm2739, %v4544, %v5209
  %v7170 = vsel %vm2739, %v4545, %v5211
  %v7171 = vsel %vm2739, %v4546, %v5213
  %v7172 = vsel %vm2739, %v4547, %v5215
  %v7173 = vsel %vm2739, %v4548, %v5217
  %v7174 = vsel %vm2739, %v4549, %v5219
  %v7175 = vsel %vm2739, %v4550, %v5221
  %v7176 = vsel %vm2739, %v4551, %v5223
  %v7177 = vsel %vm2739, %v4552, %v5225
  %v7178 = vsel %vm2739, %v4553, %v5227
  %v7179 = vsel %vm2739, %v4554, %v5229
  %v7180 = vsel %vm2739, %v4555, %v5231
  %v7181 = vsel %vm2739, %v4556, %v5233
  %v7182 = vsel %vm2739, %v4557, %v5235
  %v7183 = vsel %vm2739, %v4558, %v5237
  %v7184 = vsel %vm2739, %v4559, %v5239
  %v7185 = vsel %vm2739, %v4560, %v5241
  %v7186 = vsel %vm2739, %v4561, %v5243
  %v7187 = vsel %vm2739, %v4562, %v5245
  %v7188 = vsel %vm2739, %v4563, %v5247
  %v7189 = vsel %vm2739, %v4564, %v5249
  %v7190 = vsel %vm2739, %v4565, %v5251
  %v7191 = vsel %vm2739, %v4566, %v5253
  %v7192 = vsel %vm2739, %v4567, %v5255
  %v7193 = vsel %vm2739, %v4568, %v5257
  %v7194 = vsel %vm2739, %v4569, %v5259
  %v7195 = vsel %vm2739, %v4570, %v5261
  %v7196 = vsel %vm2739, %v4571, %v5263
  %v7197 = vsel %vm2739, %v4572, %v5265
  %v7198 = vsel %vm2739, %v4573, %v5267
  %v7199 = vsel %vm2739, %v4574, %v5269
  %v7200 = vsel %vm2739, %v4575, %v5271
  %v7201 = vsel %vm2739, %v4576, %v5273
  %v7202 = vsel %vm2739, %v4577, %v5275
  %v7203 = vsel %vm2739, %v4578, %v5277
  %v7204 = vsel %vm2739, %v4579, %v5279
  %v7205 = vsel %vm2739, %v4580, %v5281
  %v7206 = vsel %vm2739, %v4581, %v5283
  %v7207 = vsel %vm2739, %v4582, %v5285
  %v7208 = vsel %vm2739, %v4583, %v5287
  %v7209 = vsel %vm2739, %v4584, %v5289
  %v7210 = vsel %vm2869, %v7146, %v5419
  %v7211 = vsel %vm2869, %v7147, %v5421
  %v7212 = vsel %vm2869, %v7148, %v5423
  %v7213 = vsel %vm2869, %v7149, %v5425
  %v7214 = vsel %vm2869, %v7150, %v5427
  %v7215 = vsel %vm2869, %v7151, %v5429
  %v7216 = vsel %vm2869, %v7152, %v5431
  %v7217 = vsel %vm2869, %v7153, %v5433
  %v7218 = vsel %vm2869, %v7154, %v5435
  %v7219 = vsel %vm2869, %v7155, %v5437
  %v7220 = vsel %vm2869, %v7156, %v5439
  %v7221 = vsel %vm2869, %v7157, %v5441
  %v7222 = vsel %vm2869, %v7158, %v5443
  %v7223 = vsel %vm2869, %v7159, %v5445
  %v7224 = vsel %vm2869, %v7160, %v5447
  %v7225 = vsel %vm2869, %v7161, %v5449
  %v7226 = vsel %vm2869, %v7162, %v5451
  %v7227 = vsel %vm2869, %v7163, %v5453
  %v7228 = vsel %vm2869, %v7164, %v5455
  %v7229 = vsel %vm2869, %v7165, %v5457
  %v7230 = vsel %vm2869, %v7166, %v5459
  %v7231 = vsel %vm2869, %v7167, %v5461
  %v7232 = vsel %vm2869, %v7168, %v5463
  %v7233 = vsel %vm2869, %v7169, %v5465
  %v7234 = vsel %vm2869, %v7170, %v5467
  %v7235 = vsel %vm2869, %v7171, %v5469
  %v7236 = vsel %vm2869, %v7172, %v5471
  %v7237 = vsel %vm2869, %v7173, %v5473
  %v7238 = vsel %vm2869, %v7174, %v5475
  %v7239 = vsel %vm2869, %v7175, %v5477
  %v7240 = vsel %vm2869, %v7176, %v5479
  %v7241 = vsel %vm2869, %v7177, %v5481
  %v7242 = vsel %vm2869, %v7178, %v5483
  %v7243 = vsel %vm2869, %v7179, %v5485
  %v7244 = vsel %vm2869, %v7180, %v5487
  %v7245 = vsel %vm2869, %v7181, %v5489
  %v7246 = vsel %vm2869, %v7182, %v5491
  %v7247 = vsel %vm2869, %v7183, %v5493
  %v7248 = vsel %vm2869, %v7184, %v5495
  %v7249 = vsel %vm2869, %v7185, %v5497
  %v7250 = vsel %vm2869, %v7186, %v5499
  %v7251 = vsel %vm2869, %v7187, %v5501
  %v7252 = vsel %vm2869, %v7188, %v5503
  %v7253 = vsel %vm2869, %v7189, %v5505
  %v7254 = vsel %vm2869, %v7190, %v5507
  %v7255 = vsel %vm2869, %v7191, %v5509
  %v7256 = vsel %vm2869, %v7192, %v5511
  %v7257 = vsel %vm2869, %v7193, %v5513
  %v7258 = vsel %vm2869, %v7194, %v5515
  %v7259 = vsel %vm2869, %v7195, %v5517
  %v7260 = vsel %vm2869, %v7196, %v5519
  %v7261 = vsel %vm2869, %v7197, %v5521
  %v7262 = vsel %vm2869, %v7198, %v5523
  %v7263 = vsel %vm2869, %v7199, %v5525
  %v7264 = vsel %vm2869, %v7200, %v5527
  %v7265 = vsel %vm2869, %v7201, %v5529
  %v7266 = vsel %vm2869, %v7202, %v5531
  %v7267 = vsel %vm2869, %v7203, %v5533
  %v7268 = vsel %vm2869, %v7204, %v5535
  %v7269 = vsel %vm2869, %v7205, %v5537
  %v7270 = vsel %vm2869, %v7206, %v5539
  %v7271 = vsel %vm2869, %v7207, %v5541
  %v7272 = vsel %vm2869, %v7208, %v5543
  %v7273 = vsel %vm2869, %v7209, %v5545
  %v7274 = vsel %vm2999, %v7210, %v5675
  %v7275 = vsel %vm2999, %v7211, %v5677
  %v7276 = vsel %vm2999, %v7212, %v5679
  %v7277 = vsel %vm2999, %v7213, %v5681
  %v7278 = vsel %vm2999, %v7214, %v5683
  %v7279 = vsel %vm2999, %v7215, %v5685
  %v7280 = vsel %vm2999, %v7216, %v5687
  %v7281 = vsel %vm2999, %v7217, %v5689
  %v7282 = vsel %vm2999, %v7218, %v5691
  %v7283 = vsel %vm2999, %v7219, %v5693
  %v7284 = vsel %vm2999, %v7220, %v5695
  %v7285 = vsel %vm2999, %v7221, %v5697
  %v7286 = vsel %vm2999, %v7222, %v5699
  %v7287 = vsel %vm2999, %v7223, %v5701
  %v7288 = vsel %vm2999, %v7224, %v5703
  %v7289 = vsel %vm2999, %v7225, %v5705
  %v7290 = vsel %vm2999, %v7226, %v5707
  %v7291 = vsel %vm2999, %v7227, %v5709
  %v7292 = vsel %vm2999, %v7228, %v5711
  %v7293 = vsel %vm2999, %v7229, %v5713
  %v7294 = vsel %vm2999, %v7230, %v5715
  %v7295 = vsel %vm2999, %v7231, %v5717
  %v7296 = vsel %vm2999, %v7232, %v5719
  %v7297 = vsel %vm2999, %v7233, %v5721
  %v7298 = vsel %vm2999, %v7234, %v5723
  %v7299 = vsel %vm2999, %v7235, %v5725
  %v7300 = vsel %vm2999, %v7236, %v5727
  %v7301 = vsel %vm2999, %v7237, %v5729
  %v7302 = vsel %vm2999, %v7238, %v5731
  %v7303 = vsel %vm2999, %v7239, %v5733
  %v7304 = vsel %vm2999, %v7240, %v5735
  %v7305 = vsel %vm2999, %v7241, %v5737
  %v7306 = vsel %vm2999, %v7242, %v5739
  %v7307 = vsel %vm2999, %v7243, %v5741
  %v7308 = vsel %vm2999, %v7244, %v5743
  %v7309 = vsel %vm2999, %v7245, %v5745
  %v7310 = vsel %vm2999, %v7246, %v5747
  %v7311 = vsel %vm2999, %v7247, %v5749
  %v7312 = vsel %vm2999, %v7248, %v5751
  %v7313 = vsel %vm2999, %v7249, %v5753
  %v7314 = vsel %vm2999, %v7250, %v5755
  %v7315 = vsel %vm2999, %v7251, %v5757
  %v7316 = vsel %vm2999, %v7252, %v5759
  %v7317 = vsel %vm2999, %v7253, %v5761
  %v7318 = vsel %vm2999, %v7254, %v5763
  %v7319 = vsel %vm2999, %v7255, %v5765
  %v7320 = vsel %vm2999, %v7256, %v5767
  %v7321 = vsel %vm2999, %v7257, %v5769
  %v7322 = vsel %vm2999, %v7258, %v5771
  %v7323 = vsel %vm2999, %v7259, %v5773
  %v7324 = vsel %vm2999, %v7260, %v5775
  %v7325 = vsel %vm2999, %v7261, %v5777
  %v7326 = vsel %vm2999, %v7262, %v5779
  %v7327 = vsel %vm2999, %v7263, %v5781
  %v7328 = vsel %vm2999, %v7264, %v5783
  %v7329 = vsel %vm2999, %v7265, %v5785
  %v7330 = vsel %vm2999, %v7266, %v5787
  %v7331 = vsel %vm2999, %v7267, %v5789
  %v7332 = vsel %vm2999, %v7268, %v5791
  %v7333 = vsel %vm2999, %v7269, %v5793
  %v7334 = vsel %vm2999, %v7270, %v5795
  %v7335 = vsel %vm2999, %v7271, %v5797
  %v7336 = vsel %vm2999, %v7272, %v5799
  %v7337 = vsel %vm2999, %v7273, %v5801
  %v7338 = vsel %vm3129, %v7274, %v5931
  %v7339 = vsel %vm3129, %v7275, %v5933
  %v7340 = vsel %vm3129, %v7276, %v5935
  %v7341 = vsel %vm3129, %v7277, %v5937
  %v7342 = vsel %vm3129, %v7278, %v5939
  %v7343 = vsel %vm3129, %v7279, %v5941
  %v7344 = vsel %vm3129, %v7280, %v5943
  %v7345 = vsel %vm3129, %v7281, %v5945
  %v7346 = vsel %vm3129, %v7282, %v5947
  %v7347 = vsel %vm3129, %v7283, %v5949
  %v7348 = vsel %vm3129, %v7284, %v5951
  %v7349 = vsel %vm3129, %v7285, %v5953
  %v7350 = vsel %vm3129, %v7286, %v5955
  %v7351 = vsel %vm3129, %v7287, %v5957
  %v7352 = vsel %vm3129, %v7288, %v5959
  %v7353 = vsel %vm3129, %v7289, %v5961
  %v7354 = vsel %vm3129, %v7290, %v5963
  %v7355 = vsel %vm3129, %v7291, %v5965
  %v7356 = vsel %vm3129, %v7292, %v5967
  %v7357 = vsel %vm3129, %v7293, %v5969
  %v7358 = vsel %vm3129, %v7294, %v5971
  %v7359 = vsel %vm3129, %v7295, %v5973
  %v7360 = vsel %vm3129, %v7296, %v5975
  %v7361 = vsel %vm3129, %v7297, %v5977
  %v7362 = vsel %vm3129, %v7298, %v5979
  %v7363 = vsel %vm3129, %v7299, %v5981
  %v7364 = vsel %vm3129, %v7300, %v5983
  %v7365 = vsel %vm3129, %v7301, %v5985
  %v7366 = vsel %vm3129, %v7302, %v5987
  %v7367 = vsel %vm3129, %v7303, %v5989
  %v7368 = vsel %vm3129, %v7304, %v5991
  %v7369 = vsel %vm3129, %v7305, %v5993
  %v7370 = vsel %vm3129, %v7306, %v5995
  %v7371 = vsel %vm3129, %v7307, %v5997
  %v7372 = vsel %vm3129, %v7308, %v5999
  %v7373 = vsel %vm3129, %v7309, %v6001
  %v7374 = vsel %vm3129, %v7310, %v6003
  %v7375 = vsel %vm3129, %v7311, %v6005
  %v7376 = vsel %vm3129, %v7312, %v6007
  %v7377 = vsel %vm3129, %v7313, %v6009
  %v7378 = vsel %vm3129, %v7314, %v6011
  %v7379 = vsel %vm3129, %v7315, %v6013
  %v7380 = vsel %vm3129, %v7316, %v6015
  %v7381 = vsel %vm3129, %v7317, %v6017
  %v7382 = vsel %vm3129, %v7318, %v6019
  %v7383 = vsel %vm3129, %v7319, %v6021
  %v7384 = vsel %vm3129, %v7320, %v6023
  %v7385 = vsel %vm3129, %v7321, %v6025
  %v7386 = vsel %vm3129, %v7322, %v6027
  %v7387 = vsel %vm3129, %v7323, %v6029
  %v7388 = vsel %vm3129, %v7324, %v6031
  %v7389 = vsel %vm3129, %v7325, %v6033
  %v7390 = vsel %vm3129, %v7326, %v6035
  %v7391 = vsel %vm3129, %v7327, %v6037
  %v7392 = vsel %vm3129, %v7328, %v6039
  %v7393 = vsel %vm3129, %v7329, %v6041
  %v7394 = vsel %vm3129, %v7330, %v6043
  %v7395 = vsel %vm3129, %v7331, %v6045
  %v7396 = vsel %vm3129, %v7332, %v6047
  %v7397 = vsel %vm3129, %v7333, %v6049
  %v7398 = vsel %vm3129, %v7334, %v6051
  %v7399 = vsel %vm3129, %v7335, %v6053
  %v7400 = vsel %vm3129, %v7336, %v6055
  %v7401 = vsel %vm3129, %v7337, %v6057
  %vm7402 = vcmask 326656
  %v7403 = vsel %vm7402, %v7338, %v6187
  %v7404 = vsel %vm7402, %v7339, %v6189
  %v7405 = vsel %vm7402, %v7340, %v6191
  %v7406 = vsel %vm7402, %v7341, %v6193
  %v7407 = vsel %vm7402, %v7342, %v6195
  %v7408 = vsel %vm7402, %v7343, %v6197
  %v7409 = vsel %vm7402, %v7344, %v6199
  %v7410 = vsel %vm7402, %v7345, %v6201
  %v7411 = vsel %vm7402, %v7346, %v6203
  %v7412 = vsel %vm7402, %v7347, %v6205
  %v7413 = vsel %vm7402, %v7348, %v6207
  %v7414 = vsel %vm7402, %v7349, %v6209
  %v7415 = vsel %vm7402, %v7350, %v6211
  %v7416 = vsel %vm7402, %v7351, %v6213
  %v7417 = vsel %vm7402, %v7352, %v6215
  %v7418 = vsel %vm7402, %v7353, %v6217
  %v7419 = vsel %vm7402, %v7354, %v6219
  %v7420 = vsel %vm7402, %v7355, %v6221
  %v7421 = vsel %vm7402, %v7356, %v6223
  %v7422 = vsel %vm7402, %v7357, %v6225
  %v7423 = vsel %vm7402, %v7358, %v6227
  %v7424 = vsel %vm7402, %v7359, %v6229
  %v7425 = vsel %vm7402, %v7360, %v6231
  %v7426 = vsel %vm7402, %v7361, %v6233
  %v7427 = vsel %vm7402, %v7362, %v6235
  %v7428 = vsel %vm7402, %v7363, %v6237
  %v7429 = vsel %vm7402, %v7364, %v6239
  %v7430 = vsel %vm7402, %v7365, %v6241
  %v7431 = vsel %vm7402, %v7366, %v6243
  %v7432 = vsel %vm7402, %v7367, %v6245
  %v7433 = vsel %vm7402, %v7368, %v6247
  %v7434 = vsel %vm7402, %v7369, %v6249
  %v7435 = vsel %vm7402, %v7370, %v6251
  %v7436 = vsel %vm7402, %v7371, %v6253
  %v7437 = vsel %vm7402, %v7372, %v6255
  %v7438 = vsel %vm7402, %v7373, %v6257
  %v7439 = vsel %vm7402, %v7374, %v6259
  %v7440 = vsel %vm7402, %v7375, %v6261
  %v7441 = vsel %vm7402, %v7376, %v6263
  %v7442 = vsel %vm7402, %v7377, %v6265
  %v7443 = vsel %vm7402, %v7378, %v6267
  %v7444 = vsel %vm7402, %v7379, %v6269
  %v7445 = vsel %vm7402, %v7380, %v6271
  %v7446 = vsel %vm7402, %v7381, %v6273
  %v7447 = vsel %vm7402, %v7382, %v6275
  %v7448 = vsel %vm7402, %v7383, %v6277
  %v7449 = vsel %vm7402, %v7384, %v6279
  %v7450 = vsel %vm7402, %v7385, %v6281
  %v7451 = vsel %vm7402, %v7386, %v6283
  %v7452 = vsel %vm7402, %v7387, %v6285
  %v7453 = vsel %vm7402, %v7388, %v6287
  %v7454 = vsel %vm7402, %v7389, %v6289
  %v7455 = vsel %vm7402, %v7390, %v6291
  %v7456 = vsel %vm7402, %v7391, %v6293
  %v7457 = vsel %vm7402, %v7392, %v6295
  %v7458 = vsel %vm7402, %v7393, %v6297
  %v7459 = vsel %vm7402, %v7394, %v6299
  %v7460 = vsel %vm7402, %v7395, %v6301
  %v7461 = vsel %vm7402, %v7396, %v6303
  %v7462 = vsel %vm7402, %v7397, %v6305
  %v7463 = vsel %vm7402, %v7398, %v6307
  %v7464 = vsel %vm7402, %v7399, %v6309
  %v7465 = vsel %vm7402, %v7400, %v6311
  %v7466 = vsel %vm7402, %v7401, %v6313
  %vm7467 = vcmask 392192
  %v7468 = vsel %vm7467, %v7403, %v6443
  %v7469 = vsel %vm7467, %v7404, %v6445
  %v7470 = vsel %vm7467, %v7405, %v6447
  %v7471 = vsel %vm7467, %v7406, %v6449
  %v7472 = vsel %vm7467, %v7407, %v6451
  %v7473 = vsel %vm7467, %v7408, %v6453
  %v7474 = vsel %vm7467, %v7409, %v6455
  %v7475 = vsel %vm7467, %v7410, %v6457
  %v7476 = vsel %vm7467, %v7411, %v6459
  %v7477 = vsel %vm7467, %v7412, %v6461
  %v7478 = vsel %vm7467, %v7413, %v6463
  %v7479 = vsel %vm7467, %v7414, %v6465
  %v7480 = vsel %vm7467, %v7415, %v6467
  %v7481 = vsel %vm7467, %v7416, %v6469
  %v7482 = vsel %vm7467, %v7417, %v6471
  %v7483 = vsel %vm7467, %v7418, %v6473
  %v7484 = vsel %vm7467, %v7419, %v6475
  %v7485 = vsel %vm7467, %v7420, %v6477
  %v7486 = vsel %vm7467, %v7421, %v6479
  %v7487 = vsel %vm7467, %v7422, %v6481
  %v7488 = vsel %vm7467, %v7423, %v6483
  %v7489 = vsel %vm7467, %v7424, %v6485
  %v7490 = vsel %vm7467, %v7425, %v6487
  %v7491 = vsel %vm7467, %v7426, %v6489
  %v7492 = vsel %vm7467, %v7427, %v6491
  %v7493 = vsel %vm7467, %v7428, %v6493
  %v7494 = vsel %vm7467, %v7429, %v6495
  %v7495 = vsel %vm7467, %v7430, %v6497
  %v7496 = vsel %vm7467, %v7431, %v6499
  %v7497 = vsel %vm7467, %v7432, %v6501
  %v7498 = vsel %vm7467, %v7433, %v6503
  %v7499 = vsel %vm7467, %v7434, %v6505
  %v7500 = vsel %vm7467, %v7435, %v6507
  %v7501 = vsel %vm7467, %v7436, %v6509
  %v7502 = vsel %vm7467, %v7437, %v6511
  %v7503 = vsel %vm7467, %v7438, %v6513
  %v7504 = vsel %vm7467, %v7439, %v6515
  %v7505 = vsel %vm7467, %v7440, %v6517
  %v7506 = vsel %vm7467, %v7441, %v6519
  %v7507 = vsel %vm7467, %v7442, %v6521
  %v7508 = vsel %vm7467, %v7443, %v6523
  %v7509 = vsel %vm7467, %v7444, %v6525
  %v7510 = vsel %vm7467, %v7445, %v6527
  %v7511 = vsel %vm7467, %v7446, %v6529
  %v7512 = vsel %vm7467, %v7447, %v6531
  %v7513 = vsel %vm7467, %v7448, %v6533
  %v7514 = vsel %vm7467, %v7449, %v6535
  %v7515 = vsel %vm7467, %v7450, %v6537
  %v7516 = vsel %vm7467, %v7451, %v6539
  %v7517 = vsel %vm7467, %v7452, %v6541
  %v7518 = vsel %vm7467, %v7453, %v6543
  %v7519 = vsel %vm7467, %v7454, %v6545
  %v7520 = vsel %vm7467, %v7455, %v6547
  %v7521 = vsel %vm7467, %v7456, %v6549
  %v7522 = vsel %vm7467, %v7457, %v6551
  %v7523 = vsel %vm7467, %v7458, %v6553
  %v7524 = vsel %vm7467, %v7459, %v6555
  %v7525 = vsel %vm7467, %v7460, %v6557
  %v7526 = vsel %vm7467, %v7461, %v6559
  %v7527 = vsel %vm7467, %v7462, %v6561
  %v7528 = vsel %vm7467, %v7463, %v6563
  %v7529 = vsel %vm7467, %v7464, %v6565
  %v7530 = vsel %vm7467, %v7465, %v6567
  %v7531 = vsel %vm7467, %v7466, %v6569
  %vm7532 = vcmask 457728
  %v7533 = vsel %vm7532, %v7468, %v6699
  %v7534 = vsel %vm7532, %v7469, %v6701
  %v7535 = vsel %vm7532, %v7470, %v6703
  %v7536 = vsel %vm7532, %v7471, %v6705
  %v7537 = vsel %vm7532, %v7472, %v6707
  %v7538 = vsel %vm7532, %v7473, %v6709
  %v7539 = vsel %vm7532, %v7474, %v6711
  %v7540 = vsel %vm7532, %v7475, %v6713
  %v7541 = vsel %vm7532, %v7476, %v6715
  %v7542 = vsel %vm7532, %v7477, %v6717
  %v7543 = vsel %vm7532, %v7478, %v6719
  %v7544 = vsel %vm7532, %v7479, %v6721
  %v7545 = vsel %vm7532, %v7480, %v6723
  %v7546 = vsel %vm7532, %v7481, %v6725
  %v7547 = vsel %vm7532, %v7482, %v6727
  %v7548 = vsel %vm7532, %v7483, %v6729
  %v7549 = vsel %vm7532, %v7484, %v6731
  %v7550 = vsel %vm7532, %v7485, %v6733
  %v7551 = vsel %vm7532, %v7486, %v6735
  %v7552 = vsel %vm7532, %v7487, %v6737
  %v7553 = vsel %vm7532, %v7488, %v6739
  %v7554 = vsel %vm7532, %v7489, %v6741
  %v7555 = vsel %vm7532, %v7490, %v6743
  %v7556 = vsel %vm7532, %v7491, %v6745
  %v7557 = vsel %vm7532, %v7492, %v6747
  %v7558 = vsel %vm7532, %v7493, %v6749
  %v7559 = vsel %vm7532, %v7494, %v6751
  %v7560 = vsel %vm7532, %v7495, %v6753
  %v7561 = vsel %vm7532, %v7496, %v6755
  %v7562 = vsel %vm7532, %v7497, %v6757
  %v7563 = vsel %vm7532, %v7498, %v6759
  %v7564 = vsel %vm7532, %v7499, %v6761
  %v7565 = vsel %vm7532, %v7500, %v6763
  %v7566 = vsel %vm7532, %v7501, %v6765
  %v7567 = vsel %vm7532, %v7502, %v6767
  %v7568 = vsel %vm7532, %v7503, %v6769
  %v7569 = vsel %vm7532, %v7504, %v6771
  %v7570 = vsel %vm7532, %v7505, %v6773
  %v7571 = vsel %vm7532, %v7506, %v6775
  %v7572 = vsel %vm7532, %v7507, %v6777
  %v7573 = vsel %vm7532, %v7508, %v6779
  %v7574 = vsel %vm7532, %v7509, %v6781
  %v7575 = vsel %vm7532, %v7510, %v6783
  %v7576 = vsel %vm7532, %v7511, %v6785
  %v7577 = vsel %vm7532, %v7512, %v6787
  %v7578 = vsel %vm7532, %v7513, %v6789
  %v7579 = vsel %vm7532, %v7514, %v6791
  %v7580 = vsel %vm7532, %v7515, %v6793
  %v7581 = vsel %vm7532, %v7516, %v6795
  %v7582 = vsel %vm7532, %v7517, %v6797
  %v7583 = vsel %vm7532, %v7518, %v6799
  %v7584 = vsel %vm7532, %v7519, %v6801
  %v7585 = vsel %vm7532, %v7520, %v6803
  %v7586 = vsel %vm7532, %v7521, %v6805
  %v7587 = vsel %vm7532, %v7522, %v6807
  %v7588 = vsel %vm7532, %v7523, %v6809
  %v7589 = vsel %vm7532, %v7524, %v6811
  %v7590 = vsel %vm7532, %v7525, %v6813
  %v7591 = vsel %vm7532, %v7526, %v6815
  %v7592 = vsel %vm7532, %v7527, %v6817
  %v7593 = vsel %vm7532, %v7528, %v6819
  %v7594 = vsel %vm7532, %v7529, %v6821
  %v7595 = vsel %vm7532, %v7530, %v6823
  %v7596 = vsel %vm7532, %v7531, %v6825
  %vm7597 = vcmask 523264
  %v7598 = vsel %vm7597, %v7533, %v6955
  %v7599 = vsel %vm7597, %v7534, %v6957
  %v7600 = vsel %vm7597, %v7535, %v6959
  %v7601 = vsel %vm7597, %v7536, %v6961
  %v7602 = vsel %vm7597, %v7537, %v6963
  %v7603 = vsel %vm7597, %v7538, %v6965
  %v7604 = vsel %vm7597, %v7539, %v6967
  %v7605 = vsel %vm7597, %v7540, %v6969
  %v7606 = vsel %vm7597, %v7541, %v6971
  %v7607 = vsel %vm7597, %v7542, %v6973
  %v7608 = vsel %vm7597, %v7543, %v6975
  %v7609 = vsel %vm7597, %v7544, %v6977
  %v7610 = vsel %vm7597, %v7545, %v6979
  %v7611 = vsel %vm7597, %v7546, %v6981
  %v7612 = vsel %vm7597, %v7547, %v6983
  %v7613 = vsel %vm7597, %v7548, %v6985
  %v7614 = vsel %vm7597, %v7549, %v6987
  %v7615 = vsel %vm7597, %v7550, %v6989
  %v7616 = vsel %vm7597, %v7551, %v6991
  %v7617 = vsel %vm7597, %v7552, %v6993
  %v7618 = vsel %vm7597, %v7553, %v6995
  %v7619 = vsel %vm7597, %v7554, %v6997
  %v7620 = vsel %vm7597, %v7555, %v6999
  %v7621 = vsel %vm7597, %v7556, %v7001
  %v7622 = vsel %vm7597, %v7557, %v7003
  %v7623 = vsel %vm7597, %v7558, %v7005
  %v7624 = vsel %vm7597, %v7559, %v7007
  %v7625 = vsel %vm7597, %v7560, %v7009
  %v7626 = vsel %vm7597, %v7561, %v7011
  %v7627 = vsel %vm7597, %v7562, %v7013
  %v7628 = vsel %vm7597, %v7563, %v7015
  %v7629 = vsel %vm7597, %v7564, %v7017
  %v7630 = vsel %vm7597, %v7565, %v7019
  %v7631 = vsel %vm7597, %v7566, %v7021
  %v7632 = vsel %vm7597, %v7567, %v7023
  %v7633 = vsel %vm7597, %v7568, %v7025
  %v7634 = vsel %vm7597, %v7569, %v7027
  %v7635 = vsel %vm7597, %v7570, %v7029
  %v7636 = vsel %vm7597, %v7571, %v7031
  %v7637 = vsel %vm7597, %v7572, %v7033
  %v7638 = vsel %vm7597, %v7573, %v7035
  %v7639 = vsel %vm7597, %v7574, %v7037
  %v7640 = vsel %vm7597, %v7575, %v7039
  %v7641 = vsel %vm7597, %v7576, %v7041
  %v7642 = vsel %vm7597, %v7577, %v7043
  %v7643 = vsel %vm7597, %v7578, %v7045
  %v7644 = vsel %vm7597, %v7579, %v7047
  %v7645 = vsel %vm7597, %v7580, %v7049
  %v7646 = vsel %vm7597, %v7581, %v7051
  %v7647 = vsel %vm7597, %v7582, %v7053
  %v7648 = vsel %vm7597, %v7583, %v7055
  %v7649 = vsel %vm7597, %v7584, %v7057
  %v7650 = vsel %vm7597, %v7585, %v7059
  %v7651 = vsel %vm7597, %v7586, %v7061
  %v7652 = vsel %vm7597, %v7587, %v7063
  %v7653 = vsel %vm7597, %v7588, %v7065
  %v7654 = vsel %vm7597, %v7589, %v7067
  %v7655 = vsel %vm7597, %v7590, %v7069
  %v7656 = vsel %vm7597, %v7591, %v7071
  %v7657 = vsel %vm7597, %v7592, %v7073
  %v7658 = vsel %vm7597, %v7593, %v7075
  %v7659 = vsel %vm7597, %v7594, %v7077
  %v7660 = vsel %vm7597, %v7595, %v7079
  %v7661 = vsel %vm7597, %v7596, %v7081
  %v7662 = vpack.c.bf16 %v7599, %v7598
  %v7663 = vpack.c.bf16 %v7601, %v7600
  %v7664 = vpack.c.bf16 %v7603, %v7602
  %v7665 = vpack.c.bf16 %v7605, %v7604
  %v7666 = vpack.c.bf16 %v7607, %v7606
  %v7667 = vpack.c.bf16 %v7609, %v7608
  %v7668 = vpack.c.bf16 %v7611, %v7610
  %v7669 = vpack.c.bf16 %v7613, %v7612
  %v7670 = vpack.c.bf16 %v7615, %v7614
  %v7671 = vpack.c.bf16 %v7617, %v7616
  %v7672 = vpack.c.bf16 %v7619, %v7618
  %v7673 = vpack.c.bf16 %v7621, %v7620
  %v7674 = vpack.c.bf16 %v7623, %v7622
  %v7675 = vpack.c.bf16 %v7625, %v7624
  %v7676 = vpack.c.bf16 %v7627, %v7626
  %v7677 = vpack.c.bf16 %v7629, %v7628
  %v7678 = vpack.c.bf16 %v7631, %v7630
  %v7679 = vpack.c.bf16 %v7633, %v7632
  %v7680 = vpack.c.bf16 %v7635, %v7634
  %v7681 = vpack.c.bf16 %v7637, %v7636
  %v7682 = vpack.c.bf16 %v7639, %v7638
  %v7683 = vpack.c.bf16 %v7641, %v7640
  %v7684 = vpack.c.bf16 %v7643, %v7642
  %v7685 = vpack.c.bf16 %v7645, %v7644
  %v7686 = vpack.c.bf16 %v7647, %v7646
  %v7687 = vpack.c.bf16 %v7649, %v7648
  %v7688 = vpack.c.bf16 %v7651, %v7650
  %v7689 = vpack.c.bf16 %v7653, %v7652
  %v7690 = vpack.c.bf16 %v7655, %v7654
  %v7691 = vpack.c.bf16 %v7657, %v7656
  %v7692 = vpack.c.bf16 %v7659, %v7658
  %v7693 = vpack.c.bf16 %v7661, %v7660
  %v7694 = vld [vmem:[%s8] sm:$0xf]
  %v7695 = vld [vmem:[%s8 + $0x4] sm:$0xf]
  %v7696 = vld [vmem:[%s8 + $0x8] sm:$0xf]
  %v7697 = vld [vmem:[%s8 + $0xc] sm:$0xf]
  %v7698 = vld [vmem:[%s8 + $0x10] sm:$0xf]
  %v7699 = vld [vmem:[%s8 + $0x14] sm:$0xf]
  %v7700 = vld [vmem:[%s8 + $0x18] sm:$0xf]
  %v7701 = vld [vmem:[%s8 + $0x1c] sm:$0xf]
  %v7702 = vld [vmem:[%s8 + $0x20] sm:$0xf]
  %v7703 = vld [vmem:[%s9] sm:$0x1]
  %v7705 = vlaneseq
  %v7706 = vshrl.u32 %v7705, 7
  %v7707 = vsub.s32 0, %v7706
  %v7708 = vrot.slane %v7703, %v7707
  %v7719 = vunpack.c.l.b16 %v7694
  %v7720 = vunpack.c.l.b16 %v7695
  %v7721 = vunpack.c.l.b16 %v7696
  %v7722 = vunpack.c.l.b16 %v7697
  %v7723 = vunpack.c.l.b16 %v7698
  %v7724 = vunpack.c.l.b16 %v7699
  %v7725 = vunpack.c.l.b16 %v7700
  %v7726 = vunpack.c.l.b16 %v7701
  %v7727 = vunpack.c.l.b16 %v7702
  %v7728 = vpack.c.b16 %v7720, %v7719
  %v7729 = vpack.c.b16 %v7722, %v7721
  %v7730 = vpack.c.b16 %v7724, %v7723
  %v7731 = vpack.c.b16 %v7726, %v7725
  %v7732 = vpack.c.b16 %v7727, %v7727
  %vm7737 = vcmask 588800
  %v7739 = vsel %vm7737, %v7662, 0
  %v7742 = vsel %vm7737, %v7663, 0
  %v7745 = vsel %vm7737, %v7664, 0
  %v7748 = vsel %vm7737, %v7665, 0
  %v7751 = vsel %vm7737, %v7666, 0
  %v7754 = vsel %vm7737, %v7667, 0
  %v7757 = vsel %vm7737, %v7668, 0
  %v7760 = vsel %vm7737, %v7669, 0
  %v7763 = vsel %vm7737, %v7670, 0
  %v7766 = vsel %vm7737, %v7671, 0
  %v7769 = vsel %vm7737, %v7672, 0
  %v7772 = vsel %vm7737, %v7673, 0
  %v7775 = vsel %vm7737, %v7674, 0
  %v7778 = vsel %vm7737, %v7675, 0
  %v7781 = vsel %vm7737, %v7676, 0
  %v7784 = vsel %vm7737, %v7677, 0
  %v7787 = vsel %vm7737, %v7678, 0
  %v7790 = vsel %vm7737, %v7679, 0
  %v7793 = vsel %vm7737, %v7680, 0
  %v7796 = vsel %vm7737, %v7681, 0
  %v7799 = vsel %vm7737, %v7682, 0
  %v7802 = vsel %vm7737, %v7683, 0
  %v7805 = vsel %vm7737, %v7684, 0
  %v7808 = vsel %vm7737, %v7685, 0
  %v7811 = vsel %vm7737, %v7686, 0
  %v7814 = vsel %vm7737, %v7687, 0
  %v7817 = vsel %vm7737, %v7688, 0
  %v7820 = vsel %vm7737, %v7689, 0
  %v7823 = vsel %vm7737, %v7690, 0
  %v7826 = vsel %vm7737, %v7691, 0
  %v7829 = vsel %vm7737, %v7692, 0
  %v7832 = vsel %vm7737, %v7693, 0
  %vm7834 = vcmask 1043456
  %v7836 = vsel %vm7834, %v7732, 0
  %7838 = vmatprep.subr.bf16.mxu0 0
  %7839 = vmatpush1.bf16.msra.mxu0 %v7728
  %7840 = vmatprep.subr.bf16.mxu0 0
  %7841 = vmatpush1.bf16.msra.mxu0 %v7729
  %7842 = vmatprep.subr.bf16.mxu0 0
  %7843 = vmatpush1.bf16.msra.mxu0 %v7730
  %7844 = vmatprep.subr.bf16.mxu0 0
  %7845 = vmatpush1.bf16.msra.mxu0 %v7731
  %7846 = vmatprep.subr.bf16.mxu0 0
  %7847 = vmatpush1.bf16.msra.mxu0 %v7836
  %7848 = vmatprep.subr.bf16.mxu0 0
  %7849 = vmatpush1.bf16.msra.mxu0 0
  %7850 = vmatprep.subr.bf16.mxu0 0
  %7851 = vmatpush1.bf16.msra.mxu0 0
  %7852 = vmatprep.subr.bf16.mxu0 0
  %7853 = vmatpush1.bf16.msra.mxu0 0
  %7854 = vmatprep.subr.bf16.mxu0 0
  %7855 = vmatpush1.bf16.msra.mxu0 0
  %7856 = vmatprep.subr.bf16.mxu0 0
  %7857 = vmatpush1.bf16.msra.mxu0 0
  %7858 = vmatprep.subr.bf16.mxu0 0
  %7859 = vmatpush1.bf16.msra.mxu0 0
  %7860 = vmatprep.subr.bf16.mxu0 0
  %7861 = vmatpush1.bf16.msra.mxu0 0
  %7862 = vmatprep.subr.bf16.mxu0 0
  %7863 = vmatpush1.bf16.msra.mxu0 0
  %7864 = vmatprep.subr.bf16.mxu0 0
  %7865 = vmatpush1.bf16.msra.mxu0 0
  %7866 = vmatprep.subr.bf16.mxu0 0
  %7867 = vmatpush1.bf16.msra.mxu0 0
  %7868 = vmatprep.subr.bf16.mxu0 0
  %7869 = vmatpush1.bf16.msra.mxu0 0
  %7870 = vmatprep.mubr.bf16.mxu0 0
  %7871 = vmatmul.mubr.bf16.gmra.mrb[0].mxu0 %v7739
  %v7872 = vpop.f32.mrb[0].mxu0
  %v7873 = vadd.f32 %v7708, %v7872
  %v7874 = vpop.f32.mrb[0].mxu0
  %v7875 = vpop.f32.mrb[0].mxu0
  %v7876 = vadd.f32 %v7708, %v7875
  %v7877 = vpop.f32.mrb[0].mxu0
  %7878 = vmatprep.mubr.bf16.mxu0 0
  %7879 = vmatmul.mubr.bf16.gmra.mrb[0].mxu0 %v7742
  %v7880 = vpop.f32.mrb[0].mxu0
  %v7881 = vadd.f32 %v7708, %v7880
  %v7882 = vpop.f32.mrb[0].mxu0
  %v7883 = vpop.f32.mrb[0].mxu0
  %v7884 = vadd.f32 %v7708, %v7883
  %v7885 = vpop.f32.mrb[0].mxu0
  %7886 = vmatprep.mubr.bf16.mxu0 0
  %7887 = vmatmul.mubr.bf16.gmra.mrb[0].mxu0 %v7745
  %v7888 = vpop.f32.mrb[0].mxu0
  %v7889 = vadd.f32 %v7708, %v7888
  %v7890 = vpop.f32.mrb[0].mxu0
  %v7891 = vpop.f32.mrb[0].mxu0
  %v7892 = vadd.f32 %v7708, %v7891
  %v7893 = vpop.f32.mrb[0].mxu0
  %7894 = vmatprep.mubr.bf16.mxu0 0
  %7895 = vmatmul.mubr.bf16.gmra.mrb[0].mxu0 %v7748
  %v7896 = vpop.f32.mrb[0].mxu0
  %v7897 = vadd.f32 %v7708, %v7896
  %v7898 = vpop.f32.mrb[0].mxu0
  %v7899 = vpop.f32.mrb[0].mxu0
  %v7900 = vadd.f32 %v7708, %v7899
  %v7901 = vpop.f32.mrb[0].mxu0
  %7902 = vmatprep.mubr.bf16.mxu0 0
  %7903 = vmatmul.mubr.bf16.gmra.mrb[0].mxu0 %v7751
  %v7904 = vpop.f32.mrb[0].mxu0
  %v7905 = vadd.f32 %v7708, %v7904
  %v7906 = vpop.f32.mrb[0].mxu0
  %v7907 = vpop.f32.mrb[0].mxu0
  %v7908 = vadd.f32 %v7708, %v7907
  %v7909 = vpop.f32.mrb[0].mxu0
  %7910 = vmatprep.mubr.bf16.mxu0 0
  %7911 = vmatmul.mubr.bf16.gmra.mrb[0].mxu0 %v7754
  %v7912 = vpop.f32.mrb[0].mxu0
  %v7913 = vadd.f32 %v7708, %v7912
  %v7914 = vpop.f32.mrb[0].mxu0
  %v7915 = vpop.f32.mrb[0].mxu0
  %v7916 = vadd.f32 %v7708, %v7915
  %v7917 = vpop.f32.mrb[0].mxu0
  %7918 = vmatprep.mubr.bf16.mxu0 0
  %7919 = vmatmul.mubr.bf16.gmra.mrb[0].mxu0 %v7757
  %v7920 = vpop.f32.mrb[0].mxu0
  %v7921 = vadd.f32 %v7708, %v7920
  %v7922 = vpop.f32.mrb[0].mxu0
  %v7923 = vpop.f32.mrb[0].mxu0
  %v7924 = vadd.f32 %v7708, %v7923
  %v7925 = vpop.f32.mrb[0].mxu0
  %7926 = vmatprep.mubr.bf16.mxu0 0
  %7927 = vmatmul.mubr.bf16.gmra.mrb[0].mxu0 %v7760
  %v7928 = vpop.f32.mrb[0].mxu0
  %v7929 = vadd.f32 %v7708, %v7928
  %v7930 = vpop.f32.mrb[0].mxu0
  %v7931 = vpop.f32.mrb[0].mxu0
  %v7932 = vadd.f32 %v7708, %v7931
  %v7933 = vpop.f32.mrb[0].mxu0
  %7934 = vmatprep.mubr.bf16.mxu0 0
  %7935 = vmatmul.mubr.bf16.gmra.mrb[0].mxu0 %v7763
  %v7936 = vpop.f32.mrb[0].mxu0
  %v7937 = vadd.f32 %v7708, %v7936
  %v7938 = vpop.f32.mrb[0].mxu0
  %v7939 = vpop.f32.mrb[0].mxu0
  %v7940 = vadd.f32 %v7708, %v7939
  %v7941 = vpop.f32.mrb[0].mxu0
  %7942 = vmatprep.mubr.bf16.mxu0 0
  %7943 = vmatmul.mubr.bf16.gmra.mrb[0].mxu0 %v7766
  %v7944 = vpop.f32.mrb[0].mxu0
  %v7945 = vadd.f32 %v7708, %v7944
  %v7946 = vpop.f32.mrb[0].mxu0
  %v7947 = vpop.f32.mrb[0].mxu0
  %v7948 = vadd.f32 %v7708, %v7947
  %v7949 = vpop.f32.mrb[0].mxu0
  %7950 = vmatprep.mubr.bf16.mxu0 0
  %7951 = vmatmul.mubr.bf16.gmra.mrb[0].mxu0 %v7769
  %v7952 = vpop.f32.mrb[0].mxu0
  %v7953 = vadd.f32 %v7708, %v7952
  %v7954 = vpop.f32.mrb[0].mxu0
  %v7955 = vpop.f32.mrb[0].mxu0
  %v7956 = vadd.f32 %v7708, %v7955
  %v7957 = vpop.f32.mrb[0].mxu0
  %7958 = vmatprep.mubr.bf16.mxu0 0
  %7959 = vmatmul.mubr.bf16.gmra.mrb[0].mxu0 %v7772
  %v7960 = vpop.f32.mrb[0].mxu0
  %v7961 = vadd.f32 %v7708, %v7960
  %v7962 = vpop.f32.mrb[0].mxu0
  %v7963 = vpop.f32.mrb[0].mxu0
  %v7964 = vadd.f32 %v7708, %v7963
  %v7965 = vpop.f32.mrb[0].mxu0
  %7966 = vmatprep.mubr.bf16.mxu0 0
  %7967 = vmatmul.mubr.bf16.gmra.mrb[0].mxu0 %v7775
  %v7968 = vpop.f32.mrb[0].mxu0
  %v7969 = vadd.f32 %v7708, %v7968
  %v7970 = vpop.f32.mrb[0].mxu0
  %v7971 = vpop.f32.mrb[0].mxu0
  %v7972 = vadd.f32 %v7708, %v7971
  %v7973 = vpop.f32.mrb[0].mxu0
  %7974 = vmatprep.mubr.bf16.mxu0 0
  %7975 = vmatmul.mubr.bf16.gmra.mrb[0].mxu0 %v7778
  %v7976 = vpop.f32.mrb[0].mxu0
  %v7977 = vadd.f32 %v7708, %v7976
  %v7978 = vpop.f32.mrb[0].mxu0
  %v7979 = vpop.f32.mrb[0].mxu0
  %v7980 = vadd.f32 %v7708, %v7979
  %v7981 = vpop.f32.mrb[0].mxu0
  %7982 = vmatprep.mubr.bf16.mxu0 0
  %7983 = vmatmul.mubr.bf16.gmra.mrb[0].mxu0 %v7781
  %v7984 = vpop.f32.mrb[0].mxu0
  %v7985 = vadd.f32 %v7708, %v7984
  %v7986 = vpop.f32.mrb[0].mxu0
  %v7987 = vpop.f32.mrb[0].mxu0
  %v7988 = vadd.f32 %v7708, %v7987
  %v7989 = vpop.f32.mrb[0].mxu0
  %7990 = vmatprep.mubr.bf16.mxu0 0
  %7991 = vmatmul.mubr.bf16.gmra.mrb[0].mxu0 %v7784
  %v7992 = vpop.f32.mrb[0].mxu0
  %v7993 = vadd.f32 %v7708, %v7992
  %v7994 = vpop.f32.mrb[0].mxu0
  %v7995 = vpop.f32.mrb[0].mxu0
  %v7996 = vadd.f32 %v7708, %v7995
  %v7997 = vpop.f32.mrb[0].mxu0
  %7998 = vmatprep.mubr.bf16.mxu0 0
  %7999 = vmatmul.mubr.bf16.gmra.mrb[0].mxu0 %v7787
  %v8000 = vpop.f32.mrb[0].mxu0
  %v8001 = vadd.f32 %v7708, %v8000
  %v8002 = vpop.f32.mrb[0].mxu0
  %v8003 = vpop.f32.mrb[0].mxu0
  %v8004 = vadd.f32 %v7708, %v8003
  %v8005 = vpop.f32.mrb[0].mxu0
  %8006 = vmatprep.mubr.bf16.mxu0 0
  %8007 = vmatmul.mubr.bf16.gmra.mrb[0].mxu0 %v7790
  %v8008 = vpop.f32.mrb[0].mxu0
  %v8009 = vadd.f32 %v7708, %v8008
  %v8010 = vpop.f32.mrb[0].mxu0
  %v8011 = vpop.f32.mrb[0].mxu0
  %v8012 = vadd.f32 %v7708, %v8011
  %v8013 = vpop.f32.mrb[0].mxu0
  %8014 = vmatprep.mubr.bf16.mxu0 0
  %8015 = vmatmul.mubr.bf16.gmra.mrb[0].mxu0 %v7793
  %v8016 = vpop.f32.mrb[0].mxu0
  %v8017 = vadd.f32 %v7708, %v8016
  %v8018 = vpop.f32.mrb[0].mxu0
  %v8019 = vpop.f32.mrb[0].mxu0
  %v8020 = vadd.f32 %v7708, %v8019
  %v8021 = vpop.f32.mrb[0].mxu0
  %8022 = vmatprep.mubr.bf16.mxu0 0
  %8023 = vmatmul.mubr.bf16.gmra.mrb[0].mxu0 %v7796
  %v8024 = vpop.f32.mrb[0].mxu0
  %v8025 = vadd.f32 %v7708, %v8024
  %v8026 = vpop.f32.mrb[0].mxu0
  %v8027 = vpop.f32.mrb[0].mxu0
  %v8028 = vadd.f32 %v7708, %v8027
  %v8029 = vpop.f32.mrb[0].mxu0
  %8030 = vmatprep.mubr.bf16.mxu0 0
  %8031 = vmatmul.mubr.bf16.gmra.mrb[0].mxu0 %v7799
  %v8032 = vpop.f32.mrb[0].mxu0
  %v8033 = vadd.f32 %v7708, %v8032
  %v8034 = vpop.f32.mrb[0].mxu0
  %v8035 = vpop.f32.mrb[0].mxu0
  %v8036 = vadd.f32 %v7708, %v8035
  %v8037 = vpop.f32.mrb[0].mxu0
  %8038 = vmatprep.mubr.bf16.mxu0 0
  %8039 = vmatmul.mubr.bf16.gmra.mrb[0].mxu0 %v7802
  %v8040 = vpop.f32.mrb[0].mxu0
  %v8041 = vadd.f32 %v7708, %v8040
  %v8042 = vpop.f32.mrb[0].mxu0
  %v8043 = vpop.f32.mrb[0].mxu0
  %v8044 = vadd.f32 %v7708, %v8043
  %v8045 = vpop.f32.mrb[0].mxu0
  %8046 = vmatprep.mubr.bf16.mxu0 0
  %8047 = vmatmul.mubr.bf16.gmra.mrb[0].mxu0 %v7805
  %v8048 = vpop.f32.mrb[0].mxu0
  %v8049 = vadd.f32 %v7708, %v8048
  %v8050 = vpop.f32.mrb[0].mxu0
  %v8051 = vpop.f32.mrb[0].mxu0
  %v8052 = vadd.f32 %v7708, %v8051
  %v8053 = vpop.f32.mrb[0].mxu0
  %8054 = vmatprep.mubr.bf16.mxu0 0
  %8055 = vmatmul.mubr.bf16.gmra.mrb[0].mxu0 %v7808
  %v8056 = vpop.f32.mrb[0].mxu0
  %v8057 = vadd.f32 %v7708, %v8056
  %v8058 = vpop.f32.mrb[0].mxu0
  %v8059 = vpop.f32.mrb[0].mxu0
  %v8060 = vadd.f32 %v7708, %v8059
  %v8061 = vpop.f32.mrb[0].mxu0
  %8062 = vmatprep.mubr.bf16.mxu0 0
  %8063 = vmatmul.mubr.bf16.gmra.mrb[0].mxu0 %v7811
  %v8064 = vpop.f32.mrb[0].mxu0
  %v8065 = vadd.f32 %v7708, %v8064
  %v8066 = vpop.f32.mrb[0].mxu0
  %v8067 = vpop.f32.mrb[0].mxu0
  %v8068 = vadd.f32 %v7708, %v8067
  %v8069 = vpop.f32.mrb[0].mxu0
  %8070 = vmatprep.mubr.bf16.mxu0 0
  %8071 = vmatmul.mubr.bf16.gmra.mrb[0].mxu0 %v7814
  %v8072 = vpop.f32.mrb[0].mxu0
  %v8073 = vadd.f32 %v7708, %v8072
  %v8074 = vpop.f32.mrb[0].mxu0
  %v8075 = vpop.f32.mrb[0].mxu0
  %v8076 = vadd.f32 %v7708, %v8075
  %v8077 = vpop.f32.mrb[0].mxu0
  %8078 = vmatprep.mubr.bf16.mxu0 0
  %8079 = vmatmul.mubr.bf16.gmra.mrb[0].mxu0 %v7817
  %v8080 = vpop.f32.mrb[0].mxu0
  %v8081 = vadd.f32 %v7708, %v8080
  %v8082 = vpop.f32.mrb[0].mxu0
  %v8083 = vpop.f32.mrb[0].mxu0
  %v8084 = vadd.f32 %v7708, %v8083
  %v8085 = vpop.f32.mrb[0].mxu0
  %8086 = vmatprep.mubr.bf16.mxu0 0
  %8087 = vmatmul.mubr.bf16.gmra.mrb[0].mxu0 %v7820
  %v8088 = vpop.f32.mrb[0].mxu0
  %v8089 = vadd.f32 %v7708, %v8088
  %v8090 = vpop.f32.mrb[0].mxu0
  %v8091 = vpop.f32.mrb[0].mxu0
  %v8092 = vadd.f32 %v7708, %v8091
  %v8093 = vpop.f32.mrb[0].mxu0
  %8094 = vmatprep.mubr.bf16.mxu0 0
  %8095 = vmatmul.mubr.bf16.gmra.mrb[0].mxu0 %v7823
  %v8096 = vpop.f32.mrb[0].mxu0
  %v8097 = vadd.f32 %v7708, %v8096
  %v8098 = vpop.f32.mrb[0].mxu0
  %v8099 = vpop.f32.mrb[0].mxu0
  %v8100 = vadd.f32 %v7708, %v8099
  %v8101 = vpop.f32.mrb[0].mxu0
  %8102 = vmatprep.mubr.bf16.mxu0 0
  %8103 = vmatmul.mubr.bf16.gmra.mrb[0].mxu0 %v7826
  %v8104 = vpop.f32.mrb[0].mxu0
  %v8105 = vadd.f32 %v7708, %v8104
  %v8106 = vpop.f32.mrb[0].mxu0
  %v8107 = vpop.f32.mrb[0].mxu0
  %v8108 = vadd.f32 %v7708, %v8107
  %v8109 = vpop.f32.mrb[0].mxu0
  %8110 = vmatprep.mubr.bf16.mxu0 0
  %8111 = vmatmul.mubr.bf16.gmra.mrb[0].mxu0 %v7829
  %v8112 = vpop.f32.mrb[0].mxu0
  %v8113 = vadd.f32 %v7708, %v8112
  %v8114 = vpop.f32.mrb[0].mxu0
  %v8115 = vpop.f32.mrb[0].mxu0
  %v8116 = vadd.f32 %v7708, %v8115
  %v8117 = vpop.f32.mrb[0].mxu0
  %8118 = vmatprep.mubr.bf16.mxu0 0
  %8119 = vmatmul.mubr.bf16.gmra.mrb[0].mxu0 %v7832
  %v8120 = vpop.f32.mrb[0].mxu0
  %v8121 = vadd.f32 %v7708, %v8120
  %v8122 = vpop.f32.mrb[0].mxu0
  %v8123 = vpop.f32.mrb[0].mxu0
  %v8124 = vadd.f32 %v7708, %v8123
  %v8125 = vpop.f32.mrb[0].mxu0
  %8126 = vdwg.mxu0
  %v8127 = vmax.f32 %v7873, 0.0
  %v8128 = vmax.f32 %v7876, 0.0
  %v8129 = vmax.f32 %v7881, 0.0
  %v8130 = vmax.f32 %v7884, 0.0
  %v8131 = vmax.f32 %v7889, 0.0
  %v8132 = vmax.f32 %v7892, 0.0
  %v8133 = vmax.f32 %v7897, 0.0
  %v8134 = vmax.f32 %v7900, 0.0
  %v8135 = vmax.f32 %v7905, 0.0
  %v8136 = vmax.f32 %v7908, 0.0
  %v8137 = vmax.f32 %v7913, 0.0
  %v8138 = vmax.f32 %v7916, 0.0
  %v8139 = vmax.f32 %v7921, 0.0
  %v8140 = vmax.f32 %v7924, 0.0
  %v8141 = vmax.f32 %v7929, 0.0
  %v8142 = vmax.f32 %v7932, 0.0
  %v8143 = vmax.f32 %v7937, 0.0
  %v8144 = vmax.f32 %v7940, 0.0
  %v8145 = vmax.f32 %v7945, 0.0
  %v8146 = vmax.f32 %v7948, 0.0
  %v8147 = vmax.f32 %v7953, 0.0
  %v8148 = vmax.f32 %v7956, 0.0
  %v8149 = vmax.f32 %v7961, 0.0
  %v8150 = vmax.f32 %v7964, 0.0
  %v8151 = vmax.f32 %v7969, 0.0
  %v8152 = vmax.f32 %v7972, 0.0
  %v8153 = vmax.f32 %v7977, 0.0
  %v8154 = vmax.f32 %v7980, 0.0
  %v8155 = vmax.f32 %v7985, 0.0
  %v8156 = vmax.f32 %v7988, 0.0
  %v8157 = vmax.f32 %v7993, 0.0
  %v8158 = vmax.f32 %v7996, 0.0
  %v8159 = vmax.f32 %v8001, 0.0
  %v8160 = vmax.f32 %v8004, 0.0
  %v8161 = vmax.f32 %v8009, 0.0
  %v8162 = vmax.f32 %v8012, 0.0
  %v8163 = vmax.f32 %v8017, 0.0
  %v8164 = vmax.f32 %v8020, 0.0
  %v8165 = vmax.f32 %v8025, 0.0
  %v8166 = vmax.f32 %v8028, 0.0
  %v8167 = vmax.f32 %v8033, 0.0
  %v8168 = vmax.f32 %v8036, 0.0
  %v8169 = vmax.f32 %v8041, 0.0
  %v8170 = vmax.f32 %v8044, 0.0
  %v8171 = vmax.f32 %v8049, 0.0
  %v8172 = vmax.f32 %v8052, 0.0
  %v8173 = vmax.f32 %v8057, 0.0
  %v8174 = vmax.f32 %v8060, 0.0
  %v8175 = vmax.f32 %v8065, 0.0
  %v8176 = vmax.f32 %v8068, 0.0
  %v8177 = vmax.f32 %v8073, 0.0
  %v8178 = vmax.f32 %v8076, 0.0
  %v8179 = vmax.f32 %v8081, 0.0
  %v8180 = vmax.f32 %v8084, 0.0
  %v8181 = vmax.f32 %v8089, 0.0
  %v8182 = vmax.f32 %v8092, 0.0
  %v8183 = vmax.f32 %v8097, 0.0
  %v8184 = vmax.f32 %v8100, 0.0
  %v8185 = vmax.f32 %v8105, 0.0
  %v8186 = vmax.f32 %v8108, 0.0
  %v8187 = vmax.f32 %v8113, 0.0
  %v8188 = vmax.f32 %v8116, 0.0
  %v8189 = vmax.f32 %v8121, 0.0
  %v8190 = vmax.f32 %v8124, 0.0
  %v8191 = vld [vmem:[%s10] sm:$0x1]
  %v8192 = vld [vmem:[%s11] sm:$0x1]
  %v8193 = vsel %vm2739, %v8127, 0.0
  %v8194 = vsel %vm2739, %v8128, 0.0
  %v8195 = vadd.f32 %v8193, %v8194
  %v8196 = vsel %vm2739, %v8129, 0.0
  %v8197 = vadd.f32 %v8195, %v8196
  %v8198 = vsel %vm2739, %v8130, 0.0
  %v8199 = vadd.f32 %v8197, %v8198
  %v8200 = vsel %vm2739, %v8131, 0.0
  %v8201 = vadd.f32 %v8199, %v8200
  %v8202 = vsel %vm2739, %v8132, 0.0
  %v8203 = vadd.f32 %v8201, %v8202
  %v8204 = vsel %vm2739, %v8133, 0.0
  %v8205 = vadd.f32 %v8203, %v8204
  %v8206 = vsel %vm2739, %v8134, 0.0
  %v8207 = vadd.f32 %v8205, %v8206
  %v8208 = vsel %vm2739, %v8135, 0.0
  %v8209 = vadd.f32 %v8207, %v8208
  %v8210 = vsel %vm2739, %v8136, 0.0
  %v8211 = vadd.f32 %v8209, %v8210
  %v8212 = vsel %vm2739, %v8137, 0.0
  %v8213 = vadd.f32 %v8211, %v8212
  %v8214 = vsel %vm2739, %v8138, 0.0
  %v8215 = vadd.f32 %v8213, %v8214
  %v8216 = vsel %vm2739, %v8139, 0.0
  %v8217 = vadd.f32 %v8215, %v8216
  %v8218 = vsel %vm2739, %v8140, 0.0
  %v8219 = vadd.f32 %v8217, %v8218
  %v8220 = vsel %vm2739, %v8141, 0.0
  %v8221 = vadd.f32 %v8219, %v8220
  %v8222 = vsel %vm2739, %v8142, 0.0
  %v8223 = vadd.f32 %v8221, %v8222
  %v8224 = vsel %vm2739, %v8143, 0.0
  %v8225 = vadd.f32 %v8223, %v8224
  %v8226 = vsel %vm2739, %v8144, 0.0
  %v8227 = vadd.f32 %v8225, %v8226
  %v8228 = vsel %vm2739, %v8145, 0.0
  %v8229 = vadd.f32 %v8227, %v8228
  %v8230 = vsel %vm2739, %v8146, 0.0
  %v8231 = vadd.f32 %v8229, %v8230
  %v8232 = vsel %vm2739, %v8147, 0.0
  %v8233 = vadd.f32 %v8231, %v8232
  %v8234 = vsel %vm2739, %v8148, 0.0
  %v8235 = vadd.f32 %v8233, %v8234
  %v8236 = vsel %vm2739, %v8149, 0.0
  %v8237 = vadd.f32 %v8235, %v8236
  %v8238 = vsel %vm2739, %v8150, 0.0
  %v8239 = vadd.f32 %v8237, %v8238
  %v8240 = vsel %vm2739, %v8151, 0.0
  %v8241 = vadd.f32 %v8239, %v8240
  %v8242 = vsel %vm2739, %v8152, 0.0
  %v8243 = vadd.f32 %v8241, %v8242
  %v8244 = vsel %vm2739, %v8153, 0.0
  %v8245 = vadd.f32 %v8243, %v8244
  %v8246 = vsel %vm2739, %v8154, 0.0
  %v8247 = vadd.f32 %v8245, %v8246
  %v8248 = vsel %vm2739, %v8155, 0.0
  %v8249 = vadd.f32 %v8247, %v8248
  %v8250 = vsel %vm2739, %v8156, 0.0
  %v8251 = vadd.f32 %v8249, %v8250
  %v8252 = vsel %vm2739, %v8157, 0.0
  %v8253 = vadd.f32 %v8251, %v8252
  %v8254 = vsel %vm2739, %v8158, 0.0
  %v8255 = vadd.f32 %v8253, %v8254
  %v8256 = vsel %vm2739, %v8159, 0.0
  %v8257 = vadd.f32 %v8255, %v8256
  %v8258 = vsel %vm2739, %v8160, 0.0
  %v8259 = vadd.f32 %v8257, %v8258
  %v8260 = vsel %vm2739, %v8161, 0.0
  %v8261 = vadd.f32 %v8259, %v8260
  %v8262 = vsel %vm2739, %v8162, 0.0
  %v8263 = vadd.f32 %v8261, %v8262
  %v8264 = vsel %vm2739, %v8163, 0.0
  %v8265 = vadd.f32 %v8263, %v8264
  %v8266 = vsel %vm2739, %v8164, 0.0
  %v8267 = vadd.f32 %v8265, %v8266
  %v8268 = vsel %vm2739, %v8165, 0.0
  %v8269 = vadd.f32 %v8267, %v8268
  %v8270 = vsel %vm2739, %v8166, 0.0
  %v8271 = vadd.f32 %v8269, %v8270
  %v8272 = vsel %vm2739, %v8167, 0.0
  %v8273 = vadd.f32 %v8271, %v8272
  %v8274 = vsel %vm2739, %v8168, 0.0
  %v8275 = vadd.f32 %v8273, %v8274
  %v8276 = vsel %vm2739, %v8169, 0.0
  %v8277 = vadd.f32 %v8275, %v8276
  %v8278 = vsel %vm2739, %v8170, 0.0
  %v8279 = vadd.f32 %v8277, %v8278
  %v8280 = vsel %vm2739, %v8171, 0.0
  %v8281 = vadd.f32 %v8279, %v8280
  %v8282 = vsel %vm2739, %v8172, 0.0
  %v8283 = vadd.f32 %v8281, %v8282
  %v8284 = vsel %vm2739, %v8173, 0.0
  %v8285 = vadd.f32 %v8283, %v8284
  %v8286 = vsel %vm2739, %v8174, 0.0
  %v8287 = vadd.f32 %v8285, %v8286
  %v8288 = vsel %vm2739, %v8175, 0.0
  %v8289 = vadd.f32 %v8287, %v8288
  %v8290 = vsel %vm2739, %v8176, 0.0
  %v8291 = vadd.f32 %v8289, %v8290
  %v8292 = vsel %vm2739, %v8177, 0.0
  %v8293 = vadd.f32 %v8291, %v8292
  %v8294 = vsel %vm2739, %v8178, 0.0
  %v8295 = vadd.f32 %v8293, %v8294
  %v8296 = vsel %vm2739, %v8179, 0.0
  %v8297 = vadd.f32 %v8295, %v8296
  %v8298 = vsel %vm2739, %v8180, 0.0
  %v8299 = vadd.f32 %v8297, %v8298
  %v8300 = vsel %vm2739, %v8181, 0.0
  %v8301 = vadd.f32 %v8299, %v8300
  %v8302 = vsel %vm2739, %v8182, 0.0
  %v8303 = vadd.f32 %v8301, %v8302
  %v8304 = vsel %vm2739, %v8183, 0.0
  %v8305 = vadd.f32 %v8303, %v8304
  %v8306 = vsel %vm2739, %v8184, 0.0
  %v8307 = vadd.f32 %v8305, %v8306
  %v8308 = vsel %vm2739, %v8185, 0.0
  %v8309 = vadd.f32 %v8307, %v8308
  %v8310 = vsel %vm2739, %v8186, 0.0
  %v8311 = vadd.f32 %v8309, %v8310
  %v8312 = vsel %vm2739, %v8187, 0.0
  %v8313 = vadd.f32 %v8311, %v8312
  %v8314 = vsel %vm2739, %v8188, 0.0
  %v8315 = vadd.f32 %v8313, %v8314
  %v8316 = vsel %vm2739, %v8189, 0.0
  %v8317 = vadd.f32 %v8315, %v8316
  %v8318 = vsel %vm2739, %v8190, 0.0
  %v8319 = vadd.f32 %v8317, %v8318
  %v8320 = vrot.slane %v8319, 4
  %v8321 = vadd.f32 %v8319, %v8320
  %v8322 = vrot.slane %v8321, 2
  %v8323 = vadd.f32 %v8321, %v8322
  %v8324 = vrot.slane %v8323, 1
  %v8325 = vadd.f32 %v8323, %v8324
  %v8326 = vmul.f32 %v8325, 0.001953125
  %v8327 = vmul.f32 %v8127, %v8127
  %v8328 = vmul.f32 %v8128, %v8128
  %v8329 = vmul.f32 %v8129, %v8129
  %v8330 = vmul.f32 %v8130, %v8130
  %v8331 = vmul.f32 %v8131, %v8131
  %v8332 = vmul.f32 %v8132, %v8132
  %v8333 = vmul.f32 %v8133, %v8133
  %v8334 = vmul.f32 %v8134, %v8134
  %v8335 = vmul.f32 %v8135, %v8135
  %v8336 = vmul.f32 %v8136, %v8136
  %v8337 = vmul.f32 %v8137, %v8137
  %v8338 = vmul.f32 %v8138, %v8138
  %v8339 = vmul.f32 %v8139, %v8139
  %v8340 = vmul.f32 %v8140, %v8140
  %v8341 = vmul.f32 %v8141, %v8141
  %v8342 = vmul.f32 %v8142, %v8142
  %v8343 = vmul.f32 %v8143, %v8143
  %v8344 = vmul.f32 %v8144, %v8144
  %v8345 = vmul.f32 %v8145, %v8145
  %v8346 = vmul.f32 %v8146, %v8146
  %v8347 = vmul.f32 %v8147, %v8147
  %v8348 = vmul.f32 %v8148, %v8148
  %v8349 = vmul.f32 %v8149, %v8149
  %v8350 = vmul.f32 %v8150, %v8150
  %v8351 = vmul.f32 %v8151, %v8151
  %v8352 = vmul.f32 %v8152, %v8152
  %v8353 = vmul.f32 %v8153, %v8153
  %v8354 = vmul.f32 %v8154, %v8154
  %v8355 = vmul.f32 %v8155, %v8155
  %v8356 = vmul.f32 %v8156, %v8156
  %v8357 = vmul.f32 %v8157, %v8157
  %v8358 = vmul.f32 %v8158, %v8158
  %v8359 = vmul.f32 %v8159, %v8159
  %v8360 = vmul.f32 %v8160, %v8160
  %v8361 = vmul.f32 %v8161, %v8161
  %v8362 = vmul.f32 %v8162, %v8162
  %v8363 = vmul.f32 %v8163, %v8163
  %v8364 = vmul.f32 %v8164, %v8164
  %v8365 = vmul.f32 %v8165, %v8165
  %v8366 = vmul.f32 %v8166, %v8166
  %v8367 = vmul.f32 %v8167, %v8167
  %v8368 = vmul.f32 %v8168, %v8168
  %v8369 = vmul.f32 %v8169, %v8169
  %v8370 = vmul.f32 %v8170, %v8170
  %v8371 = vmul.f32 %v8171, %v8171
  %v8372 = vmul.f32 %v8172, %v8172
  %v8373 = vmul.f32 %v8173, %v8173
  %v8374 = vmul.f32 %v8174, %v8174
  %v8375 = vmul.f32 %v8175, %v8175
  %v8376 = vmul.f32 %v8176, %v8176
  %v8377 = vmul.f32 %v8177, %v8177
  %v8378 = vmul.f32 %v8178, %v8178
  %v8379 = vmul.f32 %v8179, %v8179
  %v8380 = vmul.f32 %v8180, %v8180
  %v8381 = vmul.f32 %v8181, %v8181
  %v8382 = vmul.f32 %v8182, %v8182
  %v8383 = vmul.f32 %v8183, %v8183
  %v8384 = vmul.f32 %v8184, %v8184
  %v8385 = vmul.f32 %v8185, %v8185
  %v8386 = vmul.f32 %v8186, %v8186
  %v8387 = vmul.f32 %v8187, %v8187
  %v8388 = vmul.f32 %v8188, %v8188
  %v8389 = vmul.f32 %v8189, %v8189
  %v8390 = vmul.f32 %v8190, %v8190
  %v8391 = vsel %vm2739, %v8327, 0.0
  %v8392 = vsel %vm2739, %v8328, 0.0
  %v8393 = vadd.f32 %v8391, %v8392
  %v8394 = vsel %vm2739, %v8329, 0.0
  %v8395 = vadd.f32 %v8393, %v8394
  %v8396 = vsel %vm2739, %v8330, 0.0
  %v8397 = vadd.f32 %v8395, %v8396
  %v8398 = vsel %vm2739, %v8331, 0.0
  %v8399 = vadd.f32 %v8397, %v8398
  %v8400 = vsel %vm2739, %v8332, 0.0
  %v8401 = vadd.f32 %v8399, %v8400
  %v8402 = vsel %vm2739, %v8333, 0.0
  %v8403 = vadd.f32 %v8401, %v8402
  %v8404 = vsel %vm2739, %v8334, 0.0
  %v8405 = vadd.f32 %v8403, %v8404
  %v8406 = vsel %vm2739, %v8335, 0.0
  %v8407 = vadd.f32 %v8405, %v8406
  %v8408 = vsel %vm2739, %v8336, 0.0
  %v8409 = vadd.f32 %v8407, %v8408
  %v8410 = vsel %vm2739, %v8337, 0.0
  %v8411 = vadd.f32 %v8409, %v8410
  %v8412 = vsel %vm2739, %v8338, 0.0
  %v8413 = vadd.f32 %v8411, %v8412
  %v8414 = vsel %vm2739, %v8339, 0.0
  %v8415 = vadd.f32 %v8413, %v8414
  %v8416 = vsel %vm2739, %v8340, 0.0
  %v8417 = vadd.f32 %v8415, %v8416
  %v8418 = vsel %vm2739, %v8341, 0.0
  %v8419 = vadd.f32 %v8417, %v8418
  %v8420 = vsel %vm2739, %v8342, 0.0
  %v8421 = vadd.f32 %v8419, %v8420
  %v8422 = vsel %vm2739, %v8343, 0.0
  %v8423 = vadd.f32 %v8421, %v8422
  %v8424 = vsel %vm2739, %v8344, 0.0
  %v8425 = vadd.f32 %v8423, %v8424
  %v8426 = vsel %vm2739, %v8345, 0.0
  %v8427 = vadd.f32 %v8425, %v8426
  %v8428 = vsel %vm2739, %v8346, 0.0
  %v8429 = vadd.f32 %v8427, %v8428
  %v8430 = vsel %vm2739, %v8347, 0.0
  %v8431 = vadd.f32 %v8429, %v8430
  %v8432 = vsel %vm2739, %v8348, 0.0
  %v8433 = vadd.f32 %v8431, %v8432
  %v8434 = vsel %vm2739, %v8349, 0.0
  %v8435 = vadd.f32 %v8433, %v8434
  %v8436 = vsel %vm2739, %v8350, 0.0
  %v8437 = vadd.f32 %v8435, %v8436
  %v8438 = vsel %vm2739, %v8351, 0.0
  %v8439 = vadd.f32 %v8437, %v8438
  %v8440 = vsel %vm2739, %v8352, 0.0
  %v8441 = vadd.f32 %v8439, %v8440
  %v8442 = vsel %vm2739, %v8353, 0.0
  %v8443 = vadd.f32 %v8441, %v8442
  %v8444 = vsel %vm2739, %v8354, 0.0
  %v8445 = vadd.f32 %v8443, %v8444
  %v8446 = vsel %vm2739, %v8355, 0.0
  %v8447 = vadd.f32 %v8445, %v8446
  %v8448 = vsel %vm2739, %v8356, 0.0
  %v8449 = vadd.f32 %v8447, %v8448
  %v8450 = vsel %vm2739, %v8357, 0.0
  %v8451 = vadd.f32 %v8449, %v8450
  %v8452 = vsel %vm2739, %v8358, 0.0
  %v8453 = vadd.f32 %v8451, %v8452
  %v8454 = vsel %vm2739, %v8359, 0.0
  %v8455 = vadd.f32 %v8453, %v8454
  %v8456 = vsel %vm2739, %v8360, 0.0
  %v8457 = vadd.f32 %v8455, %v8456
  %v8458 = vsel %vm2739, %v8361, 0.0
  %v8459 = vadd.f32 %v8457, %v8458
  %v8460 = vsel %vm2739, %v8362, 0.0
  %v8461 = vadd.f32 %v8459, %v8460
  %v8462 = vsel %vm2739, %v8363, 0.0
  %v8463 = vadd.f32 %v8461, %v8462
  %v8464 = vsel %vm2739, %v8364, 0.0
  %v8465 = vadd.f32 %v8463, %v8464
  %v8466 = vsel %vm2739, %v8365, 0.0
  %v8467 = vadd.f32 %v8465, %v8466
  %v8468 = vsel %vm2739, %v8366, 0.0
  %v8469 = vadd.f32 %v8467, %v8468
  %v8470 = vsel %vm2739, %v8367, 0.0
  %v8471 = vadd.f32 %v8469, %v8470
  %v8472 = vsel %vm2739, %v8368, 0.0
  %v8473 = vadd.f32 %v8471, %v8472
  %v8474 = vsel %vm2739, %v8369, 0.0
  %v8475 = vadd.f32 %v8473, %v8474
  %v8476 = vsel %vm2739, %v8370, 0.0
  %v8477 = vadd.f32 %v8475, %v8476
  %v8478 = vsel %vm2739, %v8371, 0.0
  %v8479 = vadd.f32 %v8477, %v8478
  %v8480 = vsel %vm2739, %v8372, 0.0
  %v8481 = vadd.f32 %v8479, %v8480
  %v8482 = vsel %vm2739, %v8373, 0.0
  %v8483 = vadd.f32 %v8481, %v8482
  %v8484 = vsel %vm2739, %v8374, 0.0
  %v8485 = vadd.f32 %v8483, %v8484
  %v8486 = vsel %vm2739, %v8375, 0.0
  %v8487 = vadd.f32 %v8485, %v8486
  %v8488 = vsel %vm2739, %v8376, 0.0
  %v8489 = vadd.f32 %v8487, %v8488
  %v8490 = vsel %vm2739, %v8377, 0.0
  %v8491 = vadd.f32 %v8489, %v8490
  %v8492 = vsel %vm2739, %v8378, 0.0
  %v8493 = vadd.f32 %v8491, %v8492
  %v8494 = vsel %vm2739, %v8379, 0.0
  %v8495 = vadd.f32 %v8493, %v8494
  %v8496 = vsel %vm2739, %v8380, 0.0
  %v8497 = vadd.f32 %v8495, %v8496
  %v8498 = vsel %vm2739, %v8381, 0.0
  %v8499 = vadd.f32 %v8497, %v8498
  %v8500 = vsel %vm2739, %v8382, 0.0
  %v8501 = vadd.f32 %v8499, %v8500
  %v8502 = vsel %vm2739, %v8383, 0.0
  %v8503 = vadd.f32 %v8501, %v8502
  %v8504 = vsel %vm2739, %v8384, 0.0
  %v8505 = vadd.f32 %v8503, %v8504
  %v8506 = vsel %vm2739, %v8385, 0.0
  %v8507 = vadd.f32 %v8505, %v8506
  %v8508 = vsel %vm2739, %v8386, 0.0
  %v8509 = vadd.f32 %v8507, %v8508
  %v8510 = vsel %vm2739, %v8387, 0.0
  %v8511 = vadd.f32 %v8509, %v8510
  %v8512 = vsel %vm2739, %v8388, 0.0
  %v8513 = vadd.f32 %v8511, %v8512
  %v8514 = vsel %vm2739, %v8389, 0.0
  %v8515 = vadd.f32 %v8513, %v8514
  %v8516 = vsel %vm2739, %v8390, 0.0
  %v8517 = vadd.f32 %v8515, %v8516
  %v8518 = vrot.slane %v8517, 4
  %v8519 = vadd.f32 %v8517, %v8518
  %v8520 = vrot.slane %v8519, 2
  %v8521 = vadd.f32 %v8519, %v8520
  %v8522 = vrot.slane %v8521, 1
  %v8523 = vadd.f32 %v8521, %v8522
  %v8524 = vmul.f32 %v8523, 0.001953125
  %v8525 = vmul.f32 %v8326, %v8326
  %v8526 = vsub.f32 %v8524, %v8525
  %v8527 = vadd.f32 %v8526, 1e-05
  %v8528 = vrsqrt.pop %v8527
  %v8529 = vmul.f32 %v8528, %v8191
  %v8530 = vlaneseq
  %v8531 = vshrl.u32 %v8530, 7
  %v8532 = vsub.s32 0, %v8531
  %v8533 = vrot.slane %v8529, %v8532
  %v8534 = vmul.f32 %v8127, %v8533
  %v8535 = vmul.f32 %v8128, %v8533
  %v8536 = vmul.f32 %v8129, %v8533
  %v8537 = vmul.f32 %v8130, %v8533
  %v8538 = vmul.f32 %v8131, %v8533
  %v8539 = vmul.f32 %v8132, %v8533
  %v8540 = vmul.f32 %v8133, %v8533
  %v8541 = vmul.f32 %v8134, %v8533
  %v8542 = vmul.f32 %v8135, %v8533
  %v8543 = vmul.f32 %v8136, %v8533
  %v8544 = vmul.f32 %v8137, %v8533
  %v8545 = vmul.f32 %v8138, %v8533
  %v8546 = vmul.f32 %v8139, %v8533
  %v8547 = vmul.f32 %v8140, %v8533
  %v8548 = vmul.f32 %v8141, %v8533
  %v8549 = vmul.f32 %v8142, %v8533
  %v8550 = vmul.f32 %v8143, %v8533
  %v8551 = vmul.f32 %v8144, %v8533
  %v8552 = vmul.f32 %v8145, %v8533
  %v8553 = vmul.f32 %v8146, %v8533
  %v8554 = vmul.f32 %v8147, %v8533
  %v8555 = vmul.f32 %v8148, %v8533
  %v8556 = vmul.f32 %v8149, %v8533
  %v8557 = vmul.f32 %v8150, %v8533
  %v8558 = vmul.f32 %v8151, %v8533
  %v8559 = vmul.f32 %v8152, %v8533
  %v8560 = vmul.f32 %v8153, %v8533
  %v8561 = vmul.f32 %v8154, %v8533
  %v8562 = vmul.f32 %v8155, %v8533
  %v8563 = vmul.f32 %v8156, %v8533
  %v8564 = vmul.f32 %v8157, %v8533
  %v8565 = vmul.f32 %v8158, %v8533
  %v8566 = vmul.f32 %v8159, %v8533
  %v8567 = vmul.f32 %v8160, %v8533
  %v8568 = vmul.f32 %v8161, %v8533
  %v8569 = vmul.f32 %v8162, %v8533
  %v8570 = vmul.f32 %v8163, %v8533
  %v8571 = vmul.f32 %v8164, %v8533
  %v8572 = vmul.f32 %v8165, %v8533
  %v8573 = vmul.f32 %v8166, %v8533
  %v8574 = vmul.f32 %v8167, %v8533
  %v8575 = vmul.f32 %v8168, %v8533
  %v8576 = vmul.f32 %v8169, %v8533
  %v8577 = vmul.f32 %v8170, %v8533
  %v8578 = vmul.f32 %v8171, %v8533
  %v8579 = vmul.f32 %v8172, %v8533
  %v8580 = vmul.f32 %v8173, %v8533
  %v8581 = vmul.f32 %v8174, %v8533
  %v8582 = vmul.f32 %v8175, %v8533
  %v8583 = vmul.f32 %v8176, %v8533
  %v8584 = vmul.f32 %v8177, %v8533
  %v8585 = vmul.f32 %v8178, %v8533
  %v8586 = vmul.f32 %v8179, %v8533
  %v8587 = vmul.f32 %v8180, %v8533
  %v8588 = vmul.f32 %v8181, %v8533
  %v8589 = vmul.f32 %v8182, %v8533
  %v8590 = vmul.f32 %v8183, %v8533
  %v8591 = vmul.f32 %v8184, %v8533
  %v8592 = vmul.f32 %v8185, %v8533
  %v8593 = vmul.f32 %v8186, %v8533
  %v8594 = vmul.f32 %v8187, %v8533
  %v8595 = vmul.f32 %v8188, %v8533
  %v8596 = vmul.f32 %v8189, %v8533
  %v8597 = vmul.f32 %v8190, %v8533
  %v8598 = vmul.f32 %v8326, %v8529
  %v8599 = vsub.f32 %v8192, %v8598
  %v8601 = vlaneseq
  %v8602 = vshrl.u32 %v8601, 7
  %v8603 = vsub.s32 0, %v8602
  %v8604 = vrot.slane %v8599, %v8603
  %v8606 = vadd.f32 %v8534, %v8604
  %v8607 = vadd.f32 %v8535, %v8604
  %v8608 = vadd.f32 %v8536, %v8604
  %v8609 = vadd.f32 %v8537, %v8604
  %v8610 = vadd.f32 %v8538, %v8604
  %v8611 = vadd.f32 %v8539, %v8604
  %v8612 = vadd.f32 %v8540, %v8604
  %v8613 = vadd.f32 %v8541, %v8604
  %v8614 = vadd.f32 %v8542, %v8604
  %v8615 = vadd.f32 %v8543, %v8604
  %v8616 = vadd.f32 %v8544, %v8604
  %v8617 = vadd.f32 %v8545, %v8604
  %v8618 = vadd.f32 %v8546, %v8604
  %v8619 = vadd.f32 %v8547, %v8604
  %v8620 = vadd.f32 %v8548, %v8604
  %v8621 = vadd.f32 %v8549, %v8604
  %v8622 = vadd.f32 %v8550, %v8604
  %v8623 = vadd.f32 %v8551, %v8604
  %v8624 = vadd.f32 %v8552, %v8604
  %v8625 = vadd.f32 %v8553, %v8604
  %v8626 = vadd.f32 %v8554, %v8604
  %v8627 = vadd.f32 %v8555, %v8604
  %v8628 = vadd.f32 %v8556, %v8604
  %v8629 = vadd.f32 %v8557, %v8604
  %v8630 = vadd.f32 %v8558, %v8604
  %v8631 = vadd.f32 %v8559, %v8604
  %v8632 = vadd.f32 %v8560, %v8604
  %v8633 = vadd.f32 %v8561, %v8604
  %v8634 = vadd.f32 %v8562, %v8604
  %v8635 = vadd.f32 %v8563, %v8604
  %v8636 = vadd.f32 %v8564, %v8604
  %v8637 = vadd.f32 %v8565, %v8604
  %v8638 = vadd.f32 %v8566, %v8604
  %v8639 = vadd.f32 %v8567, %v8604
  %v8640 = vadd.f32 %v8568, %v8604
  %v8641 = vadd.f32 %v8569, %v8604
  %v8642 = vadd.f32 %v8570, %v8604
  %v8643 = vadd.f32 %v8571, %v8604
  %v8644 = vadd.f32 %v8572, %v8604
  %v8645 = vadd.f32 %v8573, %v8604
  %v8646 = vadd.f32 %v8574, %v8604
  %v8647 = vadd.f32 %v8575, %v8604
  %v8648 = vadd.f32 %v8576, %v8604
  %v8649 = vadd.f32 %v8577, %v8604
  %v8650 = vadd.f32 %v8578, %v8604
  %v8651 = vadd.f32 %v8579, %v8604
  %v8652 = vadd.f32 %v8580, %v8604
  %v8653 = vadd.f32 %v8581, %v8604
  %v8654 = vadd.f32 %v8582, %v8604
  %v8655 = vadd.f32 %v8583, %v8604
  %v8656 = vadd.f32 %v8584, %v8604
  %v8657 = vadd.f32 %v8585, %v8604
  %v8658 = vadd.f32 %v8586, %v8604
  %v8659 = vadd.f32 %v8587, %v8604
  %v8660 = vadd.f32 %v8588, %v8604
  %v8661 = vadd.f32 %v8589, %v8604
  %v8662 = vadd.f32 %v8590, %v8604
  %v8663 = vadd.f32 %v8591, %v8604
  %v8664 = vadd.f32 %v8592, %v8604
  %v8665 = vadd.f32 %v8593, %v8604
  %v8666 = vadd.f32 %v8594, %v8604
  %v8667 = vadd.f32 %v8595, %v8604
  %v8668 = vadd.f32 %v8596, %v8604
  %v8669 = vadd.f32 %v8597, %v8604
  %8670 = vst.msk [vmem:[%s4456 + $0x1] sm:$0xff] %vm2739, %v8606
  %8671 = vst.msk [vmem:[%s4456 + $0x9] sm:$0xff] %vm2739, %v8607
  %8672 = vst.msk [vmem:[%s4456 + $0x19] sm:$0xff] %vm2739, %v8608
  %8673 = vst.msk [vmem:[%s4456 + $0x21] sm:$0xff] %vm2739, %v8609
  %8674 = vst.msk [vmem:[%s4456 + $0x31] sm:$0xff] %vm2739, %v8610
  %8675 = vst.msk [vmem:[%s4456 + $0x39] sm:$0xff] %vm2739, %v8611
  %8676 = vst.msk [vmem:[%s4456 + $0x49] sm:$0xff] %vm2739, %v8612
  %8677 = vst.msk [vmem:[%s4456 + $0x51] sm:$0xff] %vm2739, %v8613
  %8678 = vst.msk [vmem:[%s4456 + $0x61] sm:$0xff] %vm2739, %v8614
  %8679 = vst.msk [vmem:[%s4456 + $0x69] sm:$0xff] %vm2739, %v8615
  %8680 = vst.msk [vmem:[%s4456 + $0x79] sm:$0xff] %vm2739, %v8616
  %8681 = vst.msk [vmem:[%s4456 + $0x81] sm:$0xff] %vm2739, %v8617
  %8682 = vst.msk [vmem:[%s4456 + $0x91] sm:$0xff] %vm2739, %v8618
  %8683 = vst.msk [vmem:[%s4456 + $0x99] sm:$0xff] %vm2739, %v8619
  %8684 = vst.msk [vmem:[%s4456 + $0xa9] sm:$0xff] %vm2739, %v8620
  %8685 = vst.msk [vmem:[%s4456 + $0xb1] sm:$0xff] %vm2739, %v8621
  %8686 = vst.msk [vmem:[%s4456 + $0xc1] sm:$0xff] %vm2739, %v8622
  %8687 = vst.msk [vmem:[%s4456 + $0xc9] sm:$0xff] %vm2739, %v8623
  %8688 = vst.msk [vmem:[%s4456 + $0xd9] sm:$0xff] %vm2739, %v8624
  %8689 = vst.msk [vmem:[%s4456 + $0xe1] sm:$0xff] %vm2739, %v8625
  %8690 = vst.msk [vmem:[%s4456 + $0xf1] sm:$0xff] %vm2739, %v8626
  %8691 = vst.msk [vmem:[%s4456 + $0xf9] sm:$0xff] %vm2739, %v8627
  %8692 = vst.msk [vmem:[%s4456 + $0x109] sm:$0xff] %vm2739, %v8628
  %8693 = vst.msk [vmem:[%s4456 + $0x111] sm:$0xff] %vm2739, %v8629
  %8694 = vst.msk [vmem:[%s4456 + $0x121] sm:$0xff] %vm2739, %v8630
  %8695 = vst.msk [vmem:[%s4456 + $0x129] sm:$0xff] %vm2739, %v8631
  %8696 = vst.msk [vmem:[%s4456 + $0x139] sm:$0xff] %vm2739, %v8632
  %8697 = vst.msk [vmem:[%s4456 + $0x141] sm:$0xff] %vm2739, %v8633
  %8698 = vst.msk [vmem:[%s4456 + $0x151] sm:$0xff] %vm2739, %v8634
  %8699 = vst.msk [vmem:[%s4456 + $0x159] sm:$0xff] %vm2739, %v8635
  %8700 = vst.msk [vmem:[%s4456 + $0x169] sm:$0xff] %vm2739, %v8636
  %8701 = vst.msk [vmem:[%s4456 + $0x171] sm:$0xff] %vm2739, %v8637
  %8702 = vst.msk [vmem:[%s4456 + $0x1b1] sm:$0xff] %vm2739, %v8638
  %8703 = vst.msk [vmem:[%s4456 + $0x1b9] sm:$0xff] %vm2739, %v8639
  %8704 = vst.msk [vmem:[%s4456 + $0x1c9] sm:$0xff] %vm2739, %v8640
  %8705 = vst.msk [vmem:[%s4456 + $0x1d1] sm:$0xff] %vm2739, %v8641
  %8706 = vst.msk [vmem:[%s4456 + $0x1e1] sm:$0xff] %vm2739, %v8642
  %8707 = vst.msk [vmem:[%s4456 + $0x1e9] sm:$0xff] %vm2739, %v8643
  %8708 = vst.msk [vmem:[%s4456 + $0x1f9] sm:$0xff] %vm2739, %v8644
  %8709 = vst.msk [vmem:[%s4456 + $0x201] sm:$0xff] %vm2739, %v8645
  %8710 = vst.msk [vmem:[%s4456 + $0x211] sm:$0xff] %vm2739, %v8646
  %8711 = vst.msk [vmem:[%s4456 + $0x219] sm:$0xff] %vm2739, %v8647
  %8712 = vst.msk [vmem:[%s4456 + $0x229] sm:$0xff] %vm2739, %v8648
  %8713 = vst.msk [vmem:[%s4456 + $0x231] sm:$0xff] %vm2739, %v8649
  %8714 = vst.msk [vmem:[%s4456 + $0x241] sm:$0xff] %vm2739, %v8650
  %8715 = vst.msk [vmem:[%s4456 + $0x249] sm:$0xff] %vm2739, %v8651
  %8716 = vst.msk [vmem:[%s4456 + $0x259] sm:$0xff] %vm2739, %v8652
  %8717 = vst.msk [vmem:[%s4456 + $0x261] sm:$0xff] %vm2739, %v8653
  %8718 = vst.msk [vmem:[%s4456 + $0x271] sm:$0xff] %vm2739, %v8654
  %8719 = vst.msk [vmem:[%s4456 + $0x279] sm:$0xff] %vm2739, %v8655
  %8720 = vst.msk [vmem:[%s4456 + $0x289] sm:$0xff] %vm2739, %v8656
  %8721 = vst.msk [vmem:[%s4456 + $0x291] sm:$0xff] %vm2739, %v8657
  %8722 = vst.msk [vmem:[%s4456 + $0x2a1] sm:$0xff] %vm2739, %v8658
  %8723 = vst.msk [vmem:[%s4456 + $0x2a9] sm:$0xff] %vm2739, %v8659
  %8724 = vst.msk [vmem:[%s4456 + $0x2b9] sm:$0xff] %vm2739, %v8660
  %8725 = vst.msk [vmem:[%s4456 + $0x2c1] sm:$0xff] %vm2739, %v8661
  %8726 = vst.msk [vmem:[%s4456 + $0x2d1] sm:$0xff] %vm2739, %v8662
  %8727 = vst.msk [vmem:[%s4456 + $0x2d9] sm:$0xff] %vm2739, %v8663
  %8728 = vst.msk [vmem:[%s4456 + $0x2e9] sm:$0xff] %vm2739, %v8664
  %8729 = vst.msk [vmem:[%s4456 + $0x2f1] sm:$0xff] %vm2739, %v8665
  %8730 = vst.msk [vmem:[%s4456 + $0x301] sm:$0xff] %vm2739, %v8666
  %8731 = vst.msk [vmem:[%s4456 + $0x309] sm:$0xff] %vm2739, %v8667
  %8732 = vst.msk [vmem:[%s4456 + $0x319] sm:$0xff] %vm2739, %v8668
  %8733 = vst.msk [vmem:[%s4456 + $0x321] sm:$0xff] %vm2739, %v8669
  %v8734 = vld [vmem:[#allocation2] ss:$2 sm:$0xff]
  %s8735 = scalar_lea.vmem [#allocation2], 16
  %v8736 = vld [vmem:[%s8735] ss:$2 sm:$0x1]
  %s8737 = scalar_lea.vmem [#allocation2], 24
  %v8738 = vld [vmem:[%s8737] ss:$2 sm:$0xff]
  %s8739 = scalar_lea.vmem [#allocation2], 40
  %v8740 = vld [vmem:[%s8739] ss:$2 sm:$0x1]
  %s8741 = scalar_lea.vmem [#allocation2], 48
  %v8742 = vld [vmem:[%s8741] ss:$2 sm:$0xff]
  %s8743 = scalar_lea.vmem [#allocation2], 64
  %v8744 = vld [vmem:[%s8743] ss:$2 sm:$0x1]
  %s8745 = scalar_lea.vmem [#allocation2], 72
  %v8746 = vld [vmem:[%s8745] ss:$2 sm:$0xff]
  %s8747 = scalar_lea.vmem [#allocation2], 88
  %v8748 = vld [vmem:[%s8747] ss:$2 sm:$0x1]
  %s8749 = scalar_lea.vmem [#allocation2], 96
  %v8750 = vld [vmem:[%s8749] ss:$2 sm:$0xff]
  %s8751 = scalar_lea.vmem [#allocation2], 112
  %v8752 = vld [vmem:[%s8751] ss:$2 sm:$0x1]
  %s8753 = scalar_lea.vmem [#allocation2], 120
  %v8754 = vld [vmem:[%s8753] ss:$2 sm:$0xff]
  %s8755 = scalar_lea.vmem [#allocation2], 136
  %v8756 = vld [vmem:[%s8755] ss:$2 sm:$0x1]
  %s8757 = scalar_lea.vmem [#allocation2], 144
  %v8758 = vld [vmem:[%s8757] ss:$2 sm:$0xff]
  %s8759 = scalar_lea.vmem [#allocation2], 160
  %v8760 = vld [vmem:[%s8759] ss:$2 sm:$0x1]
  %s8761 = scalar_lea.vmem [#allocation2], 168
  %v8762 = vld [vmem:[%s8761] ss:$2 sm:$0xff]
  %s8763 = scalar_lea.vmem [#allocation2], 184
  %v8764 = vld [vmem:[%s8763] ss:$2 sm:$0x1]
  %s8765 = scalar_lea.vmem [#allocation2], 192
  %v8766 = vld [vmem:[%s8765] ss:$2 sm:$0xff]
  %s8767 = scalar_lea.vmem [#allocation2], 208
  %v8768 = vld [vmem:[%s8767] ss:$2 sm:$0x1]
  %s8769 = scalar_lea.vmem [#allocation2], 216
  %v8770 = vld [vmem:[%s8769] ss:$2 sm:$0xff]
  %s8771 = scalar_lea.vmem [#allocation2], 232
  %v8772 = vld [vmem:[%s8771] ss:$2 sm:$0x1]
  %s8773 = scalar_lea.vmem [#allocation2], 240
  %v8774 = vld [vmem:[%s8773] ss:$2 sm:$0xff]
  %s8775 = scalar_lea.vmem [#allocation2], 256
  %v8776 = vld [vmem:[%s8775] ss:$2 sm:$0x1]
  %s8777 = scalar_lea.vmem [#allocation2], 264
  %v8778 = vld [vmem:[%s8777] ss:$2 sm:$0xff]
  %s8779 = scalar_lea.vmem [#allocation2], 280
  %v8780 = vld [vmem:[%s8779] ss:$2 sm:$0x1]
  %s8781 = scalar_lea.vmem [#allocation2], 288
  %v8782 = vld [vmem:[%s8781] ss:$2 sm:$0xff]
  %s8783 = scalar_lea.vmem [#allocation2], 304
  %v8784 = vld [vmem:[%s8783] ss:$2 sm:$0x1]
  %s8785 = scalar_lea.vmem [#allocation2], 312
  %v8786 = vld [vmem:[%s8785] ss:$2 sm:$0xff]
  %s8787 = scalar_lea.vmem [#allocation2], 328
  %v8788 = vld [vmem:[%s8787] ss:$2 sm:$0x1]
  %s8789 = scalar_lea.vmem [#allocation2], 336
  %v8790 = vld [vmem:[%s8789] ss:$2 sm:$0xff]
  %s8791 = scalar_lea.vmem [#allocation2], 352
  %v8792 = vld [vmem:[%s8791] ss:$2 sm:$0x1]
  %s8793 = scalar_lea.vmem [#allocation2], 360
  %v8794 = vld [vmem:[%s8793] ss:$2 sm:$0xff]
  %s8795 = scalar_lea.vmem [#allocation2], 376
  %v8796 = vld [vmem:[%s8795] ss:$2 sm:$0x1]
  %s8797 = scalar_lea.vmem [#allocation2], 384
  %v8798 = vld [vmem:[%s8797] ss:$2 sm:$0xff]
  %s8799 = scalar_lea.vmem [#allocation2], 400
  %v8800 = vld [vmem:[%s8799] ss:$2 sm:$0x1]
  %s8801 = scalar_lea.vmem [#allocation2], 408
  %v8802 = vld [vmem:[%s8801] ss:$2 sm:$0xff]
  %s8803 = scalar_lea.vmem [#allocation2], 424
  %v8804 = vld [vmem:[%s8803] ss:$2 sm:$0x1]
  %s8805 = scalar_lea.vmem [#allocation2], 432
  %v8806 = vld [vmem:[%s8805] ss:$2 sm:$0xff]
  %s8807 = scalar_lea.vmem [#allocation2], 448
  %v8808 = vld [vmem:[%s8807] ss:$2 sm:$0x1]
  %s8809 = scalar_lea.vmem [#allocation2], 456
  %v8810 = vld [vmem:[%s8809] ss:$2 sm:$0xff]
  %s8811 = scalar_lea.vmem [#allocation2], 472
  %v8812 = vld [vmem:[%s8811] ss:$2 sm:$0x1]
  %s8813 = scalar_lea.vmem [#allocation2], 480
  %v8814 = vld [vmem:[%s8813] ss:$2 sm:$0xff]
  %s8815 = scalar_lea.vmem [#allocation2], 496
  %v8816 = vld [vmem:[%s8815] ss:$2 sm:$0x1]
  %s8817 = scalar_lea.vmem [#allocation2], 504
  %v8818 = vld [vmem:[%s8817] ss:$2 sm:$0xff]
  %s8819 = scalar_lea.vmem [#allocation2], 520
  %v8820 = vld [vmem:[%s8819] ss:$2 sm:$0x1]
  %s8821 = scalar_lea.vmem [#allocation2], 528
  %v8822 = vld [vmem:[%s8821] ss:$2 sm:$0xff]
  %s8823 = scalar_lea.vmem [#allocation2], 544
  %v8824 = vld [vmem:[%s8823] ss:$2 sm:$0x1]
  %s8825 = scalar_lea.vmem [#allocation2], 552
  %v8826 = vld [vmem:[%s8825] ss:$2 sm:$0xff]
  %s8827 = scalar_lea.vmem [#allocation2], 568
  %v8828 = vld [vmem:[%s8827] ss:$2 sm:$0x1]
  %s8829 = scalar_lea.vmem [#allocation2], 576
  %v8830 = vld [vmem:[%s8829] ss:$2 sm:$0xff]
  %s8831 = scalar_lea.vmem [#allocation2], 592
  %v8832 = vld [vmem:[%s8831] ss:$2 sm:$0x1]
  %s8833 = scalar_lea.vmem [#allocation2], 600
  %v8834 = vld [vmem:[%s8833] ss:$2 sm:$0xff]
  %s8835 = scalar_lea.vmem [#allocation2], 616
  %v8836 = vld [vmem:[%s8835] ss:$2 sm:$0x1]
  %s8837 = scalar_lea.vmem [#allocation2], 624
  %v8838 = vld [vmem:[%s8837] ss:$2 sm:$0xff]
  %s8839 = scalar_lea.vmem [#allocation2], 640
  %v8840 = vld [vmem:[%s8839] ss:$2 sm:$0x1]
  %s8841 = scalar_lea.vmem [#allocation2], 648
  %v8842 = vld [vmem:[%s8841] ss:$2 sm:$0xff]
  %s8843 = scalar_lea.vmem [#allocation2], 664
  %v8844 = vld [vmem:[%s8843] ss:$2 sm:$0x1]
  %s8845 = scalar_lea.vmem [#allocation2], 672
  %v8846 = vld [vmem:[%s8845] ss:$2 sm:$0xff]
  %s8847 = scalar_lea.vmem [#allocation2], 688
  %v8848 = vld [vmem:[%s8847] ss:$2 sm:$0x1]
  %s8849 = scalar_lea.vmem [#allocation2], 696
  %v8850 = vld [vmem:[%s8849] ss:$2 sm:$0xff]
  %s8851 = scalar_lea.vmem [#allocation2], 712
  %v8852 = vld [vmem:[%s8851] ss:$2 sm:$0x1]
  %s8853 = scalar_lea.vmem [#allocation2], 720
  %v8854 = vld [vmem:[%s8853] ss:$2 sm:$0xff]
  %s8855 = scalar_lea.vmem [#allocation2], 736
  %v8856 = vld [vmem:[%s8855] ss:$2 sm:$0x1]
  %s8857 = scalar_lea.vmem [#allocation2], 744
  %v8858 = vld [vmem:[%s8857] ss:$2 sm:$0xff]
  %s8859 = scalar_lea.vmem [#allocation2], 760
  %v8860 = vld [vmem:[%s8859] ss:$2 sm:$0x1]
  %s8861 = scalar_lea.vmem [#allocation2], 768
  %v8862 = vld [vmem:[%s8861] ss:$2 sm:$0xff]
  %s8863 = scalar_lea.vmem [#allocation2], 784
  %v8864 = vld [vmem:[%s8863] ss:$2 sm:$0x1]
  %s8865 = scalar_lea.vmem [#allocation2], 792
  %v8866 = vld [vmem:[%s8865] ss:$2 sm:$0xff]
  %s8867 = scalar_lea.vmem [#allocation2], 808
  %v8868 = vld [vmem:[%s8867] ss:$2 sm:$0x1]
  %s8869 = scalar_lea.vmem [#allocation2], 816
  %v8870 = vld [vmem:[%s8869] ss:$2 sm:$0xff]
  %s8871 = scalar_lea.vmem [#allocation2], 832
  %v8872 = vld [vmem:[%s8871] ss:$2 sm:$0x1]
  %s8873 = scalar_lea.vmem [#allocation2], 840
  %v8874 = vld [vmem:[%s8873] ss:$2 sm:$0xff]
  %s8875 = scalar_lea.vmem [#allocation2], 856
  %v8876 = vld [vmem:[%s8875] ss:$2 sm:$0x1]
  %s8877 = scalar_lea.vmem [#allocation2], 1
  %v8878 = vld [vmem:[%s8877] ss:$2 sm:$0xff]
  %s8879 = scalar_lea.vmem [#allocation2], 17
  %v8880 = vld [vmem:[%s8879] ss:$2 sm:$0x1]
  %s8881 = scalar_lea.vmem [#allocation2], 25
  %v8882 = vld [vmem:[%s8881] ss:$2 sm:$0xff]
  %s8883 = scalar_lea.vmem [#allocation2], 41
  %v8884 = vld [vmem:[%s8883] ss:$2 sm:$0x1]
  %s8885 = scalar_lea.vmem [#allocation2], 49
  %v8886 = vld [vmem:[%s8885] ss:$2 sm:$0xff]
  %s8887 = scalar_lea.vmem [#allocation2], 65
  %v8888 = vld [vmem:[%s8887] ss:$2 sm:$0x1]
  %s8889 = scalar_lea.vmem [#allocation2], 73
  %v8890 = vld [vmem:[%s8889] ss:$2 sm:$0xff]
  %s8891 = scalar_lea.vmem [#allocation2], 89
  %v8892 = vld [vmem:[%s8891] ss:$2 sm:$0x1]
  %s8893 = scalar_lea.vmem [#allocation2], 97
  %v8894 = vld [vmem:[%s8893] ss:$2 sm:$0xff]
  %s8895 = scalar_lea.vmem [#allocation2], 113
  %v8896 = vld [vmem:[%s8895] ss:$2 sm:$0x1]
  %s8897 = scalar_lea.vmem [#allocation2], 121
  %v8898 = vld [vmem:[%s8897] ss:$2 sm:$0xff]
  %s8899 = scalar_lea.vmem [#allocation2], 137
  %v8900 = vld [vmem:[%s8899] ss:$2 sm:$0x1]
  %s8901 = scalar_lea.vmem [#allocation2], 145
  %v8902 = vld [vmem:[%s8901] ss:$2 sm:$0xff]
  %s8903 = scalar_lea.vmem [#allocation2], 161
  %v8904 = vld [vmem:[%s8903] ss:$2 sm:$0x1]
  %s8905 = scalar_lea.vmem [#allocation2], 169
  %v8906 = vld [vmem:[%s8905] ss:$2 sm:$0xff]
  %s8907 = scalar_lea.vmem [#allocation2], 185
  %v8908 = vld [vmem:[%s8907] ss:$2 sm:$0x1]
  %s8909 = scalar_lea.vmem [#allocation2], 193
  %v8910 = vld [vmem:[%s8909] ss:$2 sm:$0xff]
  %s8911 = scalar_lea.vmem [#allocation2], 209
  %v8912 = vld [vmem:[%s8911] ss:$2 sm:$0x1]
  %s8913 = scalar_lea.vmem [#allocation2], 217
  %v8914 = vld [vmem:[%s8913] ss:$2 sm:$0xff]
  %s8915 = scalar_lea.vmem [#allocation2], 233
  %v8916 = vld [vmem:[%s8915] ss:$2 sm:$0x1]
  %s8917 = scalar_lea.vmem [#allocation2], 241
  %v8918 = vld [vmem:[%s8917] ss:$2 sm:$0xff]
  %s8919 = scalar_lea.vmem [#allocation2], 257
  %v8920 = vld [vmem:[%s8919] ss:$2 sm:$0x1]
  %s8921 = scalar_lea.vmem [#allocation2], 265
  %v8922 = vld [vmem:[%s8921] ss:$2 sm:$0xff]
  %s8923 = scalar_lea.vmem [#allocation2], 281
  %v8924 = vld [vmem:[%s8923] ss:$2 sm:$0x1]
  %s8925 = scalar_lea.vmem [#allocation2], 289
  %v8926 = vld [vmem:[%s8925] ss:$2 sm:$0xff]
  %s8927 = scalar_lea.vmem [#allocation2], 305
  %v8928 = vld [vmem:[%s8927] ss:$2 sm:$0x1]
  %s8929 = scalar_lea.vmem [#allocation2], 313
  %v8930 = vld [vmem:[%s8929] ss:$2 sm:$0xff]
  %s8931 = scalar_lea.vmem [#allocation2], 329
  %v8932 = vld [vmem:[%s8931] ss:$2 sm:$0x1]
  %s8933 = scalar_lea.vmem [#allocation2], 337
  %v8934 = vld [vmem:[%s8933] ss:$2 sm:$0xff]
  %s8935 = scalar_lea.vmem [#allocation2], 353
  %v8936 = vld [vmem:[%s8935] ss:$2 sm:$0x1]
  %s8937 = scalar_lea.vmem [#allocation2], 361
  %v8938 = vld [vmem:[%s8937] ss:$2 sm:$0xff]
  %s8939 = scalar_lea.vmem [#allocation2], 377
  %v8940 = vld [vmem:[%s8939] ss:$2 sm:$0x1]
  %s8941 = scalar_lea.vmem [#allocation2], 385
  %v8942 = vld [vmem:[%s8941] ss:$2 sm:$0xff]
  %s8943 = scalar_lea.vmem [#allocation2], 401
  %v8944 = vld [vmem:[%s8943] ss:$2 sm:$0x1]
  %s8945 = scalar_lea.vmem [#allocation2], 409
  %v8946 = vld [vmem:[%s8945] ss:$2 sm:$0xff]
  %s8947 = scalar_lea.vmem [#allocation2], 425
  %v8948 = vld [vmem:[%s8947] ss:$2 sm:$0x1]
  %s8949 = scalar_lea.vmem [#allocation2], 433
  %v8950 = vld [vmem:[%s8949] ss:$2 sm:$0xff]
  %s8951 = scalar_lea.vmem [#allocation2], 449
  %v8952 = vld [vmem:[%s8951] ss:$2 sm:$0x1]
  %s8953 = scalar_lea.vmem [#allocation2], 457
  %v8954 = vld [vmem:[%s8953] ss:$2 sm:$0xff]
  %s8955 = scalar_lea.vmem [#allocation2], 473
  %v8956 = vld [vmem:[%s8955] ss:$2 sm:$0x1]
  %s8957 = scalar_lea.vmem [#allocation2], 481
  %v8958 = vld [vmem:[%s8957] ss:$2 sm:$0xff]
  %s8959 = scalar_lea.vmem [#allocation2], 497
  %v8960 = vld [vmem:[%s8959] ss:$2 sm:$0x1]
  %s8961 = scalar_lea.vmem [#allocation2], 505
  %v8962 = vld [vmem:[%s8961] ss:$2 sm:$0xff]
  %s8963 = scalar_lea.vmem [#allocation2], 521
  %v8964 = vld [vmem:[%s8963] ss:$2 sm:$0x1]
  %s8965 = scalar_lea.vmem [#allocation2], 529
  %v8966 = vld [vmem:[%s8965] ss:$2 sm:$0xff]
  %s8967 = scalar_lea.vmem [#allocation2], 545
  %v8968 = vld [vmem:[%s8967] ss:$2 sm:$0x1]
  %s8969 = scalar_lea.vmem [#allocation2], 553
  %v8970 = vld [vmem:[%s8969] ss:$2 sm:$0xff]
  %s8971 = scalar_lea.vmem [#allocation2], 569
  %v8972 = vld [vmem:[%s8971] ss:$2 sm:$0x1]
  %s8973 = scalar_lea.vmem [#allocation2], 577
  %v8974 = vld [vmem:[%s8973] ss:$2 sm:$0xff]
  %s8975 = scalar_lea.vmem [#allocation2], 593
  %v8976 = vld [vmem:[%s8975] ss:$2 sm:$0x1]
  %s8977 = scalar_lea.vmem [#allocation2], 601
  %v8978 = vld [vmem:[%s8977] ss:$2 sm:$0xff]
  %s8979 = scalar_lea.vmem [#allocation2], 617
  %v8980 = vld [vmem:[%s8979] ss:$2 sm:$0x1]
  %s8981 = scalar_lea.vmem [#allocation2], 625
  %v8982 = vld [vmem:[%s8981] ss:$2 sm:$0xff]
  %s8983 = scalar_lea.vmem [#allocation2], 641
  %v8984 = vld [vmem:[%s8983] ss:$2 sm:$0x1]
  %s8985 = scalar_lea.vmem [#allocation2], 649
  %v8986 = vld [vmem:[%s8985] ss:$2 sm:$0xff]
  %s8987 = scalar_lea.vmem [#allocation2], 665
  %v8988 = vld [vmem:[%s8987] ss:$2 sm:$0x1]
  %s8989 = scalar_lea.vmem [#allocation2], 673
  %v8990 = vld [vmem:[%s8989] ss:$2 sm:$0xff]
  %s8991 = scalar_lea.vmem [#allocation2], 689
  %v8992 = vld [vmem:[%s8991] ss:$2 sm:$0x1]
  %s8993 = scalar_lea.vmem [#allocation2], 697
  %v8994 = vld [vmem:[%s8993] ss:$2 sm:$0xff]
  %s8995 = scalar_lea.vmem [#allocation2], 713
  %v8996 = vld [vmem:[%s8995] ss:$2 sm:$0x1]
  %s8997 = scalar_lea.vmem [#allocation2], 721
  %v8998 = vld [vmem:[%s8997] ss:$2 sm:$0xff]
  %s8999 = scalar_lea.vmem [#allocation2], 737
  %v9000 = vld [vmem:[%s8999] ss:$2 sm:$0x1]
  %s9001 = scalar_lea.vmem [#allocation2], 745
  %v9002 = vld [vmem:[%s9001] ss:$2 sm:$0xff]
  %s9003 = scalar_lea.vmem [#allocation2], 761
  %v9004 = vld [vmem:[%s9003] ss:$2 sm:$0x1]
  %s9005 = scalar_lea.vmem [#allocation2], 769
  %v9006 = vld [vmem:[%s9005] ss:$2 sm:$0xff]
  %s9007 = scalar_lea.vmem [#allocation2], 785
  %v9008 = vld [vmem:[%s9007] ss:$2 sm:$0x1]
  %s9009 = scalar_lea.vmem [#allocation2], 793
  %v9010 = vld [vmem:[%s9009] ss:$2 sm:$0xff]
  %s9011 = scalar_lea.vmem [#allocation2], 809
  %v9012 = vld [vmem:[%s9011] ss:$2 sm:$0x1]
  %s9013 = scalar_lea.vmem [#allocation2], 817
  %v9014 = vld [vmem:[%s9013] ss:$2 sm:$0xff]
  %s9015 = scalar_lea.vmem [#allocation2], 833
  %v9016 = vld [vmem:[%s9015] ss:$2 sm:$0x1]
  %s9017 = scalar_lea.vmem [#allocation2], 841
  %v9018 = vld [vmem:[%s9017] ss:$2 sm:$0xff]
  %s9019 = scalar_lea.vmem [#allocation2], 857
  %v9020 = vld [vmem:[%s9019] ss:$2 sm:$0x1]
  %vm9053 = vcmask 1046528
  %v9054 = vrot.slane %v8734, 1
  %v9055 = vrot.slane %v8736, 1
  %v9056 = vsel %vm9053, %v9054, %v9055
  %v9057 = vrot.slane %v8742, 1
  %v9058 = vrot.slane %v8744, 1
  %v9059 = vsel %vm9053, %v9057, %v9058
  %v9060 = vrot.slane %v8750, 1
  %v9061 = vrot.slane %v8752, 1
  %v9062 = vsel %vm9053, %v9060, %v9061
  %v9063 = vrot.slane %v8758, 1
  %v9064 = vrot.slane %v8760, 1
  %v9065 = vsel %vm9053, %v9063, %v9064
  %v9066 = vrot.slane %v8766, 1
  %v9067 = vrot.slane %v8768, 1
  %v9068 = vsel %vm9053, %v9066, %v9067
  %v9069 = vrot.slane %v8774, 1
  %v9070 = vrot.slane %v8776, 1
  %v9071 = vsel %vm9053, %v9069, %v9070
  %v9072 = vrot.slane %v8782, 1
  %v9073 = vrot.slane %v8784, 1
  %v9074 = vsel %vm9053, %v9072, %v9073
  %v9075 = vrot.slane %v8790, 1
  %v9076 = vrot.slane %v8792, 1
  %v9077 = vsel %vm9053, %v9075, %v9076
  %v9078 = vrot.slane %v8806, 1
  %v9079 = vrot.slane %v8808, 1
  %v9080 = vsel %vm9053, %v9078, %v9079
  %v9081 = vrot.slane %v8814, 1
  %v9082 = vrot.slane %v8816, 1
  %v9083 = vsel %vm9053, %v9081, %v9082
  %v9084 = vrot.slane %v8822, 1
  %v9085 = vrot.slane %v8824, 1
  %v9086 = vsel %vm9053, %v9084, %v9085
  %v9087 = vrot.slane %v8830, 1
  %v9088 = vrot.slane %v8832, 1
  %v9089 = vsel %vm9053, %v9087, %v9088
  %v9090 = vrot.slane %v8838, 1
  %v9091 = vrot.slane %v8840, 1
  %v9092 = vsel %vm9053, %v9090, %v9091
  %v9093 = vrot.slane %v8846, 1
  %v9094 = vrot.slane %v8848, 1
  %v9095 = vsel %vm9053, %v9093, %v9094
  %v9096 = vrot.slane %v8854, 1
  %v9097 = vrot.slane %v8856, 1
  %v9098 = vsel %vm9053, %v9096, %v9097
  %v9099 = vrot.slane %v8862, 1
  %v9100 = vrot.slane %v8864, 1
  %v9101 = vsel %vm9053, %v9099, %v9100
  %v9134 = vrot.slane %v8878, 1
  %v9135 = vrot.slane %v8880, 1
  %v9136 = vsel %vm9053, %v9134, %v9135
  %v9137 = vrot.slane %v8886, 1
  %v9138 = vrot.slane %v8888, 1
  %v9139 = vsel %vm9053, %v9137, %v9138
  %v9140 = vrot.slane %v8894, 1
  %v9141 = vrot.slane %v8896, 1
  %v9142 = vsel %vm9053, %v9140, %v9141
  %v9143 = vrot.slane %v8902, 1
  %v9144 = vrot.slane %v8904, 1
  %v9145 = vsel %vm9053, %v9143, %v9144
  %v9146 = vrot.slane %v8910, 1
  %v9147 = vrot.slane %v8912, 1
  %v9148 = vsel %vm9053, %v9146, %v9147
  %v9149 = vrot.slane %v8918, 1
  %v9150 = vrot.slane %v8920, 1
  %v9151 = vsel %vm9053, %v9149, %v9150
  %v9152 = vrot.slane %v8926, 1
  %v9153 = vrot.slane %v8928, 1
  %v9154 = vsel %vm9053, %v9152, %v9153
  %v9155 = vrot.slane %v8934, 1
  %v9156 = vrot.slane %v8936, 1
  %v9157 = vsel %vm9053, %v9155, %v9156
  %v9158 = vrot.slane %v8950, 1
  %v9159 = vrot.slane %v8952, 1
  %v9160 = vsel %vm9053, %v9158, %v9159
  %v9161 = vrot.slane %v8958, 1
  %v9162 = vrot.slane %v8960, 1
  %v9163 = vsel %vm9053, %v9161, %v9162
  %v9164 = vrot.slane %v8966, 1
  %v9165 = vrot.slane %v8968, 1
  %v9166 = vsel %vm9053, %v9164, %v9165
  %v9167 = vrot.slane %v8974, 1
  %v9168 = vrot.slane %v8976, 1
  %v9169 = vsel %vm9053, %v9167, %v9168
  %v9170 = vrot.slane %v8982, 1
  %v9171 = vrot.slane %v8984, 1
  %v9172 = vsel %vm9053, %v9170, %v9171
  %v9173 = vrot.slane %v8990, 1
  %v9174 = vrot.slane %v8992, 1
  %v9175 = vsel %vm9053, %v9173, %v9174
  %v9176 = vrot.slane %v8998, 1
  %v9177 = vrot.slane %v9000, 1
  %v9178 = vsel %vm9053, %v9176, %v9177
  %v9179 = vrot.slane %v9006, 1
  %v9180 = vrot.slane %v9008, 1
  %v9181 = vsel %vm9053, %v9179, %v9180
  %v9214 = vrot.slane %v8738, 1
  %v9215 = vrot.slane %v8740, 1
  %v9216 = vsel %vm9053, %v9214, %v9215
  %v9217 = vrot.slane %v8746, 1
  %v9218 = vrot.slane %v8748, 1
  %v9219 = vsel %vm9053, %v9217, %v9218
  %v9220 = vrot.slane %v8754, 1
  %v9221 = vrot.slane %v8756, 1
  %v9222 = vsel %vm9053, %v9220, %v9221
  %v9223 = vrot.slane %v8762, 1
  %v9224 = vrot.slane %v8764, 1
  %v9225 = vsel %vm9053, %v9223, %v9224
  %v9226 = vrot.slane %v8770, 1
  %v9227 = vrot.slane %v8772, 1
  %v9228 = vsel %vm9053, %v9226, %v9227
  %v9229 = vrot.slane %v8778, 1
  %v9230 = vrot.slane %v8780, 1
  %v9231 = vsel %vm9053, %v9229, %v9230
  %v9232 = vrot.slane %v8786, 1
  %v9233 = vrot.slane %v8788, 1
  %v9234 = vsel %vm9053, %v9232, %v9233
  %v9235 = vrot.slane %v8794, 1
  %v9236 = vrot.slane %v8796, 1
  %v9237 = vsel %vm9053, %v9235, %v9236
  %v9238 = vrot.slane %v8810, 1
  %v9239 = vrot.slane %v8812, 1
  %v9240 = vsel %vm9053, %v9238, %v9239
  %v9241 = vrot.slane %v8818, 1
  %v9242 = vrot.slane %v8820, 1
  %v9243 = vsel %vm9053, %v9241, %v9242
  %v9244 = vrot.slane %v8826, 1
  %v9245 = vrot.slane %v8828, 1
  %v9246 = vsel %vm9053, %v9244, %v9245
  %v9247 = vrot.slane %v8834, 1
  %v9248 = vrot.slane %v8836, 1
  %v9249 = vsel %vm9053, %v9247, %v9248
  %v9250 = vrot.slane %v8842, 1
  %v9251 = vrot.slane %v8844, 1
  %v9252 = vsel %vm9053, %v9250, %v9251
  %v9253 = vrot.slane %v8850, 1
  %v9254 = vrot.slane %v8852, 1
  %v9255 = vsel %vm9053, %v9253, %v9254
  %v9256 = vrot.slane %v8858, 1
  %v9257 = vrot.slane %v8860, 1
  %v9258 = vsel %vm9053, %v9256, %v9257
  %v9259 = vrot.slane %v8866, 1
  %v9260 = vrot.slane %v8868, 1
  %v9261 = vsel %vm9053, %v9259, %v9260
  %v9294 = vrot.slane %v8882, 1
  %v9295 = vrot.slane %v8884, 1
  %v9296 = vsel %vm9053, %v9294, %v9295
  %v9297 = vrot.slane %v8890, 1
  %v9298 = vrot.slane %v8892, 1
  %v9299 = vsel %vm9053, %v9297, %v9298
  %v9300 = vrot.slane %v8898, 1
  %v9301 = vrot.slane %v8900, 1
  %v9302 = vsel %vm9053, %v9300, %v9301
  %v9303 = vrot.slane %v8906, 1
  %v9304 = vrot.slane %v8908, 1
  %v9305 = vsel %vm9053, %v9303, %v9304
  %v9306 = vrot.slane %v8914, 1
  %v9307 = vrot.slane %v8916, 1
  %v9308 = vsel %vm9053, %v9306, %v9307
  %v9309 = vrot.slane %v8922, 1
  %v9310 = vrot.slane %v8924, 1
  %v9311 = vsel %vm9053, %v9309, %v9310
  %v9312 = vrot.slane %v8930, 1
  %v9313 = vrot.slane %v8932, 1
  %v9314 = vsel %vm9053, %v9312, %v9313
  %v9315 = vrot.slane %v8938, 1
  %v9316 = vrot.slane %v8940, 1
  %v9317 = vsel %vm9053, %v9315, %v9316
  %v9318 = vrot.slane %v8954, 1
  %v9319 = vrot.slane %v8956, 1
  %v9320 = vsel %vm9053, %v9318, %v9319
  %v9321 = vrot.slane %v8962, 1
  %v9322 = vrot.slane %v8964, 1
  %v9323 = vsel %vm9053, %v9321, %v9322
  %v9324 = vrot.slane %v8970, 1
  %v9325 = vrot.slane %v8972, 1
  %v9326 = vsel %vm9053, %v9324, %v9325
  %v9327 = vrot.slane %v8978, 1
  %v9328 = vrot.slane %v8980, 1
  %v9329 = vsel %vm9053, %v9327, %v9328
  %v9330 = vrot.slane %v8986, 1
  %v9331 = vrot.slane %v8988, 1
  %v9332 = vsel %vm9053, %v9330, %v9331
  %v9333 = vrot.slane %v8994, 1
  %v9334 = vrot.slane %v8996, 1
  %v9335 = vsel %vm9053, %v9333, %v9334
  %v9336 = vrot.slane %v9002, 1
  %v9337 = vrot.slane %v9004, 1
  %v9338 = vsel %vm9053, %v9336, %v9337
  %v9339 = vrot.slane %v9010, 1
  %v9340 = vrot.slane %v9012, 1
  %v9341 = vsel %vm9053, %v9339, %v9340
  %v9346 = vrot.slane %v8798, 1
  %v9347 = vrot.slane %v8800, 1
  %v9348 = vsel %vm9053, %v9346, %v9347
  %v9349 = vrot.slane %v8870, 1
  %v9350 = vrot.slane %v8872, 1
  %v9351 = vsel %vm9053, %v9349, %v9350
  %v9356 = vrot.slane %v8942, 1
  %v9357 = vrot.slane %v8944, 1
  %v9358 = vsel %vm9053, %v9356, %v9357
  %v9359 = vrot.slane %v9014, 1
  %v9360 = vrot.slane %v9016, 1
  %v9361 = vsel %vm9053, %v9359, %v9360
  %v9366 = vrot.slane %v8802, 1
  %v9367 = vrot.slane %v8804, 1
  %v9368 = vsel %vm9053, %v9366, %v9367
  %v9369 = vrot.slane %v8874, 1
  %v9370 = vrot.slane %v8876, 1
  %v9371 = vsel %vm9053, %v9369, %v9370
  %v9376 = vrot.slane %v8946, 1
  %v9377 = vrot.slane %v8948, 1
  %v9378 = vsel %vm9053, %v9376, %v9377
  %v9379 = vrot.slane %v9018, 1
  %v9380 = vrot.slane %v9020, 1
  %v9381 = vsel %vm9053, %v9379, %v9380
  %9382 = vrot.lane.b32.xlu0 %v8878, 8
  %v9383 = vpop.permute.xlu0 %9382
  %9384 = vrot.lane.b32.xlu0 %v8886, 8
  %v9385 = vpop.permute.xlu0 %9384
  %9386 = vrot.lane.b32.xlu0 %v8894, 8
  %v9387 = vpop.permute.xlu0 %9386
  %9388 = vrot.lane.b32.xlu0 %v8902, 8
  %v9389 = vpop.permute.xlu0 %9388
  %9390 = vrot.lane.b32.xlu0 %v8910, 8
  %v9391 = vpop.permute.xlu0 %9390
  %9392 = vrot.lane.b32.xlu0 %v8918, 8
  %v9393 = vpop.permute.xlu0 %9392
  %9394 = vrot.lane.b32.xlu0 %v8926, 8
  %v9395 = vpop.permute.xlu0 %9394
  %9396 = vrot.lane.b32.xlu0 %v8934, 8
  %v9397 = vpop.permute.xlu0 %9396
  %9398 = vrot.lane.b32.xlu0 %v8950, 8
  %v9399 = vpop.permute.xlu0 %9398
  %9400 = vrot.lane.b32.xlu0 %v8958, 8
  %v9401 = vpop.permute.xlu0 %9400
  %9402 = vrot.lane.b32.xlu0 %v8966, 8
  %v9403 = vpop.permute.xlu0 %9402
  %9404 = vrot.lane.b32.xlu0 %v8974, 8
  %v9405 = vpop.permute.xlu0 %9404
  %9406 = vrot.lane.b32.xlu0 %v8982, 8
  %v9407 = vpop.permute.xlu0 %9406
  %9408 = vrot.lane.b32.xlu0 %v8990, 8
  %v9409 = vpop.permute.xlu0 %9408
  %9410 = vrot.lane.b32.xlu0 %v8998, 8
  %v9411 = vpop.permute.xlu0 %9410
  %9412 = vrot.lane.b32.xlu0 %v9006, 8
  %v9413 = vpop.permute.xlu0 %9412
  %9430 = vrot.lane.b32.xlu0 %v9056, 16
  %v9431 = vpop.permute.xlu0 %9430
  %9432 = vrot.lane.b32.xlu0 %v9059, 16
  %v9433 = vpop.permute.xlu0 %9432
  %9434 = vrot.lane.b32.xlu0 %v9062, 16
  %v9435 = vpop.permute.xlu0 %9434
  %9436 = vrot.lane.b32.xlu0 %v9065, 16
  %v9437 = vpop.permute.xlu0 %9436
  %9438 = vrot.lane.b32.xlu0 %v9068, 16
  %v9439 = vpop.permute.xlu0 %9438
  %9440 = vrot.lane.b32.xlu0 %v9071, 16
  %v9441 = vpop.permute.xlu0 %9440
  %9442 = vrot.lane.b32.xlu0 %v9074, 16
  %v9443 = vpop.permute.xlu0 %9442
  %9444 = vrot.lane.b32.xlu0 %v9077, 16
  %v9445 = vpop.permute.xlu0 %9444
  %9446 = vrot.lane.b32.xlu0 %v9080, 16
  %v9447 = vpop.permute.xlu0 %9446
  %9448 = vrot.lane.b32.xlu0 %v9083, 16
  %v9449 = vpop.permute.xlu0 %9448
  %9450 = vrot.lane.b32.xlu0 %v9086, 16
  %v9451 = vpop.permute.xlu0 %9450
  %9452 = vrot.lane.b32.xlu0 %v9089, 16
  %v9453 = vpop.permute.xlu0 %9452
  %9454 = vrot.lane.b32.xlu0 %v9092, 16
  %v9455 = vpop.permute.xlu0 %9454
  %9456 = vrot.lane.b32.xlu0 %v9095, 16
  %v9457 = vpop.permute.xlu0 %9456
  %9458 = vrot.lane.b32.xlu0 %v9098, 16
  %v9459 = vpop.permute.xlu0 %9458
  %9460 = vrot.lane.b32.xlu0 %v9101, 16
  %v9461 = vpop.permute.xlu0 %9460
  %9478 = vrot.lane.b32.xlu0 %v9136, 24
  %v9479 = vpop.permute.xlu0 %9478
  %9480 = vrot.lane.b32.xlu0 %v9139, 24
  %v9481 = vpop.permute.xlu0 %9480
  %9482 = vrot.lane.b32.xlu0 %v9142, 24
  %v9483 = vpop.permute.xlu0 %9482
  %9484 = vrot.lane.b32.xlu0 %v9145, 24
  %v9485 = vpop.permute.xlu0 %9484
  %9486 = vrot.lane.b32.xlu0 %v9148, 24
  %v9487 = vpop.permute.xlu0 %9486
  %9488 = vrot.lane.b32.xlu0 %v9151, 24
  %v9489 = vpop.permute.xlu0 %9488
  %9490 = vrot.lane.b32.xlu0 %v9154, 24
  %v9491 = vpop.permute.xlu0 %9490
  %9492 = vrot.lane.b32.xlu0 %v9157, 24
  %v9493 = vpop.permute.xlu0 %9492
  %9494 = vrot.lane.b32.xlu0 %v9160, 24
  %v9495 = vpop.permute.xlu0 %9494
  %9496 = vrot.lane.b32.xlu0 %v9163, 24
  %v9497 = vpop.permute.xlu0 %9496
  %9498 = vrot.lane.b32.xlu0 %v9166, 24
  %v9499 = vpop.permute.xlu0 %9498
  %9500 = vrot.lane.b32.xlu0 %v9169, 24
  %v9501 = vpop.permute.xlu0 %9500
  %9502 = vrot.lane.b32.xlu0 %v9172, 24
  %v9503 = vpop.permute.xlu0 %9502
  %9504 = vrot.lane.b32.xlu0 %v9175, 24
  %v9505 = vpop.permute.xlu0 %9504
  %9506 = vrot.lane.b32.xlu0 %v9178, 24
  %v9507 = vpop.permute.xlu0 %9506
  %9508 = vrot.lane.b32.xlu0 %v9181, 24
  %v9509 = vpop.permute.xlu0 %9508
  %9526 = vrot.lane.b32.xlu0 %v8738, 32
  %v9527 = vpop.permute.xlu0 %9526
  %9528 = vrot.lane.b32.xlu0 %v8746, 32
  %v9529 = vpop.permute.xlu0 %9528
  %9530 = vrot.lane.b32.xlu0 %v8754, 32
  %v9531 = vpop.permute.xlu0 %9530
  %9532 = vrot.lane.b32.xlu0 %v8762, 32
  %v9533 = vpop.permute.xlu0 %9532
  %9534 = vrot.lane.b32.xlu0 %v8770, 32
  %v9535 = vpop.permute.xlu0 %9534
  %9536 = vrot.lane.b32.xlu0 %v8778, 32
  %v9537 = vpop.permute.xlu0 %9536
  %9538 = vrot.lane.b32.xlu0 %v8786, 32
  %v9539 = vpop.permute.xlu0 %9538
  %9540 = vrot.lane.b32.xlu0 %v8794, 32
  %v9541 = vpop.permute.xlu0 %9540
  %9542 = vrot.lane.b32.xlu0 %v8810, 32
  %v9543 = vpop.permute.xlu0 %9542
  %9544 = vrot.lane.b32.xlu0 %v8818, 32
  %v9545 = vpop.permute.xlu0 %9544
  %9546 = vrot.lane.b32.xlu0 %v8826, 32
  %v9547 = vpop.permute.xlu0 %9546
  %9548 = vrot.lane.b32.xlu0 %v8834, 32
  %v9549 = vpop.permute.xlu0 %9548
  %9550 = vrot.lane.b32.xlu0 %v8842, 32
  %v9551 = vpop.permute.xlu0 %9550
  %9552 = vrot.lane.b32.xlu0 %v8850, 32
  %v9553 = vpop.permute.xlu0 %9552
  %9554 = vrot.lane.b32.xlu0 %v8858, 32
  %v9555 = vpop.permute.xlu0 %9554
  %9556 = vrot.lane.b32.xlu0 %v8866, 32
  %v9557 = vpop.permute.xlu0 %9556
  %9574 = vrot.lane.b32.xlu0 %v8882, 40
  %v9575 = vpop.permute.xlu0 %9574
  %9576 = vrot.lane.b32.xlu0 %v8890, 40
  %v9577 = vpop.permute.xlu0 %9576
  %9578 = vrot.lane.b32.xlu0 %v8898, 40
  %v9579 = vpop.permute.xlu0 %9578
  %9580 = vrot.lane.b32.xlu0 %v8906, 40
  %v9581 = vpop.permute.xlu0 %9580
  %9582 = vrot.lane.b32.xlu0 %v8914, 40
  %v9583 = vpop.permute.xlu0 %9582
  %9584 = vrot.lane.b32.xlu0 %v8922, 40
  %v9585 = vpop.permute.xlu0 %9584
  %9586 = vrot.lane.b32.xlu0 %v8930, 40
  %v9587 = vpop.permute.xlu0 %9586
  %9588 = vrot.lane.b32.xlu0 %v8938, 40
  %v9589 = vpop.permute.xlu0 %9588
  %9590 = vrot.lane.b32.xlu0 %v8954, 40
  %v9591 = vpop.permute.xlu0 %9590
  %9592 = vrot.lane.b32.xlu0 %v8962, 40
  %v9593 = vpop.permute.xlu0 %9592
  %9594 = vrot.lane.b32.xlu0 %v8970, 40
  %v9595 = vpop.permute.xlu0 %9594
  %9596 = vrot.lane.b32.xlu0 %v8978, 40
  %v9597 = vpop.permute.xlu0 %9596
  %9598 = vrot.lane.b32.xlu0 %v8986, 40
  %v9599 = vpop.permute.xlu0 %9598
  %9600 = vrot.lane.b32.xlu0 %v8994, 40
  %v9601 = vpop.permute.xlu0 %9600
  %9602 = vrot.lane.b32.xlu0 %v9002, 40
  %v9603 = vpop.permute.xlu0 %9602
  %9604 = vrot.lane.b32.xlu0 %v9010, 40
  %v9605 = vpop.permute.xlu0 %9604
  %9622 = vrot.lane.b32.xlu0 %v9216, 48
  %v9623 = vpop.permute.xlu0 %9622
  %9624 = vrot.lane.b32.xlu0 %v9219, 48
  %v9625 = vpop.permute.xlu0 %9624
  %9626 = vrot.lane.b32.xlu0 %v9222, 48
  %v9627 = vpop.permute.xlu0 %9626
  %9628 = vrot.lane.b32.xlu0 %v9225, 48
  %v9629 = vpop.permute.xlu0 %9628
  %9630 = vrot.lane.b32.xlu0 %v9228, 48
  %v9631 = vpop.permute.xlu0 %9630
  %9632 = vrot.lane.b32.xlu0 %v9231, 48
  %v9633 = vpop.permute.xlu0 %9632
  %9634 = vrot.lane.b32.xlu0 %v9234, 48
  %v9635 = vpop.permute.xlu0 %9634
  %9636 = vrot.lane.b32.xlu0 %v9237, 48
  %v9637 = vpop.permute.xlu0 %9636
  %9638 = vrot.lane.b32.xlu0 %v9240, 48
  %v9639 = vpop.permute.xlu0 %9638
  %9640 = vrot.lane.b32.xlu0 %v9243, 48
  %v9641 = vpop.permute.xlu0 %9640
  %9642 = vrot.lane.b32.xlu0 %v9246, 48
  %v9643 = vpop.permute.xlu0 %9642
  %9644 = vrot.lane.b32.xlu0 %v9249, 48
  %v9645 = vpop.permute.xlu0 %9644
  %9646 = vrot.lane.b32.xlu0 %v9252, 48
  %v9647 = vpop.permute.xlu0 %9646
  %9648 = vrot.lane.b32.xlu0 %v9255, 48
  %v9649 = vpop.permute.xlu0 %9648
  %9650 = vrot.lane.b32.xlu0 %v9258, 48
  %v9651 = vpop.permute.xlu0 %9650
  %9652 = vrot.lane.b32.xlu0 %v9261, 48
  %v9653 = vpop.permute.xlu0 %9652
  %9670 = vrot.lane.b32.xlu0 %v9296, 56
  %v9671 = vpop.permute.xlu0 %9670
  %9672 = vrot.lane.b32.xlu0 %v9299, 56
  %v9673 = vpop.permute.xlu0 %9672
  %9674 = vrot.lane.b32.xlu0 %v9302, 56
  %v9675 = vpop.permute.xlu0 %9674
  %9676 = vrot.lane.b32.xlu0 %v9305, 56
  %v9677 = vpop.permute.xlu0 %9676
  %9678 = vrot.lane.b32.xlu0 %v9308, 56
  %v9679 = vpop.permute.xlu0 %9678
  %9680 = vrot.lane.b32.xlu0 %v9311, 56
  %v9681 = vpop.permute.xlu0 %9680
  %9682 = vrot.lane.b32.xlu0 %v9314, 56
  %v9683 = vpop.permute.xlu0 %9682
  %9684 = vrot.lane.b32.xlu0 %v9317, 56
  %v9685 = vpop.permute.xlu0 %9684
  %9686 = vrot.lane.b32.xlu0 %v9320, 56
  %v9687 = vpop.permute.xlu0 %9686
  %9688 = vrot.lane.b32.xlu0 %v9323, 56
  %v9689 = vpop.permute.xlu0 %9688
  %9690 = vrot.lane.b32.xlu0 %v9326, 56
  %v9691 = vpop.permute.xlu0 %9690
  %9692 = vrot.lane.b32.xlu0 %v9329, 56
  %v9693 = vpop.permute.xlu0 %9692
  %9694 = vrot.lane.b32.xlu0 %v9332, 56
  %v9695 = vpop.permute.xlu0 %9694
  %9696 = vrot.lane.b32.xlu0 %v9335, 56
  %v9697 = vpop.permute.xlu0 %9696
  %9698 = vrot.lane.b32.xlu0 %v9338, 56
  %v9699 = vpop.permute.xlu0 %9698
  %9700 = vrot.lane.b32.xlu0 %v9341, 56
  %v9701 = vpop.permute.xlu0 %9700
  %9718 = vrot.lane.b32.xlu0 %v8742, 64
  %v9719 = vpop.permute.xlu0 %9718
  %9720 = vrot.lane.b32.xlu0 %v8750, 64
  %v9721 = vpop.permute.xlu0 %9720
  %9722 = vrot.lane.b32.xlu0 %v8758, 64
  %v9723 = vpop.permute.xlu0 %9722
  %9724 = vrot.lane.b32.xlu0 %v8766, 64
  %v9725 = vpop.permute.xlu0 %9724
  %9726 = vrot.lane.b32.xlu0 %v8774, 64
  %v9727 = vpop.permute.xlu0 %9726
  %9728 = vrot.lane.b32.xlu0 %v8782, 64
  %v9729 = vpop.permute.xlu0 %9728
  %9730 = vrot.lane.b32.xlu0 %v8790, 64
  %v9731 = vpop.permute.xlu0 %9730
  %9732 = vrot.lane.b32.xlu0 %v8798, 64
  %v9733 = vpop.permute.xlu0 %9732
  %9734 = vrot.lane.b32.xlu0 %v8814, 64
  %v9735 = vpop.permute.xlu0 %9734
  %9736 = vrot.lane.b32.xlu0 %v8822, 64
  %v9737 = vpop.permute.xlu0 %9736
  %9738 = vrot.lane.b32.xlu0 %v8830, 64
  %v9739 = vpop.permute.xlu0 %9738
  %9740 = vrot.lane.b32.xlu0 %v8838, 64
  %v9741 = vpop.permute.xlu0 %9740
  %9742 = vrot.lane.b32.xlu0 %v8846, 64
  %v9743 = vpop.permute.xlu0 %9742
  %9744 = vrot.lane.b32.xlu0 %v8854, 64
  %v9745 = vpop.permute.xlu0 %9744
  %9746 = vrot.lane.b32.xlu0 %v8862, 64
  %v9747 = vpop.permute.xlu0 %9746
  %9748 = vrot.lane.b32.xlu0 %v8870, 64
  %v9749 = vpop.permute.xlu0 %9748
  %9766 = vrot.lane.b32.xlu0 %v8886, 72
  %v9767 = vpop.permute.xlu0 %9766
  %9768 = vrot.lane.b32.xlu0 %v8894, 72
  %v9769 = vpop.permute.xlu0 %9768
  %9770 = vrot.lane.b32.xlu0 %v8902, 72
  %v9771 = vpop.permute.xlu0 %9770
  %9772 = vrot.lane.b32.xlu0 %v8910, 72
  %v9773 = vpop.permute.xlu0 %9772
  %9774 = vrot.lane.b32.xlu0 %v8918, 72
  %v9775 = vpop.permute.xlu0 %9774
  %9776 = vrot.lane.b32.xlu0 %v8926, 72
  %v9777 = vpop.permute.xlu0 %9776
  %9778 = vrot.lane.b32.xlu0 %v8934, 72
  %v9779 = vpop.permute.xlu0 %9778
  %9780 = vrot.lane.b32.xlu0 %v8942, 72
  %v9781 = vpop.permute.xlu0 %9780
  %9782 = vrot.lane.b32.xlu0 %v8958, 72
  %v9783 = vpop.permute.xlu0 %9782
  %9784 = vrot.lane.b32.xlu0 %v8966, 72
  %v9785 = vpop.permute.xlu0 %9784
  %9786 = vrot.lane.b32.xlu0 %v8974, 72
  %v9787 = vpop.permute.xlu0 %9786
  %9788 = vrot.lane.b32.xlu0 %v8982, 72
  %v9789 = vpop.permute.xlu0 %9788
  %9790 = vrot.lane.b32.xlu0 %v8990, 72
  %v9791 = vpop.permute.xlu0 %9790
  %9792 = vrot.lane.b32.xlu0 %v8998, 72
  %v9793 = vpop.permute.xlu0 %9792
  %9794 = vrot.lane.b32.xlu0 %v9006, 72
  %v9795 = vpop.permute.xlu0 %9794
  %9796 = vrot.lane.b32.xlu0 %v9014, 72
  %v9797 = vpop.permute.xlu0 %9796
  %9814 = vrot.lane.b32.xlu0 %v9059, 80
  %v9815 = vpop.permute.xlu0 %9814
  %9816 = vrot.lane.b32.xlu0 %v9062, 80
  %v9817 = vpop.permute.xlu0 %9816
  %9818 = vrot.lane.b32.xlu0 %v9065, 80
  %v9819 = vpop.permute.xlu0 %9818
  %9820 = vrot.lane.b32.xlu0 %v9068, 80
  %v9821 = vpop.permute.xlu0 %9820
  %9822 = vrot.lane.b32.xlu0 %v9071, 80
  %v9823 = vpop.permute.xlu0 %9822
  %9824 = vrot.lane.b32.xlu0 %v9074, 80
  %v9825 = vpop.permute.xlu0 %9824
  %9826 = vrot.lane.b32.xlu0 %v9077, 80
  %v9827 = vpop.permute.xlu0 %9826
  %9828 = vrot.lane.b32.xlu0 %v9348, 80
  %v9829 = vpop.permute.xlu0 %9828
  %9830 = vrot.lane.b32.xlu0 %v9083, 80
  %v9831 = vpop.permute.xlu0 %9830
  %9832 = vrot.lane.b32.xlu0 %v9086, 80
  %v9833 = vpop.permute.xlu0 %9832
  %9834 = vrot.lane.b32.xlu0 %v9089, 80
  %v9835 = vpop.permute.xlu0 %9834
  %9836 = vrot.lane.b32.xlu0 %v9092, 80
  %v9837 = vpop.permute.xlu0 %9836
  %9838 = vrot.lane.b32.xlu0 %v9095, 80
  %v9839 = vpop.permute.xlu0 %9838
  %9840 = vrot.lane.b32.xlu0 %v9098, 80
  %v9841 = vpop.permute.xlu0 %9840
  %9842 = vrot.lane.b32.xlu0 %v9101, 80
  %v9843 = vpop.permute.xlu0 %9842
  %9844 = vrot.lane.b32.xlu0 %v9351, 80
  %v9845 = vpop.permute.xlu0 %9844
  %9862 = vrot.lane.b32.xlu0 %v9139, 88
  %v9863 = vpop.permute.xlu0 %9862
  %9864 = vrot.lane.b32.xlu0 %v9142, 88
  %v9865 = vpop.permute.xlu0 %9864
  %9866 = vrot.lane.b32.xlu0 %v9145, 88
  %v9867 = vpop.permute.xlu0 %9866
  %9868 = vrot.lane.b32.xlu0 %v9148, 88
  %v9869 = vpop.permute.xlu0 %9868
  %9870 = vrot.lane.b32.xlu0 %v9151, 88
  %v9871 = vpop.permute.xlu0 %9870
  %9872 = vrot.lane.b32.xlu0 %v9154, 88
  %v9873 = vpop.permute.xlu0 %9872
  %9874 = vrot.lane.b32.xlu0 %v9157, 88
  %v9875 = vpop.permute.xlu0 %9874
  %9876 = vrot.lane.b32.xlu0 %v9358, 88
  %v9877 = vpop.permute.xlu0 %9876
  %9878 = vrot.lane.b32.xlu0 %v9163, 88
  %v9879 = vpop.permute.xlu0 %9878
  %9880 = vrot.lane.b32.xlu0 %v9166, 88
  %v9881 = vpop.permute.xlu0 %9880
  %9882 = vrot.lane.b32.xlu0 %v9169, 88
  %v9883 = vpop.permute.xlu0 %9882
  %9884 = vrot.lane.b32.xlu0 %v9172, 88
  %v9885 = vpop.permute.xlu0 %9884
  %9886 = vrot.lane.b32.xlu0 %v9175, 88
  %v9887 = vpop.permute.xlu0 %9886
  %9888 = vrot.lane.b32.xlu0 %v9178, 88
  %v9889 = vpop.permute.xlu0 %9888
  %9890 = vrot.lane.b32.xlu0 %v9181, 88
  %v9891 = vpop.permute.xlu0 %9890
  %9892 = vrot.lane.b32.xlu0 %v9361, 88
  %v9893 = vpop.permute.xlu0 %9892
  %9910 = vrot.lane.b32.xlu0 %v8746, 96
  %v9911 = vpop.permute.xlu0 %9910
  %9912 = vrot.lane.b32.xlu0 %v8754, 96
  %v9913 = vpop.permute.xlu0 %9912
  %9914 = vrot.lane.b32.xlu0 %v8762, 96
  %v9915 = vpop.permute.xlu0 %9914
  %9916 = vrot.lane.b32.xlu0 %v8770, 96
  %v9917 = vpop.permute.xlu0 %9916
  %9918 = vrot.lane.b32.xlu0 %v8778, 96
  %v9919 = vpop.permute.xlu0 %9918
  %9920 = vrot.lane.b32.xlu0 %v8786, 96
  %v9921 = vpop.permute.xlu0 %9920
  %9922 = vrot.lane.b32.xlu0 %v8794, 96
  %v9923 = vpop.permute.xlu0 %9922
  %9924 = vrot.lane.b32.xlu0 %v8802, 96
  %v9925 = vpop.permute.xlu0 %9924
  %9926 = vrot.lane.b32.xlu0 %v8818, 96
  %v9927 = vpop.permute.xlu0 %9926
  %9928 = vrot.lane.b32.xlu0 %v8826, 96
  %v9929 = vpop.permute.xlu0 %9928
  %9930 = vrot.lane.b32.xlu0 %v8834, 96
  %v9931 = vpop.permute.xlu0 %9930
  %9932 = vrot.lane.b32.xlu0 %v8842, 96
  %v9933 = vpop.permute.xlu0 %9932
  %9934 = vrot.lane.b32.xlu0 %v8850, 96
  %v9935 = vpop.permute.xlu0 %9934
  %9936 = vrot.lane.b32.xlu0 %v8858, 96
  %v9937 = vpop.permute.xlu0 %9936
  %9938 = vrot.lane.b32.xlu0 %v8866, 96
  %v9939 = vpop.permute.xlu0 %9938
  %9940 = vrot.lane.b32.xlu0 %v8874, 96
  %v9941 = vpop.permute.xlu0 %9940
  %9958 = vrot.lane.b32.xlu0 %v8890, 104
  %v9959 = vpop.permute.xlu0 %9958
  %9960 = vrot.lane.b32.xlu0 %v8898, 104
  %v9961 = vpop.permute.xlu0 %9960
  %9962 = vrot.lane.b32.xlu0 %v8906, 104
  %v9963 = vpop.permute.xlu0 %9962
  %9964 = vrot.lane.b32.xlu0 %v8914, 104
  %v9965 = vpop.permute.xlu0 %9964
  %9966 = vrot.lane.b32.xlu0 %v8922, 104
  %v9967 = vpop.permute.xlu0 %9966
  %9968 = vrot.lane.b32.xlu0 %v8930, 104
  %v9969 = vpop.permute.xlu0 %9968
  %9970 = vrot.lane.b32.xlu0 %v8938, 104
  %v9971 = vpop.permute.xlu0 %9970
  %9972 = vrot.lane.b32.xlu0 %v8946, 104
  %v9973 = vpop.permute.xlu0 %9972
  %9974 = vrot.lane.b32.xlu0 %v8962, 104
  %v9975 = vpop.permute.xlu0 %9974
  %9976 = vrot.lane.b32.xlu0 %v8970, 104
  %v9977 = vpop.permute.xlu0 %9976
  %9978 = vrot.lane.b32.xlu0 %v8978, 104
  %v9979 = vpop.permute.xlu0 %9978
  %9980 = vrot.lane.b32.xlu0 %v8986, 104
  %v9981 = vpop.permute.xlu0 %9980
  %9982 = vrot.lane.b32.xlu0 %v8994, 104
  %v9983 = vpop.permute.xlu0 %9982
  %9984 = vrot.lane.b32.xlu0 %v9002, 104
  %v9985 = vpop.permute.xlu0 %9984
  %9986 = vrot.lane.b32.xlu0 %v9010, 104
  %v9987 = vpop.permute.xlu0 %9986
  %9988 = vrot.lane.b32.xlu0 %v9018, 104
  %v9989 = vpop.permute.xlu0 %9988
  %10006 = vrot.lane.b32.xlu0 %v9219, 112
  %v10007 = vpop.permute.xlu0 %10006
  %10008 = vrot.lane.b32.xlu0 %v9222, 112
  %v10009 = vpop.permute.xlu0 %10008
  %10010 = vrot.lane.b32.xlu0 %v9225, 112
  %v10011 = vpop.permute.xlu0 %10010
  %10012 = vrot.lane.b32.xlu0 %v9228, 112
  %v10013 = vpop.permute.xlu0 %10012
  %10014 = vrot.lane.b32.xlu0 %v9231, 112
  %v10015 = vpop.permute.xlu0 %10014
  %10016 = vrot.lane.b32.xlu0 %v9234, 112
  %v10017 = vpop.permute.xlu0 %10016
  %10018 = vrot.lane.b32.xlu0 %v9237, 112
  %v10019 = vpop.permute.xlu0 %10018
  %10020 = vrot.lane.b32.xlu0 %v9368, 112
  %v10021 = vpop.permute.xlu0 %10020
  %10022 = vrot.lane.b32.xlu0 %v9243, 112
  %v10023 = vpop.permute.xlu0 %10022
  %10024 = vrot.lane.b32.xlu0 %v9246, 112
  %v10025 = vpop.permute.xlu0 %10024
  %10026 = vrot.lane.b32.xlu0 %v9249, 112
  %v10027 = vpop.permute.xlu0 %10026
  %10028 = vrot.lane.b32.xlu0 %v9252, 112
  %v10029 = vpop.permute.xlu0 %10028
  %10030 = vrot.lane.b32.xlu0 %v9255, 112
  %v10031 = vpop.permute.xlu0 %10030
  %10032 = vrot.lane.b32.xlu0 %v9258, 112
  %v10033 = vpop.permute.xlu0 %10032
  %10034 = vrot.lane.b32.xlu0 %v9261, 112
  %v10035 = vpop.permute.xlu0 %10034
  %10036 = vrot.lane.b32.xlu0 %v9371, 112
  %v10037 = vpop.permute.xlu0 %10036
  %10054 = vrot.lane.b32.xlu0 %v9299, 120
  %v10055 = vpop.permute.xlu0 %10054
  %10056 = vrot.lane.b32.xlu0 %v9302, 120
  %v10057 = vpop.permute.xlu0 %10056
  %10058 = vrot.lane.b32.xlu0 %v9305, 120
  %v10059 = vpop.permute.xlu0 %10058
  %10060 = vrot.lane.b32.xlu0 %v9308, 120
  %v10061 = vpop.permute.xlu0 %10060
  %10062 = vrot.lane.b32.xlu0 %v9311, 120
  %v10063 = vpop.permute.xlu0 %10062
  %10064 = vrot.lane.b32.xlu0 %v9314, 120
  %v10065 = vpop.permute.xlu0 %10064
  %10066 = vrot.lane.b32.xlu0 %v9317, 120
  %v10067 = vpop.permute.xlu0 %10066
  %10068 = vrot.lane.b32.xlu0 %v9378, 120
  %v10069 = vpop.permute.xlu0 %10068
  %10070 = vrot.lane.b32.xlu0 %v9323, 120
  %v10071 = vpop.permute.xlu0 %10070
  %10072 = vrot.lane.b32.xlu0 %v9326, 120
  %v10073 = vpop.permute.xlu0 %10072
  %10074 = vrot.lane.b32.xlu0 %v9329, 120
  %v10075 = vpop.permute.xlu0 %10074
  %10076 = vrot.lane.b32.xlu0 %v9332, 120
  %v10077 = vpop.permute.xlu0 %10076
  %10078 = vrot.lane.b32.xlu0 %v9335, 120
  %v10079 = vpop.permute.xlu0 %10078
  %10080 = vrot.lane.b32.xlu0 %v9338, 120
  %v10081 = vpop.permute.xlu0 %10080
  %10082 = vrot.lane.b32.xlu0 %v9341, 120
  %v10083 = vpop.permute.xlu0 %10082
  %10084 = vrot.lane.b32.xlu0 %v9381, 120
  %v10085 = vpop.permute.xlu0 %10084
  %v10102 = vsel %vm2739, %v8734, %v9383
  %v10103 = vsel %vm2739, %v8742, %v9385
  %v10104 = vsel %vm2739, %v8750, %v9387
  %v10105 = vsel %vm2739, %v8758, %v9389
  %v10106 = vsel %vm2739, %v8766, %v9391
  %v10107 = vsel %vm2739, %v8774, %v9393
  %v10108 = vsel %vm2739, %v8782, %v9395
  %v10109 = vsel %vm2739, %v8790, %v9397
  %v10110 = vsel %vm2739, %v8806, %v9399
  %v10111 = vsel %vm2739, %v8814, %v9401
  %v10112 = vsel %vm2739, %v8822, %v9403
  %v10113 = vsel %vm2739, %v8830, %v9405
  %v10114 = vsel %vm2739, %v8838, %v9407
  %v10115 = vsel %vm2739, %v8846, %v9409
  %v10116 = vsel %vm2739, %v8854, %v9411
  %v10117 = vsel %vm2739, %v8862, %v9413
  %v10118 = vsel %vm2869, %v10102, %v9431
  %v10119 = vsel %vm2869, %v10103, %v9433
  %v10120 = vsel %vm2869, %v10104, %v9435
  %v10121 = vsel %vm2869, %v10105, %v9437
  %v10122 = vsel %vm2869, %v10106, %v9439
  %v10123 = vsel %vm2869, %v10107, %v9441
  %v10124 = vsel %vm2869, %v10108, %v9443
  %v10125 = vsel %vm2869, %v10109, %v9445
  %v10126 = vsel %vm2869, %v10110, %v9447
  %v10127 = vsel %vm2869, %v10111, %v9449
  %v10128 = vsel %vm2869, %v10112, %v9451
  %v10129 = vsel %vm2869, %v10113, %v9453
  %v10130 = vsel %vm2869, %v10114, %v9455
  %v10131 = vsel %vm2869, %v10115, %v9457
  %v10132 = vsel %vm2869, %v10116, %v9459
  %v10133 = vsel %vm2869, %v10117, %v9461
  %v10134 = vsel %vm2999, %v10118, %v9479
  %v10135 = vsel %vm2999, %v10119, %v9481
  %v10136 = vsel %vm2999, %v10120, %v9483
  %v10137 = vsel %vm2999, %v10121, %v9485
  %v10138 = vsel %vm2999, %v10122, %v9487
  %v10139 = vsel %vm2999, %v10123, %v9489
  %v10140 = vsel %vm2999, %v10124, %v9491
  %v10141 = vsel %vm2999, %v10125, %v9493
  %v10142 = vsel %vm2999, %v10126, %v9495
  %v10143 = vsel %vm2999, %v10127, %v9497
  %v10144 = vsel %vm2999, %v10128, %v9499
  %v10145 = vsel %vm2999, %v10129, %v9501
  %v10146 = vsel %vm2999, %v10130, %v9503
  %v10147 = vsel %vm2999, %v10131, %v9505
  %v10148 = vsel %vm2999, %v10132, %v9507
  %v10149 = vsel %vm2999, %v10133, %v9509
  %v10150 = vsel %vm3129, %v10134, %v9527
  %v10151 = vsel %vm3129, %v10135, %v9529
  %v10152 = vsel %vm3129, %v10136, %v9531
  %v10153 = vsel %vm3129, %v10137, %v9533
  %v10154 = vsel %vm3129, %v10138, %v9535
  %v10155 = vsel %vm3129, %v10139, %v9537
  %v10156 = vsel %vm3129, %v10140, %v9539
  %v10157 = vsel %vm3129, %v10141, %v9541
  %v10158 = vsel %vm3129, %v10142, %v9543
  %v10159 = vsel %vm3129, %v10143, %v9545
  %v10160 = vsel %vm3129, %v10144, %v9547
  %v10161 = vsel %vm3129, %v10145, %v9549
  %v10162 = vsel %vm3129, %v10146, %v9551
  %v10163 = vsel %vm3129, %v10147, %v9553
  %v10164 = vsel %vm3129, %v10148, %v9555
  %v10165 = vsel %vm3129, %v10149, %v9557
  %v10166 = vsel %vm7402, %v10150, %v9575
  %v10167 = vsel %vm7402, %v10151, %v9577
  %v10168 = vsel %vm7402, %v10152, %v9579
  %v10169 = vsel %vm7402, %v10153, %v9581
  %v10170 = vsel %vm7402, %v10154, %v9583
  %v10171 = vsel %vm7402, %v10155, %v9585
  %v10172 = vsel %vm7402, %v10156, %v9587
  %v10173 = vsel %vm7402, %v10157, %v9589
  %v10174 = vsel %vm7402, %v10158, %v9591
  %v10175 = vsel %vm7402, %v10159, %v9593
  %v10176 = vsel %vm7402, %v10160, %v9595
  %v10177 = vsel %vm7402, %v10161, %v9597
  %v10178 = vsel %vm7402, %v10162, %v9599
  %v10179 = vsel %vm7402, %v10163, %v9601
  %v10180 = vsel %vm7402, %v10164, %v9603
  %v10181 = vsel %vm7402, %v10165, %v9605
  %v10182 = vsel %vm7467, %v10166, %v9623
  %v10183 = vsel %vm7467, %v10167, %v9625
  %v10184 = vsel %vm7467, %v10168, %v9627
  %v10185 = vsel %vm7467, %v10169, %v9629
  %v10186 = vsel %vm7467, %v10170, %v9631
  %v10187 = vsel %vm7467, %v10171, %v9633
  %v10188 = vsel %vm7467, %v10172, %v9635
  %v10189 = vsel %vm7467, %v10173, %v9637
  %v10190 = vsel %vm7467, %v10174, %v9639
  %v10191 = vsel %vm7467, %v10175, %v9641
  %v10192 = vsel %vm7467, %v10176, %v9643
  %v10193 = vsel %vm7467, %v10177, %v9645
  %v10194 = vsel %vm7467, %v10178, %v9647
  %v10195 = vsel %vm7467, %v10179, %v9649
  %v10196 = vsel %vm7467, %v10180, %v9651
  %v10197 = vsel %vm7467, %v10181, %v9653
  %v10198 = vsel %vm7532, %v10182, %v9671
  %v10199 = vsel %vm7532, %v10183, %v9673
  %v10200 = vsel %vm7532, %v10184, %v9675
  %v10201 = vsel %vm7532, %v10185, %v9677
  %v10202 = vsel %vm7532, %v10186, %v9679
  %v10203 = vsel %vm7532, %v10187, %v9681
  %v10204 = vsel %vm7532, %v10188, %v9683
  %v10205 = vsel %vm7532, %v10189, %v9685
  %v10206 = vsel %vm7532, %v10190, %v9687
  %v10207 = vsel %vm7532, %v10191, %v9689
  %v10208 = vsel %vm7532, %v10192, %v9691
  %v10209 = vsel %vm7532, %v10193, %v9693
  %v10210 = vsel %vm7532, %v10194, %v9695
  %v10211 = vsel %vm7532, %v10195, %v9697
  %v10212 = vsel %vm7532, %v10196, %v9699
  %v10213 = vsel %vm7532, %v10197, %v9701
  %v10214 = vsel %vm7597, %v10198, %v9719
  %v10215 = vsel %vm7597, %v10199, %v9721
  %v10216 = vsel %vm7597, %v10200, %v9723
  %v10217 = vsel %vm7597, %v10201, %v9725
  %v10218 = vsel %vm7597, %v10202, %v9727
  %v10219 = vsel %vm7597, %v10203, %v9729
  %v10220 = vsel %vm7597, %v10204, %v9731
  %v10221 = vsel %vm7597, %v10205, %v9733
  %v10222 = vsel %vm7597, %v10206, %v9735
  %v10223 = vsel %vm7597, %v10207, %v9737
  %v10224 = vsel %vm7597, %v10208, %v9739
  %v10225 = vsel %vm7597, %v10209, %v9741
  %v10226 = vsel %vm7597, %v10210, %v9743
  %v10227 = vsel %vm7597, %v10211, %v9745
  %v10228 = vsel %vm7597, %v10212, %v9747
  %v10229 = vsel %vm7597, %v10213, %v9749
  %v10230 = vsel %vm7737, %v10214, %v9767
  %v10231 = vsel %vm7737, %v10215, %v9769
  %v10232 = vsel %vm7737, %v10216, %v9771
  %v10233 = vsel %vm7737, %v10217, %v9773
  %v10234 = vsel %vm7737, %v10218, %v9775
  %v10235 = vsel %vm7737, %v10219, %v9777
  %v10236 = vsel %vm7737, %v10220, %v9779
  %v10237 = vsel %vm7737, %v10221, %v9781
  %v10238 = vsel %vm7737, %v10222, %v9783
  %v10239 = vsel %vm7737, %v10223, %v9785
  %v10240 = vsel %vm7737, %v10224, %v9787
  %v10241 = vsel %vm7737, %v10225, %v9789
  %v10242 = vsel %vm7737, %v10226, %v9791
  %v10243 = vsel %vm7737, %v10227, %v9793
  %v10244 = vsel %vm7737, %v10228, %v9795
  %v10245 = vsel %vm7737, %v10229, %v9797
  %vm10246 = vcmask 654336
  %v10247 = vsel %vm10246, %v10230, %v9815
  %v10248 = vsel %vm10246, %v10231, %v9817
  %v10249 = vsel %vm10246, %v10232, %v9819
  %v10250 = vsel %vm10246, %v10233, %v9821
  %v10251 = vsel %vm10246, %v10234, %v9823
  %v10252 = vsel %vm10246, %v10235, %v9825
  %v10253 = vsel %vm10246, %v10236, %v9827
  %v10254 = vsel %vm10246, %v10237, %v9829
  %v10255 = vsel %vm10246, %v10238, %v9831
  %v10256 = vsel %vm10246, %v10239, %v9833
  %v10257 = vsel %vm10246, %v10240, %v9835
  %v10258 = vsel %vm10246, %v10241, %v9837
  %v10259 = vsel %vm10246, %v10242, %v9839
  %v10260 = vsel %vm10246, %v10243, %v9841
  %v10261 = vsel %vm10246, %v10244, %v9843
  %v10262 = vsel %vm10246, %v10245, %v9845
  %vm10263 = vcmask 719872
  %v10264 = vsel %vm10263, %v10247, %v9863
  %v10265 = vsel %vm10263, %v10248, %v9865
  %v10266 = vsel %vm10263, %v10249, %v9867
  %v10267 = vsel %vm10263, %v10250, %v9869
  %v10268 = vsel %vm10263, %v10251, %v9871
  %v10269 = vsel %vm10263, %v10252, %v9873
  %v10270 = vsel %vm10263, %v10253, %v9875
  %v10271 = vsel %vm10263, %v10254, %v9877
  %v10272 = vsel %vm10263, %v10255, %v9879
  %v10273 = vsel %vm10263, %v10256, %v9881
  %v10274 = vsel %vm10263, %v10257, %v9883
  %v10275 = vsel %vm10263, %v10258, %v9885
  %v10276 = vsel %vm10263, %v10259, %v9887
  %v10277 = vsel %vm10263, %v10260, %v9889
  %v10278 = vsel %vm10263, %v10261, %v9891
  %v10279 = vsel %vm10263, %v10262, %v9893
  %vm10280 = vcmask 785408
  %v10281 = vsel %vm10280, %v10264, %v9911
  %v10282 = vsel %vm10280, %v10265, %v9913
  %v10283 = vsel %vm10280, %v10266, %v9915
  %v10284 = vsel %vm10280, %v10267, %v9917
  %v10285 = vsel %vm10280, %v10268, %v9919
  %v10286 = vsel %vm10280, %v10269, %v9921
  %v10287 = vsel %vm10280, %v10270, %v9923
  %v10288 = vsel %vm10280, %v10271, %v9925
  %v10289 = vsel %vm10280, %v10272, %v9927
  %v10290 = vsel %vm10280, %v10273, %v9929
  %v10291 = vsel %vm10280, %v10274, %v9931
  %v10292 = vsel %vm10280, %v10275, %v9933
  %v10293 = vsel %vm10280, %v10276, %v9935
  %v10294 = vsel %vm10280, %v10277, %v9937
  %v10295 = vsel %vm10280, %v10278, %v9939
  %v10296 = vsel %vm10280, %v10279, %v9941
  %vm10297 = vcmask 850944
  %v10298 = vsel %vm10297, %v10281, %v9959
  %v10299 = vsel %vm10297, %v10282, %v9961
  %v10300 = vsel %vm10297, %v10283, %v9963
  %v10301 = vsel %vm10297, %v10284, %v9965
  %v10302 = vsel %vm10297, %v10285, %v9967
  %v10303 = vsel %vm10297, %v10286, %v9969
  %v10304 = vsel %vm10297, %v10287, %v9971
  %v10305 = vsel %vm10297, %v10288, %v9973
  %v10306 = vsel %vm10297, %v10289, %v9975
  %v10307 = vsel %vm10297, %v10290, %v9977
  %v10308 = vsel %vm10297, %v10291, %v9979
  %v10309 = vsel %vm10297, %v10292, %v9981
  %v10310 = vsel %vm10297, %v10293, %v9983
  %v10311 = vsel %vm10297, %v10294, %v9985
  %v10312 = vsel %vm10297, %v10295, %v9987
  %v10313 = vsel %vm10297, %v10296, %v9989
  %vm10314 = vcmask 916480
  %v10315 = vsel %vm10314, %v10298, %v10007
  %v10316 = vsel %vm10314, %v10299, %v10009
  %v10317 = vsel %vm10314, %v10300, %v10011
  %v10318 = vsel %vm10314, %v10301, %v10013
  %v10319 = vsel %vm10314, %v10302, %v10015
  %v10320 = vsel %vm10314, %v10303, %v10017
  %v10321 = vsel %vm10314, %v10304, %v10019
  %v10322 = vsel %vm10314, %v10305, %v10021
  %v10323 = vsel %vm10314, %v10306, %v10023
  %v10324 = vsel %vm10314, %v10307, %v10025
  %v10325 = vsel %vm10314, %v10308, %v10027
  %v10326 = vsel %vm10314, %v10309, %v10029
  %v10327 = vsel %vm10314, %v10310, %v10031
  %v10328 = vsel %vm10314, %v10311, %v10033
  %v10329 = vsel %vm10314, %v10312, %v10035
  %v10330 = vsel %vm10314, %v10313, %v10037
  %vm10331 = vcmask 982016
  %v10332 = vsel %vm10331, %v10315, %v10055
  %v10333 = vsel %vm10331, %v10316, %v10057
  %v10334 = vsel %vm10331, %v10317, %v10059
  %v10335 = vsel %vm10331, %v10318, %v10061
  %v10336 = vsel %vm10331, %v10319, %v10063
  %v10337 = vsel %vm10331, %v10320, %v10065
  %v10338 = vsel %vm10331, %v10321, %v10067
  %v10339 = vsel %vm10331, %v10322, %v10069
  %v10340 = vsel %vm10331, %v10323, %v10071
  %v10341 = vsel %vm10331, %v10324, %v10073
  %v10342 = vsel %vm10331, %v10325, %v10075
  %v10343 = vsel %vm10331, %v10326, %v10077
  %v10344 = vsel %vm10331, %v10327, %v10079
  %v10345 = vsel %vm10331, %v10328, %v10081
  %v10346 = vsel %vm10331, %v10329, %v10083
  %v10347 = vsel %vm10331, %v10330, %v10085
  %v10348 = vpack.c.bf16 %v10333, %v10332
  %v10349 = vpack.c.bf16 %v10335, %v10334
  %v10350 = vpack.c.bf16 %v10337, %v10336
  %v10351 = vpack.c.bf16 %v10339, %v10338
  %v10352 = vpack.c.bf16 %v10341, %v10340
  %v10353 = vpack.c.bf16 %v10343, %v10342
  %v10354 = vpack.c.bf16 %v10345, %v10344
  %v10355 = vpack.c.bf16 %v10347, %v10346
  %v10356 = vld [vmem:[%s12] sm:$0xf]
  %v10357 = vld [vmem:[%s12 + $0x4] sm:$0xf]
  %v10358 = vld [vmem:[%s12 + $0x8] sm:$0xf]
  %v10359 = vld [vmem:[%s12 + $0xc] sm:$0xf]
  %v10360 = vld [vmem:[%s12 + $0x10] sm:$0xf]
  %v10361 = vld [vmem:[%s12 + $0x14] sm:$0xf]
  %v10362 = vld [vmem:[%s12 + $0x18] sm:$0xf]
  %v10363 = vld [vmem:[%s12 + $0x1c] sm:$0xf]
  %v10364 = vld [vmem:[%s12 + $0x20] sm:$0xf]
  %v10365 = vld [vmem:[%s12 + $0x24] sm:$0xf]
  %v10366 = vld [vmem:[%s12 + $0x28] sm:$0xf]
  %v10367 = vld [vmem:[%s12 + $0x2c] sm:$0xf]
  %v10368 = vld [vmem:[%s12 + $0x30] sm:$0xf]
  %v10369 = vld [vmem:[%s12 + $0x34] sm:$0xf]
  %v10370 = vld [vmem:[%s12 + $0x38] sm:$0xf]
  %v10371 = vld [vmem:[%s12 + $0x3c] sm:$0xf]
  %v10372 = vld [vmem:[%s13] sm:$0x1]
  %v10374 = vlaneseq
  %v10375 = vshrl.u32 %v10374, 7
  %v10376 = vsub.s32 0, %v10375
  %v10377 = vrot.slane %v10372, %v10376
  %v10395 = vunpack.c.l.b16 %v10356
  %v10396 = vunpack.c.l.b16 %v10357
  %v10397 = vunpack.c.l.b16 %v10358
  %v10398 = vunpack.c.l.b16 %v10359
  %v10399 = vunpack.c.l.b16 %v10360
  %v10400 = vunpack.c.l.b16 %v10361
  %v10401 = vunpack.c.l.b16 %v10362
  %v10402 = vunpack.c.l.b16 %v10363
  %v10403 = vunpack.c.l.b16 %v10364
  %v10404 = vunpack.c.l.b16 %v10365
  %v10405 = vunpack.c.l.b16 %v10366
  %v10406 = vunpack.c.l.b16 %v10367
  %v10407 = vunpack.c.l.b16 %v10368
  %v10408 = vunpack.c.l.b16 %v10369
  %v10409 = vunpack.c.l.b16 %v10370
  %v10410 = vunpack.c.l.b16 %v10371
  %v10411 = vpack.c.b16 %v10396, %v10395
  %v10412 = vpack.c.b16 %v10398, %v10397
  %v10413 = vpack.c.b16 %v10400, %v10399
  %v10414 = vpack.c.b16 %v10402, %v10401
  %v10415 = vpack.c.b16 %v10404, %v10403
  %v10416 = vpack.c.b16 %v10406, %v10405
  %v10417 = vpack.c.b16 %v10408, %v10407
  %v10418 = vpack.c.b16 %v10410, %v10409
  %10427 = vmatprep.subr.bf16.mxu0 0
  %10428 = vmatpush1.bf16.msra.mxu0 %v10411
  %10429 = vmatprep.subr.bf16.mxu0 0
  %10430 = vmatpush1.bf16.msra.mxu0 %v10412
  %10431 = vmatprep.subr.bf16.mxu0 0
  %10432 = vmatpush1.bf16.msra.mxu0 %v10413
  %10433 = vmatprep.subr.bf16.mxu0 0
  %10434 = vmatpush1.bf16.msra.mxu0 %v10414
  %10435 = vmatprep.subr.bf16.mxu0 0
  %10436 = vmatpush1.bf16.msra.mxu0 %v10415
  %10437 = vmatprep.subr.bf16.mxu0 0
  %10438 = vmatpush1.bf16.msra.mxu0 %v10416
  %10439 = vmatprep.subr.bf16.mxu0 0
  %10440 = vmatpush1.bf16.msra.mxu0 %v10417
  %10441 = vmatprep.subr.bf16.mxu0 0
  %10442 = vmatpush1.bf16.msra.mxu0 %v10418
  %10443 = vmatprep.subr.bf16.mxu0 0
  %10444 = vmatpush1.bf16.msra.mxu0 0
  %10445 = vmatprep.subr.bf16.mxu0 0
  %10446 = vmatpush1.bf16.msra.mxu0 0
  %10447 = vmatprep.subr.bf16.mxu0 0
  %10448 = vmatpush1.bf16.msra.mxu0 0
  %10449 = vmatprep.subr.bf16.mxu0 0
  %10450 = vmatpush1.bf16.msra.mxu0 0
  %10451 = vmatprep.subr.bf16.mxu0 0
  %10452 = vmatpush1.bf16.msra.mxu0 0
  %10453 = vmatprep.subr.bf16.mxu0 0
  %10454 = vmatpush1.bf16.msra.mxu0 0
  %10455 = vmatprep.subr.bf16.mxu0 0
  %10456 = vmatpush1.bf16.msra.mxu0 0
  %10457 = vmatprep.subr.bf16.mxu0 0
  %10458 = vmatpush1.bf16.msra.mxu0 0
  %10459 = vmatprep.mubr.bf16.mxu0 0
  %10460 = vmatmul.mubr.bf16.gmra.mrb[0].mxu0 %v10348
  %v10461 = vpop.f32.mrb[0].mxu0
  %v10462 = vadd.f32 %v10377, %v10461
  %v10463 = vpop.f32.mrb[0].mxu0
  %v10464 = vpop.f32.mrb[0].mxu0
  %v10465 = vadd.f32 %v10377, %v10464
  %v10466 = vpop.f32.mrb[0].mxu0
  %10467 = vmatprep.mubr.bf16.mxu0 0
  %10468 = vmatmul.mubr.bf16.gmra.mrb[0].mxu0 %v10349
  %v10469 = vpop.f32.mrb[0].mxu0
  %v10470 = vadd.f32 %v10377, %v10469
  %v10471 = vpop.f32.mrb[0].mxu0
  %v10472 = vpop.f32.mrb[0].mxu0
  %v10473 = vadd.f32 %v10377, %v10472
  %v10474 = vpop.f32.mrb[0].mxu0
  %10475 = vmatprep.mubr.bf16.mxu0 0
  %10476 = vmatmul.mubr.bf16.gmra.mrb[0].mxu0 %v10350
  %v10477 = vpop.f32.mrb[0].mxu0
  %v10478 = vadd.f32 %v10377, %v10477
  %v10479 = vpop.f32.mrb[0].mxu0
  %v10480 = vpop.f32.mrb[0].mxu0
  %v10481 = vadd.f32 %v10377, %v10480
  %v10482 = vpop.f32.mrb[0].mxu0
  %10483 = vmatprep.mubr.bf16.mxu0 0
  %10484 = vmatmul.mubr.bf16.gmra.mrb[0].mxu0 %v10351
  %v10485 = vpop.f32.mrb[0].mxu0
  %v10486 = vadd.f32 %v10377, %v10485
  %v10487 = vpop.f32.mrb[0].mxu0
  %v10488 = vpop.f32.mrb[0].mxu0
  %v10489 = vadd.f32 %v10377, %v10488
  %v10490 = vpop.f32.mrb[0].mxu0
  %10491 = vmatprep.mubr.bf16.mxu0 0
  %10492 = vmatmul.mubr.bf16.gmra.mrb[0].mxu0 %v10352
  %v10493 = vpop.f32.mrb[0].mxu0
  %v10494 = vadd.f32 %v10377, %v10493
  %v10495 = vpop.f32.mrb[0].mxu0
  %v10496 = vpop.f32.mrb[0].mxu0
  %v10497 = vadd.f32 %v10377, %v10496
  %v10498 = vpop.f32.mrb[0].mxu0
  %10499 = vmatprep.mubr.bf16.mxu0 0
  %10500 = vmatmul.mubr.bf16.gmra.mrb[0].mxu0 %v10353
  %v10501 = vpop.f32.mrb[0].mxu0
  %v10502 = vadd.f32 %v10377, %v10501
  %v10503 = vpop.f32.mrb[0].mxu0
  %v10504 = vpop.f32.mrb[0].mxu0
  %v10505 = vadd.f32 %v10377, %v10504
  %v10506 = vpop.f32.mrb[0].mxu0
  %10507 = vmatprep.mubr.bf16.mxu0 0
  %10508 = vmatmul.mubr.bf16.gmra.mrb[0].mxu0 %v10354
  %v10509 = vpop.f32.mrb[0].mxu0
  %v10510 = vadd.f32 %v10377, %v10509
  %v10511 = vpop.f32.mrb[0].mxu0
  %v10512 = vpop.f32.mrb[0].mxu0
  %v10513 = vadd.f32 %v10377, %v10512
  %v10514 = vpop.f32.mrb[0].mxu0
  %10515 = vmatprep.mubr.bf16.mxu0 0
  %10516 = vmatmul.mubr.bf16.gmra.mrb[0].mxu0 %v10355
  %v10517 = vpop.f32.mrb[0].mxu0
  %v10518 = vadd.f32 %v10377, %v10517
  %v10519 = vpop.f32.mrb[0].mxu0
  %v10520 = vpop.f32.mrb[0].mxu0
  %v10521 = vadd.f32 %v10377, %v10520
  %v10522 = vpop.f32.mrb[0].mxu0
  %10523 = vdwg.mxu0
  %v10540 = vrot.slane %v10465, 7
  %vm10541 = vcmask 1041409
  %v10542 = vsel %vm10541, %v10540, %v10462
  %v10543 = vrot.slane %v10470, 6
  %vm10544 = vcmask 1042434
  %v10545 = vsel %vm10544, %v10543, %v10542
  %v10546 = vrot.slane %v10473, 5
  %vm10547 = vcmask 1043459
  %v10548 = vsel %vm10547, %v10546, %v10545
  %v10549 = vrot.slane %v10478, 4
  %vm10550 = vcmask 1044484
  %v10551 = vsel %vm10550, %v10549, %v10548
  %v10552 = vrot.slane %v10481, 3
  %vm10553 = vcmask 1045509
  %v10554 = vsel %vm10553, %v10552, %v10551
  %v10555 = vrot.slane %v10486, 2
  %vm10556 = vcmask 1046534
  %v10557 = vsel %vm10556, %v10555, %v10554
  %v10558 = vrot.slane %v10489, 1
  %vm10559 = vcmask 1047559
  %v10560 = vsel %vm10559, %v10558, %v10557
  %v10561 = vrot.slane %v10497, 7
  %v10562 = vsel %vm10541, %v10561, %v10494
  %v10563 = vrot.slane %v10502, 6
  %v10564 = vsel %vm10544, %v10563, %v10562
  %v10565 = vrot.slane %v10505, 5
  %v10566 = vsel %vm10547, %v10565, %v10564
  %v10567 = vrot.slane %v10510, 4
  %v10568 = vsel %vm10550, %v10567, %v10566
  %v10569 = vrot.slane %v10513, 3
  %v10570 = vsel %vm10553, %v10569, %v10568
  %v10571 = vrot.slane %v10518, 2
  %v10572 = vsel %vm10556, %v10571, %v10570
  %v10573 = vrot.slane %v10521, 1
  %v10574 = vsel %vm10559, %v10573, %v10572
  %v10577 = vrot.slane %v10462, 1
  %v10578 = vsel %vm10541, %v10465, %v10577
  %v10579 = vrot.slane %v10470, 7
  %v10580 = vsel %vm10544, %v10579, %v10578
  %v10581 = vrot.slane %v10473, 6
  %v10582 = vsel %vm10547, %v10581, %v10580
  %v10583 = vrot.slane %v10478, 5
  %v10584 = vsel %vm10550, %v10583, %v10582
  %v10585 = vrot.slane %v10481, 4
  %v10586 = vsel %vm10553, %v10585, %v10584
  %v10587 = vrot.slane %v10486, 3
  %v10588 = vsel %vm10556, %v10587, %v10586
  %v10589 = vrot.slane %v10489, 2
  %v10590 = vsel %vm10559, %v10589, %v10588
  %v10591 = vrot.slane %v10494, 1
  %v10592 = vsel %vm10541, %v10497, %v10591
  %v10593 = vrot.slane %v10502, 7
  %v10594 = vsel %vm10544, %v10593, %v10592
  %v10595 = vrot.slane %v10505, 6
  %v10596 = vsel %vm10547, %v10595, %v10594
  %v10597 = vrot.slane %v10510, 5
  %v10598 = vsel %vm10550, %v10597, %v10596
  %v10599 = vrot.slane %v10513, 4
  %v10600 = vsel %vm10553, %v10599, %v10598
  %v10601 = vrot.slane %v10518, 3
  %v10602 = vsel %vm10556, %v10601, %v10600
  %v10603 = vrot.slane %v10521, 2
  %v10604 = vsel %vm10559, %v10603, %v10602
  %10605 = vrot.lane.b32.xlu0 %v10590, 8
  %v10606 = vpop.permute.xlu0 %10605
  %10607 = vrot.lane.b32.xlu0 %v10604, 8
  %v10608 = vpop.permute.xlu0 %10607
  %v10611 = vrot.slane %v10462, 2
  %v10612 = vrot.slane %v10465, 1
  %v10613 = vsel %vm10541, %v10612, %v10611
  %v10614 = vsel %vm10544, %v10470, %v10613
  %v10615 = vrot.slane %v10473, 7
  %v10616 = vsel %vm10547, %v10615, %v10614
  %v10617 = vrot.slane %v10478, 6
  %v10618 = vsel %vm10550, %v10617, %v10616
  %v10619 = vrot.slane %v10481, 5
  %v10620 = vsel %vm10553, %v10619, %v10618
  %v10621 = vrot.slane %v10486, 4
  %v10622 = vsel %vm10556, %v10621, %v10620
  %v10623 = vrot.slane %v10489, 3
  %v10624 = vsel %vm10559, %v10623, %v10622
  %v10625 = vrot.slane %v10494, 2
  %v10626 = vrot.slane %v10497, 1
  %v10627 = vsel %vm10541, %v10626, %v10625
  %v10628 = vsel %vm10544, %v10502, %v10627
  %v10629 = vrot.slane %v10505, 7
  %v10630 = vsel %vm10547, %v10629, %v10628
  %v10631 = vrot.slane %v10510, 6
  %v10632 = vsel %vm10550, %v10631, %v10630
  %v10633 = vrot.slane %v10513, 5
  %v10634 = vsel %vm10553, %v10633, %v10632
  %v10635 = vrot.slane %v10518, 4
  %v10636 = vsel %vm10556, %v10635, %v10634
  %v10637 = vrot.slane %v10521, 3
  %v10638 = vsel %vm10559, %v10637, %v10636
  %10639 = vrot.lane.b32.xlu0 %v10624, 16
  %v10640 = vpop.permute.xlu0 %10639
  %10641 = vrot.lane.b32.xlu0 %v10638, 16
  %v10642 = vpop.permute.xlu0 %10641
  %v10645 = vrot.slane %v10462, 3
  %v10646 = vrot.slane %v10465, 2
  %v10647 = vsel %vm10541, %v10646, %v10645
  %v10648 = vrot.slane %v10470, 1
  %v10649 = vsel %vm10544, %v10648, %v10647
  %v10650 = vsel %vm10547, %v10473, %v10649
  %v10651 = vrot.slane %v10478, 7
  %v10652 = vsel %vm10550, %v10651, %v10650
  %v10653 = vrot.slane %v10481, 6
  %v10654 = vsel %vm10553, %v10653, %v10652
  %v10655 = vrot.slane %v10486, 5
  %v10656 = vsel %vm10556, %v10655, %v10654
  %v10657 = vrot.slane %v10489, 4
  %v10658 = vsel %vm10559, %v10657, %v10656
  %v10659 = vrot.slane %v10494, 3
  %v10660 = vrot.slane %v10497, 2
  %v10661 = vsel %vm10541, %v10660, %v10659
  %v10662 = vrot.slane %v10502, 1
  %v10663 = vsel %vm10544, %v10662, %v10661
  %v10664 = vsel %vm10547, %v10505, %v10663
  %v10665 = vrot.slane %v10510, 7
  %v10666 = vsel %vm10550, %v10665, %v10664
  %v10667 = vrot.slane %v10513, 6
  %v10668 = vsel %vm10553, %v10667, %v10666
  %v10669 = vrot.slane %v10518, 5
  %v10670 = vsel %vm10556, %v10669, %v10668
  %v10671 = vrot.slane %v10521, 4
  %v10672 = vsel %vm10559, %v10671, %v10670
  %10673 = vrot.lane.b32.xlu0 %v10658, 24
  %v10674 = vpop.permute.xlu0 %10673
  %10675 = vrot.lane.b32.xlu0 %v10672, 24
  %v10676 = vpop.permute.xlu0 %10675
  %v10679 = vrot.slane %v10462, 4
  %v10680 = vrot.slane %v10465, 3
  %v10681 = vsel %vm10541, %v10680, %v10679
  %v10682 = vrot.slane %v10470, 2
  %v10683 = vsel %vm10544, %v10682, %v10681
  %v10684 = vrot.slane %v10473, 1
  %v10685 = vsel %vm10547, %v10684, %v10683
  %v10686 = vsel %vm10550, %v10478, %v10685
  %v10687 = vrot.slane %v10481, 7
  %v10688 = vsel %vm10553, %v10687, %v10686
  %v10689 = vrot.slane %v10486, 6
  %v10690 = vsel %vm10556, %v10689, %v10688
  %v10691 = vrot.slane %v10489, 5
  %v10692 = vsel %vm10559, %v10691, %v10690
  %v10693 = vrot.slane %v10494, 4
  %v10694 = vrot.slane %v10497, 3
  %v10695 = vsel %vm10541, %v10694, %v10693
  %v10696 = vrot.slane %v10502, 2
  %v10697 = vsel %vm10544, %v10696, %v10695
  %v10698 = vrot.slane %v10505, 1
  %v10699 = vsel %vm10547, %v10698, %v10697
  %v10700 = vsel %vm10550, %v10510, %v10699
  %v10701 = vrot.slane %v10513, 7
  %v10702 = vsel %vm10553, %v10701, %v10700
  %v10703 = vrot.slane %v10518, 6
  %v10704 = vsel %vm10556, %v10703, %v10702
  %v10705 = vrot.slane %v10521, 5
  %v10706 = vsel %vm10559, %v10705, %v10704
  %10707 = vrot.lane.b32.xlu0 %v10692, 32
  %v10708 = vpop.permute.xlu0 %10707
  %10709 = vrot.lane.b32.xlu0 %v10706, 32
  %v10710 = vpop.permute.xlu0 %10709
  %v10713 = vrot.slane %v10462, 5
  %v10714 = vrot.slane %v10465, 4
  %v10715 = vsel %vm10541, %v10714, %v10713
  %v10716 = vrot.slane %v10470, 3
  %v10717 = vsel %vm10544, %v10716, %v10715
  %v10718 = vrot.slane %v10473, 2
  %v10719 = vsel %vm10547, %v10718, %v10717
  %v10720 = vrot.slane %v10478, 1
  %v10721 = vsel %vm10550, %v10720, %v10719
  %v10722 = vsel %vm10553, %v10481, %v10721
  %v10723 = vrot.slane %v10486, 7
  %v10724 = vsel %vm10556, %v10723, %v10722
  %v10725 = vrot.slane %v10489, 6
  %v10726 = vsel %vm10559, %v10725, %v10724
  %v10727 = vrot.slane %v10494, 5
  %v10728 = vrot.slane %v10497, 4
  %v10729 = vsel %vm10541, %v10728, %v10727
  %v10730 = vrot.slane %v10502, 3
  %v10731 = vsel %vm10544, %v10730, %v10729
  %v10732 = vrot.slane %v10505, 2
  %v10733 = vsel %vm10547, %v10732, %v10731
  %v10734 = vrot.slane %v10510, 1
  %v10735 = vsel %vm10550, %v10734, %v10733
  %v10736 = vsel %vm10553, %v10513, %v10735
  %v10737 = vrot.slane %v10518, 7
  %v10738 = vsel %vm10556, %v10737, %v10736
  %v10739 = vrot.slane %v10521, 6
  %v10740 = vsel %vm10559, %v10739, %v10738
  %10741 = vrot.lane.b32.xlu0 %v10726, 40
  %v10742 = vpop.permute.xlu0 %10741
  %10743 = vrot.lane.b32.xlu0 %v10740, 40
  %v10744 = vpop.permute.xlu0 %10743
  %v10747 = vrot.slane %v10462, 6
  %v10748 = vrot.slane %v10465, 5
  %v10749 = vsel %vm10541, %v10748, %v10747
  %v10750 = vrot.slane %v10470, 4
  %v10751 = vsel %vm10544, %v10750, %v10749
  %v10752 = vrot.slane %v10473, 3
  %v10753 = vsel %vm10547, %v10752, %v10751
  %v10754 = vrot.slane %v10478, 2
  %v10755 = vsel %vm10550, %v10754, %v10753
  %v10756 = vrot.slane %v10481, 1
  %v10757 = vsel %vm10553, %v10756, %v10755
  %v10758 = vsel %vm10556, %v10486, %v10757
  %v10759 = vrot.slane %v10489, 7
  %v10760 = vsel %vm10559, %v10759, %v10758
  %v10761 = vrot.slane %v10494, 6
  %v10762 = vrot.slane %v10497, 5
  %v10763 = vsel %vm10541, %v10762, %v10761
  %v10764 = vrot.slane %v10502, 4
  %v10765 = vsel %vm10544, %v10764, %v10763
  %v10766 = vrot.slane %v10505, 3
  %v10767 = vsel %vm10547, %v10766, %v10765
  %v10768 = vrot.slane %v10510, 2
  %v10769 = vsel %vm10550, %v10768, %v10767
  %v10770 = vrot.slane %v10513, 1
  %v10771 = vsel %vm10553, %v10770, %v10769
  %v10772 = vsel %vm10556, %v10518, %v10771
  %v10773 = vrot.slane %v10521, 7
  %v10774 = vsel %vm10559, %v10773, %v10772
  %10775 = vrot.lane.b32.xlu0 %v10760, 48
  %v10776 = vpop.permute.xlu0 %10775
  %10777 = vrot.lane.b32.xlu0 %v10774, 48
  %v10778 = vpop.permute.xlu0 %10777
  %v10781 = vrot.slane %v10462, 7
  %v10782 = vrot.slane %v10465, 6
  %v10783 = vsel %vm10541, %v10782, %v10781
  %v10784 = vrot.slane %v10470, 5
  %v10785 = vsel %vm10544, %v10784, %v10783
  %v10786 = vrot.slane %v10473, 4
  %v10787 = vsel %vm10547, %v10786, %v10785
  %v10788 = vrot.slane %v10478, 3
  %v10789 = vsel %vm10550, %v10788, %v10787
  %v10790 = vrot.slane %v10481, 2
  %v10791 = vsel %vm10553, %v10790, %v10789
  %v10792 = vrot.slane %v10486, 1
  %v10793 = vsel %vm10556, %v10792, %v10791
  %v10794 = vsel %vm10559, %v10489, %v10793
  %v10795 = vrot.slane %v10494, 7
  %v10796 = vrot.slane %v10497, 6
  %v10797 = vsel %vm10541, %v10796, %v10795
  %v10798 = vrot.slane %v10502, 5
  %v10799 = vsel %vm10544, %v10798, %v10797
  %v10800 = vrot.slane %v10505, 4
  %v10801 = vsel %vm10547, %v10800, %v10799
  %v10802 = vrot.slane %v10510, 3
  %v10803 = vsel %vm10550, %v10802, %v10801
  %v10804 = vrot.slane %v10513, 2
  %v10805 = vsel %vm10553, %v10804, %v10803
  %v10806 = vrot.slane %v10518, 1
  %v10807 = vsel %vm10556, %v10806, %v10805
  %v10808 = vsel %vm10559, %v10521, %v10807
  %10809 = vrot.lane.b32.xlu0 %v10794, 56
  %v10810 = vpop.permute.xlu0 %10809
  %10811 = vrot.lane.b32.xlu0 %v10808, 56
  %v10812 = vpop.permute.xlu0 %10811
  %v10815 = vsel %vm2739, %v10560, %v10606
  %v10816 = vsel %vm2739, %v10574, %v10608
  %v10817 = vsel %vm2869, %v10815, %v10640
  %v10818 = vsel %vm2869, %v10816, %v10642
  %v10819 = vsel %vm2999, %v10817, %v10674
  %v10820 = vsel %vm2999, %v10818, %v10676
  %v10821 = vsel %vm3129, %v10819, %v10708
  %v10822 = vsel %vm3129, %v10820, %v10710
  %v10823 = vsel %vm7402, %v10821, %v10742
  %v10824 = vsel %vm7402, %v10822, %v10744
  %v10825 = vsel %vm7467, %v10823, %v10776
  %v10826 = vsel %vm7467, %v10824, %v10778
  %v10827 = vsel %vm7532, %v10825, %v10810
  %v10828 = vsel %vm7532, %v10826, %v10812
  %10829 = vst.msk [vmem:[%s14] sm:$0xff] %vm7597, %v10827
  %10830 = vst.msk [vmem:[%s14 + $0x8] sm:$0xff] %vm7597, %v10828
  // Predicated region
  $region58: #{block_forward.1} parent=0 // pred_check
    _
  $region59: #{block_forward.1} parent=0 // pred_check_branch
    %10832 = sbr.rel (0) target = $region61
  $region60: #{block_forward.1} parent=0 // pred_region
    _
  $region61: #{block_forward.1} parent=0 // pred_fallthru
    _
  // Predicated region
  $region62: #{block_forward.1} parent=0 // pred_check
    _
  $region63: #{block_forward.1} parent=0 // pred_check_branch
    %10834 = sbr.rel (0) target = $region65
  $region64: #{block_forward.1} parent=0 // pred_region
    _
  $region65: #{block_forward.1} parent=0 // pred_fallthru
    _

</llo_original>
